<compile_context>
chip_gen: v6e
topology: v6e:2x2x1
jax: 0.10.0
libtpu: 0.0.40
codegen_flags: <defaults>
</compile_context>

<pallas_src>
import jax
import jax.numpy as jnp
from jax.experimental import pallas as pl
from jax.experimental.pallas import tpu as pltpu


# ----------------------------------------------------------------------------
# Kernels
# ----------------------------------------------------------------------------
def _upconv2x2_kernel(x_ref, w0_ref, w1_ref, b_ref, o_ref):
    """ConvTranspose2d(kernel=2, stride=2) on one (n, row-tile) block.

    x_ref  : (1, TH, Win, Cin)          bf16 input rows
    w0_ref : (Cin, 2*Cout)              taps (di=0, dj, co)
    w1_ref : (Cin, 2*Cout)              taps (di=1, dj, co)
    b_ref  : (1, 2*Cout)                f32 bias, tiled over dj
    o_ref  : (1, TH, 2, 2*Win, Cout)    interleaved output (reshape outside is free)
    """
    _, th, win, cin = x_ref.shape
    cout = o_ref.shape[-1]

    x2 = x_ref[0].reshape(th * win, cin)                                 # bf16
    y0 = jnp.dot(x2, w0_ref[...], preferred_element_type=jnp.float32) + b_ref[...]
    y1 = jnp.dot(x2, w1_ref[...], preferred_element_type=jnp.float32) + b_ref[...]
    y0 = y0.reshape(th, 1, 2 * win, cout)   # row 2h+0, width-interleaved
    y1 = y1.reshape(th, 1, 2 * win, cout)   # row 2h+1
    o_ref[0] = jnp.concatenate([y0, y1], axis=1).astype(o_ref.dtype)


def _conv3x3_relu_kernel(xp_hbm, w_ref, b_ref, o_ref, st_ref, xbuf, sem):
    """3x3 SAME conv + bias + ReLU on one (n, row-tile) block, plus BN partial stats.

    xp_hbm : (N, H+2, Wp, Cin)      zero-padded input in HBM (manual halo DMA)
    w_ref  : (9, Cin, Cout)         tap index k = kh*3 + kw
    b_ref  : (1, Cout)              f32 conv bias
    o_ref  : (1, TH, W, Cout)       pre-BatchNorm activations (float32)
    st_ref : (1, 1, 8, Cout)        row0 = sum(h), row1 = sum(h*h) over this tile
    xbuf   : (2, TH+2, Wp, Cin)     double-buffered VMEM halo buffers (bf16)
    sem    : (2,) DMA semaphores
    """
    n = pl.program_id(0)
    t = pl.program_id(1)
    n_tiles = pl.num_programs(1)
    _, thp, wp, cin = xbuf.shape
    th = thp - 2
    _, _, w_out, cout = o_ref.shape
    slot = t % 2

    def _copy(tile_idx, s):
        row0 = pl.multiple_of(tile_idx * th, th)
        return pltpu.make_async_copy(
            xp_hbm.at[n, pl.ds(row0, thp)], xbuf.at[s], sem.at[s])

    # Prime the pipeline: first tile of this image fetches its own halo.
    @pl.when(t == 0)
    def _():
        _copy(0, 0).start()

    # Wait for the halo of the current tile (issued at t==0 or by the previous tile).
    _copy(t, slot).wait()

    # Prefetch next tile's halo into the other slot; overlaps with the matmuls below.
    @pl.when(t + 1 < n_tiles)
    def _():
        _copy(t + 1, 1 - slot).start()

    xb = xbuf[slot]                                                      # bf16

    # ---- 3x3 conv: 9 deep-K MXU matmuls over full-width slabs --------------------
    # (the kh slice is on the leading, untiled dim -> cheap; only 3 column-shifted
    #  adds of the f32 partials are needed instead of 9 strided slice+reshape copies)
    acc = jnp.zeros((th, w_out, cout), jnp.float32)
    for kw in range(3):
        p = jnp.zeros((th * wp, cout), jnp.float32)
        for kh in range(3):
            slab = xb[kh:kh + th].reshape(th * wp, cin)
            p = p + jnp.dot(slab, w_ref[3 * kh + kw],
                            preferred_element_type=jnp.float32)
        acc = acc + p.reshape(th, wp, cout)[:, kw:kw + w_out, :]

    h = jnp.maximum(acc + b_ref[...], 0.0)                               # bias + ReLU
    o_ref[0] = h

    # ---- per-tile BatchNorm partial statistics (f32, lane-dense (8, Cout) slab) --
    h2 = h.reshape(th * w_out, cout)
    s1 = jnp.sum(h2, axis=0, keepdims=True)
    s2 = jnp.sum(h2 * h2, axis=0, keepdims=True)
    st_ref[0, 0] = jnp.concatenate(
        [s1, s2, jnp.zeros((6, cout), jnp.float32)], axis=0)


# ----------------------------------------------------------------------------
# Wrappers
# ----------------------------------------------------------------------------
_VMEM_LIMIT = 32 * 1024 * 1024  # safe scoped-VMEM budget on v5e / v6e / v7x


def upconv2x2_stride2(x_bf16, w_up, b_up, *, tile_h=8):
    """ConvTranspose2d(kernel=2, stride=2).  w_up: (Cin, 2, 2, Cout), b_up: (Cout,)."""
    nb, hin, win, cin = x_bf16.shape
    cout = w_up.shape[-1]
    tile_h = min(tile_h, hin)
    assert hin % tile_h == 0, (hin, tile_h)
    n_tiles = hin // tile_h

    w0 = w_up[:, 0].reshape(cin, 2 * cout).astype(jnp.bfloat16)   # (dj, co) columns
    w1 = w_up[:, 1].reshape(cin, 2 * cout).astype(jnp.bfloat16)
    b2 = jnp.tile(b_up.astype(jnp.float32), 2).reshape(1, 2 * cout)

    out5 = pl.pallas_call(
        _upconv2x2_kernel,
        out_shape=jax.ShapeDtypeStruct((nb, hin, 2, 2 * win, cout), jnp.bfloat16),
        grid_spec=pltpu.PrefetchScalarGridSpec(
            num_scalar_prefetch=0,
            grid=(nb, n_tiles),
            in_specs=[
                pl.BlockSpec((1, tile_h, win, cin), lambda i, t: (i, t, 0, 0)),
                pl.BlockSpec((cin, 2 * cout), lambda i, t: (0, 0)),
                pl.BlockSpec((cin, 2 * cout), lambda i, t: (0, 0)),
                pl.BlockSpec((1, 2 * cout), lambda i, t: (0, 0)),
            ],
            out_specs=pl.BlockSpec((1, tile_h, 2, 2 * win, cout),
                                   lambda i, t: (i, t, 0, 0, 0)),
        ),
        compiler_params=pltpu.CompilerParams(
            dimension_semantics=("parallel", "parallel"),
            vmem_limit_bytes=_VMEM_LIMIT),
    )(x_bf16, w0, w1, b2)

    # (nb, hin, 2, 2*win, cout) -> (nb, 2*hin, 2*win, cout): contiguous, free in XLA.
    return out5.reshape(nb, 2 * hin, 2 * win, cout)


def conv3x3_relu_bn_stats(x_bf16, w9, b, *, tile_h=8):
    """Conv2d(3x3, padding=1) + bias + ReLU; returns f32 pre-BN output and batch stats."""
    nb, h_dim, w_dim, cin = x_bf16.shape
    cout = w9.shape[-1]
    tile_h = min(tile_h, h_dim)
    assert h_dim % tile_h == 0, (h_dim, tile_h)
    n_tiles = h_dim // tile_h

    # Zero-pad H by 1 each side; pad W up to a sublane multiple (extra right columns
    # are zeros and never read back).  One XLA pass; XLA fuses the producer into it.
    wp = ((w_dim + 2 + 7) // 8) * 8
    xp = jnp.pad(x_bf16, ((0, 0), (1, 1), (1, wp - w_dim - 1), (0, 0)))

    h_out, stats = pl.pallas_call(
        _conv3x3_relu_kernel,
        out_shape=(
            jax.ShapeDtypeStruct((nb, h_dim, w_dim, cout), jnp.float32),
            jax.ShapeDtypeStruct((nb, n_tiles, 8, cout), jnp.float32),
        ),
        grid_spec=pltpu.PrefetchScalarGridSpec(
            num_scalar_prefetch=0,
            grid=(nb, n_tiles),
            in_specs=[
                pl.BlockSpec(memory_space=pl.ANY),                       # padded input
                pl.BlockSpec((9, cin, cout), lambda i, t: (0, 0, 0)),    # weights
                pl.BlockSpec((1, cout), lambda i, t: (0, 0)),            # bias
            ],
            out_specs=[
                pl.BlockSpec((1, tile_h, w_dim, cout), lambda i, t: (i, t, 0, 0)),
                pl.BlockSpec((1, 1, 8, cout), lambda i, t: (i, t, 0, 0)),
            ],
            scratch_shapes=[
                pltpu.VMEM((2, tile_h + 2, wp, cin), jnp.bfloat16),      # halo dbl-buf
                pltpu.SemaphoreType.DMA((2,)),
            ],
        ),
        compiler_params=pltpu.CompilerParams(
            # Tile axis is "arbitrary": per-image tiles run in order on one core,
            # which is required for the cross-tile halo prefetch hand-off.
            dimension_semantics=("parallel", "arbitrary"),
            vmem_limit_bytes=_VMEM_LIMIT),
    )(xp, w9.astype(jnp.bfloat16), b.reshape(1, cout).astype(jnp.float32))

    rows = nb * h_dim * w_dim
    s1 = jnp.sum(stats[:, :, 0, :], axis=(0, 1))
    s2 = jnp.sum(stats[:, :, 1, :], axis=(0, 1))
    mean = s1 / rows
    var = jnp.maximum(s2 / rows - mean * mean, 0.0)     # biased variance (training BN)
    return h_out, mean, var


def _bn_affine(h_f32, mean, var, gamma, beta, eps=1e-5):
    """Training-mode BatchNorm as a per-channel affine; fuses with adjacent XLA ops."""
    a = gamma * jax.lax.rsqrt(var + eps)
    c = beta - mean * a
    return h_f32 * a + c


def unet_up_block_forward(x_nchw, bridge_nchw, params, *, tile_h=8):
    """Forward of UNetUpBlock(up_mode='upconv', padding=True) with batch_norm=True."""
    # TODO(synk): up_mode='upsample' (bilinear Upsample + 1x1 conv) branch not implemented.
    x = jnp.transpose(x_nchw, (0, 2, 3, 1)).astype(jnp.bfloat16)        # NCHW -> NHWC
    bridge = jnp.transpose(bridge_nchw, (0, 2, 3, 1))

    up = upconv2x2_stride2(x, params["w_up"], params["b_up"], tile_h=tile_h)
    hu, wu = up.shape[1], up.shape[2]

    # center_crop(bridge, up.shape[2:]) and torch.cat([crop1, up], dim=channel).
    dy = (bridge.shape[1] - hu) // 2
    dx = (bridge.shape[2] - wu) // 2
    crop = bridge[:, dy:dy + hu, dx:dx + wu, :].astype(jnp.bfloat16)
    cat = jnp.concatenate([crop, up], axis=-1)
    # TODO(synk): crop/concat could be fused into the first conv kernel by DMA'ing
    # bridge and up channel slabs straight into the halo buffer (saves one HBM pass).

    h1, m1, v1 = conv3x3_relu_bn_stats(cat, params["w1"], params["b1"], tile_h=tile_h)
    h1n = _bn_affine(h1, m1, v1, params["g1"], params["beta1"]).astype(jnp.bfloat16)

    h2, m2, v2 = conv3x3_relu_bn_stats(h1n, params["w2"], params["b2"], tile_h=tile_h)
    out = _bn_affine(h2, m2, v2, params["g2"], params["beta2"])

    return jnp.transpose(out, (0, 3, 1, 2))                             # NHWC -> NCHW


# ----------------------------------------------------------------------------
# Pure-JAX reference (same precision policy: bf16 matmul operands, f32 accumulation,
# f32 training-mode BatchNorm) for a sanity check of the Pallas path.
# ----------------------------------------------------------------------------
def reference_forward(x_nchw, bridge_nchw, params):
    x = jnp.transpose(x_nchw, (0, 2, 3, 1))
    bridge = jnp.transpose(bridge_nchw, (0, 2, 3, 1))
    nb, hin, win, _ = x.shape
    cout = params["w_up"].shape[-1]

    up = jnp.einsum("nhwc,cijd->nhiwjd",
                    x.astype(jnp.bfloat16), params["w_up"].astype(jnp.bfloat16),
                    preferred_element_type=jnp.float32)
    up = up.reshape(nb, 2 * hin, 2 * win, cout) + params["b_up"]
    up = up.astype(jnp.bfloat16)

    hu, wu = up.shape[1], up.shape[2]
    dy = (bridge.shape[1] - hu) // 2
    dx = (bridge.shape[2] - wu) // 2
    cat = jnp.concatenate(
        [bridge[:, dy:dy + hu, dx:dx + wu, :].astype(jnp.bfloat16), up], axis=-1)

    def conv_relu(h, w9, b):
        w_hwio = w9.reshape(3, 3, w9.shape[1], w9.shape[2]).astype(jnp.bfloat16)
        y = jax.lax.conv_general_dilated(
            h, w_hwio, (1, 1), "SAME",
            dimension_numbers=("NHWC", "HWIO", "NHWC"),
            preferred_element_type=jnp.float32) + b
        return jnp.maximum(y, 0.0)

    def bn(y, g, beta):
        mu = jnp.mean(y, axis=(0, 1, 2), keepdims=True)
        var = jnp.mean((y - mu) ** 2, axis=(0, 1, 2), keepdims=True)
        return (y - mu) * jax.lax.rsqrt(var + 1e-5) * g + beta

    h1 = conv_relu(cat, params["w1"], params["b1"])
    h1 = bn(h1, params["g1"], params["beta1"]).astype(jnp.bfloat16)
    h2 = conv_relu(h1, params["w2"], params["b2"])
    out = bn(h2, params["g2"], params["beta2"])
    return jnp.transpose(out, (0, 3, 1, 2))


# ----------------------------------------------------------------------------
# Main
# ----------------------------------------------------------------------------
if __name__ == "__main__":
    in_chans, out_chans = 256, 128        # multiples of 128 -> lane-dense MXU tiles/stores
    n_batch = 2
    hin = win = 8                         # x spatial -> upconv output is 16x16
    hb = wb = 18                          # bridge spatial (exercises center_crop)
    cb = in_chans - out_chans             # bridge channels so that cat has in_chans channels

    key = jax.random.PRNGKey(0)
    ks = jax.random.split(key, 12)

    x = jax.random.normal(ks[0], (n_batch, in_chans, hin, win), jnp.float32)      # NCHW
    bridge = jax.random.normal(ks[1], (n_batch, cb, hb, wb), jnp.float32)         # NCHW

    params = {
        # ConvTranspose2d(in_chans, out_chans, k=2, s=2): weight stored as (Cin, 2, 2, Cout)
        "w_up": 0.05 * jax.random.normal(ks[2], (in_chans, 2, 2, out_chans), jnp.float32),
        "b_up": 0.1 * jax.random.normal(ks[3], (out_chans,), jnp.float32),
        # Conv2d(in_chans, out_chans, 3, padding=1): taps (9, Cin, Cout), k = kh*3 + kw
        "w1": 0.05 * jax.random.normal(ks[4], (9, in_chans, out_chans), jnp.float32),
        "b1": 0.1 * jax.random.normal(ks[5], (out_chans,), jnp.float32),
        "g1": 1.0 + 0.1 * jax.random.normal(ks[6], (out_chans,), jnp.float32),
        "beta1": 0.1 * jax.random.normal(ks[7], (out_chans,), jnp.float32),
        # Conv2d(out_chans, out_chans, 3, padding=1)
        "w2": 0.05 * jax.random.normal(ks[8], (9, out_chans, out_chans), jnp.float32),
        "b2": 0.1 * jax.random.normal(ks[9], (out_chans,), jnp.float32),
        "g2": 1.0 + 0.1 * jax.random.normal(ks[10], (out_chans,), jnp.float32),
        "beta2": 0.1 * jax.random.normal(ks[11], (out_chans,), jnp.float32),
    }

    out = jax.block_until_ready(jax.jit(unet_up_block_forward)(x, bridge, params))
    ref = jax.block_until_ready(jax.jit(reference_forward)(x, bridge, params))

    assert out.shape == (n_batch, out_chans, 2 * hin, 2 * win), out.shape
    # Tolerance sized for bf16-operand rounding-boundary differences between the two
    # (otherwise precision-matched) pipelines; observed max error is ~1e-3.
    max_err = float(jnp.max(jnp.abs(out - ref)))
    assert jnp.allclose(out, ref, atol=1e-2, rtol=1e-2), max_err
    print("KERNEL_OK")
</pallas_src>

<mosaic_0001>
module attributes {stable_mosaic.version = 11 : i64} {
  func.func @_upconv2x2_kernel(%arg0: i32, %arg1: i32, %arg2: memref<1x8x8x256xbf16, #tpu.memory_space<vmem>>, %arg3: memref<256x256xbf16, #tpu.memory_space<vmem>>, %arg4: memref<256x256xbf16, #tpu.memory_space<vmem>>, %arg5: memref<1x256xf32, #tpu.memory_space<vmem>>, %arg6: memref<1x8x2x16x128xbf16, #tpu.memory_space<vmem>>) attributes {dimension_semantics = [#tpu.dimension_semantics<parallel>, #tpu.dimension_semantics<parallel>], iteration_bounds = array<i64: 2, 1>, scalar_prefetch = 0 : i64, scratch_operands = 0 : i64, tpu.core_type = #tpu.core_type<tc>, window_params = [{transform_indices = @transform_0, window_bounds = array<i64: 1, 8, 8, 256>}, {pipeline_mode = #tpu.pipeline_mode<synchronous>, transform_indices = @transform_1, window_bounds = array<i64: 256, 256>}, {pipeline_mode = #tpu.pipeline_mode<synchronous>, transform_indices = @transform_2, window_bounds = array<i64: 256, 256>}, {pipeline_mode = #tpu.pipeline_mode<synchronous>, transform_indices = @transform_3, window_bounds = array<i64: 1, 256>}, {transform_indices = @transform_4, window_bounds = array<i64: 1, 8, 2, 16, 128>}]} {
    %c0 = arith.constant 0 : index
    %c0_0 = arith.constant 0 : index
    %c0_1 = arith.constant 0 : index
    %c0_2 = arith.constant 0 : index
    %0 = vector.load %arg2[%c0, %c0_0, %c0_1, %c0_2] : memref<1x8x8x256xbf16, #tpu.memory_space<vmem>>, vector<1x8x8x256xbf16>
    %1 = vector.shape_cast %0 : vector<1x8x8x256xbf16> to vector<8x8x256xbf16>
    %2 = vector.shape_cast %1 : vector<8x8x256xbf16> to vector<64x256xbf16>
    %c0_3 = arith.constant 0 : index
    %c0_4 = arith.constant 0 : index
    %3 = vector.load %arg3[%c0_3, %c0_4] : memref<256x256xbf16, #tpu.memory_space<vmem>>, vector<256x256xbf16>
    %cst = arith.constant dense<0.000000e+00> : vector<64x256xf32>
    %4 = tpu.matmul %2, %3, %cst {dimension_numbers = #tpu.dot_dimension_numbers<[1], [0], [0], [1], [0, 0, 1, 1], [], []>} : vector<64x256xbf16>, vector<256x256xbf16>, vector<64x256xf32> -> vector<64x256xf32>
    %c0_5 = arith.constant 0 : index
    %c0_6 = arith.constant 0 : index
    %5 = vector.load %arg5[%c0_5, %c0_6] : memref<1x256xf32, #tpu.memory_space<vmem>>, vector<1x256xf32>
    %6 = vector.broadcast %5 : vector<1x256xf32> to vector<64x256xf32>
    %7 = arith.addf %4, %6 : vector<64x256xf32>
    %c0_7 = arith.constant 0 : index
    %c0_8 = arith.constant 0 : index
    %8 = vector.load %arg4[%c0_7, %c0_8] : memref<256x256xbf16, #tpu.memory_space<vmem>>, vector<256x256xbf16>
    %cst_9 = arith.constant dense<0.000000e+00> : vector<64x256xf32>
    %9 = tpu.matmul %2, %8, %cst_9 {dimension_numbers = #tpu.dot_dimension_numbers<[1], [0], [0], [1], [0, 0, 1, 1], [], []>} : vector<64x256xbf16>, vector<256x256xbf16>, vector<64x256xf32> -> vector<64x256xf32>
    %c0_10 = arith.constant 0 : index
    %c0_11 = arith.constant 0 : index
    %10 = vector.load %arg5[%c0_10, %c0_11] : memref<1x256xf32, #tpu.memory_space<vmem>>, vector<1x256xf32>
    %11 = vector.broadcast %10 : vector<1x256xf32> to vector<64x256xf32>
    %12 = arith.addf %9, %11 : vector<64x256xf32>
    %13 = vector.shape_cast %7 : vector<64x256xf32> to vector<8x1x16x128xf32>
    %14 = vector.shape_cast %12 : vector<64x256xf32> to vector<8x1x16x128xf32>
    %15 = tpu.concatenate %13, %14 in 1 : vector<8x1x16x128xf32>, vector<8x1x16x128xf32> -> vector<8x2x16x128xf32>
    %16 = arith.truncf %15 : vector<8x2x16x128xf32> to vector<8x2x16x128xbf16>
    %c0_12 = arith.constant 0 : index
    %c0_13 = arith.constant 0 : index
    %c0_14 = arith.constant 0 : index
    %c0_15 = arith.constant 0 : index
    %c0_16 = arith.constant 0 : index
    %17 = vector.load %arg6[%c0_12, %c0_13, %c0_14, %c0_15, %c0_16] : memref<1x8x2x16x128xbf16, #tpu.memory_space<vmem>>, vector<1x8x2x16x128xbf16>
    %18 = vector.shape_cast %17 : vector<1x8x2x16x128xbf16> to vector<8x2x16x128xbf16>
    %19 = vector.shape_cast %16 : vector<8x2x16x128xbf16> to vector<1x8x2x16x128xbf16>
    tpu.vector_store %arg6[%c0_12, %c0_13, %c0_14, %c0_15, %c0_16], %19 {strides = array<i32>} : memref<1x8x2x16x128xbf16, #tpu.memory_space<vmem>>, vector<1x8x2x16x128xbf16>,
    return
  }
  func.func @transform_0(%arg0: i32, %arg1: i32) -> (i32, i32, i32, i32) {
    %c0_i32 = arith.constant 0 : i32
    %c0_i32_0 = arith.constant 0 : i32
    %c0_i32_1 = arith.constant 0 : i32
    return %arg0, %arg1, %c0_i32, %c0_i32_0 : i32, i32, i32, i32
  }
  func.func @transform_1(%arg0: i32, %arg1: i32) -> (i32, i32) {
    %c0_i32 = arith.constant 0 : i32
    %c0_i32_0 = arith.constant 0 : i32
    %c0_i32_1 = arith.constant 0 : i32
    return %c0_i32, %c0_i32_0 : i32, i32
  }
  func.func @transform_2(%arg0: i32, %arg1: i32) -> (i32, i32) {
    %c0_i32 = arith.constant 0 : i32
    %c0_i32_0 = arith.constant 0 : i32
    %c0_i32_1 = arith.constant 0 : i32
    return %c0_i32, %c0_i32_0 : i32, i32
  }
  func.func @transform_3(%arg0: i32, %arg1: i32) -> (i32, i32) {
    %c0_i32 = arith.constant 0 : i32
    %c0_i32_0 = arith.constant 0 : i32
    %c0_i32_1 = arith.constant 0 : i32
    return %c0_i32, %c0_i32_0 : i32, i32
  }
  func.func @transform_4(%arg0: i32, %arg1: i32) -> (i32, i32, i32, i32, i32) {
    %c0_i32 = arith.constant 0 : i32
    %c0_i32_0 = arith.constant 0 : i32
    %c0_i32_1 = arith.constant 0 : i32
    %c0_i32_2 = arith.constant 0 : i32
    return %arg0, %arg1, %c0_i32, %c0_i32_0, %c0_i32_1 : i32, i32, i32, i32, i32
  }
}

module attributes {stable_mosaic.version = 11 : i64} {
  func.func @_conv3x3_relu_kernel(%arg0: i32, %arg1: i32, %arg2: memref<2x18x24x256xbf16, #tpu.memory_space<any>>, %arg3: memref<9x256x128xbf16, #tpu.memory_space<vmem>>, %arg4: memref<1x128xf32, #tpu.memory_space<vmem>>, %arg5: memref<1x8x16x128xf32, #tpu.memory_space<vmem>>, %arg6: memref<1x1x8x128xf32, #tpu.memory_space<vmem>>, %arg7: memref<2x10x24x256xbf16, #tpu.memory_space<vmem>>, %arg8: memref<2x!tpu.dma_semaphore, #tpu.memory_space<semaphore_mem>>) attributes {dimension_semantics = [#tpu.dimension_semantics<parallel>, #tpu.dimension_semantics<arbitrary>], iteration_bounds = array<i64: 2, 2>, scalar_prefetch = 0 : i64, scratch_operands = 2 : i64, tpu.core_type = #tpu.core_type<tc>, window_params = [{}, {pipeline_mode = #tpu.pipeline_mode<synchronous>, transform_indices = @transform_1, window_bounds = array<i64: 9, 256, 128>}, {pipeline_mode = #tpu.pipeline_mode<synchronous>, transform_indices = @transform_2, window_bounds = array<i64: 1, 128>}, {transform_indices = @transform_3, window_bounds = array<i64: 1, 8, 16, 128>}, {transform_indices = @transform_4, window_bounds = array<i64: 1, 1, 8, 128>}]} {
    %c2_i32 = arith.constant 2 : i32
    %c0_i32 = arith.constant 0 : i32
    %0 = arith.cmpi eq, %c2_i32, %c0_i32 : i32
    %c1_i32 = arith.constant 1 : i32
    %1 = arith.select %0, %c1_i32, %c2_i32 : i32
    %2 = arith.remsi %arg1, %1 : i32
    %c0_i32_0 = arith.constant 0 : i32
    %3 = arith.cmpi ne, %2, %c0_i32_0 : i32
    %c0_i32_1 = arith.constant 0 : i32
    %4 = arith.cmpi slt, %2, %c0_i32_1 : i32
    %c0_i32_2 = arith.constant 0 : i32
    %5 = arith.cmpi slt, %1, %c0_i32_2 : i32
    %6 = arith.xori %4, %5 : i1
    %7 = arith.andi %6, %3 : i1
    %8 = arith.addi %2, %1 : i32
    %9 = arith.select %7, %8, %2 : i32
    %c0_i32_3 = arith.constant 0 : i32
    %10 = arith.cmpi eq, %arg1, %c0_i32_3 : i32
    %11 = arith.extui %10 : i1 to i32
    %c0_i32_4 = arith.constant 0 : i32
    %12 = arith.cmpi ne, %11, %c0_i32_4 : i32
    scf.if %12 {
      %c0_i32_60 = arith.constant 0 : i32
      %115 = tpu.assume_multiple %c0_i32_60, 8 : i32
      %c0_i32_61 = arith.constant 0 : i32
      %c0_i32_62 = arith.constant 0 : i32
      %c0_i32_63 = arith.constant 0 : i32
      %c0_i32_64 = arith.constant 0 : i32
      %116 = tpu.memref_slice %arg2[%arg0, %115, %c0_i32_63, %c0_i32_64] : memref<2x18x24x256xbf16, #tpu.memory_space<any>> -> memref<1x10x24x256xbf16, #tpu.memory_space<any>>
      %117 = tpu.memref_squeeze %116 : memref<1x10x24x256xbf16, #tpu.memory_space<any>> -> memref<10x24x256xbf16, #tpu.memory_space<any>>
      %c0_i32_65 = arith.constant 0 : i32
      %c0_i32_66 = arith.constant 0 : i32
      %c0_i32_67 = arith.constant 0 : i32
      %118 = tpu.memref_slice %arg7[%c0_i32_61, %c0_i32_65, %c0_i32_66, %c0_i32_67] : memref<2x10x24x256xbf16, #tpu.memory_space<vmem>> -> memref<1x10x24x256xbf16, #tpu.memory_space<vmem>>
      %119 = tpu.memref_squeeze %118 : memref<1x10x24x256xbf16, #tpu.memory_space<vmem>> -> memref<10x24x256xbf16, #tpu.memory_space<vmem>>
      %120 = tpu.memref_slice %arg8[%c0_i32_62] : memref<2x!tpu.dma_semaphore, #tpu.memory_space<semaphore_mem>> -> memref<1x!tpu.dma_semaphore, #tpu.memory_space<semaphore_mem>>
      %121 = tpu.memref_squeeze %120 : memref<1x!tpu.dma_semaphore, #tpu.memory_space<semaphore_mem>> -> memref<!tpu.dma_semaphore, #tpu.memory_space<semaphore_mem>>
      tpu.enqueue_dma source(%117 : memref<10x24x256xbf16, #tpu.memory_space<any>>) target(%119 : memref<10x24x256xbf16, #tpu.memory_space<vmem>>) target_semaphore(%121 : memref<!tpu.dma_semaphore, #tpu.memory_space<semaphore_mem>>)
    } else {
    }
    %c8_i32 = arith.constant 8 : i32
    %13 = arith.muli %arg1, %c8_i32 : i32
    %14 = tpu.assume_multiple %13, 8 : i32
    %c0_i32_5 = arith.constant 0 : i32
    %c0_i32_6 = arith.constant 0 : i32
    %15 = tpu.memref_slice %arg2[%arg0, %14, %c0_i32_5, %c0_i32_6] : memref<2x18x24x256xbf16, #tpu.memory_space<any>> -> memref<1x10x24x256xbf16, #tpu.memory_space<any>>
    %16 = tpu.memref_squeeze %15 : memref<1x10x24x256xbf16, #tpu.memory_space<any>> -> memref<10x24x256xbf16, #tpu.memory_space<any>>
    %c0_i32_7 = arith.constant 0 : i32
    %c0_i32_8 = arith.constant 0 : i32
    %c0_i32_9 = arith.constant 0 : i32
    %17 = tpu.memref_slice %arg7[%9, %c0_i32_7, %c0_i32_8, %c0_i32_9] : memref<2x10x24x256xbf16, #tpu.memory_space<vmem>> -> memref<1x10x24x256xbf16, #tpu.memory_space<vmem>>
    %18 = tpu.memref_squeeze %17 : memref<1x10x24x256xbf16, #tpu.memory_space<vmem>> -> memref<10x24x256xbf16, #tpu.memory_space<vmem>>
    %19 = tpu.memref_slice %arg8[%9] : memref<2x!tpu.dma_semaphore, #tpu.memory_space<semaphore_mem>> -> memref<1x!tpu.dma_semaphore, #tpu.memory_space<semaphore_mem>>
    %20 = tpu.memref_squeeze %19 : memref<1x!tpu.dma_semaphore, #tpu.memory_space<semaphore_mem>> -> memref<!tpu.dma_semaphore, #tpu.memory_space<semaphore_mem>>
    tpu.wait_dma2 semaphore(%20 : memref<!tpu.dma_semaphore, #tpu.memory_space<semaphore_mem>>) src(%16 : memref<10x24x256xbf16, #tpu.memory_space<any>>) dst(%18 : memref<10x24x256xbf16, #tpu.memory_space<vmem>>)
    %c1_i32_10 = arith.constant 1 : i32
    %21 = arith.addi %arg1, %c1_i32_10 : i32
    %c2_i32_11 = arith.constant 2 : i32
    %22 = arith.cmpi slt, %21, %c2_i32_11 : i32
    %23 = arith.extui %22 : i1 to i32
    %c0_i32_12 = arith.constant 0 : i32
    %24 = arith.cmpi ne, %23, %c0_i32_12 : i32
    scf.if %24 {
      %c1_i32_60 = arith.constant 1 : i32
      %115 = arith.addi %arg1, %c1_i32_60 : i32
      %c1_i32_61 = arith.constant 1 : i32
      %116 = arith.subi %c1_i32_61, %9 : i32
      %c8_i32_62 = arith.constant 8 : i32
      %117 = arith.muli %115, %c8_i32_62 : i32
      %118 = tpu.assume_multiple %117, 8 : i32
      %c0_i32_63 = arith.constant 0 : i32
      %c0_i32_64 = arith.constant 0 : i32
      %119 = tpu.memref_slice %arg2[%arg0, %118, %c0_i32_63, %c0_i32_64] : memref<2x18x24x256xbf16, #tpu.memory_space<any>> -> memref<1x10x24x256xbf16, #tpu.memory_space<any>>
      %120 = tpu.memref_squeeze %119 : memref<1x10x24x256xbf16, #tpu.memory_space<any>> -> memref<10x24x256xbf16, #tpu.memory_space<any>>
      %c0_i32_65 = arith.constant 0 : i32
      %c0_i32_66 = arith.constant 0 : i32
      %c0_i32_67 = arith.constant 0 : i32
      %121 = tpu.memref_slice %arg7[%116, %c0_i32_65, %c0_i32_66, %c0_i32_67] : memref<2x10x24x256xbf16, #tpu.memory_space<vmem>> -> memref<1x10x24x256xbf16, #tpu.memory_space<vmem>>
      %122 = tpu.memref_squeeze %121 : memref<1x10x24x256xbf16, #tpu.memory_space<vmem>> -> memref<10x24x256xbf16, #tpu.memory_space<vmem>>
      %123 = tpu.memref_slice %arg8[%116] : memref<2x!tpu.dma_semaphore, #tpu.memory_space<semaphore_mem>> -> memref<1x!tpu.dma_semaphore, #tpu.memory_space<semaphore_mem>>
      %124 = tpu.memref_squeeze %123 : memref<1x!tpu.dma_semaphore, #tpu.memory_space<semaphore_mem>> -> memref<!tpu.dma_semaphore, #tpu.memory_space<semaphore_mem>>
      tpu.enqueue_dma source(%120 : memref<10x24x256xbf16, #tpu.memory_space<any>>) target(%122 : memref<10x24x256xbf16, #tpu.memory_space<vmem>>) target_semaphore(%124 : memref<!tpu.dma_semaphore, #tpu.memory_space<semaphore_mem>>)
    } else {
    }
    %25 = arith.index_cast %9 : i32 to index
    %c0 = arith.constant 0 : index
    %c0_13 = arith.constant 0 : index
    %c0_14 = arith.constant 0 : index
    %26 = vector.load %arg7[%25, %c0, %c0_13, %c0_14] : memref<2x10x24x256xbf16, #tpu.memory_space<vmem>>, vector<1x10x24x256xbf16>
    %27 = vector.shape_cast %26 : vector<1x10x24x256xbf16> to vector<10x24x256xbf16>
    %cst = arith.constant 0.000000e+00 : f32
    %28 = vector.broadcast %cst : f32 to vector<8x16x128xf32>
    %cst_15 = arith.constant 0.000000e+00 : f32
    %29 = vector.broadcast %cst_15 : f32 to vector<192x128xf32>
    %30 = vector.extract_strided_slice %27 {offsets = [0, 0, 0], sizes = [8, 24, 256], strides = [1, 1, 1]} : vector<10x24x256xbf16> to vector<8x24x256xbf16>
    %31 = vector.shape_cast %30 : vector<8x24x256xbf16> to vector<192x256xbf16>
    %c0_16 = arith.constant 0 : index
    %c0_17 = arith.constant 0 : index
    %c0_18 = arith.constant 0 : index
    %32 = vector.load %arg3[%c0_16, %c0_17, %c0_18] : memref<9x256x128xbf16, #tpu.memory_space<vmem>>, vector<1x256x128xbf16>
    %33 = vector.shape_cast %32 : vector<1x256x128xbf16> to vector<256x128xbf16>
    %cst_19 = arith.constant dense<0.000000e+00> : vector<192x128xf32>
    %34 = tpu.matmul %31, %33, %cst_19 {dimension_numbers = #tpu.dot_dimension_numbers<[1], [0], [0], [1], [0, 0, 1, 1], [], []>} : vector<192x256xbf16>, vector<256x128xbf16>, vector<192x128xf32> -> vector<192x128xf32>
    %35 = arith.addf %29, %34 : vector<192x128xf32>
    %36 = vector.extract_strided_slice %27 {offsets = [1, 0, 0], sizes = [8, 24, 256], strides = [1, 1, 1]} : vector<10x24x256xbf16> to vector<8x24x256xbf16>
    %37 = vector.shape_cast %36 : vector<8x24x256xbf16> to vector<192x256xbf16>
    %c3 = arith.constant 3 : index
    %c0_20 = arith.constant 0 : index
    %c0_21 = arith.constant 0 : index
    %38 = vector.load %arg3[%c3, %c0_20, %c0_21] : memref<9x256x128xbf16, #tpu.memory_space<vmem>>, vector<1x256x128xbf16>
    %39 = vector.shape_cast %38 : vector<1x256x128xbf16> to vector<256x128xbf16>
    %cst_22 = arith.constant dense<0.000000e+00> : vector<192x128xf32>
    %40 = tpu.matmul %37, %39, %cst_22 {dimension_numbers = #tpu.dot_dimension_numbers<[1], [0], [0], [1], [0, 0, 1, 1], [], []>} : vector<192x256xbf16>, vector<256x128xbf16>, vector<192x128xf32> -> vector<192x128xf32>
    %41 = arith.addf %35, %40 : vector<192x128xf32>
    %42 = vector.extract_strided_slice %27 {offsets = [2, 0, 0], sizes = [8, 24, 256], strides = [1, 1, 1]} : vector<10x24x256xbf16> to vector<8x24x256xbf16>
    %43 = vector.shape_cast %42 : vector<8x24x256xbf16> to vector<192x256xbf16>
    %c6 = arith.constant 6 : index
    %c0_23 = arith.constant 0 : index
    %c0_24 = arith.constant 0 : index
    %44 = vector.load %arg3[%c6, %c0_23, %c0_24] : memref<9x256x128xbf16, #tpu.memory_space<vmem>>, vector<1x256x128xbf16>
    %45 = vector.shape_cast %44 : vector<1x256x128xbf16> to vector<256x128xbf16>
    %cst_25 = arith.constant dense<0.000000e+00> : vector<192x128xf32>
    %46 = tpu.matmul %43, %45, %cst_25 {dimension_numbers = #tpu.dot_dimension_numbers<[1], [0], [0], [1], [0, 0, 1, 1], [], []>} : vector<192x256xbf16>, vector<256x128xbf16>, vector<192x128xf32> -> vector<192x128xf32>
    %47 = arith.addf %41, %46 : vector<192x128xf32>
    %48 = vector.shape_cast %47 : vector<192x128xf32> to vector<8x24x128xf32>
    %49 = vector.extract_strided_slice %48 {offsets = [0, 0, 0], sizes = [8, 16, 128], strides = [1, 1, 1]} : vector<8x24x128xf32> to vector<8x16x128xf32>
    %50 = arith.addf %28, %49 : vector<8x16x128xf32>
    %cst_26 = arith.constant 0.000000e+00 : f32
    %51 = vector.broadcast %cst_26 : f32 to vector<192x128xf32>
    %52 = vector.extract_strided_slice %27 {offsets = [0, 0, 0], sizes = [8, 24, 256], strides = [1, 1, 1]} : vector<10x24x256xbf16> to vector<8x24x256xbf16>
    %53 = vector.shape_cast %52 : vector<8x24x256xbf16> to vector<192x256xbf16>
    %c1 = arith.constant 1 : index
    %c0_27 = arith.constant 0 : index
    %c0_28 = arith.constant 0 : index
    %54 = vector.load %arg3[%c1, %c0_27, %c0_28] : memref<9x256x128xbf16, #tpu.memory_space<vmem>>, vector<1x256x128xbf16>
    %55 = vector.shape_cast %54 : vector<1x256x128xbf16> to vector<256x128xbf16>
    %cst_29 = arith.constant dense<0.000000e+00> : vector<192x128xf32>
    %56 = tpu.matmul %53, %55, %cst_29 {dimension_numbers = #tpu.dot_dimension_numbers<[1], [0], [0], [1], [0, 0, 1, 1], [], []>} : vector<192x256xbf16>, vector<256x128xbf16>, vector<192x128xf32> -> vector<192x128xf32>
    %57 = arith.addf %51, %56 : vector<192x128xf32>
    %58 = vector.extract_strided_slice %27 {offsets = [1, 0, 0], sizes = [8, 24, 256], strides = [1, 1, 1]} : vector<10x24x256xbf16> to vector<8x24x256xbf16>
    %59 = vector.shape_cast %58 : vector<8x24x256xbf16> to vector<192x256xbf16>
    %c4 = arith.constant 4 : index
    %c0_30 = arith.constant 0 : index
    %c0_31 = arith.constant 0 : index
    %60 = vector.load %arg3[%c4, %c0_30, %c0_31] : memref<9x256x128xbf16, #tpu.memory_space<vmem>>, vector<1x256x128xbf16>
    %61 = vector.shape_cast %60 : vector<1x256x128xbf16> to vector<256x128xbf16>
    %cst_32 = arith.constant dense<0.000000e+00> : vector<192x128xf32>
    %62 = tpu.matmul %59, %61, %cst_32 {dimension_numbers = #tpu.dot_dimension_numbers<[1], [0], [0], [1], [0, 0, 1, 1], [], []>} : vector<192x256xbf16>, vector<256x128xbf16>, vector<192x128xf32> -> vector<192x128xf32>
    %63 = arith.addf %57, %62 : vector<192x128xf32>
    %64 = vector.extract_strided_slice %27 {offsets = [2, 0, 0], sizes = [8, 24, 256], strides = [1, 1, 1]} : vector<10x24x256xbf16> to vector<8x24x256xbf16>
    %65 = vector.shape_cast %64 : vector<8x24x256xbf16> to vector<192x256xbf16>
    %c7 = arith.constant 7 : index
    %c0_33 = arith.constant 0 : index
    %c0_34 = arith.constant 0 : index
    %66 = vector.load %arg3[%c7, %c0_33, %c0_34] : memref<9x256x128xbf16, #tpu.memory_space<vmem>>, vector<1x256x128xbf16>
    %67 = vector.shape_cast %66 : vector<1x256x128xbf16> to vector<256x128xbf16>
    %cst_35 = arith.constant dense<0.000000e+00> : vector<192x128xf32>
    %68 = tpu.matmul %65, %67, %cst_35 {dimension_numbers = #tpu.dot_dimension_numbers<[1], [0], [0], [1], [0, 0, 1, 1], [], []>} : vector<192x256xbf16>, vector<256x128xbf16>, vector<192x128xf32> -> vector<192x128xf32>
    %69 = arith.addf %63, %68 : vector<192x128xf32>
    %70 = vector.shape_cast %69 : vector<192x128xf32> to vector<8x24x128xf32>
    %71 = vector.extract_strided_slice %70 {offsets = [0, 1, 0], sizes = [8, 16, 128], strides = [1, 1, 1]} : vector<8x24x128xf32> to vector<8x16x128xf32>
    %72 = arith.addf %50, %71 : vector<8x16x128xf32>
    %cst_36 = arith.constant 0.000000e+00 : f32
    %73 = vector.broadcast %cst_36 : f32 to vector<192x128xf32>
    %74 = vector.extract_strided_slice %27 {offsets = [0, 0, 0], sizes = [8, 24, 256], strides = [1, 1, 1]} : vector<10x24x256xbf16> to vector<8x24x256xbf16>
    %75 = vector.shape_cast %74 : vector<8x24x256xbf16> to vector<192x256xbf16>
    %c2 = arith.constant 2 : index
    %c0_37 = arith.constant 0 : index
    %c0_38 = arith.constant 0 : index
    %76 = vector.load %arg3[%c2, %c0_37, %c0_38] : memref<9x256x128xbf16, #tpu.memory_space<vmem>>, vector<1x256x128xbf16>
    %77 = vector.shape_cast %76 : vector<1x256x128xbf16> to vector<256x128xbf16>
    %cst_39 = arith.constant dense<0.000000e+00> : vector<192x128xf32>
    %78 = tpu.matmul %75, %77, %cst_39 {dimension_numbers = #tpu.dot_dimension_numbers<[1], [0], [0], [1], [0, 0, 1, 1], [], []>} : vector<192x256xbf16>, vector<256x128xbf16>, vector<192x128xf32> -> vector<192x128xf32>
    %79 = arith.addf %73, %78 : vector<192x128xf32>
    %80 = vector.extract_strided_slice %27 {offsets = [1, 0, 0], sizes = [8, 24, 256], strides = [1, 1, 1]} : vector<10x24x256xbf16> to vector<8x24x256xbf16>
    %81 = vector.shape_cast %80 : vector<8x24x256xbf16> to vector<192x256xbf16>
    %c5 = arith.constant 5 : index
    %c0_40 = arith.constant 0 : index
    %c0_41 = arith.constant 0 : index
    %82 = vector.load %arg3[%c5, %c0_40, %c0_41] : memref<9x256x128xbf16, #tpu.memory_space<vmem>>, vector<1x256x128xbf16>
    %83 = vector.shape_cast %82 : vector<1x256x128xbf16> to vector<256x128xbf16>
    %cst_42 = arith.constant dense<0.000000e+00> : vector<192x128xf32>
    %84 = tpu.matmul %81, %83, %cst_42 {dimension_numbers = #tpu.dot_dimension_numbers<[1], [0], [0], [1], [0, 0, 1, 1], [], []>} : vector<192x256xbf16>, vector<256x128xbf16>, vector<192x128xf32> -> vector<192x128xf32>
    %85 = arith.addf %79, %84 : vector<192x128xf32>
    %86 = vector.extract_strided_slice %27 {offsets = [2, 0, 0], sizes = [8, 24, 256], strides = [1, 1, 1]} : vector<10x24x256xbf16> to vector<8x24x256xbf16>
    %87 = vector.shape_cast %86 : vector<8x24x256xbf16> to vector<192x256xbf16>
    %c8 = arith.constant 8 : index
    %c0_43 = arith.constant 0 : index
    %c0_44 = arith.constant 0 : index
    %88 = vector.load %arg3[%c8, %c0_43, %c0_44] : memref<9x256x128xbf16, #tpu.memory_space<vmem>>, vector<1x256x128xbf16>
    %89 = vector.shape_cast %88 : vector<1x256x128xbf16> to vector<256x128xbf16>
    %cst_45 = arith.constant dense<0.000000e+00> : vector<192x128xf32>
    %90 = tpu.matmul %87, %89, %cst_45 {dimension_numbers = #tpu.dot_dimension_numbers<[1], [0], [0], [1], [0, 0, 1, 1], [], []>} : vector<192x256xbf16>, vector<256x128xbf16>, vector<192x128xf32> -> vector<192x128xf32>
    %91 = arith.addf %85, %90 : vector<192x128xf32>
    %92 = vector.shape_cast %91 : vector<192x128xf32> to vector<8x24x128xf32>
    %93 = vector.extract_strided_slice %92 {offsets = [0, 2, 0], sizes = [8, 16, 128], strides = [1, 1, 1]} : vector<8x24x128xf32> to vector<8x16x128xf32>
    %94 = arith.addf %72, %93 : vector<8x16x128xf32>
    %c0_46 = arith.constant 0 : index
    %c0_47 = arith.constant 0 : index
    %95 = vector.load %arg4[%c0_46, %c0_47] : memref<1x128xf32, #tpu.memory_space<vmem>>, vector<1x128xf32>
    %96 = vector.shape_cast %95 : vector<1x128xf32> to vector<1x1x128xf32>
    %97 = vector.broadcast %96 : vector<1x1x128xf32> to vector<8x16x128xf32>
    %98 = arith.addf %94, %97 : vector<8x16x128xf32>
    %cst_48 = arith.constant 0.000000e+00 : f32
    %99 = vector.broadcast %cst_48 : f32 to vector<8x16x128xf32>
    %100 = arith.maximumf %98, %99 : vector<8x16x128xf32>
    %c0_49 = arith.constant 0 : index
    %c0_50 = arith.constant 0 : index
    %c0_51 = arith.constant 0 : index
    %c0_52 = arith.constant 0 : index
    %101 = vector.load %arg5[%c0_49, %c0_50, %c0_51, %c0_52] : memref<1x8x16x128xf32, #tpu.memory_space<vmem>>, vector<1x8x16x128xf32>
    %102 = vector.shape_cast %101 : vector<1x8x16x128xf32> to vector<8x16x128xf32>
    %103 = vector.shape_cast %100 : vector<8x16x128xf32> to vector<1x8x16x128xf32>
    tpu.vector_store %arg5[%c0_49, %c0_50, %c0_51, %c0_52], %103 {strides = array<i32>} : memref<1x8x16x128xf32, #tpu.memory_space<vmem>>, vector<1x8x16x128xf32>,
    %104 = vector.shape_cast %100 : vector<8x16x128xf32> to vector<128x128xf32>
    %cst_53 = arith.constant dense<0.000000e+00> : vector<128xf32>
    %105 = vector.multi_reduction <add>, %104, %cst_53 [0] : vector<128x128xf32> to vector<128xf32>
    %106 = vector.shape_cast %105 : vector<128xf32> to vector<1x128xf32>
    %107 = arith.mulf %104, %104 : vector<128x128xf32>
    %cst_54 = arith.constant dense<0.000000e+00> : vector<128xf32>
    %108 = vector.multi_reduction <add>, %107, %cst_54 [0] : vector<128x128xf32> to vector<128xf32>
    %109 = vector.shape_cast %108 : vector<128xf32> to vector<1x128xf32>
    %cst_55 = arith.constant 0.000000e+00 : f32
    %110 = vector.broadcast %cst_55 : f32 to vector<6x128xf32>
    %111 = tpu.concatenate %106, %109, %110 in 0 : vector<1x128xf32>, vector<1x128xf32>, vector<6x128xf32> -> vector<8x128xf32>
    %c0_56 = arith.constant 0 : index
    %c0_57 = arith.constant 0 : index
    %c0_58 = arith.constant 0 : index
    %c0_59 = arith.constant 0 : index
    %112 = vector.load %arg6[%c0_56, %c0_57, %c0_58, %c0_59] : memref<1x1x8x128xf32, #tpu.memory_space<vmem>>, vector<1x1x8x128xf32>
    %113 = vector.shape_cast %112 : vector<1x1x8x128xf32> to vector<8x128xf32>
    %114 = vector.shape_cast %111 : vector<8x128xf32> to vector<1x1x8x128xf32>
    tpu.vector_store %arg6[%c0_56, %c0_57, %c0_58, %c0_59], %114 {strides = array<i32>} : memref<1x1x8x128xf32, #tpu.memory_space<vmem>>, vector<1x1x8x128xf32>,
    return
  }
  func.func @transform_1(%arg0: i32, %arg1: i32) -> (i32, i32, i32) {
    %c0_i32 = arith.constant 0 : i32
    %c0_i32_0 = arith.constant 0 : i32
    %c0_i32_1 = arith.constant 0 : i32
    %c0_i32_2 = arith.constant 0 : i32
    return %c0_i32, %c0_i32_0, %c0_i32_1 : i32, i32, i32
  }
  func.func @transform_2(%arg0: i32, %arg1: i32) -> (i32, i32) {
    %c0_i32 = arith.constant 0 : i32
    %c0_i32_0 = arith.constant 0 : i32
    %c0_i32_1 = arith.constant 0 : i32
    return %c0_i32, %c0_i32_0 : i32, i32
  }
  func.func @transform_3(%arg0: i32, %arg1: i32) -> (i32, i32, i32, i32) {
    %c0_i32 = arith.constant 0 : i32
    %c0_i32_0 = arith.constant 0 : i32
    %c0_i32_1 = arith.constant 0 : i32
    return %arg0, %arg1, %c0_i32, %c0_i32_0 : i32, i32, i32, i32
  }
  func.func @transform_4(%arg0: i32, %arg1: i32) -> (i32, i32, i32, i32) {
    %c0_i32 = arith.constant 0 : i32
    %c0_i32_0 = arith.constant 0 : i32
    %c0_i32_1 = arith.constant 0 : i32
    return %arg0, %arg1, %c0_i32, %c0_i32_0 : i32, i32, i32, i32
  }
}

module attributes {stable_mosaic.version = 11 : i64} {
  func.func @_conv3x3_relu_kernel(%arg0: i32, %arg1: i32, %arg2: memref<2x18x24x128xbf16, #tpu.memory_space<any>>, %arg3: memref<9x128x128xbf16, #tpu.memory_space<vmem>>, %arg4: memref<1x128xf32, #tpu.memory_space<vmem>>, %arg5: memref<1x8x16x128xf32, #tpu.memory_space<vmem>>, %arg6: memref<1x1x8x128xf32, #tpu.memory_space<vmem>>, %arg7: memref<2x10x24x128xbf16, #tpu.memory_space<vmem>>, %arg8: memref<2x!tpu.dma_semaphore, #tpu.memory_space<semaphore_mem>>) attributes {dimension_semantics = [#tpu.dimension_semantics<parallel>, #tpu.dimension_semantics<arbitrary>], iteration_bounds = array<i64: 2, 2>, scalar_prefetch = 0 : i64, scratch_operands = 2 : i64, tpu.core_type = #tpu.core_type<tc>, window_params = [{}, {pipeline_mode = #tpu.pipeline_mode<synchronous>, transform_indices = @transform_1, window_bounds = array<i64: 9, 128, 128>}, {pipeline_mode = #tpu.pipeline_mode<synchronous>, transform_indices = @transform_2, window_bounds = array<i64: 1, 128>}, {transform_indices = @transform_3, window_bounds = array<i64: 1, 8, 16, 128>}, {transform_indices = @transform_4, window_bounds = array<i64: 1, 1, 8, 128>}]} {
    %c2_i32 = arith.constant 2 : i32
    %c0_i32 = arith.constant 0 : i32
    %0 = arith.cmpi eq, %c2_i32, %c0_i32 : i32
    %c1_i32 = arith.constant 1 : i32
    %1 = arith.select %0, %c1_i32, %c2_i32 : i32
    %2 = arith.remsi %arg1, %1 : i32
    %c0_i32_0 = arith.constant 0 : i32
    %3 = arith.cmpi ne, %2, %c0_i32_0 : i32
    %c0_i32_1 = arith.constant 0 : i32
    %4 = arith.cmpi slt, %2, %c0_i32_1 : i32
    %c0_i32_2 = arith.constant 0 : i32
    %5 = arith.cmpi slt, %1, %c0_i32_2 : i32
    %6 = arith.xori %4, %5 : i1
    %7 = arith.andi %6, %3 : i1
    %8 = arith.addi %2, %1 : i32
    %9 = arith.select %7, %8, %2 : i32
    %c0_i32_3 = arith.constant 0 : i32
    %10 = arith.cmpi eq, %arg1, %c0_i32_3 : i32
    %11 = arith.extui %10 : i1 to i32
    %c0_i32_4 = arith.constant 0 : i32
    %12 = arith.cmpi ne, %11, %c0_i32_4 : i32
    scf.if %12 {
      %c0_i32_60 = arith.constant 0 : i32
      %115 = tpu.assume_multiple %c0_i32_60, 8 : i32
      %c0_i32_61 = arith.constant 0 : i32
      %c0_i32_62 = arith.constant 0 : i32
      %c0_i32_63 = arith.constant 0 : i32
      %c0_i32_64 = arith.constant 0 : i32
      %116 = tpu.memref_slice %arg2[%arg0, %115, %c0_i32_63, %c0_i32_64] : memref<2x18x24x128xbf16, #tpu.memory_space<any>> -> memref<1x10x24x128xbf16, #tpu.memory_space<any>>
      %117 = tpu.memref_squeeze %116 : memref<1x10x24x128xbf16, #tpu.memory_space<any>> -> memref<10x24x128xbf16, #tpu.memory_space<any>>
      %c0_i32_65 = arith.constant 0 : i32
      %c0_i32_66 = arith.constant 0 : i32
      %c0_i32_67 = arith.constant 0 : i32
      %118 = tpu.memref_slice %arg7[%c0_i32_61, %c0_i32_65, %c0_i32_66, %c0_i32_67] : memref<2x10x24x128xbf16, #tpu.memory_space<vmem>> -> memref<1x10x24x128xbf16, #tpu.memory_space<vmem>>
      %119 = tpu.memref_squeeze %118 : memref<1x10x24x128xbf16, #tpu.memory_space<vmem>> -> memref<10x24x128xbf16, #tpu.memory_space<vmem>>
      %120 = tpu.memref_slice %arg8[%c0_i32_62] : memref<2x!tpu.dma_semaphore, #tpu.memory_space<semaphore_mem>> -> memref<1x!tpu.dma_semaphore, #tpu.memory_space<semaphore_mem>>
      %121 = tpu.memref_squeeze %120 : memref<1x!tpu.dma_semaphore, #tpu.memory_space<semaphore_mem>> -> memref<!tpu.dma_semaphore, #tpu.memory_space<semaphore_mem>>
      tpu.enqueue_dma source(%117 : memref<10x24x128xbf16, #tpu.memory_space<any>>) target(%119 : memref<10x24x128xbf16, #tpu.memory_space<vmem>>) target_semaphore(%121 : memref<!tpu.dma_semaphore, #tpu.memory_space<semaphore_mem>>)
    } else {
    }
    %c8_i32 = arith.constant 8 : i32
    %13 = arith.muli %arg1, %c8_i32 : i32
    %14 = tpu.assume_multiple %13, 8 : i32
    %c0_i32_5 = arith.constant 0 : i32
    %c0_i32_6 = arith.constant 0 : i32
    %15 = tpu.memref_slice %arg2[%arg0, %14, %c0_i32_5, %c0_i32_6] : memref<2x18x24x128xbf16, #tpu.memory_space<any>> -> memref<1x10x24x128xbf16, #tpu.memory_space<any>>
    %16 = tpu.memref_squeeze %15 : memref<1x10x24x128xbf16, #tpu.memory_space<any>> -> memref<10x24x128xbf16, #tpu.memory_space<any>>
    %c0_i32_7 = arith.constant 0 : i32
    %c0_i32_8 = arith.constant 0 : i32
    %c0_i32_9 = arith.constant 0 : i32
    %17 = tpu.memref_slice %arg7[%9, %c0_i32_7, %c0_i32_8, %c0_i32_9] : memref<2x10x24x128xbf16, #tpu.memory_space<vmem>> -> memref<1x10x24x128xbf16, #tpu.memory_space<vmem>>
    %18 = tpu.memref_squeeze %17 : memref<1x10x24x128xbf16, #tpu.memory_space<vmem>> -> memref<10x24x128xbf16, #tpu.memory_space<vmem>>
    %19 = tpu.memref_slice %arg8[%9] : memref<2x!tpu.dma_semaphore, #tpu.memory_space<semaphore_mem>> -> memref<1x!tpu.dma_semaphore, #tpu.memory_space<semaphore_mem>>
    %20 = tpu.memref_squeeze %19 : memref<1x!tpu.dma_semaphore, #tpu.memory_space<semaphore_mem>> -> memref<!tpu.dma_semaphore, #tpu.memory_space<semaphore_mem>>
    tpu.wait_dma2 semaphore(%20 : memref<!tpu.dma_semaphore, #tpu.memory_space<semaphore_mem>>) src(%16 : memref<10x24x128xbf16, #tpu.memory_space<any>>) dst(%18 : memref<10x24x128xbf16, #tpu.memory_space<vmem>>)
    %c1_i32_10 = arith.constant 1 : i32
    %21 = arith.addi %arg1, %c1_i32_10 : i32
    %c2_i32_11 = arith.constant 2 : i32
    %22 = arith.cmpi slt, %21, %c2_i32_11 : i32
    %23 = arith.extui %22 : i1 to i32
    %c0_i32_12 = arith.constant 0 : i32
    %24 = arith.cmpi ne, %23, %c0_i32_12 : i32
    scf.if %24 {
      %c1_i32_60 = arith.constant 1 : i32
      %115 = arith.addi %arg1, %c1_i32_60 : i32
      %c1_i32_61 = arith.constant 1 : i32
      %116 = arith.subi %c1_i32_61, %9 : i32
      %c8_i32_62 = arith.constant 8 : i32
      %117 = arith.muli %115, %c8_i32_62 : i32
      %118 = tpu.assume_multiple %117, 8 : i32
      %c0_i32_63 = arith.constant 0 : i32
      %c0_i32_64 = arith.constant 0 : i32
      %119 = tpu.memref_slice %arg2[%arg0, %118, %c0_i32_63, %c0_i32_64] : memref<2x18x24x128xbf16, #tpu.memory_space<any>> -> memref<1x10x24x128xbf16, #tpu.memory_space<any>>
      %120 = tpu.memref_squeeze %119 : memref<1x10x24x128xbf16, #tpu.memory_space<any>> -> memref<10x24x128xbf16, #tpu.memory_space<any>>
      %c0_i32_65 = arith.constant 0 : i32
      %c0_i32_66 = arith.constant 0 : i32
      %c0_i32_67 = arith.constant 0 : i32
      %121 = tpu.memref_slice %arg7[%116, %c0_i32_65, %c0_i32_66, %c0_i32_67] : memref<2x10x24x128xbf16, #tpu.memory_space<vmem>> -> memref<1x10x24x128xbf16, #tpu.memory_space<vmem>>
      %122 = tpu.memref_squeeze %121 : memref<1x10x24x128xbf16, #tpu.memory_space<vmem>> -> memref<10x24x128xbf16, #tpu.memory_space<vmem>>
      %123 = tpu.memref_slice %arg8[%116] : memref<2x!tpu.dma_semaphore, #tpu.memory_space<semaphore_mem>> -> memref<1x!tpu.dma_semaphore, #tpu.memory_space<semaphore_mem>>
      %124 = tpu.memref_squeeze %123 : memref<1x!tpu.dma_semaphore, #tpu.memory_space<semaphore_mem>> -> memref<!tpu.dma_semaphore, #tpu.memory_space<semaphore_mem>>
      tpu.enqueue_dma source(%120 : memref<10x24x128xbf16, #tpu.memory_space<any>>) target(%122 : memref<10x24x128xbf16, #tpu.memory_space<vmem>>) target_semaphore(%124 : memref<!tpu.dma_semaphore, #tpu.memory_space<semaphore_mem>>)
    } else {
    }
    %25 = arith.index_cast %9 : i32 to index
    %c0 = arith.constant 0 : index
    %c0_13 = arith.constant 0 : index
    %c0_14 = arith.constant 0 : index
    %26 = vector.load %arg7[%25, %c0, %c0_13, %c0_14] : memref<2x10x24x128xbf16, #tpu.memory_space<vmem>>, vector<1x10x24x128xbf16>
    %27 = vector.shape_cast %26 : vector<1x10x24x128xbf16> to vector<10x24x128xbf16>
    %cst = arith.constant 0.000000e+00 : f32
    %28 = vector.broadcast %cst : f32 to vector<8x16x128xf32>
    %cst_15 = arith.constant 0.000000e+00 : f32
    %29 = vector.broadcast %cst_15 : f32 to vector<192x128xf32>
    %30 = vector.extract_strided_slice %27 {offsets = [0, 0, 0], sizes = [8, 24, 128], strides = [1, 1, 1]} : vector<10x24x128xbf16> to vector<8x24x128xbf16>
    %31 = vector.shape_cast %30 : vector<8x24x128xbf16> to vector<192x128xbf16>
    %c0_16 = arith.constant 0 : index
    %c0_17 = arith.constant 0 : index
    %c0_18 = arith.constant 0 : index
    %32 = vector.load %arg3[%c0_16, %c0_17, %c0_18] : memref<9x128x128xbf16, #tpu.memory_space<vmem>>, vector<1x128x128xbf16>
    %33 = vector.shape_cast %32 : vector<1x128x128xbf16> to vector<128x128xbf16>
    %cst_19 = arith.constant dense<0.000000e+00> : vector<192x128xf32>
    %34 = tpu.matmul %31, %33, %cst_19 {dimension_numbers = #tpu.dot_dimension_numbers<[1], [0], [0], [1], [0, 0, 1, 1], [], []>} : vector<192x128xbf16>, vector<128x128xbf16>, vector<192x128xf32> -> vector<192x128xf32>
    %35 = arith.addf %29, %34 : vector<192x128xf32>
    %36 = vector.extract_strided_slice %27 {offsets = [1, 0, 0], sizes = [8, 24, 128], strides = [1, 1, 1]} : vector<10x24x128xbf16> to vector<8x24x128xbf16>
    %37 = vector.shape_cast %36 : vector<8x24x128xbf16> to vector<192x128xbf16>
    %c3 = arith.constant 3 : index
    %c0_20 = arith.constant 0 : index
    %c0_21 = arith.constant 0 : index
    %38 = vector.load %arg3[%c3, %c0_20, %c0_21] : memref<9x128x128xbf16, #tpu.memory_space<vmem>>, vector<1x128x128xbf16>
    %39 = vector.shape_cast %38 : vector<1x128x128xbf16> to vector<128x128xbf16>
    %cst_22 = arith.constant dense<0.000000e+00> : vector<192x128xf32>
    %40 = tpu.matmul %37, %39, %cst_22 {dimension_numbers = #tpu.dot_dimension_numbers<[1], [0], [0], [1], [0, 0, 1, 1], [], []>} : vector<192x128xbf16>, vector<128x128xbf16>, vector<192x128xf32> -> vector<192x128xf32>
    %41 = arith.addf %35, %40 : vector<192x128xf32>
    %42 = vector.extract_strided_slice %27 {offsets = [2, 0, 0], sizes = [8, 24, 128], strides = [1, 1, 1]} : vector<10x24x128xbf16> to vector<8x24x128xbf16>
    %43 = vector.shape_cast %42 : vector<8x24x128xbf16> to vector<192x128xbf16>
    %c6 = arith.constant 6 : index
    %c0_23 = arith.constant 0 : index
    %c0_24 = arith.constant 0 : index
    %44 = vector.load %arg3[%c6, %c0_23, %c0_24] : memref<9x128x128xbf16, #tpu.memory_space<vmem>>, vector<1x128x128xbf16>
    %45 = vector.shape_cast %44 : vector<1x128x128xbf16> to vector<128x128xbf16>
    %cst_25 = arith.constant dense<0.000000e+00> : vector<192x128xf32>
    %46 = tpu.matmul %43, %45, %cst_25 {dimension_numbers = #tpu.dot_dimension_numbers<[1], [0], [0], [1], [0, 0, 1, 1], [], []>} : vector<192x128xbf16>, vector<128x128xbf16>, vector<192x128xf32> -> vector<192x128xf32>
    %47 = arith.addf %41, %46 : vector<192x128xf32>
    %48 = vector.shape_cast %47 : vector<192x128xf32> to vector<8x24x128xf32>
    %49 = vector.extract_strided_slice %48 {offsets = [0, 0, 0], sizes = [8, 16, 128], strides = [1, 1, 1]} : vector<8x24x128xf32> to vector<8x16x128xf32>
    %50 = arith.addf %28, %49 : vector<8x16x128xf32>
    %cst_26 = arith.constant 0.000000e+00 : f32
    %51 = vector.broadcast %cst_26 : f32 to vector<192x128xf32>
    %52 = vector.extract_strided_slice %27 {offsets = [0, 0, 0], sizes = [8, 24, 128], strides = [1, 1, 1]} : vector<10x24x128xbf16> to vector<8x24x128xbf16>
    %53 = vector.shape_cast %52 : vector<8x24x128xbf16> to vector<192x128xbf16>
    %c1 = arith.constant 1 : index
    %c0_27 = arith.constant 0 : index
    %c0_28 = arith.constant 0 : index
    %54 = vector.load %arg3[%c1, %c0_27, %c0_28] : memref<9x128x128xbf16, #tpu.memory_space<vmem>>, vector<1x128x128xbf16>
    %55 = vector.shape_cast %54 : vector<1x128x128xbf16> to vector<128x128xbf16>
    %cst_29 = arith.constant dense<0.000000e+00> : vector<192x128xf32>
    %56 = tpu.matmul %53, %55, %cst_29 {dimension_numbers = #tpu.dot_dimension_numbers<[1], [0], [0], [1], [0, 0, 1, 1], [], []>} : vector<192x128xbf16>, vector<128x128xbf16>, vector<192x128xf32> -> vector<192x128xf32>
    %57 = arith.addf %51, %56 : vector<192x128xf32>
    %58 = vector.extract_strided_slice %27 {offsets = [1, 0, 0], sizes = [8, 24, 128], strides = [1, 1, 1]} : vector<10x24x128xbf16> to vector<8x24x128xbf16>
    %59 = vector.shape_cast %58 : vector<8x24x128xbf16> to vector<192x128xbf16>
    %c4 = arith.constant 4 : index
    %c0_30 = arith.constant 0 : index
    %c0_31 = arith.constant 0 : index
    %60 = vector.load %arg3[%c4, %c0_30, %c0_31] : memref<9x128x128xbf16, #tpu.memory_space<vmem>>, vector<1x128x128xbf16>
    %61 = vector.shape_cast %60 : vector<1x128x128xbf16> to vector<128x128xbf16>
    %cst_32 = arith.constant dense<0.000000e+00> : vector<192x128xf32>
    %62 = tpu.matmul %59, %61, %cst_32 {dimension_numbers = #tpu.dot_dimension_numbers<[1], [0], [0], [1], [0, 0, 1, 1], [], []>} : vector<192x128xbf16>, vector<128x128xbf16>, vector<192x128xf32> -> vector<192x128xf32>
    %63 = arith.addf %57, %62 : vector<192x128xf32>
    %64 = vector.extract_strided_slice %27 {offsets = [2, 0, 0], sizes = [8, 24, 128], strides = [1, 1, 1]} : vector<10x24x128xbf16> to vector<8x24x128xbf16>
    %65 = vector.shape_cast %64 : vector<8x24x128xbf16> to vector<192x128xbf16>
    %c7 = arith.constant 7 : index
    %c0_33 = arith.constant 0 : index
    %c0_34 = arith.constant 0 : index
    %66 = vector.load %arg3[%c7, %c0_33, %c0_34] : memref<9x128x128xbf16, #tpu.memory_space<vmem>>, vector<1x128x128xbf16>
    %67 = vector.shape_cast %66 : vector<1x128x128xbf16> to vector<128x128xbf16>
    %cst_35 = arith.constant dense<0.000000e+00> : vector<192x128xf32>
    %68 = tpu.matmul %65, %67, %cst_35 {dimension_numbers = #tpu.dot_dimension_numbers<[1], [0], [0], [1], [0, 0, 1, 1], [], []>} : vector<192x128xbf16>, vector<128x128xbf16>, vector<192x128xf32> -> vector<192x128xf32>
    %69 = arith.addf %63, %68 : vector<192x128xf32>
    %70 = vector.shape_cast %69 : vector<192x128xf32> to vector<8x24x128xf32>
    %71 = vector.extract_strided_slice %70 {offsets = [0, 1, 0], sizes = [8, 16, 128], strides = [1, 1, 1]} : vector<8x24x128xf32> to vector<8x16x128xf32>
    %72 = arith.addf %50, %71 : vector<8x16x128xf32>
    %cst_36 = arith.constant 0.000000e+00 : f32
    %73 = vector.broadcast %cst_36 : f32 to vector<192x128xf32>
    %74 = vector.extract_strided_slice %27 {offsets = [0, 0, 0], sizes = [8, 24, 128], strides = [1, 1, 1]} : vector<10x24x128xbf16> to vector<8x24x128xbf16>
    %75 = vector.shape_cast %74 : vector<8x24x128xbf16> to vector<192x128xbf16>
    %c2 = arith.constant 2 : index
    %c0_37 = arith.constant 0 : index
    %c0_38 = arith.constant 0 : index
    %76 = vector.load %arg3[%c2, %c0_37, %c0_38] : memref<9x128x128xbf16, #tpu.memory_space<vmem>>, vector<1x128x128xbf16>
    %77 = vector.shape_cast %76 : vector<1x128x128xbf16> to vector<128x128xbf16>
    %cst_39 = arith.constant dense<0.000000e+00> : vector<192x128xf32>
    %78 = tpu.matmul %75, %77, %cst_39 {dimension_numbers = #tpu.dot_dimension_numbers<[1], [0], [0], [1], [0, 0, 1, 1], [], []>} : vector<192x128xbf16>, vector<128x128xbf16>, vector<192x128xf32> -> vector<192x128xf32>
    %79 = arith.addf %73, %78 : vector<192x128xf32>
    %80 = vector.extract_strided_slice %27 {offsets = [1, 0, 0], sizes = [8, 24, 128], strides = [1, 1, 1]} : vector<10x24x128xbf16> to vector<8x24x128xbf16>
    %81 = vector.shape_cast %80 : vector<8x24x128xbf16> to vector<192x128xbf16>
    %c5 = arith.constant 5 : index
    %c0_40 = arith.constant 0 : index
    %c0_41 = arith.constant 0 : index
    %82 = vector.load %arg3[%c5, %c0_40, %c0_41] : memref<9x128x128xbf16, #tpu.memory_space<vmem>>, vector<1x128x128xbf16>
    %83 = vector.shape_cast %82 : vector<1x128x128xbf16> to vector<128x128xbf16>
    %cst_42 = arith.constant dense<0.000000e+00> : vector<192x128xf32>
    %84 = tpu.matmul %81, %83, %cst_42 {dimension_numbers = #tpu.dot_dimension_numbers<[1], [0], [0], [1], [0, 0, 1, 1], [], []>} : vector<192x128xbf16>, vector<128x128xbf16>, vector<192x128xf32> -> vector<192x128xf32>
    %85 = arith.addf %79, %84 : vector<192x128xf32>
    %86 = vector.extract_strided_slice %27 {offsets = [2, 0, 0], sizes = [8, 24, 128], strides = [1, 1, 1]} : vector<10x24x128xbf16> to vector<8x24x128xbf16>
    %87 = vector.shape_cast %86 : vector<8x24x128xbf16> to vector<192x128xbf16>
    %c8 = arith.constant 8 : index
    %c0_43 = arith.constant 0 : index
    %c0_44 = arith.constant 0 : index
    %88 = vector.load %arg3[%c8, %c0_43, %c0_44] : memref<9x128x128xbf16, #tpu.memory_space<vmem>>, vector<1x128x128xbf16>
    %89 = vector.shape_cast %88 : vector<1x128x128xbf16> to vector<128x128xbf16>
    %cst_45 = arith.constant dense<0.000000e+00> : vector<192x128xf32>
    %90 = tpu.matmul %87, %89, %cst_45 {dimension_numbers = #tpu.dot_dimension_numbers<[1], [0], [0], [1], [0, 0, 1, 1], [], []>} : vector<192x128xbf16>, vector<128x128xbf16>, vector<192x128xf32> -> vector<192x128xf32>
    %91 = arith.addf %85, %90 : vector<192x128xf32>
    %92 = vector.shape_cast %91 : vector<192x128xf32> to vector<8x24x128xf32>
    %93 = vector.extract_strided_slice %92 {offsets = [0, 2, 0], sizes = [8, 16, 128], strides = [1, 1, 1]} : vector<8x24x128xf32> to vector<8x16x128xf32>
    %94 = arith.addf %72, %93 : vector<8x16x128xf32>
    %c0_46 = arith.constant 0 : index
    %c0_47 = arith.constant 0 : index
    %95 = vector.load %arg4[%c0_46, %c0_47] : memref<1x128xf32, #tpu.memory_space<vmem>>, vector<1x128xf32>
    %96 = vector.shape_cast %95 : vector<1x128xf32> to vector<1x1x128xf32>
    %97 = vector.broadcast %96 : vector<1x1x128xf32> to vector<8x16x128xf32>
    %98 = arith.addf %94, %97 : vector<8x16x128xf32>
    %cst_48 = arith.constant 0.000000e+00 : f32
    %99 = vector.broadcast %cst_48 : f32 to vector<8x16x128xf32>
    %100 = arith.maximumf %98, %99 : vector<8x16x128xf32>
    %c0_49 = arith.constant 0 : index
    %c0_50 = arith.constant 0 : index
    %c0_51 = arith.constant 0 : index
    %c0_52 = arith.constant 0 : index
    %101 = vector.load %arg5[%c0_49, %c0_50, %c0_51, %c0_52] : memref<1x8x16x128xf32, #tpu.memory_space<vmem>>, vector<1x8x16x128xf32>
    %102 = vector.shape_cast %101 : vector<1x8x16x128xf32> to vector<8x16x128xf32>
    %103 = vector.shape_cast %100 : vector<8x16x128xf32> to vector<1x8x16x128xf32>
    tpu.vector_store %arg5[%c0_49, %c0_50, %c0_51, %c0_52], %103 {strides = array<i32>} : memref<1x8x16x128xf32, #tpu.memory_space<vmem>>, vector<1x8x16x128xf32>,
    %104 = vector.shape_cast %100 : vector<8x16x128xf32> to vector<128x128xf32>
    %cst_53 = arith.constant dense<0.000000e+00> : vector<128xf32>
    %105 = vector.multi_reduction <add>, %104, %cst_53 [0] : vector<128x128xf32> to vector<128xf32>
    %106 = vector.shape_cast %105 : vector<128xf32> to vector<1x128xf32>
    %107 = arith.mulf %104, %104 : vector<128x128xf32>
    %cst_54 = arith.constant dense<0.000000e+00> : vector<128xf32>
    %108 = vector.multi_reduction <add>, %107, %cst_54 [0] : vector<128x128xf32> to vector<128xf32>
    %109 = vector.shape_cast %108 : vector<128xf32> to vector<1x128xf32>
    %cst_55 = arith.constant 0.000000e+00 : f32
    %110 = vector.broadcast %cst_55 : f32 to vector<6x128xf32>
    %111 = tpu.concatenate %106, %109, %110 in 0 : vector<1x128xf32>, vector<1x128xf32>, vector<6x128xf32> -> vector<8x128xf32>
    %c0_56 = arith.constant 0 : index
    %c0_57 = arith.constant 0 : index
    %c0_58 = arith.constant 0 : index
    %c0_59 = arith.constant 0 : index
    %112 = vector.load %arg6[%c0_56, %c0_57, %c0_58, %c0_59] : memref<1x1x8x128xf32, #tpu.memory_space<vmem>>, vector<1x1x8x128xf32>
    %113 = vector.shape_cast %112 : vector<1x1x8x128xf32> to vector<8x128xf32>
    %114 = vector.shape_cast %111 : vector<8x128xf32> to vector<1x1x8x128xf32>
    tpu.vector_store %arg6[%c0_56, %c0_57, %c0_58, %c0_59], %114 {strides = array<i32>} : memref<1x1x8x128xf32, #tpu.memory_space<vmem>>, vector<1x1x8x128xf32>,
    return
  }
  func.func @transform_1(%arg0: i32, %arg1: i32) -> (i32, i32, i32) {
    %c0_i32 = arith.constant 0 : i32
    %c0_i32_0 = arith.constant 0 : i32
    %c0_i32_1 = arith.constant 0 : i32
    %c0_i32_2 = arith.constant 0 : i32
    return %c0_i32, %c0_i32_0, %c0_i32_1 : i32, i32, i32
  }
  func.func @transform_2(%arg0: i32, %arg1: i32) -> (i32, i32) {
    %c0_i32 = arith.constant 0 : i32
    %c0_i32_0 = arith.constant 0 : i32
    %c0_i32_1 = arith.constant 0 : i32
    return %c0_i32, %c0_i32_0 : i32, i32
  }
  func.func @transform_3(%arg0: i32, %arg1: i32) -> (i32, i32, i32, i32) {
    %c0_i32 = arith.constant 0 : i32
    %c0_i32_0 = arith.constant 0 : i32
    %c0_i32_1 = arith.constant 0 : i32
    return %arg0, %arg1, %c0_i32, %c0_i32_0 : i32, i32, i32, i32
  }
  func.func @transform_4(%arg0: i32, %arg1: i32) -> (i32, i32, i32, i32) {
    %c0_i32 = arith.constant 0 : i32
    %c0_i32_0 = arith.constant 0 : i32
    %c0_i32_1 = arith.constant 0 : i32
    return %arg0, %arg1, %c0_i32, %c0_i32_0 : i32, i32, i32, i32
  }
}

</mosaic_0001>

<llo_original>
// kernel: tile.8
$region0: #{tile.8}
  #allocation0 [shape = 's32[1]{0}', space=sflag, size = 0x4, scoped, tag = 'scoped memory for tile.8']
  %s0 = inlined_call_operand.vmem [shape: f32[128], index: 0, kind: input, shape index: {}]
  %s1 = inlined_call_operand.vmem [shape: f32[2,128], index: 1, kind: output, shape index: {}]
  // Predicated region
  $region2: #{tile.8} parent=0 // pred_check
    _
  $region3: #{tile.8} parent=0 // pred_check_branch
    %3 = sbr.rel (0) target = $region5
  $region4: #{tile.8} parent=0 // pred_region
    _
  $region5: #{tile.8} parent=0 // pred_fallthru
    _
  %v4 = vld [vmem:[%s0] ss:$0 sm:$0xff]
  %5 = vst [vmem:[%s1] sm:$0x3] %v4

// kernel: unet_up_block_forward.3
$region0: #{unet_up_block_forward.3}
  #allocation0 [shape = 'u32[]', space=smem, size = 0x4, offset = 0x4, fixed_abs, tag = 'smem constant byte address 0x4 - core index']
  #allocation1 [shape = 'u32[144,128]{1,0:T(1,128)}', space=vmem, size = 0x12000, scoped, tag = 'internal scratch']
  %s0 = inlined_call_operand.vmem [shape: bf16[2,8,8,256], index: 0, kind: input, shape index: {}]
  %s1 = inlined_call_operand.vmem [shape: bf16[256,256], index: 1, kind: input, shape index: {}]
  %s2 = inlined_call_operand.vmem [shape: bf16[256,256], index: 2, kind: input, shape index: {}]
  %s3 = inlined_call_operand.vmem [shape: f32[1,256], index: 3, kind: input, shape index: {}]
  %s4 = inlined_call_operand.vmem [shape: bf16[2,8,2,16,128], index: 4, kind: output, shape index: {}]
  %s5 = sld [smem:[#allocation0]]
  $region49: #{unet_up_block_forward.3} parent=0
    _
  %s7 = ssub.s32 1, %s5
  %s8 = scalar_select 0, %s7, %s5
  loop: start=0, step=1, limit=4
  $region2: #{unet_up_block_forward.3} parent=0 // loop_pre_header
    _
  $region3: #{unet_up_block_forward.3} parent=0 // loop_header
    %s10 = sphi 0, %s14
    %p11 = scmp.ge.s32.totalorder %s10, 4
    %s17 = sphi 0, %s29
    %s18 = sphi 0, %s25
    %s19 = sphi 0, %s17
    %s20 = sphi 0, %s18
    %s21 = sphi 0, %s19
    %s22 = sphi 0, %s20
    %s34 = sphi 0, %s36
    %s37 = sphi 0, %s34
    %s38 = sphi 0, %s37
    %s54 = sphi 0, %s38
    %s58 = sphi 0, %s58
    %s60 = sphi 0, %s58
    %s61 = sphi 0, %s60
    %s75 = sphi 0, %s61
    %s79 = sphi 0, %s79
    %s81 = sphi 0, %s79
    %s82 = sphi 0, %s81
    %s96 = sphi 0, %s82
    %s100 = sphi 0, %s100
    %s102 = sphi 0, %s100
    %s103 = sphi 0, %s102
    %s117 = sphi 0, %s103
    %s125 = sphi 0, %s127
    %s128 = sphi 0, %s125
    %s129 = sphi 0, %s128
    %s145 = sphi 0, %s129
  $region4: #{unet_up_block_forward.3} parent=0 // loop_header_branch
    %13 = sbr.rel (%p11) target = $region8
  $region5: #{unet_up_block_forward.3} parent=0 // loop_body
    %s15 = ssub.s32 %s10, 1
    %s16 = ssub.s32 %s10, 2
    %s23 = sadd.s32 1, %s18
    %p24 = scmp.ge.s32.totalorder %s23, 1
    %s25 = scalar_select %p24, 0, %s23
    %s26 = sadd.s32 1, %s17
    %s27 = scalar_select %p24, %s26, %s17
    %p28 = scmp.ge.s32.totalorder %s27, 2
    %s29 = scalar_select %p28, 0, %s27
    %s30 = ssub.s32 %s17, %s29
    %s31 = ssub.s32 %s18, %s25
    %s32 = sor.u32 %s30, %s31
    %p33 = scmp.eq.s32.totalorder %s32, 0
    %s35 = sadd.s32 %s34, 1
    %s36 = scalar_select %p33, %s34, %s35
    %p39 = pneg %p33
    %p40 = scmp.eq.s32.totalorder %s10, 1
    %p41 = por %p39, %p40
    %p42 = scmp.ne.s32.totalorder %s34, %s37
    %p43 = scmp.eq.s32.totalorder %s10, 0
    %p44 = por %p42, %p43
    %p45 = scmp.ne.s32.totalorder %s34, %s37
    %p46 = scmp.eq.s32.totalorder %s15, 1
    %p47 = por %p45, %p46
    %p48 = scmp.ne.s32.totalorder %s37, %s38
    %p49 = scmp.eq.s32.totalorder %s15, 0
    %p50 = por %p48, %p49
    %p51 = scmp.ne.s32.totalorder %s37, %s38
    %p52 = scmp.eq.s32.totalorder %s16, 1
    %p53 = por %p51, %p52
    %p55 = scmp.ne.s32.totalorder %s38, %s54
    %p56 = scmp.eq.s32.totalorder %s16, 0
    %p57 = por %p55, %p56
    %s59 = sadd.s32 %s58, 1
    %p62 = scmp.eq.s32.totalorder %s10, 1
    %p63 = scmp.ne.s32.totalorder %s58, %s60
    %p64 = scmp.eq.s32.totalorder %s10, 0
    %p65 = por %p63, %p64
    %p66 = scmp.ne.s32.totalorder %s58, %s60
    %p67 = scmp.eq.s32.totalorder %s15, 1
    %p68 = por %p66, %p67
    %p69 = scmp.ne.s32.totalorder %s60, %s61
    %p70 = scmp.eq.s32.totalorder %s15, 0
    %p71 = por %p69, %p70
    %p72 = scmp.ne.s32.totalorder %s60, %s61
    %p73 = scmp.eq.s32.totalorder %s16, 1
    %p74 = por %p72, %p73
    %p76 = scmp.ne.s32.totalorder %s61, %s75
    %p77 = scmp.eq.s32.totalorder %s16, 0
    %p78 = por %p76, %p77
    %s80 = sadd.s32 %s79, 1
    %p83 = scmp.eq.s32.totalorder %s10, 1
    %p84 = scmp.ne.s32.totalorder %s79, %s81
    %p85 = scmp.eq.s32.totalorder %s10, 0
    %p86 = por %p84, %p85
    %p87 = scmp.ne.s32.totalorder %s79, %s81
    %p88 = scmp.eq.s32.totalorder %s15, 1
    %p89 = por %p87, %p88
    %p90 = scmp.ne.s32.totalorder %s81, %s82
    %p91 = scmp.eq.s32.totalorder %s15, 0
    %p92 = por %p90, %p91
    %p93 = scmp.ne.s32.totalorder %s81, %s82
    %p94 = scmp.eq.s32.totalorder %s16, 1
    %p95 = por %p93, %p94
    %p97 = scmp.ne.s32.totalorder %s82, %s96
    %p98 = scmp.eq.s32.totalorder %s16, 0
    %p99 = por %p97, %p98
    %s101 = sadd.s32 %s100, 1
    %p104 = scmp.eq.s32.totalorder %s10, 1
    %p105 = scmp.ne.s32.totalorder %s100, %s102
    %p106 = scmp.eq.s32.totalorder %s10, 0
    %p107 = por %p105, %p106
    %p108 = scmp.ne.s32.totalorder %s100, %s102
    %p109 = scmp.eq.s32.totalorder %s15, 1
    %p110 = por %p108, %p109
    %p111 = scmp.ne.s32.totalorder %s102, %s103
    %p112 = scmp.eq.s32.totalorder %s15, 0
    %p113 = por %p111, %p112
    %p114 = scmp.ne.s32.totalorder %s102, %s103
    %p115 = scmp.eq.s32.totalorder %s16, 1
    %p116 = por %p114, %p115
    %p118 = scmp.ne.s32.totalorder %s103, %s117
    %p119 = scmp.eq.s32.totalorder %s16, 0
    %p120 = por %p118, %p119
    %s121 = ssub.s32 %s17, %s29
    %s122 = ssub.s32 %s18, %s25
    %s123 = sor.u32 %s121, %s122
    %p124 = scmp.eq.s32.totalorder %s123, 0
    %s126 = sadd.s32 %s125, 1
    %s127 = scalar_select %p124, %s125, %s126
    %p130 = pneg %p124
    %p131 = scmp.eq.s32.totalorder %s10, 1
    %p132 = por %p130, %p131
    %p133 = scmp.ne.s32.totalorder %s125, %s128
    %p134 = scmp.eq.s32.totalorder %s10, 0
    %p135 = por %p133, %p134
    %p136 = scmp.ne.s32.totalorder %s125, %s128
    %p137 = scmp.eq.s32.totalorder %s15, 1
    %p138 = por %p136, %p137
    %p139 = scmp.ne.s32.totalorder %s128, %s129
    %p140 = scmp.eq.s32.totalorder %s15, 0
    %p141 = por %p139, %p140
    %p142 = scmp.ne.s32.totalorder %s128, %s129
    %p143 = scmp.eq.s32.totalorder %s16, 1
    %p144 = por %p142, %p143
    %p146 = scmp.ne.s32.totalorder %s129, %s145
    %p147 = scmp.eq.s32.totalorder %s16, 0
    %p148 = por %p146, %p147
    %p149 = scmp.le.s32.totalorder 1, %s10
    %p150 = scmp.lt.s32.totalorder %s10, 3
    %p151 = pnand %p149, %p150
    %p152 = pneg %p151
    // Predicated region
    $region9: #{unet_up_block_forward.3} parent=5 // pred_check
      _
    $region10: #{unet_up_block_forward.3} parent=5 // pred_check_branch
      %154 = sbr.rel (%p151) target = $region12
    $region11: #{unet_up_block_forward.3} parent=5 // pred_region
      %s155 = ssub.s32 %s10, 1
      // Predicated region
      $region13: #{unet_up_block_forward.3} parent=11 // pred_check
        %p156 = pneg %p71
      $region14: #{unet_up_block_forward.3} parent=11 // pred_check_branch
        %158 = sbr.rel (%p156) target = $region16
      $region15: #{unet_up_block_forward.3} parent=11 // pred_region
        _
      $region16: #{unet_up_block_forward.3} parent=11 // pred_fallthru
        _
      // Predicated region
      $region17: #{unet_up_block_forward.3} parent=11 // pred_check
        %p159 = pneg %p92
      $region18: #{unet_up_block_forward.3} parent=11 // pred_check_branch
        %161 = sbr.rel (%p159) target = $region20
      $region19: #{unet_up_block_forward.3} parent=11 // pred_region
        _
      $region20: #{unet_up_block_forward.3} parent=11 // pred_fallthru
        _
      // Predicated region
      $region21: #{unet_up_block_forward.3} parent=11 // pred_check
        %p162 = pneg %p113
      $region22: #{unet_up_block_forward.3} parent=11 // pred_check_branch
        %164 = sbr.rel (%p162) target = $region24
      $region23: #{unet_up_block_forward.3} parent=11 // pred_region
        _
      $region24: #{unet_up_block_forward.3} parent=11 // pred_fallthru
        _
    $region12: #{unet_up_block_forward.3} parent=5 // pred_fallthru
      _
    %p165 = scmp.lt.s32.totalorder %s10, 2
    // Predicated region
    $region25: #{unet_up_block_forward.3} parent=5 // pred_check
      %p166 = pneg %p165
    $region26: #{unet_up_block_forward.3} parent=5 // pred_check_branch
      %168 = sbr.rel (%p166) target = $region28
    $region27: #{unet_up_block_forward.3} parent=5 // pred_region
      // Predicated region
      $region29: #{unet_up_block_forward.3} parent=27 // pred_check
        %p169 = pneg %p44
      $region30: #{unet_up_block_forward.3} parent=27 // pred_check_branch
        %171 = sbr.rel (%p169) target = $region32
      $region31: #{unet_up_block_forward.3} parent=27 // pred_region
        %s172 = smul.u32 8, %s18
        %p173 = scmp.lt.s32.totalorder %s17, 1
        %s174 = scalar_select %p173, %s17, 1
        %p175 = scmp.lt.s32.totalorder %s172, 7
        %s176 = scalar_select %p175, %s172, 7
        %s177 = smul.addr %s176, 2
        %s178 = smul.addr %s174, 16
        %s179 = sadd.s32 %s177, %s178
        %s180 = smul.addr %s179, 4
        %s181 = scalar_lea.vmem %s0, %s180
        %s182 = smul.u32 8, %s18
      $region32: #{unet_up_block_forward.3} parent=27 // pred_fallthru
        _
    $region28: #{unet_up_block_forward.3} parent=5 // pred_fallthru
      _
    %p183 = scmp.le.s32.totalorder 1, %s10
    %p184 = scmp.lt.s32.totalorder %s10, 3
    %p185 = pnand %p183, %p184
    %p186 = pneg %p185
    // Predicated region
    $region33: #{unet_up_block_forward.3} parent=5 // pred_check
      _
    $region34: #{unet_up_block_forward.3} parent=5 // pred_check_branch
      %188 = sbr.rel (%p185) target = $region36
    $region35: #{unet_up_block_forward.3} parent=5 // pred_region
      %s189 = ssub.s32 %s10, 1
      %s190 = smul.u32 8, %s20
      %p191 = scmp.lt.s32.totalorder %s19, 1
      %s192 = scalar_select %p191, %s19, 1
      %p193 = scmp.lt.s32.totalorder %s190, 7
      %s194 = scalar_select %p193, %s190, 7
      %s195 = smul.addr %s194, 2
      %s196 = smul.addr %s192, 16
      %s197 = sadd.s32 %s195, %s196
      %s198 = smul.addr %s197, 4
      %s199 = scalar_lea.vmem %s0, %s198
      %p200 = pneg %p50
      %p201 = pneg %p47
      %p202 = pneg %p71
      %p203 = pneg %p68
      %p204 = pneg %p92
      %p205 = pneg %p89
      %p206 = pneg %p113
      %p207 = pneg %p110
      %p208 = pneg %p141
      %p209 = pneg %p138
      %s210 = smul.u32 8, %s20
      %p211 = scmp.lt.s32.totalorder %s19, 1
      %s212 = scalar_select %p211, %s19, 1
      %p213 = scmp.lt.s32.totalorder %s210, 7
      %s214 = scalar_select %p213, %s210, 7
      %s215 = smul.addr %s214, 4
      %s216 = smul.addr %s212, 32
      %s217 = sadd.s32 %s215, %s216
      %s218 = smul.addr %s217, 4
      %s219 = scalar_lea.vmem %s4, %s218
      %s220 = smul.u32 8, %s20
      %p221 = scmp.lt.s32.totalorder %s19, 1
      %s222 = scalar_select %p221, %s19, 1
      %p223 = scmp.lt.s32.totalorder %s220, 7
      %s224 = scalar_select %p223, %s220, 7
      %s225 = smul.addr %s224, 2
      %s226 = smul.addr %s222, 16
      %s227 = sadd.s32 %s225, %s226
      %s228 = smul.addr %s227, 4
      %s229 = scalar_lea.vmem %s0, %s228
      %s230 = smul.u32 8, %s20
      %s231 = smul.u32 8, %s20
      %p232 = scmp.lt.s32.totalorder %s19, 1
      %s233 = scalar_select %p232, %s19, 1
      %p234 = scmp.lt.s32.totalorder %s231, 7
      %s235 = scalar_select %p234, %s231, 7
      %s236 = smul.addr %s235, 4
      %s237 = smul.addr %s233, 32
      %s238 = sadd.s32 %s236, %s237
      %s239 = smul.addr %s238, 4
      %s240 = scalar_lea.vmem %s4, %s239
      %s241 = smul.u32 8, %s20
      %v242 = vld [vmem:[%s229] sm:$0xff]
      %v243 = vld [vmem:[%s229 + $0x8] sm:$0xff]
      %v244 = vld [vmem:[%s229 + $0x10] sm:$0xff]
      %v245 = vld [vmem:[%s229 + $0x18] sm:$0xff]
      %v246 = vld [vmem:[%s229 + $0x20] sm:$0xff]
      %v247 = vld [vmem:[%s229 + $0x28] sm:$0xff]
      %v248 = vld [vmem:[%s229 + $0x30] sm:$0xff]
      %v249 = vld [vmem:[%s229 + $0x38] sm:$0xff]
      %v250 = vld [vmem:[%s1] sm:$0xff]
      %v251 = vld [vmem:[%s1 + $0x8] sm:$0xff]
      %v252 = vld [vmem:[%s1 + $0x10] sm:$0xff]
      %v253 = vld [vmem:[%s1 + $0x18] sm:$0xff]
      %v254 = vld [vmem:[%s1 + $0x20] sm:$0xff]
      %v255 = vld [vmem:[%s1 + $0x28] sm:$0xff]
      %v256 = vld [vmem:[%s1 + $0x30] sm:$0xff]
      %v257 = vld [vmem:[%s1 + $0x38] sm:$0xff]
      %v258 = vld [vmem:[%s1 + $0x40] sm:$0xff]
      %v259 = vld [vmem:[%s1 + $0x48] sm:$0xff]
      %v260 = vld [vmem:[%s1 + $0x50] sm:$0xff]
      %v261 = vld [vmem:[%s1 + $0x58] sm:$0xff]
      %v262 = vld [vmem:[%s1 + $0x60] sm:$0xff]
      %v263 = vld [vmem:[%s1 + $0x68] sm:$0xff]
      %v264 = vld [vmem:[%s1 + $0x70] sm:$0xff]
      %v265 = vld [vmem:[%s1 + $0x78] sm:$0xff]
      %v266 = vld [vmem:[%s1 + $0x80] sm:$0xff]
      %v267 = vld [vmem:[%s1 + $0x88] sm:$0xff]
      %v268 = vld [vmem:[%s1 + $0x90] sm:$0xff]
      %v269 = vld [vmem:[%s1 + $0x98] sm:$0xff]
      %v270 = vld [vmem:[%s1 + $0xa0] sm:$0xff]
      %v271 = vld [vmem:[%s1 + $0xa8] sm:$0xff]
      %v272 = vld [vmem:[%s1 + $0xb0] sm:$0xff]
      %v273 = vld [vmem:[%s1 + $0xb8] sm:$0xff]
      %v274 = vld [vmem:[%s1 + $0xc0] sm:$0xff]
      %v275 = vld [vmem:[%s1 + $0xc8] sm:$0xff]
      %v276 = vld [vmem:[%s1 + $0xd0] sm:$0xff]
      %v277 = vld [vmem:[%s1 + $0xd8] sm:$0xff]
      %v278 = vld [vmem:[%s1 + $0xe0] sm:$0xff]
      %v279 = vld [vmem:[%s1 + $0xe8] sm:$0xff]
      %v280 = vld [vmem:[%s1 + $0xf0] sm:$0xff]
      %v281 = vld [vmem:[%s1 + $0xf8] sm:$0xff]
      %v282 = vld [vmem:[%s3] sm:$0x3]
      %v284 = vlaneseq
      %v285 = vshrl.u32 %v284, 7
      %v286 = vsub.s32 0, %v285
      %v287 = vrot.slane %v282, %v286
      %v288 = vlaneseq
      %v289 = vshrl.u32 %v288, 7
      %v290 = vsub.s32 1, %v289
      %v291 = vrot.slane %v282, %v290
      %v302 = vunpack.c.l.b16 %v242
      %v303 = vunpack.c.h.b16 %v242
      %v304 = vunpack.c.l.b16 %v243
      %v305 = vunpack.c.h.b16 %v243
      %v306 = vunpack.c.l.b16 %v244
      %v307 = vunpack.c.h.b16 %v244
      %v308 = vunpack.c.l.b16 %v245
      %v309 = vunpack.c.h.b16 %v245
      %v310 = vunpack.c.l.b16 %v246
      %v311 = vunpack.c.h.b16 %v246
      %v312 = vunpack.c.l.b16 %v247
      %v313 = vunpack.c.h.b16 %v247
      %v314 = vunpack.c.l.b16 %v248
      %v315 = vunpack.c.h.b16 %v248
      %v316 = vunpack.c.l.b16 %v249
      %v317 = vunpack.c.h.b16 %v249
      %v318 = vpack.c.b16 %v304, %v302
      %v319 = vpack.c.b16 %v305, %v303
      %v320 = vpack.c.b16 %v308, %v306
      %v321 = vpack.c.b16 %v309, %v307
      %v322 = vpack.c.b16 %v312, %v310
      %v323 = vpack.c.b16 %v313, %v311
      %v324 = vpack.c.b16 %v316, %v314
      %v325 = vpack.c.b16 %v317, %v315
      %v366 = vunpack.c.l.b16 %v250
      %v367 = vunpack.c.h.b16 %v250
      %v368 = vunpack.c.l.b16 %v251
      %v369 = vunpack.c.h.b16 %v251
      %v370 = vunpack.c.l.b16 %v252
      %v371 = vunpack.c.h.b16 %v252
      %v372 = vunpack.c.l.b16 %v253
      %v373 = vunpack.c.h.b16 %v253
      %v374 = vunpack.c.l.b16 %v254
      %v375 = vunpack.c.h.b16 %v254
      %v376 = vunpack.c.l.b16 %v255
      %v377 = vunpack.c.h.b16 %v255
      %v378 = vunpack.c.l.b16 %v256
      %v379 = vunpack.c.h.b16 %v256
      %v380 = vunpack.c.l.b16 %v257
      %v381 = vunpack.c.h.b16 %v257
      %v382 = vunpack.c.l.b16 %v258
      %v383 = vunpack.c.h.b16 %v258
      %v384 = vunpack.c.l.b16 %v259
      %v385 = vunpack.c.h.b16 %v259
      %v386 = vunpack.c.l.b16 %v260
      %v387 = vunpack.c.h.b16 %v260
      %v388 = vunpack.c.l.b16 %v261
      %v389 = vunpack.c.h.b16 %v261
      %v390 = vunpack.c.l.b16 %v262
      %v391 = vunpack.c.h.b16 %v262
      %v392 = vunpack.c.l.b16 %v263
      %v393 = vunpack.c.h.b16 %v263
      %v394 = vunpack.c.l.b16 %v264
      %v395 = vunpack.c.h.b16 %v264
      %v396 = vunpack.c.l.b16 %v265
      %v397 = vunpack.c.h.b16 %v265
      %v398 = vunpack.c.l.b16 %v266
      %v399 = vunpack.c.h.b16 %v266
      %v400 = vunpack.c.l.b16 %v267
      %v401 = vunpack.c.h.b16 %v267
      %v402 = vunpack.c.l.b16 %v268
      %v403 = vunpack.c.h.b16 %v268
      %v404 = vunpack.c.l.b16 %v269
      %v405 = vunpack.c.h.b16 %v269
      %v406 = vunpack.c.l.b16 %v270
      %v407 = vunpack.c.h.b16 %v270
      %v408 = vunpack.c.l.b16 %v271
      %v409 = vunpack.c.h.b16 %v271
      %v410 = vunpack.c.l.b16 %v272
      %v411 = vunpack.c.h.b16 %v272
      %v412 = vunpack.c.l.b16 %v273
      %v413 = vunpack.c.h.b16 %v273
      %v414 = vunpack.c.l.b16 %v274
      %v415 = vunpack.c.h.b16 %v274
      %v416 = vunpack.c.l.b16 %v275
      %v417 = vunpack.c.h.b16 %v275
      %v418 = vunpack.c.l.b16 %v276
      %v419 = vunpack.c.h.b16 %v276
      %v420 = vunpack.c.l.b16 %v277
      %v421 = vunpack.c.h.b16 %v277
      %v422 = vunpack.c.l.b16 %v278
      %v423 = vunpack.c.h.b16 %v278
      %v424 = vunpack.c.l.b16 %v279
      %v425 = vunpack.c.h.b16 %v279
      %v426 = vunpack.c.l.b16 %v280
      %v427 = vunpack.c.h.b16 %v280
      %v428 = vunpack.c.l.b16 %v281
      %v429 = vunpack.c.h.b16 %v281
      %v430 = vpack.c.b16 %v368, %v366
      %v431 = vpack.c.b16 %v369, %v367
      %v432 = vpack.c.b16 %v372, %v370
      %v433 = vpack.c.b16 %v373, %v371
      %v434 = vpack.c.b16 %v376, %v374
      %v435 = vpack.c.b16 %v377, %v375
      %v436 = vpack.c.b16 %v380, %v378
      %v437 = vpack.c.b16 %v381, %v379
      %v438 = vpack.c.b16 %v384, %v382
      %v439 = vpack.c.b16 %v385, %v383
      %v440 = vpack.c.b16 %v388, %v386
      %v441 = vpack.c.b16 %v389, %v387
      %v442 = vpack.c.b16 %v392, %v390
      %v443 = vpack.c.b16 %v393, %v391
      %v444 = vpack.c.b16 %v396, %v394
      %v445 = vpack.c.b16 %v397, %v395
      %v446 = vpack.c.b16 %v400, %v398
      %v447 = vpack.c.b16 %v401, %v399
      %v448 = vpack.c.b16 %v404, %v402
      %v449 = vpack.c.b16 %v405, %v403
      %v450 = vpack.c.b16 %v408, %v406
      %v451 = vpack.c.b16 %v409, %v407
      %v452 = vpack.c.b16 %v412, %v410
      %v453 = vpack.c.b16 %v413, %v411
      %v454 = vpack.c.b16 %v416, %v414
      %v455 = vpack.c.b16 %v417, %v415
      %v456 = vpack.c.b16 %v420, %v418
      %v457 = vpack.c.b16 %v421, %v419
      %v458 = vpack.c.b16 %v424, %v422
      %v459 = vpack.c.b16 %v425, %v423
      %v460 = vpack.c.b16 %v428, %v426
      %v461 = vpack.c.b16 %v429, %v427
      %494 = vmatprep.subr.bf16.mxu0 %v445
      %495 = vmatpush1.bf16.msra.mxu0 %v444
      %496 = vmatprep.subr.bf16.mxu0 %v443
      %497 = vmatpush1.bf16.msra.mxu0 %v442
      %498 = vmatprep.subr.bf16.mxu0 %v441
      %499 = vmatpush1.bf16.msra.mxu0 %v440
      %500 = vmatprep.subr.bf16.mxu0 %v439
      %501 = vmatpush1.bf16.msra.mxu0 %v438
      %502 = vmatprep.subr.bf16.mxu0 %v437
      %503 = vmatpush1.bf16.msra.mxu0 %v436
      %504 = vmatprep.subr.bf16.mxu0 %v435
      %505 = vmatpush1.bf16.msra.mxu0 %v434
      %506 = vmatprep.subr.bf16.mxu0 %v433
      %507 = vmatpush1.bf16.msra.mxu0 %v432
      %508 = vmatprep.subr.bf16.mxu0 %v431
      %509 = vmatpush1.bf16.msra.mxu0 %v430
      %510 = vmatprep.subr.bf16.mxu0 %v461
      %511 = vmatpush2.bf16.msra.mxu0 %v460
      %512 = vmatprep.subr.bf16.mxu0 %v459
      %513 = vmatpush2.bf16.msra.mxu0 %v458
      %514 = vmatprep.subr.bf16.mxu0 %v457
      %515 = vmatpush2.bf16.msra.mxu0 %v456
      %516 = vmatprep.subr.bf16.mxu0 %v455
      %517 = vmatpush2.bf16.msra.mxu0 %v454
      %518 = vmatprep.subr.bf16.mxu0 %v453
      %519 = vmatpush2.bf16.msra.mxu0 %v452
      %520 = vmatprep.subr.bf16.mxu0 %v451
      %521 = vmatpush2.bf16.msra.mxu0 %v450
      %522 = vmatprep.subr.bf16.mxu0 %v449
      %523 = vmatpush2.bf16.msra.mxu0 %v448
      %524 = vmatprep.subr.bf16.mxu0 %v447
      %525 = vmatpush2.bf16.msra.mxu0 %v446
      %526 = vmatprep.mubr.bf16.mxu0 %v319
      %527 = vmatmul.mubr.bf16.gmra.mxu0 %v318
      %v528 = vpop.f32.mrf.mxu0
      %v529 = vadd.f32 %v287, %v528
      %v530 = vpop.f32.mrf.mxu0
      %v531 = vadd.f32 %v291, %v530
      %v532 = vpop.f32.mrf.mxu0
      %v533 = vadd.f32 %v287, %v532
      %v534 = vpop.f32.mrf.mxu0
      %v535 = vadd.f32 %v291, %v534
      %536 = vmatprep.mubr.bf16.mxu0 %v321
      %537 = vmatmul.mubr.bf16.gmra.mxu0 %v320
      %v538 = vpop.f32.mrf.mxu0
      %v539 = vadd.f32 %v287, %v538
      %v540 = vpop.f32.mrf.mxu0
      %v541 = vadd.f32 %v291, %v540
      %v542 = vpop.f32.mrf.mxu0
      %v543 = vadd.f32 %v287, %v542
      %v544 = vpop.f32.mrf.mxu0
      %v545 = vadd.f32 %v291, %v544
      %546 = vmatprep.mubr.bf16.mxu0 %v323
      %547 = vmatmul.mubr.bf16.gmra.mxu0 %v322
      %v548 = vpop.f32.mrf.mxu0
      %v549 = vadd.f32 %v287, %v548
      %v550 = vpop.f32.mrf.mxu0
      %v551 = vadd.f32 %v291, %v550
      %v552 = vpop.f32.mrf.mxu0
      %v553 = vadd.f32 %v287, %v552
      %v554 = vpop.f32.mrf.mxu0
      %v555 = vadd.f32 %v291, %v554
      %556 = vmatprep.mubr.bf16.mxu0 %v325
      %557 = vmatmul.mubr.bf16.gmra.mxu0 %v324
      %v558 = vpop.f32.mrf.mxu0
      %v559 = vadd.f32 %v287, %v558
      %v560 = vpop.f32.mrf.mxu0
      %v561 = vadd.f32 %v291, %v560
      %v562 = vpop.f32.mrf.mxu0
      %v563 = vadd.f32 %v287, %v562
      %v564 = vpop.f32.mrf.mxu0
      %v565 = vadd.f32 %v291, %v564
      %566 = vdwg.mxu0
      %v567 = vld [vmem:[%s2] sm:$0xff]
      %v568 = vld [vmem:[%s2 + $0x8] sm:$0xff]
      %v569 = vld [vmem:[%s2 + $0x10] sm:$0xff]
      %v570 = vld [vmem:[%s2 + $0x18] sm:$0xff]
      %v571 = vld [vmem:[%s2 + $0x20] sm:$0xff]
      %v572 = vld [vmem:[%s2 + $0x28] sm:$0xff]
      %v573 = vld [vmem:[%s2 + $0x30] sm:$0xff]
      %v574 = vld [vmem:[%s2 + $0x38] sm:$0xff]
      %v575 = vld [vmem:[%s2 + $0x40] sm:$0xff]
      %v576 = vld [vmem:[%s2 + $0x48] sm:$0xff]
      %v577 = vld [vmem:[%s2 + $0x50] sm:$0xff]
      %v578 = vld [vmem:[%s2 + $0x58] sm:$0xff]
      %v579 = vld [vmem:[%s2 + $0x60] sm:$0xff]
      %v580 = vld [vmem:[%s2 + $0x68] sm:$0xff]
      %v581 = vld [vmem:[%s2 + $0x70] sm:$0xff]
      %v582 = vld [vmem:[%s2 + $0x78] sm:$0xff]
      %v583 = vld [vmem:[%s2 + $0x80] sm:$0xff]
      %v584 = vld [vmem:[%s2 + $0x88] sm:$0xff]
      %v585 = vld [vmem:[%s2 + $0x90] sm:$0xff]
      %v586 = vld [vmem:[%s2 + $0x98] sm:$0xff]
      %v587 = vld [vmem:[%s2 + $0xa0] sm:$0xff]
      %v588 = vld [vmem:[%s2 + $0xa8] sm:$0xff]
      %v589 = vld [vmem:[%s2 + $0xb0] sm:$0xff]
      %v590 = vld [vmem:[%s2 + $0xb8] sm:$0xff]
      %v591 = vld [vmem:[%s2 + $0xc0] sm:$0xff]
      %v592 = vld [vmem:[%s2 + $0xc8] sm:$0xff]
      %v593 = vld [vmem:[%s2 + $0xd0] sm:$0xff]
      %v594 = vld [vmem:[%s2 + $0xd8] sm:$0xff]
      %v595 = vld [vmem:[%s2 + $0xe0] sm:$0xff]
      %v596 = vld [vmem:[%s2 + $0xe8] sm:$0xff]
      %v597 = vld [vmem:[%s2 + $0xf0] sm:$0xff]
      %v598 = vld [vmem:[%s2 + $0xf8] sm:$0xff]
      %v631 = vunpack.c.l.b16 %v567
      %v632 = vunpack.c.h.b16 %v567
      %v633 = vunpack.c.l.b16 %v568
      %v634 = vunpack.c.h.b16 %v568
      %v635 = vunpack.c.l.b16 %v569
      %v636 = vunpack.c.h.b16 %v569
      %v637 = vunpack.c.l.b16 %v570
      %v638 = vunpack.c.h.b16 %v570
      %v639 = vunpack.c.l.b16 %v571
      %v640 = vunpack.c.h.b16 %v571
      %v641 = vunpack.c.l.b16 %v572
      %v642 = vunpack.c.h.b16 %v572
      %v643 = vunpack.c.l.b16 %v573
      %v644 = vunpack.c.h.b16 %v573
      %v645 = vunpack.c.l.b16 %v574
      %v646 = vunpack.c.h.b16 %v574
      %v647 = vunpack.c.l.b16 %v575
      %v648 = vunpack.c.h.b16 %v575
      %v649 = vunpack.c.l.b16 %v576
      %v650 = vunpack.c.h.b16 %v576
      %v651 = vunpack.c.l.b16 %v577
      %v652 = vunpack.c.h.b16 %v577
      %v653 = vunpack.c.l.b16 %v578
      %v654 = vunpack.c.h.b16 %v578
      %v655 = vunpack.c.l.b16 %v579
      %v656 = vunpack.c.h.b16 %v579
      %v657 = vunpack.c.l.b16 %v580
      %v658 = vunpack.c.h.b16 %v580
      %v659 = vunpack.c.l.b16 %v581
      %v660 = vunpack.c.h.b16 %v581
      %v661 = vunpack.c.l.b16 %v582
      %v662 = vunpack.c.h.b16 %v582
      %v663 = vunpack.c.l.b16 %v583
      %v664 = vunpack.c.h.b16 %v583
      %v665 = vunpack.c.l.b16 %v584
      %v666 = vunpack.c.h.b16 %v584
      %v667 = vunpack.c.l.b16 %v585
      %v668 = vunpack.c.h.b16 %v585
      %v669 = vunpack.c.l.b16 %v586
      %v670 = vunpack.c.h.b16 %v586
      %v671 = vunpack.c.l.b16 %v587
      %v672 = vunpack.c.h.b16 %v587
      %v673 = vunpack.c.l.b16 %v588
      %v674 = vunpack.c.h.b16 %v588
      %v675 = vunpack.c.l.b16 %v589
      %v676 = vunpack.c.h.b16 %v589
      %v677 = vunpack.c.l.b16 %v590
      %v678 = vunpack.c.h.b16 %v590
      %v679 = vunpack.c.l.b16 %v591
      %v680 = vunpack.c.h.b16 %v591
      %v681 = vunpack.c.l.b16 %v592
      %v682 = vunpack.c.h.b16 %v592
      %v683 = vunpack.c.l.b16 %v593
      %v684 = vunpack.c.h.b16 %v593
      %v685 = vunpack.c.l.b16 %v594
      %v686 = vunpack.c.h.b16 %v594
      %v687 = vunpack.c.l.b16 %v595
      %v688 = vunpack.c.h.b16 %v595
      %v689 = vunpack.c.l.b16 %v596
      %v690 = vunpack.c.h.b16 %v596
      %v691 = vunpack.c.l.b16 %v597
      %v692 = vunpack.c.h.b16 %v597
      %v693 = vunpack.c.l.b16 %v598
      %v694 = vunpack.c.h.b16 %v598
      %v695 = vpack.c.b16 %v633, %v631
      %v696 = vpack.c.b16 %v634, %v632
      %v697 = vpack.c.b16 %v637, %v635
      %v698 = vpack.c.b16 %v638, %v636
      %v699 = vpack.c.b16 %v641, %v639
      %v700 = vpack.c.b16 %v642, %v640
      %v701 = vpack.c.b16 %v645, %v643
      %v702 = vpack.c.b16 %v646, %v644
      %v703 = vpack.c.b16 %v649, %v647
      %v704 = vpack.c.b16 %v650, %v648
      %v705 = vpack.c.b16 %v653, %v651
      %v706 = vpack.c.b16 %v654, %v652
      %v707 = vpack.c.b16 %v657, %v655
      %v708 = vpack.c.b16 %v658, %v656
      %v709 = vpack.c.b16 %v661, %v659
      %v710 = vpack.c.b16 %v662, %v660
      %v711 = vpack.c.b16 %v665, %v663
      %v712 = vpack.c.b16 %v666, %v664
      %v713 = vpack.c.b16 %v669, %v667
      %v714 = vpack.c.b16 %v670, %v668
      %v715 = vpack.c.b16 %v673, %v671
      %v716 = vpack.c.b16 %v674, %v672
      %v717 = vpack.c.b16 %v677, %v675
      %v718 = vpack.c.b16 %v678, %v676
      %v719 = vpack.c.b16 %v681, %v679
      %v720 = vpack.c.b16 %v682, %v680
      %v721 = vpack.c.b16 %v685, %v683
      %v722 = vpack.c.b16 %v686, %v684
      %v723 = vpack.c.b16 %v689, %v687
      %v724 = vpack.c.b16 %v690, %v688
      %v725 = vpack.c.b16 %v693, %v691
      %v726 = vpack.c.b16 %v694, %v692
      %759 = vmatprep.subr.bf16.mxu0 %v710
      %760 = vmatpush1.bf16.msra.mxu0 %v709
      %761 = vmatprep.subr.bf16.mxu0 %v708
      %762 = vmatpush1.bf16.msra.mxu0 %v707
      %763 = vmatprep.subr.bf16.mxu0 %v706
      %764 = vmatpush1.bf16.msra.mxu0 %v705
      %765 = vmatprep.subr.bf16.mxu0 %v704
      %766 = vmatpush1.bf16.msra.mxu0 %v703
      %767 = vmatprep.subr.bf16.mxu0 %v702
      %768 = vmatpush1.bf16.msra.mxu0 %v701
      %769 = vmatprep.subr.bf16.mxu0 %v700
      %770 = vmatpush1.bf16.msra.mxu0 %v699
      %771 = vmatprep.subr.bf16.mxu0 %v698
      %772 = vmatpush1.bf16.msra.mxu0 %v697
      %773 = vmatprep.subr.bf16.mxu0 %v696
      %774 = vmatpush1.bf16.msra.mxu0 %v695
      %775 = vmatprep.subr.bf16.mxu0 %v726
      %776 = vmatpush2.bf16.msra.mxu0 %v725
      %777 = vmatprep.subr.bf16.mxu0 %v724
      %778 = vmatpush2.bf16.msra.mxu0 %v723
      %779 = vmatprep.subr.bf16.mxu0 %v722
      %780 = vmatpush2.bf16.msra.mxu0 %v721
      %781 = vmatprep.subr.bf16.mxu0 %v720
      %782 = vmatpush2.bf16.msra.mxu0 %v719
      %783 = vmatprep.subr.bf16.mxu0 %v718
      %784 = vmatpush2.bf16.msra.mxu0 %v717
      %785 = vmatprep.subr.bf16.mxu0 %v716
      %786 = vmatpush2.bf16.msra.mxu0 %v715
      %787 = vmatprep.subr.bf16.mxu0 %v714
      %788 = vmatpush2.bf16.msra.mxu0 %v713
      %789 = vmatprep.subr.bf16.mxu0 %v712
      %790 = vmatpush2.bf16.msra.mxu0 %v711
      %791 = vmatprep.mubr.bf16.mxu0 %v319
      %792 = vmatmul.mubr.bf16.gmra.mxu0 %v318
      %v793 = vpop.f32.mrf.mxu0
      %v794 = vadd.f32 %v287, %v793
      %v795 = vpop.f32.mrf.mxu0
      %v796 = vadd.f32 %v291, %v795
      %v797 = vpop.f32.mrf.mxu0
      %v798 = vadd.f32 %v287, %v797
      %v799 = vpop.f32.mrf.mxu0
      %v800 = vadd.f32 %v291, %v799
      %801 = vmatprep.mubr.bf16.mxu0 %v321
      %802 = vmatmul.mubr.bf16.gmra.mxu0 %v320
      %v803 = vpop.f32.mrf.mxu0
      %v804 = vadd.f32 %v287, %v803
      %v805 = vpop.f32.mrf.mxu0
      %v806 = vadd.f32 %v291, %v805
      %v807 = vpop.f32.mrf.mxu0
      %v808 = vadd.f32 %v287, %v807
      %v809 = vpop.f32.mrf.mxu0
      %v810 = vadd.f32 %v291, %v809
      %811 = vmatprep.mubr.bf16.mxu0 %v323
      %812 = vmatmul.mubr.bf16.gmra.mxu0 %v322
      %v813 = vpop.f32.mrf.mxu0
      %v814 = vadd.f32 %v287, %v813
      %v815 = vpop.f32.mrf.mxu0
      %v816 = vadd.f32 %v291, %v815
      %v817 = vpop.f32.mrf.mxu0
      %v818 = vadd.f32 %v287, %v817
      %v819 = vpop.f32.mrf.mxu0
      %v820 = vadd.f32 %v291, %v819
      %821 = vmatprep.mubr.bf16.mxu0 %v325
      %822 = vmatmul.mubr.bf16.gmra.mxu0 %v324
      %v823 = vpop.f32.mrf.mxu0
      %v824 = vadd.f32 %v287, %v823
      %v825 = vpop.f32.mrf.mxu0
      %v826 = vadd.f32 %v291, %v825
      %v827 = vpop.f32.mrf.mxu0
      %v828 = vadd.f32 %v287, %v827
      %v829 = vpop.f32.mrf.mxu0
      %v830 = vadd.f32 %v291, %v829
      %831 = vdwg.mxu0
      %v848 = vcombine.low %v529, %v531
      %v849 = vcombine.high %v529, %v531
      %v850 = vcombine.low %v533, %v535
      %v851 = vcombine.high %v533, %v535
      %v852 = vcombine.low %v539, %v541
      %v853 = vcombine.high %v539, %v541
      %v854 = vcombine.low %v543, %v545
      %v855 = vcombine.high %v543, %v545
      %v856 = vcombine.low %v549, %v551
      %v857 = vcombine.high %v549, %v551
      %v858 = vcombine.low %v553, %v555
      %v859 = vcombine.high %v553, %v555
      %v860 = vcombine.low %v559, %v561
      %v861 = vcombine.high %v559, %v561
      %v862 = vcombine.low %v563, %v565
      %v863 = vcombine.high %v563, %v565
      %v881 = vunpack.c.l.s4 1935823168
      %v882 = vunpack.c.0.s8 %v881
      %v883 = vlaneseq
      %v884 = vshrl.u32 %v883, 7
      %v885 = vsub.s32 %v882, %v884
      %v886 = vrot.slane %v848, %v885
      %v888 = vunpack.c.l.s4 1935823168
      %v889 = vunpack.c.0.s8 %v888
      %v890 = vlaneseq
      %v891 = vshrl.u32 %v890, 7
      %v892 = vsub.s32 %v889, %v891
      %v893 = vrot.slane %v849, %v892
      %v895 = vunpack.c.l.s4 1935823168
      %v896 = vunpack.c.0.s8 %v895
      %v897 = vlaneseq
      %v898 = vshrl.u32 %v897, 7
      %v899 = vsub.s32 %v896, %v898
      %v900 = vrot.slane %v850, %v899
      %v902 = vunpack.c.l.s4 1935823168
      %v903 = vunpack.c.0.s8 %v902
      %v904 = vlaneseq
      %v905 = vshrl.u32 %v904, 7
      %v906 = vsub.s32 %v903, %v905
      %v907 = vrot.slane %v851, %v906
      %v909 = vunpack.c.l.s4 1935823168
      %v910 = vunpack.c.0.s8 %v909
      %v911 = vlaneseq
      %v912 = vshrl.u32 %v911, 7
      %v913 = vsub.s32 %v910, %v912
      %v914 = vrot.slane %v852, %v913
      %v916 = vunpack.c.l.s4 1935823168
      %v917 = vunpack.c.0.s8 %v916
      %v918 = vlaneseq
      %v919 = vshrl.u32 %v918, 7
      %v920 = vsub.s32 %v917, %v919
      %v921 = vrot.slane %v853, %v920
      %v923 = vunpack.c.l.s4 1935823168
      %v924 = vunpack.c.0.s8 %v923
      %v925 = vlaneseq
      %v926 = vshrl.u32 %v925, 7
      %v927 = vsub.s32 %v924, %v926
      %v928 = vrot.slane %v854, %v927
      %v930 = vunpack.c.l.s4 1935823168
      %v931 = vunpack.c.0.s8 %v930
      %v932 = vlaneseq
      %v933 = vshrl.u32 %v932, 7
      %v934 = vsub.s32 %v931, %v933
      %v935 = vrot.slane %v855, %v934
      %v937 = vunpack.c.l.s4 1935823168
      %v938 = vunpack.c.0.s8 %v937
      %v939 = vlaneseq
      %v940 = vshrl.u32 %v939, 7
      %v941 = vsub.s32 %v938, %v940
      %v942 = vrot.slane %v856, %v941
      %v944 = vunpack.c.l.s4 1935823168
      %v945 = vunpack.c.0.s8 %v944
      %v946 = vlaneseq
      %v947 = vshrl.u32 %v946, 7
      %v948 = vsub.s32 %v945, %v947
      %v949 = vrot.slane %v857, %v948
      %v951 = vunpack.c.l.s4 1935823168
      %v952 = vunpack.c.0.s8 %v951
      %v953 = vlaneseq
      %v954 = vshrl.u32 %v953, 7
      %v955 = vsub.s32 %v952, %v954
      %v956 = vrot.slane %v858, %v955
      %v958 = vunpack.c.l.s4 1935823168
      %v959 = vunpack.c.0.s8 %v958
      %v960 = vlaneseq
      %v961 = vshrl.u32 %v960, 7
      %v962 = vsub.s32 %v959, %v961
      %v963 = vrot.slane %v859, %v962
      %v965 = vunpack.c.l.s4 1935823168
      %v966 = vunpack.c.0.s8 %v965
      %v967 = vlaneseq
      %v968 = vshrl.u32 %v967, 7
      %v969 = vsub.s32 %v966, %v968
      %v970 = vrot.slane %v860, %v969
      %v972 = vunpack.c.l.s4 1935823168
      %v973 = vunpack.c.0.s8 %v972
      %v974 = vlaneseq
      %v975 = vshrl.u32 %v974, 7
      %v976 = vsub.s32 %v973, %v975
      %v977 = vrot.slane %v861, %v976
      %v979 = vunpack.c.l.s4 1935823168
      %v980 = vunpack.c.0.s8 %v979
      %v981 = vlaneseq
      %v982 = vshrl.u32 %v981, 7
      %v983 = vsub.s32 %v980, %v982
      %v984 = vrot.slane %v862, %v983
      %v986 = vunpack.c.l.s4 1935823168
      %v987 = vunpack.c.0.s8 %v986
      %v988 = vlaneseq
      %v989 = vshrl.u32 %v988, 7
      %v990 = vsub.s32 %v987, %v989
      %v991 = vrot.slane %v863, %v990
      %v1008 = vcombine.low %v794, %v796
      %v1009 = vcombine.high %v794, %v796
      %v1010 = vcombine.low %v798, %v800
      %v1011 = vcombine.high %v798, %v800
      %v1012 = vcombine.low %v804, %v806
      %v1013 = vcombine.high %v804, %v806
      %v1014 = vcombine.low %v808, %v810
      %v1015 = vcombine.high %v808, %v810
      %v1016 = vcombine.low %v814, %v816
      %v1017 = vcombine.high %v814, %v816
      %v1018 = vcombine.low %v818, %v820
      %v1019 = vcombine.high %v818, %v820
      %v1020 = vcombine.low %v824, %v826
      %v1021 = vcombine.high %v824, %v826
      %v1022 = vcombine.low %v828, %v830
      %v1023 = vcombine.high %v828, %v830
      %v1041 = vunpack.c.l.s4 1935823168
      %v1042 = vunpack.c.0.s8 %v1041
      %v1043 = vlaneseq
      %v1044 = vshrl.u32 %v1043, 7
      %v1045 = vsub.s32 %v1042, %v1044
      %v1046 = vrot.slane %v1008, %v1045
      %v1048 = vunpack.c.l.s4 1935823168
      %v1049 = vunpack.c.0.s8 %v1048
      %v1050 = vlaneseq
      %v1051 = vshrl.u32 %v1050, 7
      %v1052 = vsub.s32 %v1049, %v1051
      %v1053 = vrot.slane %v1009, %v1052
      %v1055 = vunpack.c.l.s4 1935823168
      %v1056 = vunpack.c.0.s8 %v1055
      %v1057 = vlaneseq
      %v1058 = vshrl.u32 %v1057, 7
      %v1059 = vsub.s32 %v1056, %v1058
      %v1060 = vrot.slane %v1010, %v1059
      %v1062 = vunpack.c.l.s4 1935823168
      %v1063 = vunpack.c.0.s8 %v1062
      %v1064 = vlaneseq
      %v1065 = vshrl.u32 %v1064, 7
      %v1066 = vsub.s32 %v1063, %v1065
      %v1067 = vrot.slane %v1011, %v1066
      %v1069 = vunpack.c.l.s4 1935823168
      %v1070 = vunpack.c.0.s8 %v1069
      %v1071 = vlaneseq
      %v1072 = vshrl.u32 %v1071, 7
      %v1073 = vsub.s32 %v1070, %v1072
      %v1074 = vrot.slane %v1012, %v1073
      %v1076 = vunpack.c.l.s4 1935823168
      %v1077 = vunpack.c.0.s8 %v1076
      %v1078 = vlaneseq
      %v1079 = vshrl.u32 %v1078, 7
      %v1080 = vsub.s32 %v1077, %v1079
      %v1081 = vrot.slane %v1013, %v1080
      %v1083 = vunpack.c.l.s4 1935823168
      %v1084 = vunpack.c.0.s8 %v1083
      %v1085 = vlaneseq
      %v1086 = vshrl.u32 %v1085, 7
      %v1087 = vsub.s32 %v1084, %v1086
      %v1088 = vrot.slane %v1014, %v1087
      %v1090 = vunpack.c.l.s4 1935823168
      %v1091 = vunpack.c.0.s8 %v1090
      %v1092 = vlaneseq
      %v1093 = vshrl.u32 %v1092, 7
      %v1094 = vsub.s32 %v1091, %v1093
      %v1095 = vrot.slane %v1015, %v1094
      %v1097 = vunpack.c.l.s4 1935823168
      %v1098 = vunpack.c.0.s8 %v1097
      %v1099 = vlaneseq
      %v1100 = vshrl.u32 %v1099, 7
      %v1101 = vsub.s32 %v1098, %v1100
      %v1102 = vrot.slane %v1016, %v1101
      %v1104 = vunpack.c.l.s4 1935823168
      %v1105 = vunpack.c.0.s8 %v1104
      %v1106 = vlaneseq
      %v1107 = vshrl.u32 %v1106, 7
      %v1108 = vsub.s32 %v1105, %v1107
      %v1109 = vrot.slane %v1017, %v1108
      %v1111 = vunpack.c.l.s4 1935823168
      %v1112 = vunpack.c.0.s8 %v1111
      %v1113 = vlaneseq
      %v1114 = vshrl.u32 %v1113, 7
      %v1115 = vsub.s32 %v1112, %v1114
      %v1116 = vrot.slane %v1018, %v1115
      %v1118 = vunpack.c.l.s4 1935823168
      %v1119 = vunpack.c.0.s8 %v1118
      %v1120 = vlaneseq
      %v1121 = vshrl.u32 %v1120, 7
      %v1122 = vsub.s32 %v1119, %v1121
      %v1123 = vrot.slane %v1019, %v1122
      %v1125 = vunpack.c.l.s4 1935823168
      %v1126 = vunpack.c.0.s8 %v1125
      %v1127 = vlaneseq
      %v1128 = vshrl.u32 %v1127, 7
      %v1129 = vsub.s32 %v1126, %v1128
      %v1130 = vrot.slane %v1020, %v1129
      %v1132 = vunpack.c.l.s4 1935823168
      %v1133 = vunpack.c.0.s8 %v1132
      %v1134 = vlaneseq
      %v1135 = vshrl.u32 %v1134, 7
      %v1136 = vsub.s32 %v1133, %v1135
      %v1137 = vrot.slane %v1021, %v1136
      %v1139 = vunpack.c.l.s4 1935823168
      %v1140 = vunpack.c.0.s8 %v1139
      %v1141 = vlaneseq
      %v1142 = vshrl.u32 %v1141, 7
      %v1143 = vsub.s32 %v1140, %v1142
      %v1144 = vrot.slane %v1022, %v1143
      %v1146 = vunpack.c.l.s4 1935823168
      %v1147 = vunpack.c.0.s8 %v1146
      %v1148 = vlaneseq
      %v1149 = vshrl.u32 %v1148, 7
      %v1150 = vsub.s32 %v1147, %v1149
      %v1151 = vrot.slane %v1023, %v1150
      %v1152 = vpack.c.bf16 %v893, %v886
      %v1153 = vpack.c.bf16 %v1053, %v1046
      %v1154 = vpack.c.bf16 %v907, %v900
      %v1155 = vpack.c.bf16 %v1067, %v1060
      %v1156 = vpack.c.bf16 %v921, %v914
      %v1157 = vpack.c.bf16 %v1081, %v1074
      %v1158 = vpack.c.bf16 %v935, %v928
      %v1159 = vpack.c.bf16 %v1095, %v1088
      %v1160 = vpack.c.bf16 %v949, %v942
      %v1161 = vpack.c.bf16 %v1109, %v1102
      %v1162 = vpack.c.bf16 %v963, %v956
      %v1163 = vpack.c.bf16 %v1123, %v1116
      %v1164 = vpack.c.bf16 %v977, %v970
      %v1165 = vpack.c.bf16 %v1137, %v1130
      %v1166 = vpack.c.bf16 %v991, %v984
      %v1167 = vpack.c.bf16 %v1151, %v1144
      %v1184 = vunpack.c.l.b16 %v1152
      %v1185 = vunpack.c.h.b16 %v1152
      %v1186 = vunpack.c.l.b16 %v1153
      %v1187 = vunpack.c.h.b16 %v1153
      %v1188 = vunpack.c.l.b16 %v1154
      %v1189 = vunpack.c.h.b16 %v1154
      %v1190 = vunpack.c.l.b16 %v1155
      %v1191 = vunpack.c.h.b16 %v1155
      %v1192 = vunpack.c.l.b16 %v1156
      %v1193 = vunpack.c.h.b16 %v1156
      %v1194 = vunpack.c.l.b16 %v1157
      %v1195 = vunpack.c.h.b16 %v1157
      %v1196 = vunpack.c.l.b16 %v1158
      %v1197 = vunpack.c.h.b16 %v1158
      %v1198 = vunpack.c.l.b16 %v1159
      %v1199 = vunpack.c.h.b16 %v1159
      %v1200 = vunpack.c.l.b16 %v1160
      %v1201 = vunpack.c.h.b16 %v1160
      %v1202 = vunpack.c.l.b16 %v1161
      %v1203 = vunpack.c.h.b16 %v1161
      %v1204 = vunpack.c.l.b16 %v1162
      %v1205 = vunpack.c.h.b16 %v1162
      %v1206 = vunpack.c.l.b16 %v1163
      %v1207 = vunpack.c.h.b16 %v1163
      %v1208 = vunpack.c.l.b16 %v1164
      %v1209 = vunpack.c.h.b16 %v1164
      %v1210 = vunpack.c.l.b16 %v1165
      %v1211 = vunpack.c.h.b16 %v1165
      %v1212 = vunpack.c.l.b16 %v1166
      %v1213 = vunpack.c.h.b16 %v1166
      %v1214 = vunpack.c.l.b16 %v1167
      %v1215 = vunpack.c.h.b16 %v1167
      %v1216 = vpack.c.b16 %v1184, %v1184
      %v1217 = vpack.c.b16 %v1185, %v1185
      %v1218 = vpack.c.b16 %v1186, %v1186
      %v1219 = vpack.c.b16 %v1187, %v1187
      %v1220 = vpack.c.b16 %v1188, %v1188
      %v1221 = vpack.c.b16 %v1189, %v1189
      %v1222 = vpack.c.b16 %v1190, %v1190
      %v1223 = vpack.c.b16 %v1191, %v1191
      %v1224 = vpack.c.b16 %v1192, %v1192
      %v1225 = vpack.c.b16 %v1193, %v1193
      %v1226 = vpack.c.b16 %v1194, %v1194
      %v1227 = vpack.c.b16 %v1195, %v1195
      %v1228 = vpack.c.b16 %v1196, %v1196
      %v1229 = vpack.c.b16 %v1197, %v1197
      %v1230 = vpack.c.b16 %v1198, %v1198
      %v1231 = vpack.c.b16 %v1199, %v1199
      %v1232 = vpack.c.b16 %v1200, %v1200
      %v1233 = vpack.c.b16 %v1201, %v1201
      %v1234 = vpack.c.b16 %v1202, %v1202
      %v1235 = vpack.c.b16 %v1203, %v1203
      %v1236 = vpack.c.b16 %v1204, %v1204
      %v1237 = vpack.c.b16 %v1205, %v1205
      %v1238 = vpack.c.b16 %v1206, %v1206
      %v1239 = vpack.c.b16 %v1207, %v1207
      %v1240 = vpack.c.b16 %v1208, %v1208
      %v1241 = vpack.c.b16 %v1209, %v1209
      %v1242 = vpack.c.b16 %v1210, %v1210
      %v1243 = vpack.c.b16 %v1211, %v1211
      %v1244 = vpack.c.b16 %v1212, %v1212
      %v1245 = vpack.c.b16 %v1213, %v1213
      %v1246 = vpack.c.b16 %v1214, %v1214
      %v1247 = vpack.c.b16 %v1215, %v1215
      %1280 = vst [vmem:[%s240] sm:$0xf] %v1216
      %1281 = vst [vmem:[%s240 + $0x4] sm:$0xf] %v1217
      %1282 = vst [vmem:[%s240 + $0x8] sm:$0xf] %v1218
      %1283 = vst [vmem:[%s240 + $0xc] sm:$0xf] %v1219
      %1284 = vst [vmem:[%s240 + $0x10] sm:$0xf] %v1220
      %1285 = vst [vmem:[%s240 + $0x14] sm:$0xf] %v1221
      %1286 = vst [vmem:[%s240 + $0x18] sm:$0xf] %v1222
      %1287 = vst [vmem:[%s240 + $0x1c] sm:$0xf] %v1223
      %1288 = vst [vmem:[%s240 + $0x20] sm:$0xf] %v1224
      %1289 = vst [vmem:[%s240 + $0x24] sm:$0xf] %v1225
      %1290 = vst [vmem:[%s240 + $0x28] sm:$0xf] %v1226
      %1291 = vst [vmem:[%s240 + $0x2c] sm:$0xf] %v1227
      %1292 = vst [vmem:[%s240 + $0x30] sm:$0xf] %v1228
      %1293 = vst [vmem:[%s240 + $0x34] sm:$0xf] %v1229
      %1294 = vst [vmem:[%s240 + $0x38] sm:$0xf] %v1230
      %1295 = vst [vmem:[%s240 + $0x3c] sm:$0xf] %v1231
      %1296 = vst [vmem:[%s240 + $0x40] sm:$0xf] %v1232
      %1297 = vst [vmem:[%s240 + $0x44] sm:$0xf] %v1233
      %1298 = vst [vmem:[%s240 + $0x48] sm:$0xf] %v1234
      %1299 = vst [vmem:[%s240 + $0x4c] sm:$0xf] %v1235
      %1300 = vst [vmem:[%s240 + $0x50] sm:$0xf] %v1236
      %1301 = vst [vmem:[%s240 + $0x54] sm:$0xf] %v1237
      %1302 = vst [vmem:[%s240 + $0x58] sm:$0xf] %v1238
      %1303 = vst [vmem:[%s240 + $0x5c] sm:$0xf] %v1239
      %1304 = vst [vmem:[%s240 + $0x60] sm:$0xf] %v1240
      %1305 = vst [vmem:[%s240 + $0x64] sm:$0xf] %v1241
      %1306 = vst [vmem:[%s240 + $0x68] sm:$0xf] %v1242
      %1307 = vst [vmem:[%s240 + $0x6c] sm:$0xf] %v1243
      %1308 = vst [vmem:[%s240 + $0x70] sm:$0xf] %v1244
      %1309 = vst [vmem:[%s240 + $0x74] sm:$0xf] %v1245
      %1310 = vst [vmem:[%s240 + $0x78] sm:$0xf] %v1246
      %1311 = vst [vmem:[%s240 + $0x7c] sm:$0xf] %v1247
      %s1312 = smul.u32 8, %s20
      %p1313 = scmp.lt.s32.totalorder %s19, 1
      %s1314 = scalar_select %p1313, %s19, 1
      %p1315 = scmp.lt.s32.totalorder %s1312, 7
      %s1316 = scalar_select %p1315, %s1312, 7
      %s1317 = smul.addr %s1316, 4
      %s1318 = smul.addr %s1314, 32
      %s1319 = sadd.s32 %s1317, %s1318
      %s1320 = smul.addr %s1319, 4
      %s1321 = scalar_lea.vmem %s4, %s1320
      // Predicated region
      $region37: #{unet_up_block_forward.3} parent=35 // pred_check
        %p1322 = pneg %p138
      $region38: #{unet_up_block_forward.3} parent=35 // pred_check_branch
        %1324 = sbr.rel (%p1322) target = $region40
      $region39: #{unet_up_block_forward.3} parent=35 // pred_region
        %s1325 = smul.u32 8, %s20
      $region40: #{unet_up_block_forward.3} parent=35 // pred_fallthru
        _
    $region36: #{unet_up_block_forward.3} parent=5 // pred_fallthru
      _
    %p1326 = scmp.le.s32.totalorder 2, %s10
    // Predicated region
    $region41: #{unet_up_block_forward.3} parent=5 // pred_check
      %p1327 = pneg %p1326
    $region42: #{unet_up_block_forward.3} parent=5 // pred_check_branch
      %1329 = sbr.rel (%p1327) target = $region44
    $region43: #{unet_up_block_forward.3} parent=5 // pred_region
      %s1330 = ssub.s32 %s10, 2
      // Predicated region
      $region45: #{unet_up_block_forward.3} parent=43 // pred_check
        %p1331 = pneg %p144
      $region46: #{unet_up_block_forward.3} parent=43 // pred_check_branch
        %1333 = sbr.rel (%p1331) target = $region48
      $region47: #{unet_up_block_forward.3} parent=43 // pred_region
        %s1334 = smul.u32 8, %s22
        %p1335 = scmp.lt.s32.totalorder %s21, 1
        %s1336 = scalar_select %p1335, %s21, 1
        %p1337 = scmp.lt.s32.totalorder %s1334, 7
        %s1338 = scalar_select %p1337, %s1334, 7
        %s1339 = smul.addr %s1338, 4
        %s1340 = smul.addr %s1336, 32
        %s1341 = sadd.s32 %s1339, %s1340
        %s1342 = smul.addr %s1341, 4
        %s1343 = scalar_lea.vmem %s4, %s1342
      $region48: #{unet_up_block_forward.3} parent=43 // pred_fallthru
        _
    $region44: #{unet_up_block_forward.3} parent=5 // pred_fallthru
      _
  $region6: #{unet_up_block_forward.3} parent=0 // loop_footer
    %s14 = sadd.s32 1, %s10
  $region7: #{unet_up_block_forward.3} parent=0 // loop_footer_branch
    %9 = sbr.rel target = $region3
  $region8: #{unet_up_block_forward.3} parent=0 // loop_exit
    _

// kernel: unet_up_block_forward.4
$region0: #{unet_up_block_forward.4}
  #allocation0 [shape = 'u32[]', space=smem, size = 0x4, offset = 0x4, fixed_abs, tag = 'smem constant byte address 0x4 - core index']
  #allocation1 [shape = 'u32[144,128]{1,0:T(1,128)}', space=vmem, size = 0x12000, scoped, tag = 'internal scratch']
  #allocation2 [shape = 'bf16[2,10,24,256]{3,2,1,0:T(8,128)(2,1)}', space=vmem, size = 0x3c000, scoped, tag = 'scratch operand']
  #allocation3 [shape = 's32[2]{0}', space=sflag, size = 0x8, scoped, tag = 'scratch operand']
  #allocation4 [shape = 's32[]', space=sflag, size = 0x4, offset = 0, fixed_abs, tag = 'sflag constant byte address 0x0 - dummy sync flag']
  #allocation5 [shape = 's32[]', space=sflag, size = 0x4, offset = 0, fixed_abs, tag = 'sflag constant byte address 0x0 - dummy sync flag']
  %s0 = inlined_call_operand.vmem [shape: bf16[2,18,24,256], index: 0, kind: input, shape index: {}]
  %s1 = inlined_call_operand.vmem [shape: bf16[9,256,128], index: 1, kind: input, shape index: {}]
  %s2 = inlined_call_operand.vmem [shape: f32[1,128], index: 2, kind: input, shape index: {}]
  %s3 = inlined_call_operand.vmem [shape: f32[2,16,16,128], index: 3, kind: output, shape index: {0}]
  %s4 = inlined_call_operand.vmem [shape: f32[2,2,8,128], index: 4, kind: output, shape index: {1}]
  %5 = xla_tuple %s3, %s4
  %s6 = sld [smem:[#allocation0]]
  $region125: #{unet_up_block_forward.4} parent=0
    _
  %s8 = ssub.s32 1, %s6
  %s9 = scalar_select 0, %s8, %s6
  loop: start=0, step=1, limit=6
  $region2: #{unet_up_block_forward.4} parent=0 // loop_pre_header
    _
  $region3: #{unet_up_block_forward.4} parent=0 // loop_header
    %s11 = sphi 0, %s15
    %p12 = scmp.ge.s32.totalorder %s11, 6
    %s18 = sphi 0, %s30
    %s19 = sphi 0, %s26
    %s20 = sphi 0, %s18
    %s21 = sphi 0, %s19
    %s22 = sphi 0, %s20
    %s23 = sphi 0, %s21
    %s31 = sphi 0, %s31
    %s33 = sphi 0, %s31
    %s34 = sphi 0, %s33
    %s48 = sphi 0, %s34
    %s52 = sphi 0, %s52
    %s54 = sphi 0, %s52
    %s55 = sphi 0, %s54
    %s69 = sphi 0, %s55
    %s77 = sphi 0, %s79
    %s80 = sphi 0, %s77
    %s81 = sphi 0, %s80
    %s97 = sphi 0, %s81
    %s105 = sphi 0, %s107
    %s108 = sphi 0, %s105
    %s109 = sphi 0, %s108
    %s125 = sphi 0, %s109
  $region4: #{unet_up_block_forward.4} parent=0 // loop_header_branch
    %14 = sbr.rel (%p12) target = $region8
  $region5: #{unet_up_block_forward.4} parent=0 // loop_body
    %s16 = ssub.s32 %s11, 1
    %s17 = ssub.s32 %s11, 2
    %s24 = sadd.s32 1, %s19
    %p25 = scmp.ge.s32.totalorder %s24, 2
    %s26 = scalar_select %p25, 0, %s24
    %s27 = sadd.s32 1, %s18
    %s28 = scalar_select %p25, %s27, %s18
    %p29 = scmp.ge.s32.totalorder %s28, 2
    %s30 = scalar_select %p29, 0, %s28
    %s32 = sadd.s32 %s31, 1
    %p35 = scmp.eq.s32.totalorder %s11, 3
    %p36 = scmp.ne.s32.totalorder %s31, %s33
    %p37 = scmp.eq.s32.totalorder %s11, 0
    %p38 = por %p36, %p37
    %p39 = scmp.ne.s32.totalorder %s31, %s33
    %p40 = scmp.eq.s32.totalorder %s16, 3
    %p41 = por %p39, %p40
    %p42 = scmp.ne.s32.totalorder %s33, %s34
    %p43 = scmp.eq.s32.totalorder %s16, 0
    %p44 = por %p42, %p43
    %p45 = scmp.ne.s32.totalorder %s33, %s34
    %p46 = scmp.eq.s32.totalorder %s17, 3
    %p47 = por %p45, %p46
    %p49 = scmp.ne.s32.totalorder %s34, %s48
    %p50 = scmp.eq.s32.totalorder %s17, 0
    %p51 = por %p49, %p50
    %s53 = sadd.s32 %s52, 1
    %p56 = scmp.eq.s32.totalorder %s11, 3
    %p57 = scmp.ne.s32.totalorder %s52, %s54
    %p58 = scmp.eq.s32.totalorder %s11, 0
    %p59 = por %p57, %p58
    %p60 = scmp.ne.s32.totalorder %s52, %s54
    %p61 = scmp.eq.s32.totalorder %s16, 3
    %p62 = por %p60, %p61
    %p63 = scmp.ne.s32.totalorder %s54, %s55
    %p64 = scmp.eq.s32.totalorder %s16, 0
    %p65 = por %p63, %p64
    %p66 = scmp.ne.s32.totalorder %s54, %s55
    %p67 = scmp.eq.s32.totalorder %s17, 3
    %p68 = por %p66, %p67
    %p70 = scmp.ne.s32.totalorder %s55, %s69
    %p71 = scmp.eq.s32.totalorder %s17, 0
    %p72 = por %p70, %p71
    %s73 = ssub.s32 %s18, %s30
    %s74 = ssub.s32 %s19, %s26
    %s75 = sor.u32 %s73, %s74
    %p76 = scmp.eq.s32.totalorder %s75, 0
    %s78 = sadd.s32 %s77, 1
    %s79 = scalar_select %p76, %s77, %s78
    %p82 = pneg %p76
    %p83 = scmp.eq.s32.totalorder %s11, 3
    %p84 = por %p82, %p83
    %p85 = scmp.ne.s32.totalorder %s77, %s80
    %p86 = scmp.eq.s32.totalorder %s11, 0
    %p87 = por %p85, %p86
    %p88 = scmp.ne.s32.totalorder %s77, %s80
    %p89 = scmp.eq.s32.totalorder %s16, 3
    %p90 = por %p88, %p89
    %p91 = scmp.ne.s32.totalorder %s80, %s81
    %p92 = scmp.eq.s32.totalorder %s16, 0
    %p93 = por %p91, %p92
    %p94 = scmp.ne.s32.totalorder %s80, %s81
    %p95 = scmp.eq.s32.totalorder %s17, 3
    %p96 = por %p94, %p95
    %p98 = scmp.ne.s32.totalorder %s81, %s97
    %p99 = scmp.eq.s32.totalorder %s17, 0
    %p100 = por %p98, %p99
    %s101 = ssub.s32 %s18, %s30
    %s102 = ssub.s32 %s19, %s26
    %s103 = sor.u32 %s101, %s102
    %p104 = scmp.eq.s32.totalorder %s103, 0
    %s106 = sadd.s32 %s105, 1
    %s107 = scalar_select %p104, %s105, %s106
    %p110 = pneg %p104
    %p111 = scmp.eq.s32.totalorder %s11, 3
    %p112 = por %p110, %p111
    %p113 = scmp.ne.s32.totalorder %s105, %s108
    %p114 = scmp.eq.s32.totalorder %s11, 0
    %p115 = por %p113, %p114
    %p116 = scmp.ne.s32.totalorder %s105, %s108
    %p117 = scmp.eq.s32.totalorder %s16, 3
    %p118 = por %p116, %p117
    %p119 = scmp.ne.s32.totalorder %s108, %s109
    %p120 = scmp.eq.s32.totalorder %s16, 0
    %p121 = por %p119, %p120
    %p122 = scmp.ne.s32.totalorder %s108, %s109
    %p123 = scmp.eq.s32.totalorder %s17, 3
    %p124 = por %p122, %p123
    %p126 = scmp.ne.s32.totalorder %s109, %s125
    %p127 = scmp.eq.s32.totalorder %s17, 0
    %p128 = por %p126, %p127
    %p129 = scmp.le.s32.totalorder 1, %s11
    %p130 = scmp.lt.s32.totalorder %s11, 5
    %p131 = pnand %p129, %p130
    %p132 = pneg %p131
    // Predicated region
    $region9: #{unet_up_block_forward.4} parent=5 // pred_check
      _
    $region10: #{unet_up_block_forward.4} parent=5 // pred_check_branch
      %134 = sbr.rel (%p131) target = $region12
    $region11: #{unet_up_block_forward.4} parent=5 // pred_region
      %s135 = ssub.s32 %s11, 1
      // Predicated region
      $region13: #{unet_up_block_forward.4} parent=11 // pred_check
        %p136 = pneg %p44
      $region14: #{unet_up_block_forward.4} parent=11 // pred_check_branch
        %138 = sbr.rel (%p136) target = $region16
      $region15: #{unet_up_block_forward.4} parent=11 // pred_region
        _
      $region16: #{unet_up_block_forward.4} parent=11 // pred_fallthru
        _
      // Predicated region
      $region17: #{unet_up_block_forward.4} parent=11 // pred_check
        %p139 = pneg %p65
      $region18: #{unet_up_block_forward.4} parent=11 // pred_check_branch
        %141 = sbr.rel (%p139) target = $region20
      $region19: #{unet_up_block_forward.4} parent=11 // pred_region
        _
      $region20: #{unet_up_block_forward.4} parent=11 // pred_fallthru
        _
    $region12: #{unet_up_block_forward.4} parent=5 // pred_fallthru
      _
    %p142 = scmp.lt.s32.totalorder %s11, 4
    // Predicated region
    $region21: #{unet_up_block_forward.4} parent=5 // pred_check
      %p143 = pneg %p142
    $region22: #{unet_up_block_forward.4} parent=5 // pred_check_branch
      %145 = sbr.rel (%p143) target = $region24
    $region23: #{unet_up_block_forward.4} parent=5 // pred_region
      _
    $region24: #{unet_up_block_forward.4} parent=5 // pred_fallthru
      _
    %p146 = scmp.le.s32.totalorder 1, %s11
    %p147 = scmp.lt.s32.totalorder %s11, 5
    %p148 = pnand %p146, %p147
    %p149 = pneg %p148
    // Predicated region
    $region25: #{unet_up_block_forward.4} parent=5 // pred_check
      _
    $region26: #{unet_up_block_forward.4} parent=5 // pred_check_branch
      %151 = sbr.rel (%p148) target = $region28
    $region27: #{unet_up_block_forward.4} parent=5 // pred_region
      %s152 = ssub.s32 %s11, 1
      %p153 = pneg %p44
      %p154 = pneg %p41
      %p155 = pneg %p65
      %p156 = pneg %p62
      %p157 = pneg %p93
      %p158 = pneg %p90
      %s159 = smul.u32 8, %s21
      %p160 = scmp.lt.s32.totalorder %s20, 1
      %s161 = scalar_select %p160, %s20, 1
      %p162 = scmp.lt.s32.totalorder %s159, 15
      %s163 = scalar_select %p162, %s159, 15
      %s164 = smul.addr %s163, 2
      %s165 = smul.addr %s161, 32
      %s166 = sadd.s32 %s164, %s165
      %s167 = smul.addr %s166, 8
      %s168 = scalar_lea.vmem %s3, %s167
      %p169 = pneg %p121
      %p170 = pneg %p118
      %p171 = scmp.lt.s32.totalorder %s20, 1
      %s172 = scalar_select %p171, %s20, 1
      %p173 = scmp.lt.s32.totalorder %s21, 1
      %s174 = scalar_select %p173, %s21, 1
      %s175 = smul.addr %s172, 2
      %s176 = sadd.s32 %s174, %s175
      %s177 = smul.addr %s176, 8
      %s178 = scalar_lea.vmem %s4, %s177
      %s179 = smul.u32 8, %s21
      %p180 = scmp.lt.s32.totalorder %s20, 1
      %s181 = scalar_select %p180, %s20, 1
      %p182 = scmp.lt.s32.totalorder %s179, 15
      %s183 = scalar_select %p182, %s179, 15
      %s184 = smul.addr %s183, 2
      %s185 = smul.addr %s181, 32
      %s186 = sadd.s32 %s184, %s185
      %s187 = smul.addr %s186, 8
      %s188 = scalar_lea.vmem %s3, %s187
      %s189 = smul.u32 8, %s21
      %p190 = scmp.lt.s32.totalorder %s20, 1
      %s191 = scalar_select %p190, %s20, 1
      %p192 = scmp.lt.s32.totalorder %s21, 1
      %s193 = scalar_select %p192, %s21, 1
      %s194 = smul.addr %s191, 2
      %s195 = sadd.s32 %s193, %s194
      %s196 = smul.addr %s195, 8
      %s197 = scalar_lea.vmem %s4, %s196
      %p199 = scmp.lt.s32.totalorder %s21, 0
      %s200 = ssub.s32 0, %s21
      %s201 = scalar_select %p199, %s200, %s21
      %s202 = sand.u32 %s201, 1
      %s203 = ssub.s32 0, %s202
      %s204 = scalar_select %p199, %s203, %s202
      %p205 = scmp.ne.s32.totalorder %s204, 0
      %p206 = scmp.lt.s32.totalorder %s204, 0
      %p207 = pnand %p206, %p205
      %p208 = pneg %p207
      %s209 = sadd.s32 %s204, 2
      %s210 = scalar_select %p208, %s209, %s204
      %p211 = scmp.eq.s32.totalorder %s21, 0
      // Predicated region
      $region29: #{unet_up_block_forward.4} parent=27 // pred_check
        %p212 = pneg %p211
      $region30: #{unet_up_block_forward.4} parent=27 // pred_check_branch
        %214 = sbr.rel (%p212) target = $region32
      $region31: #{unet_up_block_forward.4} parent=27 // pred_region
        %s215 = smul.u32 0, 6
        %s216 = smul.u32 %s20, 108
        %s217 = sadd.s32 %s215, %s216
        %s218 = smul.addr %s217, 4
        %s219 = scalar_lea.vmem %s0, %s218
        %p221 = scmp.lt.u32.totalorder 240, 8
        %p222 = pneg %p221
        // Predicated region
        $region33: #{unet_up_block_forward.4} parent=31 // pred_check
          _
        $region34: #{unet_up_block_forward.4} parent=31 // pred_check_branch
          %224 = sbr.rel (%p221) target = $region36
        $region35: #{unet_up_block_forward.4} parent=31 // pred_region
          %s240 = sand.u32 240, 7
          %p241 = scmp.eq.s32.totalorder %s240, 0
          // Predicated region
          $region48: #{unet_up_block_forward.4} parent=35 // pred_check
            %p242 = pneg %p241
          $region49: #{unet_up_block_forward.4} parent=35 // pred_check_branch
            %244 = sbr.rel (%p242) target = $region51
          $region50: #{unet_up_block_forward.4} parent=35 // pred_region
            loop: start=0, step=1, limit=1
            $region52: #{unet_up_block_forward.4} parent=50 // loop_pre_header
              _
            $region53: #{unet_up_block_forward.4} parent=50 // loop_header
              %s246 = sphi 0, %s250
              %p247 = scmp.ge.s32.totalorder %s246, 1
              %s251 = sphi %s219, %s219
              %s252 = sphi [#allocation2], [#allocation2]
            $region54: #{unet_up_block_forward.4} parent=50 // loop_header_branch
              %249 = sbr.rel (%p247) target = $region58
            $region55: #{unet_up_block_forward.4} parent=50 // loop_body
              %v253 = vld [vmem:[%s251] sm:$0xff]
              %254 = vst [vmem:[%s252] sm:$0xff] %v253
              %v255 = vld [vmem:[%s251 + $0x8] sm:$0xff]
              %256 = vst [vmem:[%s252 + $0x8] sm:$0xff] %v255
              %v257 = vld [vmem:[%s251 + $0x10] sm:$0xff]
              %258 = vst [vmem:[%s252 + $0x10] sm:$0xff] %v257
              %v259 = vld [vmem:[%s251 + $0x18] sm:$0xff]
              %260 = vst [vmem:[%s252 + $0x18] sm:$0xff] %v259
              %v261 = vld [vmem:[%s251 + $0x20] sm:$0xff]
              %262 = vst [vmem:[%s252 + $0x20] sm:$0xff] %v261
              %v263 = vld [vmem:[%s251 + $0x28] sm:$0xff]
              %264 = vst [vmem:[%s252 + $0x28] sm:$0xff] %v263
              %v265 = vld [vmem:[%s251 + $0x30] sm:$0xff]
              %266 = vst [vmem:[%s252 + $0x30] sm:$0xff] %v265
              %v267 = vld [vmem:[%s251 + $0x38] sm:$0xff]
              %268 = vst [vmem:[%s252 + $0x38] sm:$0xff] %v267
              %v269 = vld [vmem:[%s251 + $0x40] sm:$0xff]
              %270 = vst [vmem:[%s252 + $0x40] sm:$0xff] %v269
              %v271 = vld [vmem:[%s251 + $0x48] sm:$0xff]
              %272 = vst [vmem:[%s252 + $0x48] sm:$0xff] %v271
              %v273 = vld [vmem:[%s251 + $0x50] sm:$0xff]
              %274 = vst [vmem:[%s252 + $0x50] sm:$0xff] %v273
              %v275 = vld [vmem:[%s251 + $0x58] sm:$0xff]
              %276 = vst [vmem:[%s252 + $0x58] sm:$0xff] %v275
              %v277 = vld [vmem:[%s251 + $0x60] sm:$0xff]
              %278 = vst [vmem:[%s252 + $0x60] sm:$0xff] %v277
              %v279 = vld [vmem:[%s251 + $0x68] sm:$0xff]
              %280 = vst [vmem:[%s252 + $0x68] sm:$0xff] %v279
              %v281 = vld [vmem:[%s251 + $0x70] sm:$0xff]
              %282 = vst [vmem:[%s252 + $0x70] sm:$0xff] %v281
              %v283 = vld [vmem:[%s251 + $0x78] sm:$0xff]
              %284 = vst [vmem:[%s252 + $0x78] sm:$0xff] %v283
              %v285 = vld [vmem:[%s251 + $0x80] sm:$0xff]
              %286 = vst [vmem:[%s252 + $0x80] sm:$0xff] %v285
              %v287 = vld [vmem:[%s251 + $0x88] sm:$0xff]
              %288 = vst [vmem:[%s252 + $0x88] sm:$0xff] %v287
              %v289 = vld [vmem:[%s251 + $0x90] sm:$0xff]
              %290 = vst [vmem:[%s252 + $0x90] sm:$0xff] %v289
              %v291 = vld [vmem:[%s251 + $0x98] sm:$0xff]
              %292 = vst [vmem:[%s252 + $0x98] sm:$0xff] %v291
              %v293 = vld [vmem:[%s251 + $0xa0] sm:$0xff]
              %294 = vst [vmem:[%s252 + $0xa0] sm:$0xff] %v293
              %v295 = vld [vmem:[%s251 + $0xa8] sm:$0xff]
              %296 = vst [vmem:[%s252 + $0xa8] sm:$0xff] %v295
              %v297 = vld [vmem:[%s251 + $0xb0] sm:$0xff]
              %298 = vst [vmem:[%s252 + $0xb0] sm:$0xff] %v297
              %v299 = vld [vmem:[%s251 + $0xb8] sm:$0xff]
              %300 = vst [vmem:[%s252 + $0xb8] sm:$0xff] %v299
              %v301 = vld [vmem:[%s251 + $0xc0] sm:$0xff]
              %302 = vst [vmem:[%s252 + $0xc0] sm:$0xff] %v301
              %v303 = vld [vmem:[%s251 + $0xc8] sm:$0xff]
              %304 = vst [vmem:[%s252 + $0xc8] sm:$0xff] %v303
              %v305 = vld [vmem:[%s251 + $0xd0] sm:$0xff]
              %306 = vst [vmem:[%s252 + $0xd0] sm:$0xff] %v305
              %v307 = vld [vmem:[%s251 + $0xd8] sm:$0xff]
              %308 = vst [vmem:[%s252 + $0xd8] sm:$0xff] %v307
              %v309 = vld [vmem:[%s251 + $0xe0] sm:$0xff]
              %310 = vst [vmem:[%s252 + $0xe0] sm:$0xff] %v309
              %v311 = vld [vmem:[%s251 + $0xe8] sm:$0xff]
              %312 = vst [vmem:[%s252 + $0xe8] sm:$0xff] %v311
            $region56: #{unet_up_block_forward.4} parent=50 // loop_footer
              %s250 = sadd.s32 1, %s246
            $region57: #{unet_up_block_forward.4} parent=50 // loop_footer_branch
              %245 = sbr.rel target = $region53
            $region58: #{unet_up_block_forward.4} parent=50 // loop_exit
              _
          $region51: #{unet_up_block_forward.4} parent=35 // pred_fallthru
            _
          %p313 = pneg %p241
          // Predicated region
          $region59: #{unet_up_block_forward.4} parent=35 // pred_check
            _
          $region60: #{unet_up_block_forward.4} parent=35 // pred_check_branch
            %315 = sbr.rel (%p241) target = $region62
          $region61: #{unet_up_block_forward.4} parent=35 // pred_region
            %s316 = sand.u32 240, 7
          $region62: #{unet_up_block_forward.4} parent=35 // pred_fallthru
            _
        $region36: #{unet_up_block_forward.4} parent=31 // pred_fallthru
          _
        // Predicated region
        $region37: #{unet_up_block_forward.4} parent=31 // pred_check
          %p225 = pneg %p221
        $region38: #{unet_up_block_forward.4} parent=31 // pred_check_branch
          %227 = sbr.rel (%p225) target = $region40
        $region39: #{unet_up_block_forward.4} parent=31 // pred_region
          %s228 = sshll.u32 1, 240
          %s229 = ssub.s32 %s228, 1
          loop: start=0, step=1, limit=1
          $region41: #{unet_up_block_forward.4} parent=39 // loop_pre_header
            _
          $region42: #{unet_up_block_forward.4} parent=39 // loop_header
            %s231 = sphi 0, %s235
            %p232 = scmp.ge.s32.totalorder %s231, 1
            %s236 = sphi %s219, %s219
            %s237 = sphi [#allocation2], [#allocation2]
          $region43: #{unet_up_block_forward.4} parent=39 // loop_header_branch
            %234 = sbr.rel (%p232) target = $region47
          $region44: #{unet_up_block_forward.4} parent=39 // loop_body
            %v238 = vld [vmem:[%s236] sm:%s229]
            %239 = vst [vmem:[%s237] sm:%s229] %v238
          $region45: #{unet_up_block_forward.4} parent=39 // loop_footer
            %s235 = sadd.s32 1, %s231
          $region46: #{unet_up_block_forward.4} parent=39 // loop_footer_branch
            %230 = sbr.rel target = $region42
          $region47: #{unet_up_block_forward.4} parent=39 // loop_exit
            _
        $region40: #{unet_up_block_forward.4} parent=31 // pred_fallthru
          _
        // Predicated region
        $region63: #{unet_up_block_forward.4} parent=31 // pred_check
          _
        $region64: #{unet_up_block_forward.4} parent=31 // pred_check_branch
          %319 = sbr.rel (0) target = $region66
        $region65: #{unet_up_block_forward.4} parent=31 // pred_region
          %320 = vsyncadd [#allocation3], 3840
        $region66: #{unet_up_block_forward.4} parent=31 // pred_fallthru
          _
      $region32: #{unet_up_block_forward.4} parent=27 // pred_fallthru
        _
      %s321 = smul.u32 %s21, 8
      %s322 = smul.u32 %s210, 60
      %s323 = smul.addr %s322, 4
      %s324 = scalar_lea.vmem [#allocation2], %s323
      %s325 = scalar_lea.sflag [#allocation3], %s210
      %s326 = smul.u32 4, 10
      %s327 = smul.u32 %s326, 3
      %s328 = smul.u32 %s327, 2
      %s329 = sshll.u32 %s328, 4
      %330 = dma.done %s325, %s329
      %s331 = sadd.s32 %s21, 1
      %p332 = scmp.lt.s32.totalorder %s331, 2
      // Predicated region
      $region67: #{unet_up_block_forward.4} parent=27 // pred_check
        %p333 = pneg %p332
      $region68: #{unet_up_block_forward.4} parent=27 // pred_check_branch
        %335 = sbr.rel (%p333) target = $region70
      $region69: #{unet_up_block_forward.4} parent=27 // pred_region
        %s336 = ssub.s32 1, %s210
        %s337 = smul.u32 %s331, 8
        %s338 = smul.u32 %s337, 6
        %s339 = smul.u32 %s20, 108
        %s340 = sadd.s32 %s338, %s339
        %s341 = smul.addr %s340, 4
        %s342 = scalar_lea.vmem %s0, %s341
        %s343 = smul.u32 %s336, 60
        %s344 = smul.addr %s343, 4
        %s345 = scalar_lea.vmem [#allocation2], %s344
        %s346 = scalar_lea.sflag [#allocation3], %s336
        %p348 = scmp.lt.u32.totalorder 240, 8
        %p349 = pneg %p348
        // Predicated region
        $region71: #{unet_up_block_forward.4} parent=69 // pred_check
          _
        $region72: #{unet_up_block_forward.4} parent=69 // pred_check_branch
          %351 = sbr.rel (%p348) target = $region74
        $region73: #{unet_up_block_forward.4} parent=69 // pred_region
          %s367 = sand.u32 240, 7
          %p368 = scmp.eq.s32.totalorder %s367, 0
          // Predicated region
          $region86: #{unet_up_block_forward.4} parent=73 // pred_check
            %p369 = pneg %p368
          $region87: #{unet_up_block_forward.4} parent=73 // pred_check_branch
            %371 = sbr.rel (%p369) target = $region89
          $region88: #{unet_up_block_forward.4} parent=73 // pred_region
            loop: start=0, step=1, limit=1
            $region90: #{unet_up_block_forward.4} parent=88 // loop_pre_header
              _
            $region91: #{unet_up_block_forward.4} parent=88 // loop_header
              %s373 = sphi 0, %s377
              %p374 = scmp.ge.s32.totalorder %s373, 1
              %s378 = sphi %s342, %s342
              %s379 = sphi %s345, %s345
            $region92: #{unet_up_block_forward.4} parent=88 // loop_header_branch
              %376 = sbr.rel (%p374) target = $region96
            $region93: #{unet_up_block_forward.4} parent=88 // loop_body
              %v380 = vld [vmem:[%s378] sm:$0xff]
              %381 = vst [vmem:[%s379] sm:$0xff] %v380
              %v382 = vld [vmem:[%s378 + $0x8] sm:$0xff]
              %383 = vst [vmem:[%s379 + $0x8] sm:$0xff] %v382
              %v384 = vld [vmem:[%s378 + $0x10] sm:$0xff]
              %385 = vst [vmem:[%s379 + $0x10] sm:$0xff] %v384
              %v386 = vld [vmem:[%s378 + $0x18] sm:$0xff]
              %387 = vst [vmem:[%s379 + $0x18] sm:$0xff] %v386
              %v388 = vld [vmem:[%s378 + $0x20] sm:$0xff]
              %389 = vst [vmem:[%s379 + $0x20] sm:$0xff] %v388
              %v390 = vld [vmem:[%s378 + $0x28] sm:$0xff]
              %391 = vst [vmem:[%s379 + $0x28] sm:$0xff] %v390
              %v392 = vld [vmem:[%s378 + $0x30] sm:$0xff]
              %393 = vst [vmem:[%s379 + $0x30] sm:$0xff] %v392
              %v394 = vld [vmem:[%s378 + $0x38] sm:$0xff]
              %395 = vst [vmem:[%s379 + $0x38] sm:$0xff] %v394
              %v396 = vld [vmem:[%s378 + $0x40] sm:$0xff]
              %397 = vst [vmem:[%s379 + $0x40] sm:$0xff] %v396
              %v398 = vld [vmem:[%s378 + $0x48] sm:$0xff]
              %399 = vst [vmem:[%s379 + $0x48] sm:$0xff] %v398
              %v400 = vld [vmem:[%s378 + $0x50] sm:$0xff]
              %401 = vst [vmem:[%s379 + $0x50] sm:$0xff] %v400
              %v402 = vld [vmem:[%s378 + $0x58] sm:$0xff]
              %403 = vst [vmem:[%s379 + $0x58] sm:$0xff] %v402
              %v404 = vld [vmem:[%s378 + $0x60] sm:$0xff]
              %405 = vst [vmem:[%s379 + $0x60] sm:$0xff] %v404
              %v406 = vld [vmem:[%s378 + $0x68] sm:$0xff]
              %407 = vst [vmem:[%s379 + $0x68] sm:$0xff] %v406
              %v408 = vld [vmem:[%s378 + $0x70] sm:$0xff]
              %409 = vst [vmem:[%s379 + $0x70] sm:$0xff] %v408
              %v410 = vld [vmem:[%s378 + $0x78] sm:$0xff]
              %411 = vst [vmem:[%s379 + $0x78] sm:$0xff] %v410
              %v412 = vld [vmem:[%s378 + $0x80] sm:$0xff]
              %413 = vst [vmem:[%s379 + $0x80] sm:$0xff] %v412
              %v414 = vld [vmem:[%s378 + $0x88] sm:$0xff]
              %415 = vst [vmem:[%s379 + $0x88] sm:$0xff] %v414
              %v416 = vld [vmem:[%s378 + $0x90] sm:$0xff]
              %417 = vst [vmem:[%s379 + $0x90] sm:$0xff] %v416
              %v418 = vld [vmem:[%s378 + $0x98] sm:$0xff]
              %419 = vst [vmem:[%s379 + $0x98] sm:$0xff] %v418
              %v420 = vld [vmem:[%s378 + $0xa0] sm:$0xff]
              %421 = vst [vmem:[%s379 + $0xa0] sm:$0xff] %v420
              %v422 = vld [vmem:[%s378 + $0xa8] sm:$0xff]
              %423 = vst [vmem:[%s379 + $0xa8] sm:$0xff] %v422
              %v424 = vld [vmem:[%s378 + $0xb0] sm:$0xff]
              %425 = vst [vmem:[%s379 + $0xb0] sm:$0xff] %v424
              %v426 = vld [vmem:[%s378 + $0xb8] sm:$0xff]
              %427 = vst [vmem:[%s379 + $0xb8] sm:$0xff] %v426
              %v428 = vld [vmem:[%s378 + $0xc0] sm:$0xff]
              %429 = vst [vmem:[%s379 + $0xc0] sm:$0xff] %v428
              %v430 = vld [vmem:[%s378 + $0xc8] sm:$0xff]
              %431 = vst [vmem:[%s379 + $0xc8] sm:$0xff] %v430
              %v432 = vld [vmem:[%s378 + $0xd0] sm:$0xff]
              %433 = vst [vmem:[%s379 + $0xd0] sm:$0xff] %v432
              %v434 = vld [vmem:[%s378 + $0xd8] sm:$0xff]
              %435 = vst [vmem:[%s379 + $0xd8] sm:$0xff] %v434
              %v436 = vld [vmem:[%s378 + $0xe0] sm:$0xff]
              %437 = vst [vmem:[%s379 + $0xe0] sm:$0xff] %v436
              %v438 = vld [vmem:[%s378 + $0xe8] sm:$0xff]
              %439 = vst [vmem:[%s379 + $0xe8] sm:$0xff] %v438
            $region94: #{unet_up_block_forward.4} parent=88 // loop_footer
              %s377 = sadd.s32 1, %s373
            $region95: #{unet_up_block_forward.4} parent=88 // loop_footer_branch
              %372 = sbr.rel target = $region91
            $region96: #{unet_up_block_forward.4} parent=88 // loop_exit
              _
          $region89: #{unet_up_block_forward.4} parent=73 // pred_fallthru
            _
          %p440 = pneg %p368
          // Predicated region
          $region97: #{unet_up_block_forward.4} parent=73 // pred_check
            _
          $region98: #{unet_up_block_forward.4} parent=73 // pred_check_branch
            %442 = sbr.rel (%p368) target = $region100
          $region99: #{unet_up_block_forward.4} parent=73 // pred_region
            %s443 = sand.u32 240, 7
          $region100: #{unet_up_block_forward.4} parent=73 // pred_fallthru
            _
        $region74: #{unet_up_block_forward.4} parent=69 // pred_fallthru
          _
        // Predicated region
        $region75: #{unet_up_block_forward.4} parent=69 // pred_check
          %p352 = pneg %p348
        $region76: #{unet_up_block_forward.4} parent=69 // pred_check_branch
          %354 = sbr.rel (%p352) target = $region78
        $region77: #{unet_up_block_forward.4} parent=69 // pred_region
          %s355 = sshll.u32 1, 240
          %s356 = ssub.s32 %s355, 1
          loop: start=0, step=1, limit=1
          $region79: #{unet_up_block_forward.4} parent=77 // loop_pre_header
            _
          $region80: #{unet_up_block_forward.4} parent=77 // loop_header
            %s358 = sphi 0, %s362
            %p359 = scmp.ge.s32.totalorder %s358, 1
            %s363 = sphi %s342, %s342
            %s364 = sphi %s345, %s345
          $region81: #{unet_up_block_forward.4} parent=77 // loop_header_branch
            %361 = sbr.rel (%p359) target = $region85
          $region82: #{unet_up_block_forward.4} parent=77 // loop_body
            %v365 = vld [vmem:[%s363] sm:%s356]
            %366 = vst [vmem:[%s364] sm:%s356] %v365
          $region83: #{unet_up_block_forward.4} parent=77 // loop_footer
            %s362 = sadd.s32 1, %s358
          $region84: #{unet_up_block_forward.4} parent=77 // loop_footer_branch
            %357 = sbr.rel target = $region80
          $region85: #{unet_up_block_forward.4} parent=77 // loop_exit
            _
        $region78: #{unet_up_block_forward.4} parent=69 // pred_fallthru
          _
        // Predicated region
        $region101: #{unet_up_block_forward.4} parent=69 // pred_check
          _
        $region102: #{unet_up_block_forward.4} parent=69 // pred_check_branch
          %446 = sbr.rel (0) target = $region104
        $region103: #{unet_up_block_forward.4} parent=69 // pred_region
          %447 = vsyncadd %s346, 3840
        $region104: #{unet_up_block_forward.4} parent=69 // pred_fallthru
          _
      $region70: #{unet_up_block_forward.4} parent=27 // pred_fallthru
        _
      %v448 = vld [vmem:[%s324] sm:$0xff]
      %v449 = vld [vmem:[%s324 + $0x8] sm:$0xff]
      %v450 = vld [vmem:[%s324 + $0x10] sm:$0xff]
      %v451 = vld [vmem:[%s324 + $0x18] sm:$0xff]
      %v452 = vld [vmem:[%s324 + $0x20] sm:$0xff]
      %v453 = vld [vmem:[%s324 + $0x28] sm:$0xff]
      %v454 = vld [vmem:[%s324 + $0x30] sm:$0xff]
      %v455 = vld [vmem:[%s324 + $0x38] sm:$0xff]
      %v456 = vld [vmem:[%s324 + $0x40] sm:$0xff]
      %v457 = vld [vmem:[%s324 + $0x48] sm:$0xff]
      %v458 = vld [vmem:[%s324 + $0x50] sm:$0xff]
      %v459 = vld [vmem:[%s324 + $0x58] sm:$0xff]
      %v460 = vld [vmem:[%s324 + $0x60] sm:$0xff]
      %v461 = vld [vmem:[%s324 + $0x68] sm:$0xff]
      %v462 = vld [vmem:[%s324 + $0x70] sm:$0xff]
      %v463 = vld [vmem:[%s324 + $0x78] sm:$0xff]
      %v464 = vld [vmem:[%s324 + $0x80] sm:$0xff]
      %v465 = vld [vmem:[%s324 + $0x88] sm:$0xff]
      %v466 = vld [vmem:[%s324 + $0x90] sm:$0xff]
      %v467 = vld [vmem:[%s324 + $0x98] sm:$0xff]
      %v468 = vld [vmem:[%s324 + $0xa0] sm:$0xff]
      %v469 = vld [vmem:[%s324 + $0xa8] sm:$0xff]
      %v470 = vld [vmem:[%s324 + $0xb0] sm:$0xff]
      %v471 = vld [vmem:[%s324 + $0xb8] sm:$0xff]
      %v472 = vld [vmem:[%s324 + $0xc0] sm:$0xff]
      %v473 = vld [vmem:[%s324 + $0xc8] sm:$0xff]
      %v474 = vld [vmem:[%s324 + $0xd0] sm:$0xff]
      %v475 = vld [vmem:[%s324 + $0xd8] sm:$0xff]
      %v476 = vld [vmem:[%s324 + $0xe0] sm:$0xff]
      %v477 = vld [vmem:[%s324 + $0xe8] sm:$0xff]
      %v478 = vld [vmem:[%s1] sm:$0xf]
      %v479 = vld [vmem:[%s1 + $0x4] sm:$0xf]
      %v480 = vld [vmem:[%s1 + $0x8] sm:$0xf]
      %v481 = vld [vmem:[%s1 + $0xc] sm:$0xf]
      %v482 = vld [vmem:[%s1 + $0x10] sm:$0xf]
      %v483 = vld [vmem:[%s1 + $0x14] sm:$0xf]
      %v484 = vld [vmem:[%s1 + $0x18] sm:$0xf]
      %v485 = vld [vmem:[%s1 + $0x1c] sm:$0xf]
      %v486 = vld [vmem:[%s1 + $0x20] sm:$0xf]
      %v487 = vld [vmem:[%s1 + $0x24] sm:$0xf]
      %v488 = vld [vmem:[%s1 + $0x28] sm:$0xf]
      %v489 = vld [vmem:[%s1 + $0x2c] sm:$0xf]
      %v490 = vld [vmem:[%s1 + $0x30] sm:$0xf]
      %v491 = vld [vmem:[%s1 + $0x34] sm:$0xf]
      %v492 = vld [vmem:[%s1 + $0x38] sm:$0xf]
      %v493 = vld [vmem:[%s1 + $0x3c] sm:$0xf]
      %v494 = vld [vmem:[%s1 + $0x40] sm:$0xf]
      %v495 = vld [vmem:[%s1 + $0x44] sm:$0xf]
      %v496 = vld [vmem:[%s1 + $0x48] sm:$0xf]
      %v497 = vld [vmem:[%s1 + $0x4c] sm:$0xf]
      %v498 = vld [vmem:[%s1 + $0x50] sm:$0xf]
      %v499 = vld [vmem:[%s1 + $0x54] sm:$0xf]
      %v500 = vld [vmem:[%s1 + $0x58] sm:$0xf]
      %v501 = vld [vmem:[%s1 + $0x5c] sm:$0xf]
      %v502 = vld [vmem:[%s1 + $0x60] sm:$0xf]
      %v503 = vld [vmem:[%s1 + $0x64] sm:$0xf]
      %v504 = vld [vmem:[%s1 + $0x68] sm:$0xf]
      %v505 = vld [vmem:[%s1 + $0x6c] sm:$0xf]
      %v506 = vld [vmem:[%s1 + $0x70] sm:$0xf]
      %v507 = vld [vmem:[%s1 + $0x74] sm:$0xf]
      %v508 = vld [vmem:[%s1 + $0x78] sm:$0xf]
      %v509 = vld [vmem:[%s1 + $0x7c] sm:$0xf]
      %s510 = scalar_lea.vmem %s1, 384
      %v511 = vld [vmem:[%s510] sm:$0xf]
      %v512 = vld [vmem:[%s510 + $0x4] sm:$0xf]
      %v513 = vld [vmem:[%s510 + $0x8] sm:$0xf]
      %v514 = vld [vmem:[%s510 + $0xc] sm:$0xf]
      %v515 = vld [vmem:[%s510 + $0x10] sm:$0xf]
      %v516 = vld [vmem:[%s510 + $0x14] sm:$0xf]
      %v517 = vld [vmem:[%s510 + $0x18] sm:$0xf]
      %v518 = vld [vmem:[%s510 + $0x1c] sm:$0xf]
      %v519 = vld [vmem:[%s510 + $0x20] sm:$0xf]
      %v520 = vld [vmem:[%s510 + $0x24] sm:$0xf]
      %v521 = vld [vmem:[%s510 + $0x28] sm:$0xf]
      %v522 = vld [vmem:[%s510 + $0x2c] sm:$0xf]
      %v523 = vld [vmem:[%s510 + $0x30] sm:$0xf]
      %v524 = vld [vmem:[%s510 + $0x34] sm:$0xf]
      %v525 = vld [vmem:[%s510 + $0x38] sm:$0xf]
      %v526 = vld [vmem:[%s510 + $0x3c] sm:$0xf]
      %v527 = vld [vmem:[%s510 + $0x40] sm:$0xf]
      %v528 = vld [vmem:[%s510 + $0x44] sm:$0xf]
      %v529 = vld [vmem:[%s510 + $0x48] sm:$0xf]
      %v530 = vld [vmem:[%s510 + $0x4c] sm:$0xf]
      %v531 = vld [vmem:[%s510 + $0x50] sm:$0xf]
      %v532 = vld [vmem:[%s510 + $0x54] sm:$0xf]
      %v533 = vld [vmem:[%s510 + $0x58] sm:$0xf]
      %v534 = vld [vmem:[%s510 + $0x5c] sm:$0xf]
      %v535 = vld [vmem:[%s510 + $0x60] sm:$0xf]
      %v536 = vld [vmem:[%s510 + $0x64] sm:$0xf]
      %v537 = vld [vmem:[%s510 + $0x68] sm:$0xf]
      %v538 = vld [vmem:[%s510 + $0x6c] sm:$0xf]
      %v539 = vld [vmem:[%s510 + $0x70] sm:$0xf]
      %v540 = vld [vmem:[%s510 + $0x74] sm:$0xf]
      %v541 = vld [vmem:[%s510 + $0x78] sm:$0xf]
      %v542 = vld [vmem:[%s510 + $0x7c] sm:$0xf]
      %v567 = vunpack.c.l.b16 %v451
      %v568 = vunpack.c.h.b16 %v451
      %v569 = vunpack.c.l.b16 %v452
      %v570 = vunpack.c.h.b16 %v452
      %v571 = vunpack.c.l.b16 %v453
      %v572 = vunpack.c.h.b16 %v453
      %v573 = vunpack.c.l.b16 %v454
      %v574 = vunpack.c.h.b16 %v454
      %v575 = vunpack.c.l.b16 %v455
      %v576 = vunpack.c.h.b16 %v455
      %v577 = vunpack.c.l.b16 %v456
      %v578 = vunpack.c.h.b16 %v456
      %v579 = vunpack.c.l.b16 %v457
      %v580 = vunpack.c.h.b16 %v457
      %v581 = vunpack.c.l.b16 %v458
      %v582 = vunpack.c.h.b16 %v458
      %v583 = vunpack.c.l.b16 %v459
      %v584 = vunpack.c.h.b16 %v459
      %v585 = vunpack.c.l.b16 %v460
      %v586 = vunpack.c.h.b16 %v460
      %v587 = vunpack.c.l.b16 %v461
      %v588 = vunpack.c.h.b16 %v461
      %v589 = vunpack.c.l.b16 %v462
      %v590 = vunpack.c.h.b16 %v462
      %v591 = vunpack.c.l.b16 %v463
      %v592 = vunpack.c.h.b16 %v463
      %v593 = vunpack.c.l.b16 %v464
      %v594 = vunpack.c.h.b16 %v464
      %v595 = vunpack.c.l.b16 %v465
      %v596 = vunpack.c.h.b16 %v465
      %v597 = vunpack.c.l.b16 %v466
      %v598 = vunpack.c.h.b16 %v466
      %v599 = vunpack.c.l.b16 %v467
      %v600 = vunpack.c.h.b16 %v467
      %v601 = vunpack.c.l.b16 %v468
      %v602 = vunpack.c.h.b16 %v468
      %v603 = vunpack.c.l.b16 %v469
      %v604 = vunpack.c.h.b16 %v469
      %v605 = vunpack.c.l.b16 %v470
      %v606 = vunpack.c.h.b16 %v470
      %v607 = vunpack.c.l.b16 %v471
      %v608 = vunpack.c.h.b16 %v471
      %v609 = vunpack.c.l.b16 %v472
      %v610 = vunpack.c.h.b16 %v472
      %v611 = vunpack.c.l.b16 %v473
      %v612 = vunpack.c.h.b16 %v473
      %v613 = vunpack.c.l.b16 %v474
      %v614 = vunpack.c.h.b16 %v474
      %v615 = vpack.c.b16 %v569, %v567
      %v616 = vpack.c.b16 %v570, %v568
      %v617 = vpack.c.b16 %v573, %v571
      %v618 = vpack.c.b16 %v574, %v572
      %v619 = vpack.c.b16 %v577, %v575
      %v620 = vpack.c.b16 %v578, %v576
      %v621 = vpack.c.b16 %v581, %v579
      %v622 = vpack.c.b16 %v582, %v580
      %v623 = vpack.c.b16 %v585, %v583
      %v624 = vpack.c.b16 %v586, %v584
      %v625 = vpack.c.b16 %v589, %v587
      %v626 = vpack.c.b16 %v590, %v588
      %v627 = vpack.c.b16 %v593, %v591
      %v628 = vpack.c.b16 %v594, %v592
      %v629 = vpack.c.b16 %v597, %v595
      %v630 = vpack.c.b16 %v598, %v596
      %v631 = vpack.c.b16 %v601, %v599
      %v632 = vpack.c.b16 %v602, %v600
      %v633 = vpack.c.b16 %v605, %v603
      %v634 = vpack.c.b16 %v606, %v604
      %v635 = vpack.c.b16 %v609, %v607
      %v636 = vpack.c.b16 %v610, %v608
      %v637 = vpack.c.b16 %v613, %v611
      %v638 = vpack.c.b16 %v614, %v612
      %v695 = vunpack.c.l.b16 %v511
      %v696 = vunpack.c.l.b16 %v512
      %v697 = vunpack.c.l.b16 %v513
      %v698 = vunpack.c.l.b16 %v514
      %v699 = vunpack.c.l.b16 %v515
      %v700 = vunpack.c.l.b16 %v516
      %v701 = vunpack.c.l.b16 %v517
      %v702 = vunpack.c.l.b16 %v518
      %v703 = vunpack.c.l.b16 %v519
      %v704 = vunpack.c.l.b16 %v520
      %v705 = vunpack.c.l.b16 %v521
      %v706 = vunpack.c.l.b16 %v522
      %v707 = vunpack.c.l.b16 %v523
      %v708 = vunpack.c.l.b16 %v524
      %v709 = vunpack.c.l.b16 %v525
      %v710 = vunpack.c.l.b16 %v526
      %v711 = vunpack.c.l.b16 %v527
      %v712 = vunpack.c.l.b16 %v528
      %v713 = vunpack.c.l.b16 %v529
      %v714 = vunpack.c.l.b16 %v530
      %v715 = vunpack.c.l.b16 %v531
      %v716 = vunpack.c.l.b16 %v532
      %v717 = vunpack.c.l.b16 %v533
      %v718 = vunpack.c.l.b16 %v534
      %v719 = vunpack.c.l.b16 %v535
      %v720 = vunpack.c.l.b16 %v536
      %v721 = vunpack.c.l.b16 %v537
      %v722 = vunpack.c.l.b16 %v538
      %v723 = vunpack.c.l.b16 %v539
      %v724 = vunpack.c.l.b16 %v540
      %v725 = vunpack.c.l.b16 %v541
      %v726 = vunpack.c.l.b16 %v542
      %v727 = vpack.c.b16 %v696, %v695
      %v728 = vpack.c.b16 %v698, %v697
      %v729 = vpack.c.b16 %v700, %v699
      %v730 = vpack.c.b16 %v702, %v701
      %v731 = vpack.c.b16 %v704, %v703
      %v732 = vpack.c.b16 %v706, %v705
      %v733 = vpack.c.b16 %v708, %v707
      %v734 = vpack.c.b16 %v710, %v709
      %v735 = vpack.c.b16 %v712, %v711
      %v736 = vpack.c.b16 %v714, %v713
      %v737 = vpack.c.b16 %v716, %v715
      %v738 = vpack.c.b16 %v718, %v717
      %v739 = vpack.c.b16 %v720, %v719
      %v740 = vpack.c.b16 %v722, %v721
      %v741 = vpack.c.b16 %v724, %v723
      %v742 = vpack.c.b16 %v726, %v725
      %759 = vmatprep.subr.bf16.mxu0 0
      %760 = vmatpush1.bf16.msra.mxu0 %v734
      %761 = vmatprep.subr.bf16.mxu0 0
      %762 = vmatpush1.bf16.msra.mxu0 %v733
      %763 = vmatprep.subr.bf16.mxu0 0
      %764 = vmatpush1.bf16.msra.mxu0 %v732
      %765 = vmatprep.subr.bf16.mxu0 0
      %766 = vmatpush1.bf16.msra.mxu0 %v731
      %767 = vmatprep.subr.bf16.mxu0 0
      %768 = vmatpush1.bf16.msra.mxu0 %v730
      %769 = vmatprep.subr.bf16.mxu0 0
      %770 = vmatpush1.bf16.msra.mxu0 %v729
      %771 = vmatprep.subr.bf16.mxu0 0
      %772 = vmatpush1.bf16.msra.mxu0 %v728
      %773 = vmatprep.subr.bf16.mxu0 0
      %774 = vmatpush1.bf16.msra.mxu0 %v727
      %775 = vmatprep.subr.bf16.mxu0 0
      %776 = vmatpush2.bf16.msra.mxu0 %v742
      %777 = vmatprep.subr.bf16.mxu0 0
      %778 = vmatpush2.bf16.msra.mxu0 %v741
      %779 = vmatprep.subr.bf16.mxu0 0
      %780 = vmatpush2.bf16.msra.mxu0 %v740
      %781 = vmatprep.subr.bf16.mxu0 0
      %782 = vmatpush2.bf16.msra.mxu0 %v739
      %783 = vmatprep.subr.bf16.mxu0 0
      %784 = vmatpush2.bf16.msra.mxu0 %v738
      %785 = vmatprep.subr.bf16.mxu0 0
      %786 = vmatpush2.bf16.msra.mxu0 %v737
      %787 = vmatprep.subr.bf16.mxu0 0
      %788 = vmatpush2.bf16.msra.mxu0 %v736
      %789 = vmatprep.subr.bf16.mxu0 0
      %790 = vmatpush2.bf16.msra.mxu0 %v735
      %791 = vmatprep.mubr.bf16.mxu0 %v616
      %792 = vmatmul.mubr.bf16.gmra.mxu0 %v615
      %v793 = vpop.f32.mrf.mxu0
      %v794 = vadd.f32 0.0, %v793
      %v795 = vpop.f32.mrf.mxu0
      %v796 = vpop.f32.mrf.mxu0
      %v797 = vadd.f32 0.0, %v796
      %v798 = vpop.f32.mrf.mxu0
      %799 = vmatprep.mubr.bf16.mxu0 %v618
      %800 = vmatmul.mubr.bf16.gmra.mxu0 %v617
      %v801 = vpop.f32.mrf.mxu0
      %v802 = vpop.f32.mrf.mxu0
      %v803 = vpop.f32.mrf.mxu0
      %v804 = vadd.f32 0.0, %v803
      %v805 = vpop.f32.mrf.mxu0
      %806 = vmatprep.mubr.bf16.mxu0 %v620
      %807 = vmatmul.mubr.bf16.gmra.mxu0 %v619
      %v808 = vpop.f32.mrf.mxu0
      %v809 = vadd.f32 0.0, %v808
      %v810 = vpop.f32.mrf.mxu0
      %v811 = vpop.f32.mrf.mxu0
      %v812 = vpop.f32.mrf.mxu0
      %813 = vmatprep.mubr.bf16.mxu0 %v622
      %814 = vmatmul.mubr.bf16.gmra.mxu0 %v621
      %v815 = vpop.f32.mrf.mxu0
      %v816 = vadd.f32 0.0, %v815
      %v817 = vpop.f32.mrf.mxu0
      %v818 = vpop.f32.mrf.mxu0
      %v819 = vadd.f32 0.0, %v818
      %v820 = vpop.f32.mrf.mxu0
      %821 = vmatprep.mubr.bf16.mxu0 %v624
      %822 = vmatmul.mubr.bf16.gmra.mxu0 %v623
      %v823 = vpop.f32.mrf.mxu0
      %v824 = vpop.f32.mrf.mxu0
      %v825 = vpop.f32.mrf.mxu0
      %v826 = vadd.f32 0.0, %v825
      %v827 = vpop.f32.mrf.mxu0
      %828 = vmatprep.mubr.bf16.mxu0 %v626
      %829 = vmatmul.mubr.bf16.gmra.mxu0 %v625
      %v830 = vpop.f32.mrf.mxu0
      %v831 = vadd.f32 0.0, %v830
      %v832 = vpop.f32.mrf.mxu0
      %v833 = vpop.f32.mrf.mxu0
      %v834 = vpop.f32.mrf.mxu0
      %835 = vmatprep.mubr.bf16.mxu0 %v628
      %836 = vmatmul.mubr.bf16.gmra.mxu0 %v627
      %v837 = vpop.f32.mrf.mxu0
      %v838 = vadd.f32 0.0, %v837
      %v839 = vpop.f32.mrf.mxu0
      %v840 = vpop.f32.mrf.mxu0
      %v841 = vadd.f32 0.0, %v840
      %v842 = vpop.f32.mrf.mxu0
      %843 = vmatprep.mubr.bf16.mxu0 %v630
      %844 = vmatmul.mubr.bf16.gmra.mxu0 %v629
      %v845 = vpop.f32.mrf.mxu0
      %v846 = vpop.f32.mrf.mxu0
      %v847 = vpop.f32.mrf.mxu0
      %v848 = vadd.f32 0.0, %v847
      %v849 = vpop.f32.mrf.mxu0
      %850 = vmatprep.mubr.bf16.mxu0 %v632
      %851 = vmatmul.mubr.bf16.gmra.mxu0 %v631
      %v852 = vpop.f32.mrf.mxu0
      %v853 = vadd.f32 0.0, %v852
      %v854 = vpop.f32.mrf.mxu0
      %v855 = vpop.f32.mrf.mxu0
      %v856 = vpop.f32.mrf.mxu0
      %857 = vmatprep.mubr.bf16.mxu0 %v634
      %858 = vmatmul.mubr.bf16.gmra.mxu0 %v633
      %v859 = vpop.f32.mrf.mxu0
      %v860 = vadd.f32 0.0, %v859
      %v861 = vpop.f32.mrf.mxu0
      %v862 = vpop.f32.mrf.mxu0
      %v863 = vadd.f32 0.0, %v862
      %v864 = vpop.f32.mrf.mxu0
      %865 = vmatprep.mubr.bf16.mxu0 %v636
      %866 = vmatmul.mubr.bf16.gmra.mxu0 %v635
      %v867 = vpop.f32.mrf.mxu0
      %v868 = vpop.f32.mrf.mxu0
      %v869 = vpop.f32.mrf.mxu0
      %v870 = vadd.f32 0.0, %v869
      %v871 = vpop.f32.mrf.mxu0
      %872 = vmatprep.mubr.bf16.mxu0 %v638
      %873 = vmatmul.mubr.bf16.gmra.mxu0 %v637
      %v874 = vpop.f32.mrf.mxu0
      %v875 = vadd.f32 0.0, %v874
      %v876 = vpop.f32.mrf.mxu0
      %v877 = vpop.f32.mrf.mxu0
      %v878 = vpop.f32.mrf.mxu0
      %879 = vdwg.mxu0
      %v883 = vunpack.c.l.b16 %v448
      %v884 = vunpack.c.h.b16 %v448
      %v885 = vunpack.c.l.b16 %v449
      %v886 = vunpack.c.h.b16 %v449
      %v887 = vunpack.c.l.b16 %v450
      %v888 = vunpack.c.h.b16 %v450
      %v889 = vpack.c.b16 %v885, %v883
      %v890 = vpack.c.b16 %v886, %v884
      %v891 = vpack.c.b16 %v567, %v887
      %v892 = vpack.c.b16 %v568, %v888
      %v893 = vpack.c.b16 %v571, %v569
      %v894 = vpack.c.b16 %v572, %v570
      %v895 = vpack.c.b16 %v575, %v573
      %v896 = vpack.c.b16 %v576, %v574
      %v897 = vpack.c.b16 %v579, %v577
      %v898 = vpack.c.b16 %v580, %v578
      %v899 = vpack.c.b16 %v583, %v581
      %v900 = vpack.c.b16 %v584, %v582
      %v901 = vpack.c.b16 %v587, %v585
      %v902 = vpack.c.b16 %v588, %v586
      %v903 = vpack.c.b16 %v591, %v589
      %v904 = vpack.c.b16 %v592, %v590
      %v905 = vpack.c.b16 %v595, %v593
      %v906 = vpack.c.b16 %v596, %v594
      %v907 = vpack.c.b16 %v599, %v597
      %v908 = vpack.c.b16 %v600, %v598
      %v909 = vpack.c.b16 %v603, %v601
      %v910 = vpack.c.b16 %v604, %v602
      %v911 = vpack.c.b16 %v607, %v605
      %v912 = vpack.c.b16 %v608, %v606
      %v969 = vunpack.c.l.b16 %v478
      %v970 = vunpack.c.l.b16 %v479
      %v971 = vunpack.c.l.b16 %v480
      %v972 = vunpack.c.l.b16 %v481
      %v973 = vunpack.c.l.b16 %v482
      %v974 = vunpack.c.l.b16 %v483
      %v975 = vunpack.c.l.b16 %v484
      %v976 = vunpack.c.l.b16 %v485
      %v977 = vunpack.c.l.b16 %v486
      %v978 = vunpack.c.l.b16 %v487
      %v979 = vunpack.c.l.b16 %v488
      %v980 = vunpack.c.l.b16 %v489
      %v981 = vunpack.c.l.b16 %v490
      %v982 = vunpack.c.l.b16 %v491
      %v983 = vunpack.c.l.b16 %v492
      %v984 = vunpack.c.l.b16 %v493
      %v985 = vunpack.c.l.b16 %v494
      %v986 = vunpack.c.l.b16 %v495
      %v987 = vunpack.c.l.b16 %v496
      %v988 = vunpack.c.l.b16 %v497
      %v989 = vunpack.c.l.b16 %v498
      %v990 = vunpack.c.l.b16 %v499
      %v991 = vunpack.c.l.b16 %v500
      %v992 = vunpack.c.l.b16 %v501
      %v993 = vunpack.c.l.b16 %v502
      %v994 = vunpack.c.l.b16 %v503
      %v995 = vunpack.c.l.b16 %v504
      %v996 = vunpack.c.l.b16 %v505
      %v997 = vunpack.c.l.b16 %v506
      %v998 = vunpack.c.l.b16 %v507
      %v999 = vunpack.c.l.b16 %v508
      %v1000 = vunpack.c.l.b16 %v509
      %v1001 = vpack.c.b16 %v970, %v969
      %v1002 = vpack.c.b16 %v972, %v971
      %v1003 = vpack.c.b16 %v974, %v973
      %v1004 = vpack.c.b16 %v976, %v975
      %v1005 = vpack.c.b16 %v978, %v977
      %v1006 = vpack.c.b16 %v980, %v979
      %v1007 = vpack.c.b16 %v982, %v981
      %v1008 = vpack.c.b16 %v984, %v983
      %v1009 = vpack.c.b16 %v986, %v985
      %v1010 = vpack.c.b16 %v988, %v987
      %v1011 = vpack.c.b16 %v990, %v989
      %v1012 = vpack.c.b16 %v992, %v991
      %v1013 = vpack.c.b16 %v994, %v993
      %v1014 = vpack.c.b16 %v996, %v995
      %v1015 = vpack.c.b16 %v998, %v997
      %v1016 = vpack.c.b16 %v1000, %v999
      %1033 = vmatprep.subr.bf16.mxu0 0
      %1034 = vmatpush1.bf16.msra.mxu0 %v1008
      %1035 = vmatprep.subr.bf16.mxu0 0
      %1036 = vmatpush1.bf16.msra.mxu0 %v1007
      %1037 = vmatprep.subr.bf16.mxu0 0
      %1038 = vmatpush1.bf16.msra.mxu0 %v1006
      %1039 = vmatprep.subr.bf16.mxu0 0
      %1040 = vmatpush1.bf16.msra.mxu0 %v1005
      %1041 = vmatprep.subr.bf16.mxu0 0
      %1042 = vmatpush1.bf16.msra.mxu0 %v1004
      %1043 = vmatprep.subr.bf16.mxu0 0
      %1044 = vmatpush1.bf16.msra.mxu0 %v1003
      %1045 = vmatprep.subr.bf16.mxu0 0
      %1046 = vmatpush1.bf16.msra.mxu0 %v1002
      %1047 = vmatprep.subr.bf16.mxu0 0
      %1048 = vmatpush1.bf16.msra.mxu0 %v1001
      %1049 = vmatprep.subr.bf16.mxu0 0
      %1050 = vmatpush2.bf16.msra.mxu0 %v1016
      %1051 = vmatprep.subr.bf16.mxu0 0
      %1052 = vmatpush2.bf16.msra.mxu0 %v1015
      %1053 = vmatprep.subr.bf16.mxu0 0
      %1054 = vmatpush2.bf16.msra.mxu0 %v1014
      %1055 = vmatprep.subr.bf16.mxu0 0
      %1056 = vmatpush2.bf16.msra.mxu0 %v1013
      %1057 = vmatprep.subr.bf16.mxu0 0
      %1058 = vmatpush2.bf16.msra.mxu0 %v1012
      %1059 = vmatprep.subr.bf16.mxu0 0
      %1060 = vmatpush2.bf16.msra.mxu0 %v1011
      %1061 = vmatprep.subr.bf16.mxu0 0
      %1062 = vmatpush2.bf16.msra.mxu0 %v1010
      %1063 = vmatprep.subr.bf16.mxu0 0
      %1064 = vmatpush2.bf16.msra.mxu0 %v1009
      %1065 = vmatprep.mubr.bf16.mxu0 %v890
      %1066 = vmatmul.mubr.bf16.gmra.mxu0 %v889
      %v1067 = vpop.f32.mrf.mxu0
      %v1068 = vadd.f32 %v794, %v1067
      %v1069 = vpop.f32.mrf.mxu0
      %v1070 = vpop.f32.mrf.mxu0
      %v1071 = vadd.f32 %v797, %v1070
      %v1072 = vpop.f32.mrf.mxu0
      %1073 = vmatprep.mubr.bf16.mxu0 %v892
      %1074 = vmatmul.mubr.bf16.gmra.mxu0 %v891
      %v1075 = vpop.f32.mrf.mxu0
      %v1076 = vpop.f32.mrf.mxu0
      %v1077 = vpop.f32.mrf.mxu0
      %v1078 = vadd.f32 %v804, %v1077
      %v1079 = vpop.f32.mrf.mxu0
      %1080 = vmatprep.mubr.bf16.mxu0 %v894
      %1081 = vmatmul.mubr.bf16.gmra.mxu0 %v893
      %v1082 = vpop.f32.mrf.mxu0
      %v1083 = vadd.f32 %v809, %v1082
      %v1084 = vpop.f32.mrf.mxu0
      %v1085 = vpop.f32.mrf.mxu0
      %v1086 = vpop.f32.mrf.mxu0
      %1087 = vmatprep.mubr.bf16.mxu0 %v896
      %1088 = vmatmul.mubr.bf16.gmra.mxu0 %v895
      %v1089 = vpop.f32.mrf.mxu0
      %v1090 = vadd.f32 %v816, %v1089
      %v1091 = vpop.f32.mrf.mxu0
      %v1092 = vpop.f32.mrf.mxu0
      %v1093 = vadd.f32 %v819, %v1092
      %v1094 = vpop.f32.mrf.mxu0
      %1095 = vmatprep.mubr.bf16.mxu0 %v898
      %1096 = vmatmul.mubr.bf16.gmra.mxu0 %v897
      %v1097 = vpop.f32.mrf.mxu0
      %v1098 = vpop.f32.mrf.mxu0
      %v1099 = vpop.f32.mrf.mxu0
      %v1100 = vadd.f32 %v826, %v1099
      %v1101 = vpop.f32.mrf.mxu0
      %1102 = vmatprep.mubr.bf16.mxu0 %v900
      %1103 = vmatmul.mubr.bf16.gmra.mxu0 %v899
      %v1104 = vpop.f32.mrf.mxu0
      %v1105 = vadd.f32 %v831, %v1104
      %v1106 = vpop.f32.mrf.mxu0
      %v1107 = vpop.f32.mrf.mxu0
      %v1108 = vpop.f32.mrf.mxu0
      %1109 = vmatprep.mubr.bf16.mxu0 %v902
      %1110 = vmatmul.mubr.bf16.gmra.mxu0 %v901
      %v1111 = vpop.f32.mrf.mxu0
      %v1112 = vadd.f32 %v838, %v1111
      %v1113 = vpop.f32.mrf.mxu0
      %v1114 = vpop.f32.mrf.mxu0
      %v1115 = vadd.f32 %v841, %v1114
      %v1116 = vpop.f32.mrf.mxu0
      %1117 = vmatprep.mubr.bf16.mxu0 %v904
      %1118 = vmatmul.mubr.bf16.gmra.mxu0 %v903
      %v1119 = vpop.f32.mrf.mxu0
      %v1120 = vpop.f32.mrf.mxu0
      %v1121 = vpop.f32.mrf.mxu0
      %v1122 = vadd.f32 %v848, %v1121
      %v1123 = vpop.f32.mrf.mxu0
      %1124 = vmatprep.mubr.bf16.mxu0 %v906
      %1125 = vmatmul.mubr.bf16.gmra.mxu0 %v905
      %v1126 = vpop.f32.mrf.mxu0
      %v1127 = vadd.f32 %v853, %v1126
      %v1128 = vpop.f32.mrf.mxu0
      %v1129 = vpop.f32.mrf.mxu0
      %v1130 = vpop.f32.mrf.mxu0
      %1131 = vmatprep.mubr.bf16.mxu0 %v908
      %1132 = vmatmul.mubr.bf16.gmra.mxu0 %v907
      %v1133 = vpop.f32.mrf.mxu0
      %v1134 = vadd.f32 %v860, %v1133
      %v1135 = vpop.f32.mrf.mxu0
      %v1136 = vpop.f32.mrf.mxu0
      %v1137 = vadd.f32 %v863, %v1136
      %v1138 = vpop.f32.mrf.mxu0
      %1139 = vmatprep.mubr.bf16.mxu0 %v910
      %1140 = vmatmul.mubr.bf16.gmra.mxu0 %v909
      %v1141 = vpop.f32.mrf.mxu0
      %v1142 = vpop.f32.mrf.mxu0
      %v1143 = vpop.f32.mrf.mxu0
      %v1144 = vadd.f32 %v870, %v1143
      %v1145 = vpop.f32.mrf.mxu0
      %1146 = vmatprep.mubr.bf16.mxu0 %v912
      %1147 = vmatmul.mubr.bf16.gmra.mxu0 %v911
      %v1148 = vpop.f32.mrf.mxu0
      %v1149 = vadd.f32 %v875, %v1148
      %v1150 = vpop.f32.mrf.mxu0
      %v1151 = vpop.f32.mrf.mxu0
      %v1152 = vpop.f32.mrf.mxu0
      %1153 = vdwg.mxu0
      %s1154 = scalar_lea.vmem %s1, 768
      %v1155 = vld [vmem:[%s1154] sm:$0xf]
      %v1156 = vld [vmem:[%s1154 + $0x4] sm:$0xf]
      %v1157 = vld [vmem:[%s1154 + $0x8] sm:$0xf]
      %v1158 = vld [vmem:[%s1154 + $0xc] sm:$0xf]
      %v1159 = vld [vmem:[%s1154 + $0x10] sm:$0xf]
      %v1160 = vld [vmem:[%s1154 + $0x14] sm:$0xf]
      %v1161 = vld [vmem:[%s1154 + $0x18] sm:$0xf]
      %v1162 = vld [vmem:[%s1154 + $0x1c] sm:$0xf]
      %v1163 = vld [vmem:[%s1154 + $0x20] sm:$0xf]
      %v1164 = vld [vmem:[%s1154 + $0x24] sm:$0xf]
      %v1165 = vld [vmem:[%s1154 + $0x28] sm:$0xf]
      %v1166 = vld [vmem:[%s1154 + $0x2c] sm:$0xf]
      %v1167 = vld [vmem:[%s1154 + $0x30] sm:$0xf]
      %v1168 = vld [vmem:[%s1154 + $0x34] sm:$0xf]
      %v1169 = vld [vmem:[%s1154 + $0x38] sm:$0xf]
      %v1170 = vld [vmem:[%s1154 + $0x3c] sm:$0xf]
      %v1171 = vld [vmem:[%s1154 + $0x40] sm:$0xf]
      %v1172 = vld [vmem:[%s1154 + $0x44] sm:$0xf]
      %v1173 = vld [vmem:[%s1154 + $0x48] sm:$0xf]
      %v1174 = vld [vmem:[%s1154 + $0x4c] sm:$0xf]
      %v1175 = vld [vmem:[%s1154 + $0x50] sm:$0xf]
      %v1176 = vld [vmem:[%s1154 + $0x54] sm:$0xf]
      %v1177 = vld [vmem:[%s1154 + $0x58] sm:$0xf]
      %v1178 = vld [vmem:[%s1154 + $0x5c] sm:$0xf]
      %v1179 = vld [vmem:[%s1154 + $0x60] sm:$0xf]
      %v1180 = vld [vmem:[%s1154 + $0x64] sm:$0xf]
      %v1181 = vld [vmem:[%s1154 + $0x68] sm:$0xf]
      %v1182 = vld [vmem:[%s1154 + $0x6c] sm:$0xf]
      %v1183 = vld [vmem:[%s1154 + $0x70] sm:$0xf]
      %v1184 = vld [vmem:[%s1154 + $0x74] sm:$0xf]
      %v1185 = vld [vmem:[%s1154 + $0x78] sm:$0xf]
      %v1186 = vld [vmem:[%s1154 + $0x7c] sm:$0xf]
      %v1190 = vunpack.c.l.b16 %v475
      %v1191 = vunpack.c.h.b16 %v475
      %v1192 = vunpack.c.l.b16 %v476
      %v1193 = vunpack.c.h.b16 %v476
      %v1194 = vunpack.c.l.b16 %v477
      %v1195 = vunpack.c.h.b16 %v477
      %v1196 = vpack.c.b16 %v611, %v609
      %v1197 = vpack.c.b16 %v612, %v610
      %v1198 = vpack.c.b16 %v1190, %v613
      %v1199 = vpack.c.b16 %v1191, %v614
      %v1200 = vpack.c.b16 %v1194, %v1192
      %v1201 = vpack.c.b16 %v1195, %v1193
      %v1240 = vunpack.c.l.b16 %v1155
      %v1241 = vunpack.c.l.b16 %v1156
      %v1242 = vunpack.c.l.b16 %v1157
      %v1243 = vunpack.c.l.b16 %v1158
      %v1244 = vunpack.c.l.b16 %v1159
      %v1245 = vunpack.c.l.b16 %v1160
      %v1246 = vunpack.c.l.b16 %v1161
      %v1247 = vunpack.c.l.b16 %v1162
      %v1248 = vunpack.c.l.b16 %v1163
      %v1249 = vunpack.c.l.b16 %v1164
      %v1250 = vunpack.c.l.b16 %v1165
      %v1251 = vunpack.c.l.b16 %v1166
      %v1252 = vunpack.c.l.b16 %v1167
      %v1253 = vunpack.c.l.b16 %v1168
      %v1254 = vunpack.c.l.b16 %v1169
      %v1255 = vunpack.c.l.b16 %v1170
      %v1256 = vunpack.c.l.b16 %v1171
      %v1257 = vunpack.c.l.b16 %v1172
      %v1258 = vunpack.c.l.b16 %v1173
      %v1259 = vunpack.c.l.b16 %v1174
      %v1260 = vunpack.c.l.b16 %v1175
      %v1261 = vunpack.c.l.b16 %v1176
      %v1262 = vunpack.c.l.b16 %v1177
      %v1263 = vunpack.c.l.b16 %v1178
      %v1264 = vunpack.c.l.b16 %v1179
      %v1265 = vunpack.c.l.b16 %v1180
      %v1266 = vunpack.c.l.b16 %v1181
      %v1267 = vunpack.c.l.b16 %v1182
      %v1268 = vunpack.c.l.b16 %v1183
      %v1269 = vunpack.c.l.b16 %v1184
      %v1270 = vunpack.c.l.b16 %v1185
      %v1271 = vunpack.c.l.b16 %v1186
      %v1272 = vpack.c.b16 %v1241, %v1240
      %v1273 = vpack.c.b16 %v1243, %v1242
      %v1274 = vpack.c.b16 %v1245, %v1244
      %v1275 = vpack.c.b16 %v1247, %v1246
      %v1276 = vpack.c.b16 %v1249, %v1248
      %v1277 = vpack.c.b16 %v1251, %v1250
      %v1278 = vpack.c.b16 %v1253, %v1252
      %v1279 = vpack.c.b16 %v1255, %v1254
      %v1280 = vpack.c.b16 %v1257, %v1256
      %v1281 = vpack.c.b16 %v1259, %v1258
      %v1282 = vpack.c.b16 %v1261, %v1260
      %v1283 = vpack.c.b16 %v1263, %v1262
      %v1284 = vpack.c.b16 %v1265, %v1264
      %v1285 = vpack.c.b16 %v1267, %v1266
      %v1286 = vpack.c.b16 %v1269, %v1268
      %v1287 = vpack.c.b16 %v1271, %v1270
      %1304 = vmatprep.subr.bf16.mxu0 0
      %1305 = vmatpush1.bf16.msra.mxu0 %v1279
      %1306 = vmatprep.subr.bf16.mxu0 0
      %1307 = vmatpush1.bf16.msra.mxu0 %v1278
      %1308 = vmatprep.subr.bf16.mxu0 0
      %1309 = vmatpush1.bf16.msra.mxu0 %v1277
      %1310 = vmatprep.subr.bf16.mxu0 0
      %1311 = vmatpush1.bf16.msra.mxu0 %v1276
      %1312 = vmatprep.subr.bf16.mxu0 0
      %1313 = vmatpush1.bf16.msra.mxu0 %v1275
      %1314 = vmatprep.subr.bf16.mxu0 0
      %1315 = vmatpush1.bf16.msra.mxu0 %v1274
      %1316 = vmatprep.subr.bf16.mxu0 0
      %1317 = vmatpush1.bf16.msra.mxu0 %v1273
      %1318 = vmatprep.subr.bf16.mxu0 0
      %1319 = vmatpush1.bf16.msra.mxu0 %v1272
      %1320 = vmatprep.subr.bf16.mxu0 0
      %1321 = vmatpush2.bf16.msra.mxu0 %v1287
      %1322 = vmatprep.subr.bf16.mxu0 0
      %1323 = vmatpush2.bf16.msra.mxu0 %v1286
      %1324 = vmatprep.subr.bf16.mxu0 0
      %1325 = vmatpush2.bf16.msra.mxu0 %v1285
      %1326 = vmatprep.subr.bf16.mxu0 0
      %1327 = vmatpush2.bf16.msra.mxu0 %v1284
      %1328 = vmatprep.subr.bf16.mxu0 0
      %1329 = vmatpush2.bf16.msra.mxu0 %v1283
      %1330 = vmatprep.subr.bf16.mxu0 0
      %1331 = vmatpush2.bf16.msra.mxu0 %v1282
      %1332 = vmatprep.subr.bf16.mxu0 0
      %1333 = vmatpush2.bf16.msra.mxu0 %v1281
      %1334 = vmatprep.subr.bf16.mxu0 0
      %1335 = vmatpush2.bf16.msra.mxu0 %v1280
      %1336 = vmatprep.mubr.bf16.mxu0 %v896
      %1337 = vmatmul.mubr.bf16.gmra.mxu0 %v895
      %v1338 = vpop.f32.mrf.mxu0
      %v1339 = vadd.f32 0.0, %v1338
      %v1340 = vpop.f32.mrf.mxu0
      %v1341 = vpop.f32.mrf.mxu0
      %v1342 = vadd.f32 0.0, %v1341
      %v1343 = vpop.f32.mrf.mxu0
      %1344 = vmatprep.mubr.bf16.mxu0 %v898
      %1345 = vmatmul.mubr.bf16.gmra.mxu0 %v897
      %v1346 = vpop.f32.mrf.mxu0
      %v1347 = vpop.f32.mrf.mxu0
      %v1348 = vpop.f32.mrf.mxu0
      %v1349 = vadd.f32 0.0, %v1348
      %v1350 = vpop.f32.mrf.mxu0
      %1351 = vmatprep.mubr.bf16.mxu0 %v900
      %1352 = vmatmul.mubr.bf16.gmra.mxu0 %v899
      %v1353 = vpop.f32.mrf.mxu0
      %v1354 = vadd.f32 0.0, %v1353
      %v1355 = vpop.f32.mrf.mxu0
      %v1356 = vpop.f32.mrf.mxu0
      %v1357 = vpop.f32.mrf.mxu0
      %1358 = vmatprep.mubr.bf16.mxu0 %v902
      %1359 = vmatmul.mubr.bf16.gmra.mxu0 %v901
      %v1360 = vpop.f32.mrf.mxu0
      %v1361 = vadd.f32 0.0, %v1360
      %v1362 = vpop.f32.mrf.mxu0
      %v1363 = vpop.f32.mrf.mxu0
      %v1364 = vadd.f32 0.0, %v1363
      %v1365 = vpop.f32.mrf.mxu0
      %1366 = vmatprep.mubr.bf16.mxu0 %v904
      %1367 = vmatmul.mubr.bf16.gmra.mxu0 %v903
      %v1368 = vpop.f32.mrf.mxu0
      %v1369 = vpop.f32.mrf.mxu0
      %v1370 = vpop.f32.mrf.mxu0
      %v1371 = vadd.f32 0.0, %v1370
      %v1372 = vpop.f32.mrf.mxu0
      %1373 = vmatprep.mubr.bf16.mxu0 %v906
      %1374 = vmatmul.mubr.bf16.gmra.mxu0 %v905
      %v1375 = vpop.f32.mrf.mxu0
      %v1376 = vadd.f32 0.0, %v1375
      %v1377 = vpop.f32.mrf.mxu0
      %v1378 = vpop.f32.mrf.mxu0
      %v1379 = vpop.f32.mrf.mxu0
      %1380 = vmatprep.mubr.bf16.mxu0 %v908
      %1381 = vmatmul.mubr.bf16.gmra.mxu0 %v907
      %v1382 = vpop.f32.mrf.mxu0
      %v1383 = vadd.f32 0.0, %v1382
      %v1384 = vpop.f32.mrf.mxu0
      %v1385 = vpop.f32.mrf.mxu0
      %v1386 = vadd.f32 0.0, %v1385
      %v1387 = vpop.f32.mrf.mxu0
      %1388 = vmatprep.mubr.bf16.mxu0 %v910
      %1389 = vmatmul.mubr.bf16.gmra.mxu0 %v909
      %v1390 = vpop.f32.mrf.mxu0
      %v1391 = vpop.f32.mrf.mxu0
      %v1392 = vpop.f32.mrf.mxu0
      %v1393 = vadd.f32 0.0, %v1392
      %v1394 = vpop.f32.mrf.mxu0
      %1395 = vmatprep.mubr.bf16.mxu0 %v912
      %1396 = vmatmul.mubr.bf16.gmra.mxu0 %v911
      %v1397 = vpop.f32.mrf.mxu0
      %v1398 = vadd.f32 0.0, %v1397
      %v1399 = vpop.f32.mrf.mxu0
      %v1400 = vpop.f32.mrf.mxu0
      %v1401 = vpop.f32.mrf.mxu0
      %1402 = vmatprep.mubr.bf16.mxu0 %v1197
      %1403 = vmatmul.mubr.bf16.gmra.mxu0 %v1196
      %v1404 = vpop.f32.mrf.mxu0
      %v1405 = vadd.f32 0.0, %v1404
      %v1406 = vpop.f32.mrf.mxu0
      %v1407 = vpop.f32.mrf.mxu0
      %v1408 = vadd.f32 0.0, %v1407
      %v1409 = vpop.f32.mrf.mxu0
      %1410 = vmatprep.mubr.bf16.mxu0 %v1199
      %1411 = vmatmul.mubr.bf16.gmra.mxu0 %v1198
      %v1412 = vpop.f32.mrf.mxu0
      %v1413 = vpop.f32.mrf.mxu0
      %v1414 = vpop.f32.mrf.mxu0
      %v1415 = vadd.f32 0.0, %v1414
      %v1416 = vpop.f32.mrf.mxu0
      %1417 = vmatprep.mubr.bf16.mxu0 %v1201
      %1418 = vmatmul.mubr.bf16.gmra.mxu0 %v1200
      %v1419 = vpop.f32.mrf.mxu0
      %v1420 = vadd.f32 0.0, %v1419
      %v1421 = vpop.f32.mrf.mxu0
      %v1422 = vpop.f32.mrf.mxu0
      %v1423 = vpop.f32.mrf.mxu0
      %1424 = vdwg.mxu0
      %v1425 = vadd.f32 %v1068, %v1339
      %v1426 = vadd.f32 %v1071, %v1342
      %v1427 = vadd.f32 %v1078, %v1349
      %v1428 = vadd.f32 %v1083, %v1354
      %v1429 = vadd.f32 %v1090, %v1361
      %v1430 = vadd.f32 %v1093, %v1364
      %v1431 = vadd.f32 %v1100, %v1371
      %v1432 = vadd.f32 %v1105, %v1376
      %v1433 = vadd.f32 %v1112, %v1383
      %v1434 = vadd.f32 %v1115, %v1386
      %v1435 = vadd.f32 %v1122, %v1393
      %v1436 = vadd.f32 %v1127, %v1398
      %v1437 = vadd.f32 %v1134, %v1405
      %v1438 = vadd.f32 %v1137, %v1408
      %v1439 = vadd.f32 %v1144, %v1415
      %v1440 = vadd.f32 %v1149, %v1420
      %v1441 = vadd.f32 %v1425, 0.0
      %v1442 = vadd.f32 %v1426, 0.0
      %v1443 = vadd.f32 %v1427, 0.0
      %v1444 = vadd.f32 %v1428, 0.0
      %v1445 = vadd.f32 %v1429, 0.0
      %v1446 = vadd.f32 %v1430, 0.0
      %v1447 = vadd.f32 %v1431, 0.0
      %v1448 = vadd.f32 %v1432, 0.0
      %v1449 = vadd.f32 %v1433, 0.0
      %v1450 = vadd.f32 %v1434, 0.0
      %v1451 = vadd.f32 %v1435, 0.0
      %v1452 = vadd.f32 %v1436, 0.0
      %v1453 = vadd.f32 %v1437, 0.0
      %v1454 = vadd.f32 %v1438, 0.0
      %v1455 = vadd.f32 %v1439, 0.0
      %v1456 = vadd.f32 %v1440, 0.0
      %s1457 = scalar_lea.vmem %s1, 128
      %v1458 = vld [vmem:[%s1457] sm:$0xf]
      %v1459 = vld [vmem:[%s1457 + $0x4] sm:$0xf]
      %v1460 = vld [vmem:[%s1457 + $0x8] sm:$0xf]
      %v1461 = vld [vmem:[%s1457 + $0xc] sm:$0xf]
      %v1462 = vld [vmem:[%s1457 + $0x10] sm:$0xf]
      %v1463 = vld [vmem:[%s1457 + $0x14] sm:$0xf]
      %v1464 = vld [vmem:[%s1457 + $0x18] sm:$0xf]
      %v1465 = vld [vmem:[%s1457 + $0x1c] sm:$0xf]
      %v1466 = vld [vmem:[%s1457 + $0x20] sm:$0xf]
      %v1467 = vld [vmem:[%s1457 + $0x24] sm:$0xf]
      %v1468 = vld [vmem:[%s1457 + $0x28] sm:$0xf]
      %v1469 = vld [vmem:[%s1457 + $0x2c] sm:$0xf]
      %v1470 = vld [vmem:[%s1457 + $0x30] sm:$0xf]
      %v1471 = vld [vmem:[%s1457 + $0x34] sm:$0xf]
      %v1472 = vld [vmem:[%s1457 + $0x38] sm:$0xf]
      %v1473 = vld [vmem:[%s1457 + $0x3c] sm:$0xf]
      %v1474 = vld [vmem:[%s1457 + $0x40] sm:$0xf]
      %v1475 = vld [vmem:[%s1457 + $0x44] sm:$0xf]
      %v1476 = vld [vmem:[%s1457 + $0x48] sm:$0xf]
      %v1477 = vld [vmem:[%s1457 + $0x4c] sm:$0xf]
      %v1478 = vld [vmem:[%s1457 + $0x50] sm:$0xf]
      %v1479 = vld [vmem:[%s1457 + $0x54] sm:$0xf]
      %v1480 = vld [vmem:[%s1457 + $0x58] sm:$0xf]
      %v1481 = vld [vmem:[%s1457 + $0x5c] sm:$0xf]
      %v1482 = vld [vmem:[%s1457 + $0x60] sm:$0xf]
      %v1483 = vld [vmem:[%s1457 + $0x64] sm:$0xf]
      %v1484 = vld [vmem:[%s1457 + $0x68] sm:$0xf]
      %v1485 = vld [vmem:[%s1457 + $0x6c] sm:$0xf]
      %v1486 = vld [vmem:[%s1457 + $0x70] sm:$0xf]
      %v1487 = vld [vmem:[%s1457 + $0x74] sm:$0xf]
      %v1488 = vld [vmem:[%s1457 + $0x78] sm:$0xf]
      %v1489 = vld [vmem:[%s1457 + $0x7c] sm:$0xf]
      %s1490 = scalar_lea.vmem %s1, 512
      %v1491 = vld [vmem:[%s1490] sm:$0xf]
      %v1492 = vld [vmem:[%s1490 + $0x4] sm:$0xf]
      %v1493 = vld [vmem:[%s1490 + $0x8] sm:$0xf]
      %v1494 = vld [vmem:[%s1490 + $0xc] sm:$0xf]
      %v1495 = vld [vmem:[%s1490 + $0x10] sm:$0xf]
      %v1496 = vld [vmem:[%s1490 + $0x14] sm:$0xf]
      %v1497 = vld [vmem:[%s1490 + $0x18] sm:$0xf]
      %v1498 = vld [vmem:[%s1490 + $0x1c] sm:$0xf]
      %v1499 = vld [vmem:[%s1490 + $0x20] sm:$0xf]
      %v1500 = vld [vmem:[%s1490 + $0x24] sm:$0xf]
      %v1501 = vld [vmem:[%s1490 + $0x28] sm:$0xf]
      %v1502 = vld [vmem:[%s1490 + $0x2c] sm:$0xf]
      %v1503 = vld [vmem:[%s1490 + $0x30] sm:$0xf]
      %v1504 = vld [vmem:[%s1490 + $0x34] sm:$0xf]
      %v1505 = vld [vmem:[%s1490 + $0x38] sm:$0xf]
      %v1506 = vld [vmem:[%s1490 + $0x3c] sm:$0xf]
      %v1507 = vld [vmem:[%s1490 + $0x40] sm:$0xf]
      %v1508 = vld [vmem:[%s1490 + $0x44] sm:$0xf]
      %v1509 = vld [vmem:[%s1490 + $0x48] sm:$0xf]
      %v1510 = vld [vmem:[%s1490 + $0x4c] sm:$0xf]
      %v1511 = vld [vmem:[%s1490 + $0x50] sm:$0xf]
      %v1512 = vld [vmem:[%s1490 + $0x54] sm:$0xf]
      %v1513 = vld [vmem:[%s1490 + $0x58] sm:$0xf]
      %v1514 = vld [vmem:[%s1490 + $0x5c] sm:$0xf]
      %v1515 = vld [vmem:[%s1490 + $0x60] sm:$0xf]
      %v1516 = vld [vmem:[%s1490 + $0x64] sm:$0xf]
      %v1517 = vld [vmem:[%s1490 + $0x68] sm:$0xf]
      %v1518 = vld [vmem:[%s1490 + $0x6c] sm:$0xf]
      %v1519 = vld [vmem:[%s1490 + $0x70] sm:$0xf]
      %v1520 = vld [vmem:[%s1490 + $0x74] sm:$0xf]
      %v1521 = vld [vmem:[%s1490 + $0x78] sm:$0xf]
      %v1522 = vld [vmem:[%s1490 + $0x7c] sm:$0xf]
      %v1555 = vunpack.c.l.b16 %v1491
      %v1556 = vunpack.c.l.b16 %v1492
      %v1557 = vunpack.c.l.b16 %v1493
      %v1558 = vunpack.c.l.b16 %v1494
      %v1559 = vunpack.c.l.b16 %v1495
      %v1560 = vunpack.c.l.b16 %v1496
      %v1561 = vunpack.c.l.b16 %v1497
      %v1562 = vunpack.c.l.b16 %v1498
      %v1563 = vunpack.c.l.b16 %v1499
      %v1564 = vunpack.c.l.b16 %v1500
      %v1565 = vunpack.c.l.b16 %v1501
      %v1566 = vunpack.c.l.b16 %v1502
      %v1567 = vunpack.c.l.b16 %v1503
      %v1568 = vunpack.c.l.b16 %v1504
      %v1569 = vunpack.c.l.b16 %v1505
      %v1570 = vunpack.c.l.b16 %v1506
      %v1571 = vunpack.c.l.b16 %v1507
      %v1572 = vunpack.c.l.b16 %v1508
      %v1573 = vunpack.c.l.b16 %v1509
      %v1574 = vunpack.c.l.b16 %v1510
      %v1575 = vunpack.c.l.b16 %v1511
      %v1576 = vunpack.c.l.b16 %v1512
      %v1577 = vunpack.c.l.b16 %v1513
      %v1578 = vunpack.c.l.b16 %v1514
      %v1579 = vunpack.c.l.b16 %v1515
      %v1580 = vunpack.c.l.b16 %v1516
      %v1581 = vunpack.c.l.b16 %v1517
      %v1582 = vunpack.c.l.b16 %v1518
      %v1583 = vunpack.c.l.b16 %v1519
      %v1584 = vunpack.c.l.b16 %v1520
      %v1585 = vunpack.c.l.b16 %v1521
      %v1586 = vunpack.c.l.b16 %v1522
      %v1587 = vpack.c.b16 %v1556, %v1555
      %v1588 = vpack.c.b16 %v1558, %v1557
      %v1589 = vpack.c.b16 %v1560, %v1559
      %v1590 = vpack.c.b16 %v1562, %v1561
      %v1591 = vpack.c.b16 %v1564, %v1563
      %v1592 = vpack.c.b16 %v1566, %v1565
      %v1593 = vpack.c.b16 %v1568, %v1567
      %v1594 = vpack.c.b16 %v1570, %v1569
      %v1595 = vpack.c.b16 %v1572, %v1571
      %v1596 = vpack.c.b16 %v1574, %v1573
      %v1597 = vpack.c.b16 %v1576, %v1575
      %v1598 = vpack.c.b16 %v1578, %v1577
      %v1599 = vpack.c.b16 %v1580, %v1579
      %v1600 = vpack.c.b16 %v1582, %v1581
      %v1601 = vpack.c.b16 %v1584, %v1583
      %v1602 = vpack.c.b16 %v1586, %v1585
      %1619 = vmatprep.subr.bf16.mxu0 0
      %1620 = vmatpush1.bf16.msra.mxu0 %v1594
      %1621 = vmatprep.subr.bf16.mxu0 0
      %1622 = vmatpush1.bf16.msra.mxu0 %v1593
      %1623 = vmatprep.subr.bf16.mxu0 0
      %1624 = vmatpush1.bf16.msra.mxu0 %v1592
      %1625 = vmatprep.subr.bf16.mxu0 0
      %1626 = vmatpush1.bf16.msra.mxu0 %v1591
      %1627 = vmatprep.subr.bf16.mxu0 0
      %1628 = vmatpush1.bf16.msra.mxu0 %v1590
      %1629 = vmatprep.subr.bf16.mxu0 0
      %1630 = vmatpush1.bf16.msra.mxu0 %v1589
      %1631 = vmatprep.subr.bf16.mxu0 0
      %1632 = vmatpush1.bf16.msra.mxu0 %v1588
      %1633 = vmatprep.subr.bf16.mxu0 0
      %1634 = vmatpush1.bf16.msra.mxu0 %v1587
      %1635 = vmatprep.subr.bf16.mxu0 0
      %1636 = vmatpush2.bf16.msra.mxu0 %v1602
      %1637 = vmatprep.subr.bf16.mxu0 0
      %1638 = vmatpush2.bf16.msra.mxu0 %v1601
      %1639 = vmatprep.subr.bf16.mxu0 0
      %1640 = vmatpush2.bf16.msra.mxu0 %v1600
      %1641 = vmatprep.subr.bf16.mxu0 0
      %1642 = vmatpush2.bf16.msra.mxu0 %v1599
      %1643 = vmatprep.subr.bf16.mxu0 0
      %1644 = vmatpush2.bf16.msra.mxu0 %v1598
      %1645 = vmatprep.subr.bf16.mxu0 0
      %1646 = vmatpush2.bf16.msra.mxu0 %v1597
      %1647 = vmatprep.subr.bf16.mxu0 0
      %1648 = vmatpush2.bf16.msra.mxu0 %v1596
      %1649 = vmatprep.subr.bf16.mxu0 0
      %1650 = vmatpush2.bf16.msra.mxu0 %v1595
      %1651 = vmatprep.mubr.bf16.mxu0 %v616
      %1652 = vmatmul.mubr.bf16.gmra.mxu0 %v615
      %v1653 = vpop.f32.mrf.mxu0
      %v1654 = vadd.f32 0.0, %v1653
      %v1655 = vpop.f32.mrf.mxu0
      %v1656 = vpop.f32.mrf.mxu0
      %v1657 = vadd.f32 0.0, %v1656
      %v1658 = vpop.f32.mrf.mxu0
      %1659 = vmatprep.mubr.bf16.mxu0 %v618
      %1660 = vmatmul.mubr.bf16.gmra.mxu0 %v617
      %v1661 = vpop.f32.mrf.mxu0
      %v1662 = vadd.f32 0.0, %v1661
      %v1663 = vpop.f32.mrf.mxu0
      %v1664 = vpop.f32.mrf.mxu0
      %v1665 = vadd.f32 0.0, %v1664
      %v1666 = vpop.f32.mrf.mxu0
      %1667 = vmatprep.mubr.bf16.mxu0 %v620
      %1668 = vmatmul.mubr.bf16.gmra.mxu0 %v619
      %v1669 = vpop.f32.mrf.mxu0
      %v1670 = vadd.f32 0.0, %v1669
      %v1671 = vpop.f32.mrf.mxu0
      %v1672 = vpop.f32.mrf.mxu0
      %v1673 = vadd.f32 0.0, %v1672
      %v1674 = vpop.f32.mrf.mxu0
      %1675 = vmatprep.mubr.bf16.mxu0 %v622
      %1676 = vmatmul.mubr.bf16.gmra.mxu0 %v621
      %v1677 = vpop.f32.mrf.mxu0
      %v1678 = vadd.f32 0.0, %v1677
      %v1679 = vpop.f32.mrf.mxu0
      %v1680 = vpop.f32.mrf.mxu0
      %v1681 = vadd.f32 0.0, %v1680
      %v1682 = vpop.f32.mrf.mxu0
      %1683 = vmatprep.mubr.bf16.mxu0 %v624
      %1684 = vmatmul.mubr.bf16.gmra.mxu0 %v623
      %v1685 = vpop.f32.mrf.mxu0
      %v1686 = vadd.f32 0.0, %v1685
      %v1687 = vpop.f32.mrf.mxu0
      %v1688 = vpop.f32.mrf.mxu0
      %v1689 = vadd.f32 0.0, %v1688
      %v1690 = vpop.f32.mrf.mxu0
      %1691 = vmatprep.mubr.bf16.mxu0 %v626
      %1692 = vmatmul.mubr.bf16.gmra.mxu0 %v625
      %v1693 = vpop.f32.mrf.mxu0
      %v1694 = vadd.f32 0.0, %v1693
      %v1695 = vpop.f32.mrf.mxu0
      %v1696 = vpop.f32.mrf.mxu0
      %v1697 = vadd.f32 0.0, %v1696
      %v1698 = vpop.f32.mrf.mxu0
      %1699 = vmatprep.mubr.bf16.mxu0 %v628
      %1700 = vmatmul.mubr.bf16.gmra.mxu0 %v627
      %v1701 = vpop.f32.mrf.mxu0
      %v1702 = vadd.f32 0.0, %v1701
      %v1703 = vpop.f32.mrf.mxu0
      %v1704 = vpop.f32.mrf.mxu0
      %v1705 = vadd.f32 0.0, %v1704
      %v1706 = vpop.f32.mrf.mxu0
      %1707 = vmatprep.mubr.bf16.mxu0 %v630
      %1708 = vmatmul.mubr.bf16.gmra.mxu0 %v629
      %v1709 = vpop.f32.mrf.mxu0
      %v1710 = vadd.f32 0.0, %v1709
      %v1711 = vpop.f32.mrf.mxu0
      %v1712 = vpop.f32.mrf.mxu0
      %v1713 = vadd.f32 0.0, %v1712
      %v1714 = vpop.f32.mrf.mxu0
      %1715 = vmatprep.mubr.bf16.mxu0 %v632
      %1716 = vmatmul.mubr.bf16.gmra.mxu0 %v631
      %v1717 = vpop.f32.mrf.mxu0
      %v1718 = vadd.f32 0.0, %v1717
      %v1719 = vpop.f32.mrf.mxu0
      %v1720 = vpop.f32.mrf.mxu0
      %v1721 = vadd.f32 0.0, %v1720
      %v1722 = vpop.f32.mrf.mxu0
      %1723 = vmatprep.mubr.bf16.mxu0 %v634
      %1724 = vmatmul.mubr.bf16.gmra.mxu0 %v633
      %v1725 = vpop.f32.mrf.mxu0
      %v1726 = vadd.f32 0.0, %v1725
      %v1727 = vpop.f32.mrf.mxu0
      %v1728 = vpop.f32.mrf.mxu0
      %v1729 = vadd.f32 0.0, %v1728
      %v1730 = vpop.f32.mrf.mxu0
      %1731 = vmatprep.mubr.bf16.mxu0 %v636
      %1732 = vmatmul.mubr.bf16.gmra.mxu0 %v635
      %v1733 = vpop.f32.mrf.mxu0
      %v1734 = vadd.f32 0.0, %v1733
      %v1735 = vpop.f32.mrf.mxu0
      %v1736 = vpop.f32.mrf.mxu0
      %v1737 = vadd.f32 0.0, %v1736
      %v1738 = vpop.f32.mrf.mxu0
      %1739 = vmatprep.mubr.bf16.mxu0 %v638
      %1740 = vmatmul.mubr.bf16.gmra.mxu0 %v637
      %v1741 = vpop.f32.mrf.mxu0
      %v1742 = vadd.f32 0.0, %v1741
      %v1743 = vpop.f32.mrf.mxu0
      %v1744 = vpop.f32.mrf.mxu0
      %v1745 = vadd.f32 0.0, %v1744
      %v1746 = vpop.f32.mrf.mxu0
      %1747 = vdwg.mxu0
      %v1780 = vunpack.c.l.b16 %v1458
      %v1781 = vunpack.c.l.b16 %v1459
      %v1782 = vunpack.c.l.b16 %v1460
      %v1783 = vunpack.c.l.b16 %v1461
      %v1784 = vunpack.c.l.b16 %v1462
      %v1785 = vunpack.c.l.b16 %v1463
      %v1786 = vunpack.c.l.b16 %v1464
      %v1787 = vunpack.c.l.b16 %v1465
      %v1788 = vunpack.c.l.b16 %v1466
      %v1789 = vunpack.c.l.b16 %v1467
      %v1790 = vunpack.c.l.b16 %v1468
      %v1791 = vunpack.c.l.b16 %v1469
      %v1792 = vunpack.c.l.b16 %v1470
      %v1793 = vunpack.c.l.b16 %v1471
      %v1794 = vunpack.c.l.b16 %v1472
      %v1795 = vunpack.c.l.b16 %v1473
      %v1796 = vunpack.c.l.b16 %v1474
      %v1797 = vunpack.c.l.b16 %v1475
      %v1798 = vunpack.c.l.b16 %v1476
      %v1799 = vunpack.c.l.b16 %v1477
      %v1800 = vunpack.c.l.b16 %v1478
      %v1801 = vunpack.c.l.b16 %v1479
      %v1802 = vunpack.c.l.b16 %v1480
      %v1803 = vunpack.c.l.b16 %v1481
      %v1804 = vunpack.c.l.b16 %v1482
      %v1805 = vunpack.c.l.b16 %v1483
      %v1806 = vunpack.c.l.b16 %v1484
      %v1807 = vunpack.c.l.b16 %v1485
      %v1808 = vunpack.c.l.b16 %v1486
      %v1809 = vunpack.c.l.b16 %v1487
      %v1810 = vunpack.c.l.b16 %v1488
      %v1811 = vunpack.c.l.b16 %v1489
      %v1812 = vpack.c.b16 %v1781, %v1780
      %v1813 = vpack.c.b16 %v1783, %v1782
      %v1814 = vpack.c.b16 %v1785, %v1784
      %v1815 = vpack.c.b16 %v1787, %v1786
      %v1816 = vpack.c.b16 %v1789, %v1788
      %v1817 = vpack.c.b16 %v1791, %v1790
      %v1818 = vpack.c.b16 %v1793, %v1792
      %v1819 = vpack.c.b16 %v1795, %v1794
      %v1820 = vpack.c.b16 %v1797, %v1796
      %v1821 = vpack.c.b16 %v1799, %v1798
      %v1822 = vpack.c.b16 %v1801, %v1800
      %v1823 = vpack.c.b16 %v1803, %v1802
      %v1824 = vpack.c.b16 %v1805, %v1804
      %v1825 = vpack.c.b16 %v1807, %v1806
      %v1826 = vpack.c.b16 %v1809, %v1808
      %v1827 = vpack.c.b16 %v1811, %v1810
      %1844 = vmatprep.subr.bf16.mxu0 0
      %1845 = vmatpush1.bf16.msra.mxu0 %v1819
      %1846 = vmatprep.subr.bf16.mxu0 0
      %1847 = vmatpush1.bf16.msra.mxu0 %v1818
      %1848 = vmatprep.subr.bf16.mxu0 0
      %1849 = vmatpush1.bf16.msra.mxu0 %v1817
      %1850 = vmatprep.subr.bf16.mxu0 0
      %1851 = vmatpush1.bf16.msra.mxu0 %v1816
      %1852 = vmatprep.subr.bf16.mxu0 0
      %1853 = vmatpush1.bf16.msra.mxu0 %v1815
      %1854 = vmatprep.subr.bf16.mxu0 0
      %1855 = vmatpush1.bf16.msra.mxu0 %v1814
      %1856 = vmatprep.subr.bf16.mxu0 0
      %1857 = vmatpush1.bf16.msra.mxu0 %v1813
      %1858 = vmatprep.subr.bf16.mxu0 0
      %1859 = vmatpush1.bf16.msra.mxu0 %v1812
      %1860 = vmatprep.subr.bf16.mxu0 0
      %1861 = vmatpush2.bf16.msra.mxu0 %v1827
      %1862 = vmatprep.subr.bf16.mxu0 0
      %1863 = vmatpush2.bf16.msra.mxu0 %v1826
      %1864 = vmatprep.subr.bf16.mxu0 0
      %1865 = vmatpush2.bf16.msra.mxu0 %v1825
      %1866 = vmatprep.subr.bf16.mxu0 0
      %1867 = vmatpush2.bf16.msra.mxu0 %v1824
      %1868 = vmatprep.subr.bf16.mxu0 0
      %1869 = vmatpush2.bf16.msra.mxu0 %v1823
      %1870 = vmatprep.subr.bf16.mxu0 0
      %1871 = vmatpush2.bf16.msra.mxu0 %v1822
      %1872 = vmatprep.subr.bf16.mxu0 0
      %1873 = vmatpush2.bf16.msra.mxu0 %v1821
      %1874 = vmatprep.subr.bf16.mxu0 0
      %1875 = vmatpush2.bf16.msra.mxu0 %v1820
      %1876 = vmatprep.mubr.bf16.mxu0 %v890
      %1877 = vmatmul.mubr.bf16.gmra.mxu0 %v889
      %v1878 = vpop.f32.mrf.mxu0
      %v1879 = vadd.f32 %v1654, %v1878
      %v1880 = vpop.f32.mrf.mxu0
      %v1881 = vpop.f32.mrf.mxu0
      %v1882 = vadd.f32 %v1657, %v1881
      %v1883 = vpop.f32.mrf.mxu0
      %1884 = vmatprep.mubr.bf16.mxu0 %v892
      %1885 = vmatmul.mubr.bf16.gmra.mxu0 %v891
      %v1886 = vpop.f32.mrf.mxu0
      %v1887 = vadd.f32 %v1662, %v1886
      %v1888 = vpop.f32.mrf.mxu0
      %v1889 = vpop.f32.mrf.mxu0
      %v1890 = vadd.f32 %v1665, %v1889
      %v1891 = vpop.f32.mrf.mxu0
      %1892 = vmatprep.mubr.bf16.mxu0 %v894
      %1893 = vmatmul.mubr.bf16.gmra.mxu0 %v893
      %v1894 = vpop.f32.mrf.mxu0
      %v1895 = vadd.f32 %v1670, %v1894
      %v1896 = vpop.f32.mrf.mxu0
      %v1897 = vpop.f32.mrf.mxu0
      %v1898 = vadd.f32 %v1673, %v1897
      %v1899 = vpop.f32.mrf.mxu0
      %1900 = vmatprep.mubr.bf16.mxu0 %v896
      %1901 = vmatmul.mubr.bf16.gmra.mxu0 %v895
      %v1902 = vpop.f32.mrf.mxu0
      %v1903 = vadd.f32 %v1678, %v1902
      %v1904 = vpop.f32.mrf.mxu0
      %v1905 = vpop.f32.mrf.mxu0
      %v1906 = vadd.f32 %v1681, %v1905
      %v1907 = vpop.f32.mrf.mxu0
      %1908 = vmatprep.mubr.bf16.mxu0 %v898
      %1909 = vmatmul.mubr.bf16.gmra.mxu0 %v897
      %v1910 = vpop.f32.mrf.mxu0
      %v1911 = vadd.f32 %v1686, %v1910
      %v1912 = vpop.f32.mrf.mxu0
      %v1913 = vpop.f32.mrf.mxu0
      %v1914 = vadd.f32 %v1689, %v1913
      %v1915 = vpop.f32.mrf.mxu0
      %1916 = vmatprep.mubr.bf16.mxu0 %v900
      %1917 = vmatmul.mubr.bf16.gmra.mxu0 %v899
      %v1918 = vpop.f32.mrf.mxu0
      %v1919 = vadd.f32 %v1694, %v1918
      %v1920 = vpop.f32.mrf.mxu0
      %v1921 = vpop.f32.mrf.mxu0
      %v1922 = vadd.f32 %v1697, %v1921
      %v1923 = vpop.f32.mrf.mxu0
      %1924 = vmatprep.mubr.bf16.mxu0 %v902
      %1925 = vmatmul.mubr.bf16.gmra.mxu0 %v901
      %v1926 = vpop.f32.mrf.mxu0
      %v1927 = vadd.f32 %v1702, %v1926
      %v1928 = vpop.f32.mrf.mxu0
      %v1929 = vpop.f32.mrf.mxu0
      %v1930 = vadd.f32 %v1705, %v1929
      %v1931 = vpop.f32.mrf.mxu0
      %1932 = vmatprep.mubr.bf16.mxu0 %v904
      %1933 = vmatmul.mubr.bf16.gmra.mxu0 %v903
      %v1934 = vpop.f32.mrf.mxu0
      %v1935 = vadd.f32 %v1710, %v1934
      %v1936 = vpop.f32.mrf.mxu0
      %v1937 = vpop.f32.mrf.mxu0
      %v1938 = vadd.f32 %v1713, %v1937
      %v1939 = vpop.f32.mrf.mxu0
      %1940 = vmatprep.mubr.bf16.mxu0 %v906
      %1941 = vmatmul.mubr.bf16.gmra.mxu0 %v905
      %v1942 = vpop.f32.mrf.mxu0
      %v1943 = vadd.f32 %v1718, %v1942
      %v1944 = vpop.f32.mrf.mxu0
      %v1945 = vpop.f32.mrf.mxu0
      %v1946 = vadd.f32 %v1721, %v1945
      %v1947 = vpop.f32.mrf.mxu0
      %1948 = vmatprep.mubr.bf16.mxu0 %v908
      %1949 = vmatmul.mubr.bf16.gmra.mxu0 %v907
      %v1950 = vpop.f32.mrf.mxu0
      %v1951 = vadd.f32 %v1726, %v1950
      %v1952 = vpop.f32.mrf.mxu0
      %v1953 = vpop.f32.mrf.mxu0
      %v1954 = vadd.f32 %v1729, %v1953
      %v1955 = vpop.f32.mrf.mxu0
      %1956 = vmatprep.mubr.bf16.mxu0 %v910
      %1957 = vmatmul.mubr.bf16.gmra.mxu0 %v909
      %v1958 = vpop.f32.mrf.mxu0
      %v1959 = vadd.f32 %v1734, %v1958
      %v1960 = vpop.f32.mrf.mxu0
      %v1961 = vpop.f32.mrf.mxu0
      %v1962 = vadd.f32 %v1737, %v1961
      %v1963 = vpop.f32.mrf.mxu0
      %1964 = vmatprep.mubr.bf16.mxu0 %v912
      %1965 = vmatmul.mubr.bf16.gmra.mxu0 %v911
      %v1966 = vpop.f32.mrf.mxu0
      %v1967 = vadd.f32 %v1742, %v1966
      %v1968 = vpop.f32.mrf.mxu0
      %v1969 = vpop.f32.mrf.mxu0
      %v1970 = vadd.f32 %v1745, %v1969
      %v1971 = vpop.f32.mrf.mxu0
      %1972 = vdwg.mxu0
      %s1973 = scalar_lea.vmem %s1, 896
      %v1974 = vld [vmem:[%s1973] sm:$0xf]
      %v1975 = vld [vmem:[%s1973 + $0x4] sm:$0xf]
      %v1976 = vld [vmem:[%s1973 + $0x8] sm:$0xf]
      %v1977 = vld [vmem:[%s1973 + $0xc] sm:$0xf]
      %v1978 = vld [vmem:[%s1973 + $0x10] sm:$0xf]
      %v1979 = vld [vmem:[%s1973 + $0x14] sm:$0xf]
      %v1980 = vld [vmem:[%s1973 + $0x18] sm:$0xf]
      %v1981 = vld [vmem:[%s1973 + $0x1c] sm:$0xf]
      %v1982 = vld [vmem:[%s1973 + $0x20] sm:$0xf]
      %v1983 = vld [vmem:[%s1973 + $0x24] sm:$0xf]
      %v1984 = vld [vmem:[%s1973 + $0x28] sm:$0xf]
      %v1985 = vld [vmem:[%s1973 + $0x2c] sm:$0xf]
      %v1986 = vld [vmem:[%s1973 + $0x30] sm:$0xf]
      %v1987 = vld [vmem:[%s1973 + $0x34] sm:$0xf]
      %v1988 = vld [vmem:[%s1973 + $0x38] sm:$0xf]
      %v1989 = vld [vmem:[%s1973 + $0x3c] sm:$0xf]
      %v1990 = vld [vmem:[%s1973 + $0x40] sm:$0xf]
      %v1991 = vld [vmem:[%s1973 + $0x44] sm:$0xf]
      %v1992 = vld [vmem:[%s1973 + $0x48] sm:$0xf]
      %v1993 = vld [vmem:[%s1973 + $0x4c] sm:$0xf]
      %v1994 = vld [vmem:[%s1973 + $0x50] sm:$0xf]
      %v1995 = vld [vmem:[%s1973 + $0x54] sm:$0xf]
      %v1996 = vld [vmem:[%s1973 + $0x58] sm:$0xf]
      %v1997 = vld [vmem:[%s1973 + $0x5c] sm:$0xf]
      %v1998 = vld [vmem:[%s1973 + $0x60] sm:$0xf]
      %v1999 = vld [vmem:[%s1973 + $0x64] sm:$0xf]
      %v2000 = vld [vmem:[%s1973 + $0x68] sm:$0xf]
      %v2001 = vld [vmem:[%s1973 + $0x6c] sm:$0xf]
      %v2002 = vld [vmem:[%s1973 + $0x70] sm:$0xf]
      %v2003 = vld [vmem:[%s1973 + $0x74] sm:$0xf]
      %v2004 = vld [vmem:[%s1973 + $0x78] sm:$0xf]
      %v2005 = vld [vmem:[%s1973 + $0x7c] sm:$0xf]
      %v2038 = vunpack.c.l.b16 %v1974
      %v2039 = vunpack.c.l.b16 %v1975
      %v2040 = vunpack.c.l.b16 %v1976
      %v2041 = vunpack.c.l.b16 %v1977
      %v2042 = vunpack.c.l.b16 %v1978
      %v2043 = vunpack.c.l.b16 %v1979
      %v2044 = vunpack.c.l.b16 %v1980
      %v2045 = vunpack.c.l.b16 %v1981
      %v2046 = vunpack.c.l.b16 %v1982
      %v2047 = vunpack.c.l.b16 %v1983
      %v2048 = vunpack.c.l.b16 %v1984
      %v2049 = vunpack.c.l.b16 %v1985
      %v2050 = vunpack.c.l.b16 %v1986
      %v2051 = vunpack.c.l.b16 %v1987
      %v2052 = vunpack.c.l.b16 %v1988
      %v2053 = vunpack.c.l.b16 %v1989
      %v2054 = vunpack.c.l.b16 %v1990
      %v2055 = vunpack.c.l.b16 %v1991
      %v2056 = vunpack.c.l.b16 %v1992
      %v2057 = vunpack.c.l.b16 %v1993
      %v2058 = vunpack.c.l.b16 %v1994
      %v2059 = vunpack.c.l.b16 %v1995
      %v2060 = vunpack.c.l.b16 %v1996
      %v2061 = vunpack.c.l.b16 %v1997
      %v2062 = vunpack.c.l.b16 %v1998
      %v2063 = vunpack.c.l.b16 %v1999
      %v2064 = vunpack.c.l.b16 %v2000
      %v2065 = vunpack.c.l.b16 %v2001
      %v2066 = vunpack.c.l.b16 %v2002
      %v2067 = vunpack.c.l.b16 %v2003
      %v2068 = vunpack.c.l.b16 %v2004
      %v2069 = vunpack.c.l.b16 %v2005
      %v2070 = vpack.c.b16 %v2039, %v2038
      %v2071 = vpack.c.b16 %v2041, %v2040
      %v2072 = vpack.c.b16 %v2043, %v2042
      %v2073 = vpack.c.b16 %v2045, %v2044
      %v2074 = vpack.c.b16 %v2047, %v2046
      %v2075 = vpack.c.b16 %v2049, %v2048
      %v2076 = vpack.c.b16 %v2051, %v2050
      %v2077 = vpack.c.b16 %v2053, %v2052
      %v2078 = vpack.c.b16 %v2055, %v2054
      %v2079 = vpack.c.b16 %v2057, %v2056
      %v2080 = vpack.c.b16 %v2059, %v2058
      %v2081 = vpack.c.b16 %v2061, %v2060
      %v2082 = vpack.c.b16 %v2063, %v2062
      %v2083 = vpack.c.b16 %v2065, %v2064
      %v2084 = vpack.c.b16 %v2067, %v2066
      %v2085 = vpack.c.b16 %v2069, %v2068
      %2102 = vmatprep.subr.bf16.mxu0 0
      %2103 = vmatpush1.bf16.msra.mxu0 %v2077
      %2104 = vmatprep.subr.bf16.mxu0 0
      %2105 = vmatpush1.bf16.msra.mxu0 %v2076
      %2106 = vmatprep.subr.bf16.mxu0 0
      %2107 = vmatpush1.bf16.msra.mxu0 %v2075
      %2108 = vmatprep.subr.bf16.mxu0 0
      %2109 = vmatpush1.bf16.msra.mxu0 %v2074
      %2110 = vmatprep.subr.bf16.mxu0 0
      %2111 = vmatpush1.bf16.msra.mxu0 %v2073
      %2112 = vmatprep.subr.bf16.mxu0 0
      %2113 = vmatpush1.bf16.msra.mxu0 %v2072
      %2114 = vmatprep.subr.bf16.mxu0 0
      %2115 = vmatpush1.bf16.msra.mxu0 %v2071
      %2116 = vmatprep.subr.bf16.mxu0 0
      %2117 = vmatpush1.bf16.msra.mxu0 %v2070
      %2118 = vmatprep.subr.bf16.mxu0 0
      %2119 = vmatpush2.bf16.msra.mxu0 %v2085
      %2120 = vmatprep.subr.bf16.mxu0 0
      %2121 = vmatpush2.bf16.msra.mxu0 %v2084
      %2122 = vmatprep.subr.bf16.mxu0 0
      %2123 = vmatpush2.bf16.msra.mxu0 %v2083
      %2124 = vmatprep.subr.bf16.mxu0 0
      %2125 = vmatpush2.bf16.msra.mxu0 %v2082
      %2126 = vmatprep.subr.bf16.mxu0 0
      %2127 = vmatpush2.bf16.msra.mxu0 %v2081
      %2128 = vmatprep.subr.bf16.mxu0 0
      %2129 = vmatpush2.bf16.msra.mxu0 %v2080
      %2130 = vmatprep.subr.bf16.mxu0 0
      %2131 = vmatpush2.bf16.msra.mxu0 %v2079
      %2132 = vmatprep.subr.bf16.mxu0 0
      %2133 = vmatpush2.bf16.msra.mxu0 %v2078
      %2134 = vmatprep.mubr.bf16.mxu0 %v896
      %2135 = vmatmul.mubr.bf16.gmra.mxu0 %v895
      %v2136 = vpop.f32.mrf.mxu0
      %v2137 = vadd.f32 0.0, %v2136
      %v2138 = vpop.f32.mrf.mxu0
      %v2139 = vpop.f32.mrf.mxu0
      %v2140 = vadd.f32 0.0, %v2139
      %v2141 = vpop.f32.mrf.mxu0
      %2142 = vmatprep.mubr.bf16.mxu0 %v898
      %2143 = vmatmul.mubr.bf16.gmra.mxu0 %v897
      %v2144 = vpop.f32.mrf.mxu0
      %v2145 = vadd.f32 0.0, %v2144
      %v2146 = vpop.f32.mrf.mxu0
      %v2147 = vpop.f32.mrf.mxu0
      %v2148 = vadd.f32 0.0, %v2147
      %v2149 = vpop.f32.mrf.mxu0
      %2150 = vmatprep.mubr.bf16.mxu0 %v900
      %2151 = vmatmul.mubr.bf16.gmra.mxu0 %v899
      %v2152 = vpop.f32.mrf.mxu0
      %v2153 = vadd.f32 0.0, %v2152
      %v2154 = vpop.f32.mrf.mxu0
      %v2155 = vpop.f32.mrf.mxu0
      %v2156 = vadd.f32 0.0, %v2155
      %v2157 = vpop.f32.mrf.mxu0
      %2158 = vmatprep.mubr.bf16.mxu0 %v902
      %2159 = vmatmul.mubr.bf16.gmra.mxu0 %v901
      %v2160 = vpop.f32.mrf.mxu0
      %v2161 = vadd.f32 0.0, %v2160
      %v2162 = vpop.f32.mrf.mxu0
      %v2163 = vpop.f32.mrf.mxu0
      %v2164 = vadd.f32 0.0, %v2163
      %v2165 = vpop.f32.mrf.mxu0
      %2166 = vmatprep.mubr.bf16.mxu0 %v904
      %2167 = vmatmul.mubr.bf16.gmra.mxu0 %v903
      %v2168 = vpop.f32.mrf.mxu0
      %v2169 = vadd.f32 0.0, %v2168
      %v2170 = vpop.f32.mrf.mxu0
      %v2171 = vpop.f32.mrf.mxu0
      %v2172 = vadd.f32 0.0, %v2171
      %v2173 = vpop.f32.mrf.mxu0
      %2174 = vmatprep.mubr.bf16.mxu0 %v906
      %2175 = vmatmul.mubr.bf16.gmra.mxu0 %v905
      %v2176 = vpop.f32.mrf.mxu0
      %v2177 = vadd.f32 0.0, %v2176
      %v2178 = vpop.f32.mrf.mxu0
      %v2179 = vpop.f32.mrf.mxu0
      %v2180 = vadd.f32 0.0, %v2179
      %v2181 = vpop.f32.mrf.mxu0
      %2182 = vmatprep.mubr.bf16.mxu0 %v908
      %2183 = vmatmul.mubr.bf16.gmra.mxu0 %v907
      %v2184 = vpop.f32.mrf.mxu0
      %v2185 = vadd.f32 0.0, %v2184
      %v2186 = vpop.f32.mrf.mxu0
      %v2187 = vpop.f32.mrf.mxu0
      %v2188 = vadd.f32 0.0, %v2187
      %v2189 = vpop.f32.mrf.mxu0
      %2190 = vmatprep.mubr.bf16.mxu0 %v910
      %2191 = vmatmul.mubr.bf16.gmra.mxu0 %v909
      %v2192 = vpop.f32.mrf.mxu0
      %v2193 = vadd.f32 0.0, %v2192
      %v2194 = vpop.f32.mrf.mxu0
      %v2195 = vpop.f32.mrf.mxu0
      %v2196 = vadd.f32 0.0, %v2195
      %v2197 = vpop.f32.mrf.mxu0
      %2198 = vmatprep.mubr.bf16.mxu0 %v912
      %2199 = vmatmul.mubr.bf16.gmra.mxu0 %v911
      %v2200 = vpop.f32.mrf.mxu0
      %v2201 = vadd.f32 0.0, %v2200
      %v2202 = vpop.f32.mrf.mxu0
      %v2203 = vpop.f32.mrf.mxu0
      %v2204 = vadd.f32 0.0, %v2203
      %v2205 = vpop.f32.mrf.mxu0
      %2206 = vmatprep.mubr.bf16.mxu0 %v1197
      %2207 = vmatmul.mubr.bf16.gmra.mxu0 %v1196
      %v2208 = vpop.f32.mrf.mxu0
      %v2209 = vadd.f32 0.0, %v2208
      %v2210 = vpop.f32.mrf.mxu0
      %v2211 = vpop.f32.mrf.mxu0
      %v2212 = vadd.f32 0.0, %v2211
      %v2213 = vpop.f32.mrf.mxu0
      %2214 = vmatprep.mubr.bf16.mxu0 %v1199
      %2215 = vmatmul.mubr.bf16.gmra.mxu0 %v1198
      %v2216 = vpop.f32.mrf.mxu0
      %v2217 = vadd.f32 0.0, %v2216
      %v2218 = vpop.f32.mrf.mxu0
      %v2219 = vpop.f32.mrf.mxu0
      %v2220 = vadd.f32 0.0, %v2219
      %v2221 = vpop.f32.mrf.mxu0
      %2222 = vmatprep.mubr.bf16.mxu0 %v1201
      %2223 = vmatmul.mubr.bf16.gmra.mxu0 %v1200
      %v2224 = vpop.f32.mrf.mxu0
      %v2225 = vadd.f32 0.0, %v2224
      %v2226 = vpop.f32.mrf.mxu0
      %v2227 = vpop.f32.mrf.mxu0
      %v2228 = vadd.f32 0.0, %v2227
      %v2229 = vpop.f32.mrf.mxu0
      %2230 = vdwg.mxu0
      %v2231 = vadd.f32 %v1879, %v2137
      %v2232 = vadd.f32 %v1882, %v2140
      %v2233 = vadd.f32 %v1887, %v2145
      %v2234 = vadd.f32 %v1890, %v2148
      %v2235 = vadd.f32 %v1895, %v2153
      %v2236 = vadd.f32 %v1898, %v2156
      %v2237 = vadd.f32 %v1903, %v2161
      %v2238 = vadd.f32 %v1906, %v2164
      %v2239 = vadd.f32 %v1911, %v2169
      %v2240 = vadd.f32 %v1914, %v2172
      %v2241 = vadd.f32 %v1919, %v2177
      %v2242 = vadd.f32 %v1922, %v2180
      %v2243 = vadd.f32 %v1927, %v2185
      %v2244 = vadd.f32 %v1930, %v2188
      %v2245 = vadd.f32 %v1935, %v2193
      %v2246 = vadd.f32 %v1938, %v2196
      %v2247 = vadd.f32 %v1943, %v2201
      %v2248 = vadd.f32 %v1946, %v2204
      %v2249 = vadd.f32 %v1951, %v2209
      %v2250 = vadd.f32 %v1954, %v2212
      %v2251 = vadd.f32 %v1959, %v2217
      %v2252 = vadd.f32 %v1962, %v2220
      %v2253 = vadd.f32 %v1967, %v2225
      %v2254 = vadd.f32 %v1970, %v2228
      %vm2279 = vcmask 1046528
      %v2280 = vrot.slane %v2231, 1
      %v2281 = vrot.slane %v2232, 1
      %v2282 = vsel %vm2279, %v2280, %v2281
      %v2283 = vrot.slane %v2233, 1
      %v2284 = vsel %vm2279, %v2281, %v2283
      %v2285 = vrot.slane %v2234, 1
      %v2286 = vrot.slane %v2235, 1
      %v2287 = vsel %vm2279, %v2285, %v2286
      %v2288 = vrot.slane %v2236, 1
      %v2289 = vsel %vm2279, %v2286, %v2288
      %v2290 = vrot.slane %v2237, 1
      %v2291 = vrot.slane %v2238, 1
      %v2292 = vsel %vm2279, %v2290, %v2291
      %v2293 = vrot.slane %v2239, 1
      %v2294 = vsel %vm2279, %v2291, %v2293
      %v2295 = vrot.slane %v2240, 1
      %v2296 = vrot.slane %v2241, 1
      %v2297 = vsel %vm2279, %v2295, %v2296
      %v2298 = vrot.slane %v2242, 1
      %v2299 = vsel %vm2279, %v2296, %v2298
      %v2300 = vrot.slane %v2243, 1
      %v2301 = vrot.slane %v2244, 1
      %v2302 = vsel %vm2279, %v2300, %v2301
      %v2303 = vrot.slane %v2245, 1
      %v2304 = vsel %vm2279, %v2301, %v2303
      %v2305 = vrot.slane %v2246, 1
      %v2306 = vrot.slane %v2247, 1
      %v2307 = vsel %vm2279, %v2305, %v2306
      %v2308 = vrot.slane %v2248, 1
      %v2309 = vsel %vm2279, %v2306, %v2308
      %v2310 = vrot.slane %v2249, 1
      %v2311 = vrot.slane %v2250, 1
      %v2312 = vsel %vm2279, %v2310, %v2311
      %v2313 = vrot.slane %v2251, 1
      %v2314 = vsel %vm2279, %v2311, %v2313
      %v2315 = vrot.slane %v2252, 1
      %v2316 = vrot.slane %v2253, 1
      %v2317 = vsel %vm2279, %v2315, %v2316
      %v2318 = vrot.slane %v2254, 1
      %v2319 = vsel %vm2279, %v2316, %v2318
      %v2336 = vadd.f32 %v1441, %v2282
      %v2337 = vadd.f32 %v1442, %v2284
      %v2338 = vadd.f32 %v1443, %v2287
      %v2339 = vadd.f32 %v1444, %v2289
      %v2340 = vadd.f32 %v1445, %v2292
      %v2341 = vadd.f32 %v1446, %v2294
      %v2342 = vadd.f32 %v1447, %v2297
      %v2343 = vadd.f32 %v1448, %v2299
      %v2344 = vadd.f32 %v1449, %v2302
      %v2345 = vadd.f32 %v1450, %v2304
      %v2346 = vadd.f32 %v1451, %v2307
      %v2347 = vadd.f32 %v1452, %v2309
      %v2348 = vadd.f32 %v1453, %v2312
      %v2349 = vadd.f32 %v1454, %v2314
      %v2350 = vadd.f32 %v1455, %v2317
      %v2351 = vadd.f32 %v1456, %v2319
      %s2352 = scalar_lea.vmem %s1, 256
      %v2353 = vld [vmem:[%s2352] sm:$0xf]
      %v2354 = vld [vmem:[%s2352 + $0x4] sm:$0xf]
      %v2355 = vld [vmem:[%s2352 + $0x8] sm:$0xf]
      %v2356 = vld [vmem:[%s2352 + $0xc] sm:$0xf]
      %v2357 = vld [vmem:[%s2352 + $0x10] sm:$0xf]
      %v2358 = vld [vmem:[%s2352 + $0x14] sm:$0xf]
      %v2359 = vld [vmem:[%s2352 + $0x18] sm:$0xf]
      %v2360 = vld [vmem:[%s2352 + $0x1c] sm:$0xf]
      %v2361 = vld [vmem:[%s2352 + $0x20] sm:$0xf]
      %v2362 = vld [vmem:[%s2352 + $0x24] sm:$0xf]
      %v2363 = vld [vmem:[%s2352 + $0x28] sm:$0xf]
      %v2364 = vld [vmem:[%s2352 + $0x2c] sm:$0xf]
      %v2365 = vld [vmem:[%s2352 + $0x30] sm:$0xf]
      %v2366 = vld [vmem:[%s2352 + $0x34] sm:$0xf]
      %v2367 = vld [vmem:[%s2352 + $0x38] sm:$0xf]
      %v2368 = vld [vmem:[%s2352 + $0x3c] sm:$0xf]
      %v2369 = vld [vmem:[%s2352 + $0x40] sm:$0xf]
      %v2370 = vld [vmem:[%s2352 + $0x44] sm:$0xf]
      %v2371 = vld [vmem:[%s2352 + $0x48] sm:$0xf]
      %v2372 = vld [vmem:[%s2352 + $0x4c] sm:$0xf]
      %v2373 = vld [vmem:[%s2352 + $0x50] sm:$0xf]
      %v2374 = vld [vmem:[%s2352 + $0x54] sm:$0xf]
      %v2375 = vld [vmem:[%s2352 + $0x58] sm:$0xf]
      %v2376 = vld [vmem:[%s2352 + $0x5c] sm:$0xf]
      %v2377 = vld [vmem:[%s2352 + $0x60] sm:$0xf]
      %v2378 = vld [vmem:[%s2352 + $0x64] sm:$0xf]
      %v2379 = vld [vmem:[%s2352 + $0x68] sm:$0xf]
      %v2380 = vld [vmem:[%s2352 + $0x6c] sm:$0xf]
      %v2381 = vld [vmem:[%s2352 + $0x70] sm:$0xf]
      %v2382 = vld [vmem:[%s2352 + $0x74] sm:$0xf]
      %v2383 = vld [vmem:[%s2352 + $0x78] sm:$0xf]
      %v2384 = vld [vmem:[%s2352 + $0x7c] sm:$0xf]
      %s2385 = scalar_lea.vmem %s1, 640
      %v2386 = vld [vmem:[%s2385] sm:$0xf]
      %v2387 = vld [vmem:[%s2385 + $0x4] sm:$0xf]
      %v2388 = vld [vmem:[%s2385 + $0x8] sm:$0xf]
      %v2389 = vld [vmem:[%s2385 + $0xc] sm:$0xf]
      %v2390 = vld [vmem:[%s2385 + $0x10] sm:$0xf]
      %v2391 = vld [vmem:[%s2385 + $0x14] sm:$0xf]
      %v2392 = vld [vmem:[%s2385 + $0x18] sm:$0xf]
      %v2393 = vld [vmem:[%s2385 + $0x1c] sm:$0xf]
      %v2394 = vld [vmem:[%s2385 + $0x20] sm:$0xf]
      %v2395 = vld [vmem:[%s2385 + $0x24] sm:$0xf]
      %v2396 = vld [vmem:[%s2385 + $0x28] sm:$0xf]
      %v2397 = vld [vmem:[%s2385 + $0x2c] sm:$0xf]
      %v2398 = vld [vmem:[%s2385 + $0x30] sm:$0xf]
      %v2399 = vld [vmem:[%s2385 + $0x34] sm:$0xf]
      %v2400 = vld [vmem:[%s2385 + $0x38] sm:$0xf]
      %v2401 = vld [vmem:[%s2385 + $0x3c] sm:$0xf]
      %v2402 = vld [vmem:[%s2385 + $0x40] sm:$0xf]
      %v2403 = vld [vmem:[%s2385 + $0x44] sm:$0xf]
      %v2404 = vld [vmem:[%s2385 + $0x48] sm:$0xf]
      %v2405 = vld [vmem:[%s2385 + $0x4c] sm:$0xf]
      %v2406 = vld [vmem:[%s2385 + $0x50] sm:$0xf]
      %v2407 = vld [vmem:[%s2385 + $0x54] sm:$0xf]
      %v2408 = vld [vmem:[%s2385 + $0x58] sm:$0xf]
      %v2409 = vld [vmem:[%s2385 + $0x5c] sm:$0xf]
      %v2410 = vld [vmem:[%s2385 + $0x60] sm:$0xf]
      %v2411 = vld [vmem:[%s2385 + $0x64] sm:$0xf]
      %v2412 = vld [vmem:[%s2385 + $0x68] sm:$0xf]
      %v2413 = vld [vmem:[%s2385 + $0x6c] sm:$0xf]
      %v2414 = vld [vmem:[%s2385 + $0x70] sm:$0xf]
      %v2415 = vld [vmem:[%s2385 + $0x74] sm:$0xf]
      %v2416 = vld [vmem:[%s2385 + $0x78] sm:$0xf]
      %v2417 = vld [vmem:[%s2385 + $0x7c] sm:$0xf]
      %v2450 = vunpack.c.l.b16 %v2386
      %v2451 = vunpack.c.l.b16 %v2387
      %v2452 = vunpack.c.l.b16 %v2388
      %v2453 = vunpack.c.l.b16 %v2389
      %v2454 = vunpack.c.l.b16 %v2390
      %v2455 = vunpack.c.l.b16 %v2391
      %v2456 = vunpack.c.l.b16 %v2392
      %v2457 = vunpack.c.l.b16 %v2393
      %v2458 = vunpack.c.l.b16 %v2394
      %v2459 = vunpack.c.l.b16 %v2395
      %v2460 = vunpack.c.l.b16 %v2396
      %v2461 = vunpack.c.l.b16 %v2397
      %v2462 = vunpack.c.l.b16 %v2398
      %v2463 = vunpack.c.l.b16 %v2399
      %v2464 = vunpack.c.l.b16 %v2400
      %v2465 = vunpack.c.l.b16 %v2401
      %v2466 = vunpack.c.l.b16 %v2402
      %v2467 = vunpack.c.l.b16 %v2403
      %v2468 = vunpack.c.l.b16 %v2404
      %v2469 = vunpack.c.l.b16 %v2405
      %v2470 = vunpack.c.l.b16 %v2406
      %v2471 = vunpack.c.l.b16 %v2407
      %v2472 = vunpack.c.l.b16 %v2408
      %v2473 = vunpack.c.l.b16 %v2409
      %v2474 = vunpack.c.l.b16 %v2410
      %v2475 = vunpack.c.l.b16 %v2411
      %v2476 = vunpack.c.l.b16 %v2412
      %v2477 = vunpack.c.l.b16 %v2413
      %v2478 = vunpack.c.l.b16 %v2414
      %v2479 = vunpack.c.l.b16 %v2415
      %v2480 = vunpack.c.l.b16 %v2416
      %v2481 = vunpack.c.l.b16 %v2417
      %v2482 = vpack.c.b16 %v2451, %v2450
      %v2483 = vpack.c.b16 %v2453, %v2452
      %v2484 = vpack.c.b16 %v2455, %v2454
      %v2485 = vpack.c.b16 %v2457, %v2456
      %v2486 = vpack.c.b16 %v2459, %v2458
      %v2487 = vpack.c.b16 %v2461, %v2460
      %v2488 = vpack.c.b16 %v2463, %v2462
      %v2489 = vpack.c.b16 %v2465, %v2464
      %v2490 = vpack.c.b16 %v2467, %v2466
      %v2491 = vpack.c.b16 %v2469, %v2468
      %v2492 = vpack.c.b16 %v2471, %v2470
      %v2493 = vpack.c.b16 %v2473, %v2472
      %v2494 = vpack.c.b16 %v2475, %v2474
      %v2495 = vpack.c.b16 %v2477, %v2476
      %v2496 = vpack.c.b16 %v2479, %v2478
      %v2497 = vpack.c.b16 %v2481, %v2480
      %2514 = vmatprep.subr.bf16.mxu0 0
      %2515 = vmatpush1.bf16.msra.mxu0 %v2489
      %2516 = vmatprep.subr.bf16.mxu0 0
      %2517 = vmatpush1.bf16.msra.mxu0 %v2488
      %2518 = vmatprep.subr.bf16.mxu0 0
      %2519 = vmatpush1.bf16.msra.mxu0 %v2487
      %2520 = vmatprep.subr.bf16.mxu0 0
      %2521 = vmatpush1.bf16.msra.mxu0 %v2486
      %2522 = vmatprep.subr.bf16.mxu0 0
      %2523 = vmatpush1.bf16.msra.mxu0 %v2485
      %2524 = vmatprep.subr.bf16.mxu0 0
      %2525 = vmatpush1.bf16.msra.mxu0 %v2484
      %2526 = vmatprep.subr.bf16.mxu0 0
      %2527 = vmatpush1.bf16.msra.mxu0 %v2483
      %2528 = vmatprep.subr.bf16.mxu0 0
      %2529 = vmatpush1.bf16.msra.mxu0 %v2482
      %2530 = vmatprep.subr.bf16.mxu0 0
      %2531 = vmatpush2.bf16.msra.mxu0 %v2497
      %2532 = vmatprep.subr.bf16.mxu0 0
      %2533 = vmatpush2.bf16.msra.mxu0 %v2496
      %2534 = vmatprep.subr.bf16.mxu0 0
      %2535 = vmatpush2.bf16.msra.mxu0 %v2495
      %2536 = vmatprep.subr.bf16.mxu0 0
      %2537 = vmatpush2.bf16.msra.mxu0 %v2494
      %2538 = vmatprep.subr.bf16.mxu0 0
      %2539 = vmatpush2.bf16.msra.mxu0 %v2493
      %2540 = vmatprep.subr.bf16.mxu0 0
      %2541 = vmatpush2.bf16.msra.mxu0 %v2492
      %2542 = vmatprep.subr.bf16.mxu0 0
      %2543 = vmatpush2.bf16.msra.mxu0 %v2491
      %2544 = vmatprep.subr.bf16.mxu0 0
      %2545 = vmatpush2.bf16.msra.mxu0 %v2490
      %2546 = vmatprep.mubr.bf16.mxu0 %v616
      %2547 = vmatmul.mubr.bf16.gmra.mxu0 %v615
      %v2548 = vpop.f32.mrf.mxu0
      %v2549 = vadd.f32 0.0, %v2548
      %v2550 = vpop.f32.mrf.mxu0
      %v2551 = vpop.f32.mrf.mxu0
      %v2552 = vadd.f32 0.0, %v2551
      %v2553 = vpop.f32.mrf.mxu0
      %2554 = vmatprep.mubr.bf16.mxu0 %v618
      %2555 = vmatmul.mubr.bf16.gmra.mxu0 %v617
      %v2556 = vpop.f32.mrf.mxu0
      %v2557 = vadd.f32 0.0, %v2556
      %v2558 = vpop.f32.mrf.mxu0
      %v2559 = vpop.f32.mrf.mxu0
      %v2560 = vadd.f32 0.0, %v2559
      %v2561 = vpop.f32.mrf.mxu0
      %2562 = vmatprep.mubr.bf16.mxu0 %v620
      %2563 = vmatmul.mubr.bf16.gmra.mxu0 %v619
      %v2564 = vpop.f32.mrf.mxu0
      %v2565 = vadd.f32 0.0, %v2564
      %v2566 = vpop.f32.mrf.mxu0
      %v2567 = vpop.f32.mrf.mxu0
      %v2568 = vadd.f32 0.0, %v2567
      %v2569 = vpop.f32.mrf.mxu0
      %2570 = vmatprep.mubr.bf16.mxu0 %v622
      %2571 = vmatmul.mubr.bf16.gmra.mxu0 %v621
      %v2572 = vpop.f32.mrf.mxu0
      %v2573 = vadd.f32 0.0, %v2572
      %v2574 = vpop.f32.mrf.mxu0
      %v2575 = vpop.f32.mrf.mxu0
      %v2576 = vadd.f32 0.0, %v2575
      %v2577 = vpop.f32.mrf.mxu0
      %2578 = vmatprep.mubr.bf16.mxu0 %v624
      %2579 = vmatmul.mubr.bf16.gmra.mxu0 %v623
      %v2580 = vpop.f32.mrf.mxu0
      %v2581 = vadd.f32 0.0, %v2580
      %v2582 = vpop.f32.mrf.mxu0
      %v2583 = vpop.f32.mrf.mxu0
      %v2584 = vadd.f32 0.0, %v2583
      %v2585 = vpop.f32.mrf.mxu0
      %2586 = vmatprep.mubr.bf16.mxu0 %v626
      %2587 = vmatmul.mubr.bf16.gmra.mxu0 %v625
      %v2588 = vpop.f32.mrf.mxu0
      %v2589 = vadd.f32 0.0, %v2588
      %v2590 = vpop.f32.mrf.mxu0
      %v2591 = vpop.f32.mrf.mxu0
      %v2592 = vadd.f32 0.0, %v2591
      %v2593 = vpop.f32.mrf.mxu0
      %2594 = vmatprep.mubr.bf16.mxu0 %v628
      %2595 = vmatmul.mubr.bf16.gmra.mxu0 %v627
      %v2596 = vpop.f32.mrf.mxu0
      %v2597 = vadd.f32 0.0, %v2596
      %v2598 = vpop.f32.mrf.mxu0
      %v2599 = vpop.f32.mrf.mxu0
      %v2600 = vadd.f32 0.0, %v2599
      %v2601 = vpop.f32.mrf.mxu0
      %2602 = vmatprep.mubr.bf16.mxu0 %v630
      %2603 = vmatmul.mubr.bf16.gmra.mxu0 %v629
      %v2604 = vpop.f32.mrf.mxu0
      %v2605 = vadd.f32 0.0, %v2604
      %v2606 = vpop.f32.mrf.mxu0
      %v2607 = vpop.f32.mrf.mxu0
      %v2608 = vadd.f32 0.0, %v2607
      %v2609 = vpop.f32.mrf.mxu0
      %2610 = vmatprep.mubr.bf16.mxu0 %v632
      %2611 = vmatmul.mubr.bf16.gmra.mxu0 %v631
      %v2612 = vpop.f32.mrf.mxu0
      %v2613 = vadd.f32 0.0, %v2612
      %v2614 = vpop.f32.mrf.mxu0
      %v2615 = vpop.f32.mrf.mxu0
      %v2616 = vadd.f32 0.0, %v2615
      %v2617 = vpop.f32.mrf.mxu0
      %2618 = vmatprep.mubr.bf16.mxu0 %v634
      %2619 = vmatmul.mubr.bf16.gmra.mxu0 %v633
      %v2620 = vpop.f32.mrf.mxu0
      %v2621 = vadd.f32 0.0, %v2620
      %v2622 = vpop.f32.mrf.mxu0
      %v2623 = vpop.f32.mrf.mxu0
      %v2624 = vadd.f32 0.0, %v2623
      %v2625 = vpop.f32.mrf.mxu0
      %2626 = vmatprep.mubr.bf16.mxu0 %v636
      %2627 = vmatmul.mubr.bf16.gmra.mxu0 %v635
      %v2628 = vpop.f32.mrf.mxu0
      %v2629 = vadd.f32 0.0, %v2628
      %v2630 = vpop.f32.mrf.mxu0
      %v2631 = vpop.f32.mrf.mxu0
      %v2632 = vadd.f32 0.0, %v2631
      %v2633 = vpop.f32.mrf.mxu0
      %2634 = vmatprep.mubr.bf16.mxu0 %v638
      %2635 = vmatmul.mubr.bf16.gmra.mxu0 %v637
      %v2636 = vpop.f32.mrf.mxu0
      %v2637 = vadd.f32 0.0, %v2636
      %v2638 = vpop.f32.mrf.mxu0
      %v2639 = vpop.f32.mrf.mxu0
      %v2640 = vadd.f32 0.0, %v2639
      %v2641 = vpop.f32.mrf.mxu0
      %2642 = vdwg.mxu0
      %v2675 = vunpack.c.l.b16 %v2353
      %v2676 = vunpack.c.l.b16 %v2354
      %v2677 = vunpack.c.l.b16 %v2355
      %v2678 = vunpack.c.l.b16 %v2356
      %v2679 = vunpack.c.l.b16 %v2357
      %v2680 = vunpack.c.l.b16 %v2358
      %v2681 = vunpack.c.l.b16 %v2359
      %v2682 = vunpack.c.l.b16 %v2360
      %v2683 = vunpack.c.l.b16 %v2361
      %v2684 = vunpack.c.l.b16 %v2362
      %v2685 = vunpack.c.l.b16 %v2363
      %v2686 = vunpack.c.l.b16 %v2364
      %v2687 = vunpack.c.l.b16 %v2365
      %v2688 = vunpack.c.l.b16 %v2366
      %v2689 = vunpack.c.l.b16 %v2367
      %v2690 = vunpack.c.l.b16 %v2368
      %v2691 = vunpack.c.l.b16 %v2369
      %v2692 = vunpack.c.l.b16 %v2370
      %v2693 = vunpack.c.l.b16 %v2371
      %v2694 = vunpack.c.l.b16 %v2372
      %v2695 = vunpack.c.l.b16 %v2373
      %v2696 = vunpack.c.l.b16 %v2374
      %v2697 = vunpack.c.l.b16 %v2375
      %v2698 = vunpack.c.l.b16 %v2376
      %v2699 = vunpack.c.l.b16 %v2377
      %v2700 = vunpack.c.l.b16 %v2378
      %v2701 = vunpack.c.l.b16 %v2379
      %v2702 = vunpack.c.l.b16 %v2380
      %v2703 = vunpack.c.l.b16 %v2381
      %v2704 = vunpack.c.l.b16 %v2382
      %v2705 = vunpack.c.l.b16 %v2383
      %v2706 = vunpack.c.l.b16 %v2384
      %v2707 = vpack.c.b16 %v2676, %v2675
      %v2708 = vpack.c.b16 %v2678, %v2677
      %v2709 = vpack.c.b16 %v2680, %v2679
      %v2710 = vpack.c.b16 %v2682, %v2681
      %v2711 = vpack.c.b16 %v2684, %v2683
      %v2712 = vpack.c.b16 %v2686, %v2685
      %v2713 = vpack.c.b16 %v2688, %v2687
      %v2714 = vpack.c.b16 %v2690, %v2689
      %v2715 = vpack.c.b16 %v2692, %v2691
      %v2716 = vpack.c.b16 %v2694, %v2693
      %v2717 = vpack.c.b16 %v2696, %v2695
      %v2718 = vpack.c.b16 %v2698, %v2697
      %v2719 = vpack.c.b16 %v2700, %v2699
      %v2720 = vpack.c.b16 %v2702, %v2701
      %v2721 = vpack.c.b16 %v2704, %v2703
      %v2722 = vpack.c.b16 %v2706, %v2705
      %2739 = vmatprep.subr.bf16.mxu0 0
      %2740 = vmatpush1.bf16.msra.mxu0 %v2714
      %2741 = vmatprep.subr.bf16.mxu0 0
      %2742 = vmatpush1.bf16.msra.mxu0 %v2713
      %2743 = vmatprep.subr.bf16.mxu0 0
      %2744 = vmatpush1.bf16.msra.mxu0 %v2712
      %2745 = vmatprep.subr.bf16.mxu0 0
      %2746 = vmatpush1.bf16.msra.mxu0 %v2711
      %2747 = vmatprep.subr.bf16.mxu0 0
      %2748 = vmatpush1.bf16.msra.mxu0 %v2710
      %2749 = vmatprep.subr.bf16.mxu0 0
      %2750 = vmatpush1.bf16.msra.mxu0 %v2709
      %2751 = vmatprep.subr.bf16.mxu0 0
      %2752 = vmatpush1.bf16.msra.mxu0 %v2708
      %2753 = vmatprep.subr.bf16.mxu0 0
      %2754 = vmatpush1.bf16.msra.mxu0 %v2707
      %2755 = vmatprep.subr.bf16.mxu0 0
      %2756 = vmatpush2.bf16.msra.mxu0 %v2722
      %2757 = vmatprep.subr.bf16.mxu0 0
      %2758 = vmatpush2.bf16.msra.mxu0 %v2721
      %2759 = vmatprep.subr.bf16.mxu0 0
      %2760 = vmatpush2.bf16.msra.mxu0 %v2720
      %2761 = vmatprep.subr.bf16.mxu0 0
      %2762 = vmatpush2.bf16.msra.mxu0 %v2719
      %2763 = vmatprep.subr.bf16.mxu0 0
      %2764 = vmatpush2.bf16.msra.mxu0 %v2718
      %2765 = vmatprep.subr.bf16.mxu0 0
      %2766 = vmatpush2.bf16.msra.mxu0 %v2717
      %2767 = vmatprep.subr.bf16.mxu0 0
      %2768 = vmatpush2.bf16.msra.mxu0 %v2716
      %2769 = vmatprep.subr.bf16.mxu0 0
      %2770 = vmatpush2.bf16.msra.mxu0 %v2715
      %2771 = vmatprep.mubr.bf16.mxu0 %v890
      %2772 = vmatmul.mubr.bf16.gmra.mxu0 %v889
      %v2773 = vpop.f32.mrf.mxu0
      %v2774 = vadd.f32 %v2549, %v2773
      %v2775 = vpop.f32.mrf.mxu0
      %v2776 = vpop.f32.mrf.mxu0
      %v2777 = vadd.f32 %v2552, %v2776
      %v2778 = vpop.f32.mrf.mxu0
      %2779 = vmatprep.mubr.bf16.mxu0 %v892
      %2780 = vmatmul.mubr.bf16.gmra.mxu0 %v891
      %v2781 = vpop.f32.mrf.mxu0
      %v2782 = vadd.f32 %v2557, %v2781
      %v2783 = vpop.f32.mrf.mxu0
      %v2784 = vpop.f32.mrf.mxu0
      %v2785 = vadd.f32 %v2560, %v2784
      %v2786 = vpop.f32.mrf.mxu0
      %2787 = vmatprep.mubr.bf16.mxu0 %v894
      %2788 = vmatmul.mubr.bf16.gmra.mxu0 %v893
      %v2789 = vpop.f32.mrf.mxu0
      %v2790 = vadd.f32 %v2565, %v2789
      %v2791 = vpop.f32.mrf.mxu0
      %v2792 = vpop.f32.mrf.mxu0
      %v2793 = vadd.f32 %v2568, %v2792
      %v2794 = vpop.f32.mrf.mxu0
      %2795 = vmatprep.mubr.bf16.mxu0 %v896
      %2796 = vmatmul.mubr.bf16.gmra.mxu0 %v895
      %v2797 = vpop.f32.mrf.mxu0
      %v2798 = vadd.f32 %v2573, %v2797
      %v2799 = vpop.f32.mrf.mxu0
      %v2800 = vpop.f32.mrf.mxu0
      %v2801 = vadd.f32 %v2576, %v2800
      %v2802 = vpop.f32.mrf.mxu0
      %2803 = vmatprep.mubr.bf16.mxu0 %v898
      %2804 = vmatmul.mubr.bf16.gmra.mxu0 %v897
      %v2805 = vpop.f32.mrf.mxu0
      %v2806 = vadd.f32 %v2581, %v2805
      %v2807 = vpop.f32.mrf.mxu0
      %v2808 = vpop.f32.mrf.mxu0
      %v2809 = vadd.f32 %v2584, %v2808
      %v2810 = vpop.f32.mrf.mxu0
      %2811 = vmatprep.mubr.bf16.mxu0 %v900
      %2812 = vmatmul.mubr.bf16.gmra.mxu0 %v899
      %v2813 = vpop.f32.mrf.mxu0
      %v2814 = vadd.f32 %v2589, %v2813
      %v2815 = vpop.f32.mrf.mxu0
      %v2816 = vpop.f32.mrf.mxu0
      %v2817 = vadd.f32 %v2592, %v2816
      %v2818 = vpop.f32.mrf.mxu0
      %2819 = vmatprep.mubr.bf16.mxu0 %v902
      %2820 = vmatmul.mubr.bf16.gmra.mxu0 %v901
      %v2821 = vpop.f32.mrf.mxu0
      %v2822 = vadd.f32 %v2597, %v2821
      %v2823 = vpop.f32.mrf.mxu0
      %v2824 = vpop.f32.mrf.mxu0
      %v2825 = vadd.f32 %v2600, %v2824
      %v2826 = vpop.f32.mrf.mxu0
      %2827 = vmatprep.mubr.bf16.mxu0 %v904
      %2828 = vmatmul.mubr.bf16.gmra.mxu0 %v903
      %v2829 = vpop.f32.mrf.mxu0
      %v2830 = vadd.f32 %v2605, %v2829
      %v2831 = vpop.f32.mrf.mxu0
      %v2832 = vpop.f32.mrf.mxu0
      %v2833 = vadd.f32 %v2608, %v2832
      %v2834 = vpop.f32.mrf.mxu0
      %2835 = vmatprep.mubr.bf16.mxu0 %v906
      %2836 = vmatmul.mubr.bf16.gmra.mxu0 %v905
      %v2837 = vpop.f32.mrf.mxu0
      %v2838 = vadd.f32 %v2613, %v2837
      %v2839 = vpop.f32.mrf.mxu0
      %v2840 = vpop.f32.mrf.mxu0
      %v2841 = vadd.f32 %v2616, %v2840
      %v2842 = vpop.f32.mrf.mxu0
      %2843 = vmatprep.mubr.bf16.mxu0 %v908
      %2844 = vmatmul.mubr.bf16.gmra.mxu0 %v907
      %v2845 = vpop.f32.mrf.mxu0
      %v2846 = vadd.f32 %v2621, %v2845
      %v2847 = vpop.f32.mrf.mxu0
      %v2848 = vpop.f32.mrf.mxu0
      %v2849 = vadd.f32 %v2624, %v2848
      %v2850 = vpop.f32.mrf.mxu0
      %2851 = vmatprep.mubr.bf16.mxu0 %v910
      %2852 = vmatmul.mubr.bf16.gmra.mxu0 %v909
      %v2853 = vpop.f32.mrf.mxu0
      %v2854 = vadd.f32 %v2629, %v2853
      %v2855 = vpop.f32.mrf.mxu0
      %v2856 = vpop.f32.mrf.mxu0
      %v2857 = vadd.f32 %v2632, %v2856
      %v2858 = vpop.f32.mrf.mxu0
      %2859 = vmatprep.mubr.bf16.mxu0 %v912
      %2860 = vmatmul.mubr.bf16.gmra.mxu0 %v911
      %v2861 = vpop.f32.mrf.mxu0
      %v2862 = vadd.f32 %v2637, %v2861
      %v2863 = vpop.f32.mrf.mxu0
      %v2864 = vpop.f32.mrf.mxu0
      %v2865 = vadd.f32 %v2640, %v2864
      %v2866 = vpop.f32.mrf.mxu0
      %2867 = vdwg.mxu0
      %s2868 = scalar_lea.vmem %s1, 1024
      %v2869 = vld [vmem:[%s2868] sm:$0xf]
      %v2870 = vld [vmem:[%s2868 + $0x4] sm:$0xf]
      %v2871 = vld [vmem:[%s2868 + $0x8] sm:$0xf]
      %v2872 = vld [vmem:[%s2868 + $0xc] sm:$0xf]
      %v2873 = vld [vmem:[%s2868 + $0x10] sm:$0xf]
      %v2874 = vld [vmem:[%s2868 + $0x14] sm:$0xf]
      %v2875 = vld [vmem:[%s2868 + $0x18] sm:$0xf]
      %v2876 = vld [vmem:[%s2868 + $0x1c] sm:$0xf]
      %v2877 = vld [vmem:[%s2868 + $0x20] sm:$0xf]
      %v2878 = vld [vmem:[%s2868 + $0x24] sm:$0xf]
      %v2879 = vld [vmem:[%s2868 + $0x28] sm:$0xf]
      %v2880 = vld [vmem:[%s2868 + $0x2c] sm:$0xf]
      %v2881 = vld [vmem:[%s2868 + $0x30] sm:$0xf]
      %v2882 = vld [vmem:[%s2868 + $0x34] sm:$0xf]
      %v2883 = vld [vmem:[%s2868 + $0x38] sm:$0xf]
      %v2884 = vld [vmem:[%s2868 + $0x3c] sm:$0xf]
      %v2885 = vld [vmem:[%s2868 + $0x40] sm:$0xf]
      %v2886 = vld [vmem:[%s2868 + $0x44] sm:$0xf]
      %v2887 = vld [vmem:[%s2868 + $0x48] sm:$0xf]
      %v2888 = vld [vmem:[%s2868 + $0x4c] sm:$0xf]
      %v2889 = vld [vmem:[%s2868 + $0x50] sm:$0xf]
      %v2890 = vld [vmem:[%s2868 + $0x54] sm:$0xf]
      %v2891 = vld [vmem:[%s2868 + $0x58] sm:$0xf]
      %v2892 = vld [vmem:[%s2868 + $0x5c] sm:$0xf]
      %v2893 = vld [vmem:[%s2868 + $0x60] sm:$0xf]
      %v2894 = vld [vmem:[%s2868 + $0x64] sm:$0xf]
      %v2895 = vld [vmem:[%s2868 + $0x68] sm:$0xf]
      %v2896 = vld [vmem:[%s2868 + $0x6c] sm:$0xf]
      %v2897 = vld [vmem:[%s2868 + $0x70] sm:$0xf]
      %v2898 = vld [vmem:[%s2868 + $0x74] sm:$0xf]
      %v2899 = vld [vmem:[%s2868 + $0x78] sm:$0xf]
      %v2900 = vld [vmem:[%s2868 + $0x7c] sm:$0xf]
      %v2933 = vunpack.c.l.b16 %v2869
      %v2934 = vunpack.c.l.b16 %v2870
      %v2935 = vunpack.c.l.b16 %v2871
      %v2936 = vunpack.c.l.b16 %v2872
      %v2937 = vunpack.c.l.b16 %v2873
      %v2938 = vunpack.c.l.b16 %v2874
      %v2939 = vunpack.c.l.b16 %v2875
      %v2940 = vunpack.c.l.b16 %v2876
      %v2941 = vunpack.c.l.b16 %v2877
      %v2942 = vunpack.c.l.b16 %v2878
      %v2943 = vunpack.c.l.b16 %v2879
      %v2944 = vunpack.c.l.b16 %v2880
      %v2945 = vunpack.c.l.b16 %v2881
      %v2946 = vunpack.c.l.b16 %v2882
      %v2947 = vunpack.c.l.b16 %v2883
      %v2948 = vunpack.c.l.b16 %v2884
      %v2949 = vunpack.c.l.b16 %v2885
      %v2950 = vunpack.c.l.b16 %v2886
      %v2951 = vunpack.c.l.b16 %v2887
      %v2952 = vunpack.c.l.b16 %v2888
      %v2953 = vunpack.c.l.b16 %v2889
      %v2954 = vunpack.c.l.b16 %v2890
      %v2955 = vunpack.c.l.b16 %v2891
      %v2956 = vunpack.c.l.b16 %v2892
      %v2957 = vunpack.c.l.b16 %v2893
      %v2958 = vunpack.c.l.b16 %v2894
      %v2959 = vunpack.c.l.b16 %v2895
      %v2960 = vunpack.c.l.b16 %v2896
      %v2961 = vunpack.c.l.b16 %v2897
      %v2962 = vunpack.c.l.b16 %v2898
      %v2963 = vunpack.c.l.b16 %v2899
      %v2964 = vunpack.c.l.b16 %v2900
      %v2965 = vpack.c.b16 %v2934, %v2933
      %v2966 = vpack.c.b16 %v2936, %v2935
      %v2967 = vpack.c.b16 %v2938, %v2937
      %v2968 = vpack.c.b16 %v2940, %v2939
      %v2969 = vpack.c.b16 %v2942, %v2941
      %v2970 = vpack.c.b16 %v2944, %v2943
      %v2971 = vpack.c.b16 %v2946, %v2945
      %v2972 = vpack.c.b16 %v2948, %v2947
      %v2973 = vpack.c.b16 %v2950, %v2949
      %v2974 = vpack.c.b16 %v2952, %v2951
      %v2975 = vpack.c.b16 %v2954, %v2953
      %v2976 = vpack.c.b16 %v2956, %v2955
      %v2977 = vpack.c.b16 %v2958, %v2957
      %v2978 = vpack.c.b16 %v2960, %v2959
      %v2979 = vpack.c.b16 %v2962, %v2961
      %v2980 = vpack.c.b16 %v2964, %v2963
      %2997 = vmatprep.subr.bf16.mxu0 0
      %2998 = vmatpush1.bf16.msra.mxu0 %v2972
      %2999 = vmatprep.subr.bf16.mxu0 0
      %3000 = vmatpush1.bf16.msra.mxu0 %v2971
      %3001 = vmatprep.subr.bf16.mxu0 0
      %3002 = vmatpush1.bf16.msra.mxu0 %v2970
      %3003 = vmatprep.subr.bf16.mxu0 0
      %3004 = vmatpush1.bf16.msra.mxu0 %v2969
      %3005 = vmatprep.subr.bf16.mxu0 0
      %3006 = vmatpush1.bf16.msra.mxu0 %v2968
      %3007 = vmatprep.subr.bf16.mxu0 0
      %3008 = vmatpush1.bf16.msra.mxu0 %v2967
      %3009 = vmatprep.subr.bf16.mxu0 0
      %3010 = vmatpush1.bf16.msra.mxu0 %v2966
      %3011 = vmatprep.subr.bf16.mxu0 0
      %3012 = vmatpush1.bf16.msra.mxu0 %v2965
      %3013 = vmatprep.subr.bf16.mxu0 0
      %3014 = vmatpush2.bf16.msra.mxu0 %v2980
      %3015 = vmatprep.subr.bf16.mxu0 0
      %3016 = vmatpush2.bf16.msra.mxu0 %v2979
      %3017 = vmatprep.subr.bf16.mxu0 0
      %3018 = vmatpush2.bf16.msra.mxu0 %v2978
      %3019 = vmatprep.subr.bf16.mxu0 0
      %3020 = vmatpush2.bf16.msra.mxu0 %v2977
      %3021 = vmatprep.subr.bf16.mxu0 0
      %3022 = vmatpush2.bf16.msra.mxu0 %v2976
      %3023 = vmatprep.subr.bf16.mxu0 0
      %3024 = vmatpush2.bf16.msra.mxu0 %v2975
      %3025 = vmatprep.subr.bf16.mxu0 0
      %3026 = vmatpush2.bf16.msra.mxu0 %v2974
      %3027 = vmatprep.subr.bf16.mxu0 0
      %3028 = vmatpush2.bf16.msra.mxu0 %v2973
      %3029 = vmatprep.mubr.bf16.mxu0 %v896
      %3030 = vmatmul.mubr.bf16.gmra.mxu0 %v895
      %v3031 = vpop.f32.mrf.mxu0
      %v3032 = vadd.f32 0.0, %v3031
      %v3033 = vpop.f32.mrf.mxu0
      %v3034 = vpop.f32.mrf.mxu0
      %v3035 = vadd.f32 0.0, %v3034
      %v3036 = vpop.f32.mrf.mxu0
      %3037 = vmatprep.mubr.bf16.mxu0 %v898
      %3038 = vmatmul.mubr.bf16.gmra.mxu0 %v897
      %v3039 = vpop.f32.mrf.mxu0
      %v3040 = vadd.f32 0.0, %v3039
      %v3041 = vpop.f32.mrf.mxu0
      %v3042 = vpop.f32.mrf.mxu0
      %v3043 = vadd.f32 0.0, %v3042
      %v3044 = vpop.f32.mrf.mxu0
      %3045 = vmatprep.mubr.bf16.mxu0 %v900
      %3046 = vmatmul.mubr.bf16.gmra.mxu0 %v899
      %v3047 = vpop.f32.mrf.mxu0
      %v3048 = vadd.f32 0.0, %v3047
      %v3049 = vpop.f32.mrf.mxu0
      %v3050 = vpop.f32.mrf.mxu0
      %v3051 = vadd.f32 0.0, %v3050
      %v3052 = vpop.f32.mrf.mxu0
      %3053 = vmatprep.mubr.bf16.mxu0 %v902
      %3054 = vmatmul.mubr.bf16.gmra.mxu0 %v901
      %v3055 = vpop.f32.mrf.mxu0
      %v3056 = vadd.f32 0.0, %v3055
      %v3057 = vpop.f32.mrf.mxu0
      %v3058 = vpop.f32.mrf.mxu0
      %v3059 = vadd.f32 0.0, %v3058
      %v3060 = vpop.f32.mrf.mxu0
      %3061 = vmatprep.mubr.bf16.mxu0 %v904
      %3062 = vmatmul.mubr.bf16.gmra.mxu0 %v903
      %v3063 = vpop.f32.mrf.mxu0
      %v3064 = vadd.f32 0.0, %v3063
      %v3065 = vpop.f32.mrf.mxu0
      %v3066 = vpop.f32.mrf.mxu0
      %v3067 = vadd.f32 0.0, %v3066
      %v3068 = vpop.f32.mrf.mxu0
      %3069 = vmatprep.mubr.bf16.mxu0 %v906
      %3070 = vmatmul.mubr.bf16.gmra.mxu0 %v905
      %v3071 = vpop.f32.mrf.mxu0
      %v3072 = vadd.f32 0.0, %v3071
      %v3073 = vpop.f32.mrf.mxu0
      %v3074 = vpop.f32.mrf.mxu0
      %v3075 = vadd.f32 0.0, %v3074
      %v3076 = vpop.f32.mrf.mxu0
      %3077 = vmatprep.mubr.bf16.mxu0 %v908
      %3078 = vmatmul.mubr.bf16.gmra.mxu0 %v907
      %v3079 = vpop.f32.mrf.mxu0
      %v3080 = vadd.f32 0.0, %v3079
      %v3081 = vpop.f32.mrf.mxu0
      %v3082 = vpop.f32.mrf.mxu0
      %v3083 = vadd.f32 0.0, %v3082
      %v3084 = vpop.f32.mrf.mxu0
      %3085 = vmatprep.mubr.bf16.mxu0 %v910
      %3086 = vmatmul.mubr.bf16.gmra.mxu0 %v909
      %v3087 = vpop.f32.mrf.mxu0
      %v3088 = vadd.f32 0.0, %v3087
      %v3089 = vpop.f32.mrf.mxu0
      %v3090 = vpop.f32.mrf.mxu0
      %v3091 = vadd.f32 0.0, %v3090
      %v3092 = vpop.f32.mrf.mxu0
      %3093 = vmatprep.mubr.bf16.mxu0 %v912
      %3094 = vmatmul.mubr.bf16.gmra.mxu0 %v911
      %v3095 = vpop.f32.mrf.mxu0
      %v3096 = vadd.f32 0.0, %v3095
      %v3097 = vpop.f32.mrf.mxu0
      %v3098 = vpop.f32.mrf.mxu0
      %v3099 = vadd.f32 0.0, %v3098
      %v3100 = vpop.f32.mrf.mxu0
      %3101 = vmatprep.mubr.bf16.mxu0 %v1197
      %3102 = vmatmul.mubr.bf16.gmra.mxu0 %v1196
      %v3103 = vpop.f32.mrf.mxu0
      %v3104 = vadd.f32 0.0, %v3103
      %v3105 = vpop.f32.mrf.mxu0
      %v3106 = vpop.f32.mrf.mxu0
      %v3107 = vadd.f32 0.0, %v3106
      %v3108 = vpop.f32.mrf.mxu0
      %3109 = vmatprep.mubr.bf16.mxu0 %v1199
      %3110 = vmatmul.mubr.bf16.gmra.mxu0 %v1198
      %v3111 = vpop.f32.mrf.mxu0
      %v3112 = vadd.f32 0.0, %v3111
      %v3113 = vpop.f32.mrf.mxu0
      %v3114 = vpop.f32.mrf.mxu0
      %v3115 = vadd.f32 0.0, %v3114
      %v3116 = vpop.f32.mrf.mxu0
      %3117 = vmatprep.mubr.bf16.mxu0 %v1201
      %3118 = vmatmul.mubr.bf16.gmra.mxu0 %v1200
      %v3119 = vpop.f32.mrf.mxu0
      %v3120 = vadd.f32 0.0, %v3119
      %v3121 = vpop.f32.mrf.mxu0
      %v3122 = vpop.f32.mrf.mxu0
      %v3123 = vadd.f32 0.0, %v3122
      %v3124 = vpop.f32.mrf.mxu0
      %3125 = vdwg.mxu0
      %v3126 = vadd.f32 %v2774, %v3032
      %v3127 = vadd.f32 %v2777, %v3035
      %v3128 = vadd.f32 %v2782, %v3040
      %v3129 = vadd.f32 %v2785, %v3043
      %v3130 = vadd.f32 %v2790, %v3048
      %v3131 = vadd.f32 %v2793, %v3051
      %v3132 = vadd.f32 %v2798, %v3056
      %v3133 = vadd.f32 %v2801, %v3059
      %v3134 = vadd.f32 %v2806, %v3064
      %v3135 = vadd.f32 %v2809, %v3067
      %v3136 = vadd.f32 %v2814, %v3072
      %v3137 = vadd.f32 %v2817, %v3075
      %v3138 = vadd.f32 %v2822, %v3080
      %v3139 = vadd.f32 %v2825, %v3083
      %v3140 = vadd.f32 %v2830, %v3088
      %v3141 = vadd.f32 %v2833, %v3091
      %v3142 = vadd.f32 %v2838, %v3096
      %v3143 = vadd.f32 %v2841, %v3099
      %v3144 = vadd.f32 %v2846, %v3104
      %v3145 = vadd.f32 %v2849, %v3107
      %v3146 = vadd.f32 %v2854, %v3112
      %v3147 = vadd.f32 %v2857, %v3115
      %v3148 = vadd.f32 %v2862, %v3120
      %v3149 = vadd.f32 %v2865, %v3123
      %vm3174 = vcmask 1045504
      %v3175 = vrot.slane %v3126, 2
      %v3176 = vrot.slane %v3127, 2
      %v3177 = vsel %vm3174, %v3175, %v3176
      %v3178 = vrot.slane %v3128, 2
      %v3179 = vsel %vm3174, %v3176, %v3178
      %v3180 = vrot.slane %v3129, 2
      %v3181 = vrot.slane %v3130, 2
      %v3182 = vsel %vm3174, %v3180, %v3181
      %v3183 = vrot.slane %v3131, 2
      %v3184 = vsel %vm3174, %v3181, %v3183
      %v3185 = vrot.slane %v3132, 2
      %v3186 = vrot.slane %v3133, 2
      %v3187 = vsel %vm3174, %v3185, %v3186
      %v3188 = vrot.slane %v3134, 2
      %v3189 = vsel %vm3174, %v3186, %v3188
      %v3190 = vrot.slane %v3135, 2
      %v3191 = vrot.slane %v3136, 2
      %v3192 = vsel %vm3174, %v3190, %v3191
      %v3193 = vrot.slane %v3137, 2
      %v3194 = vsel %vm3174, %v3191, %v3193
      %v3195 = vrot.slane %v3138, 2
      %v3196 = vrot.slane %v3139, 2
      %v3197 = vsel %vm3174, %v3195, %v3196
      %v3198 = vrot.slane %v3140, 2
      %v3199 = vsel %vm3174, %v3196, %v3198
      %v3200 = vrot.slane %v3141, 2
      %v3201 = vrot.slane %v3142, 2
      %v3202 = vsel %vm3174, %v3200, %v3201
      %v3203 = vrot.slane %v3143, 2
      %v3204 = vsel %vm3174, %v3201, %v3203
      %v3205 = vrot.slane %v3144, 2
      %v3206 = vrot.slane %v3145, 2
      %v3207 = vsel %vm3174, %v3205, %v3206
      %v3208 = vrot.slane %v3146, 2
      %v3209 = vsel %vm3174, %v3206, %v3208
      %v3210 = vrot.slane %v3147, 2
      %v3211 = vrot.slane %v3148, 2
      %v3212 = vsel %vm3174, %v3210, %v3211
      %v3213 = vrot.slane %v3149, 2
      %v3214 = vsel %vm3174, %v3211, %v3213
      %v3231 = vadd.f32 %v2336, %v3177
      %v3232 = vadd.f32 %v2337, %v3179
      %v3233 = vadd.f32 %v2338, %v3182
      %v3234 = vadd.f32 %v2339, %v3184
      %v3235 = vadd.f32 %v2340, %v3187
      %v3236 = vadd.f32 %v2341, %v3189
      %v3237 = vadd.f32 %v2342, %v3192
      %v3238 = vadd.f32 %v2343, %v3194
      %v3239 = vadd.f32 %v2344, %v3197
      %v3240 = vadd.f32 %v2345, %v3199
      %v3241 = vadd.f32 %v2346, %v3202
      %v3242 = vadd.f32 %v2347, %v3204
      %v3243 = vadd.f32 %v2348, %v3207
      %v3244 = vadd.f32 %v2349, %v3209
      %v3245 = vadd.f32 %v2350, %v3212
      %v3246 = vadd.f32 %v2351, %v3214
      %v3247 = vld [vmem:[%s2] sm:$0x1]
      %v3249 = vlaneseq
      %v3250 = vshrl.u32 %v3249, 7
      %v3251 = vsub.s32 0, %v3250
      %v3252 = vrot.slane %v3247, %v3251
      %v3254 = vadd.f32 %v3231, %v3252
      %v3255 = vadd.f32 %v3232, %v3252
      %v3256 = vadd.f32 %v3233, %v3252
      %v3257 = vadd.f32 %v3234, %v3252
      %v3258 = vadd.f32 %v3235, %v3252
      %v3259 = vadd.f32 %v3236, %v3252
      %v3260 = vadd.f32 %v3237, %v3252
      %v3261 = vadd.f32 %v3238, %v3252
      %v3262 = vadd.f32 %v3239, %v3252
      %v3263 = vadd.f32 %v3240, %v3252
      %v3264 = vadd.f32 %v3241, %v3252
      %v3265 = vadd.f32 %v3242, %v3252
      %v3266 = vadd.f32 %v3243, %v3252
      %v3267 = vadd.f32 %v3244, %v3252
      %v3268 = vadd.f32 %v3245, %v3252
      %v3269 = vadd.f32 %v3246, %v3252
      %v3270 = vmax.f32 %v3254, 0.0
      %v3271 = vmax.f32 %v3255, 0.0
      %v3272 = vmax.f32 %v3256, 0.0
      %v3273 = vmax.f32 %v3257, 0.0
      %v3274 = vmax.f32 %v3258, 0.0
      %v3275 = vmax.f32 %v3259, 0.0
      %v3276 = vmax.f32 %v3260, 0.0
      %v3277 = vmax.f32 %v3261, 0.0
      %v3278 = vmax.f32 %v3262, 0.0
      %v3279 = vmax.f32 %v3263, 0.0
      %v3280 = vmax.f32 %v3264, 0.0
      %v3281 = vmax.f32 %v3265, 0.0
      %v3282 = vmax.f32 %v3266, 0.0
      %v3283 = vmax.f32 %v3267, 0.0
      %v3284 = vmax.f32 %v3268, 0.0
      %v3285 = vmax.f32 %v3269, 0.0
      %3286 = vst [vmem:[%s188] sm:$0xff] %v3270
      %3287 = vst [vmem:[%s188 + $0x8] sm:$0xff] %v3271
      %3288 = vst [vmem:[%s188 + $0x10] sm:$0xff] %v3272
      %3289 = vst [vmem:[%s188 + $0x18] sm:$0xff] %v3273
      %3290 = vst [vmem:[%s188 + $0x20] sm:$0xff] %v3274
      %3291 = vst [vmem:[%s188 + $0x28] sm:$0xff] %v3275
      %3292 = vst [vmem:[%s188 + $0x30] sm:$0xff] %v3276
      %3293 = vst [vmem:[%s188 + $0x38] sm:$0xff] %v3277
      %3294 = vst [vmem:[%s188 + $0x40] sm:$0xff] %v3278
      %3295 = vst [vmem:[%s188 + $0x48] sm:$0xff] %v3279
      %3296 = vst [vmem:[%s188 + $0x50] sm:$0xff] %v3280
      %3297 = vst [vmem:[%s188 + $0x58] sm:$0xff] %v3281
      %3298 = vst [vmem:[%s188 + $0x60] sm:$0xff] %v3282
      %3299 = vst [vmem:[%s188 + $0x68] sm:$0xff] %v3283
      %3300 = vst [vmem:[%s188 + $0x70] sm:$0xff] %v3284
      %3301 = vst [vmem:[%s188 + $0x78] sm:$0xff] %v3285
      %v3302 = vadd.f32 %v3270, %v3271
      %v3303 = vadd.f32 %v3302, %v3272
      %v3304 = vadd.f32 %v3303, %v3273
      %v3305 = vadd.f32 %v3304, %v3274
      %v3306 = vadd.f32 %v3305, %v3275
      %v3307 = vadd.f32 %v3306, %v3276
      %v3308 = vadd.f32 %v3307, %v3277
      %v3309 = vadd.f32 %v3308, %v3278
      %v3310 = vadd.f32 %v3309, %v3279
      %v3311 = vadd.f32 %v3310, %v3280
      %v3312 = vadd.f32 %v3311, %v3281
      %v3313 = vadd.f32 %v3312, %v3282
      %v3314 = vadd.f32 %v3313, %v3283
      %v3315 = vadd.f32 %v3314, %v3284
      %v3316 = vadd.f32 %v3315, %v3285
      %v3317 = vrot.slane %v3316, 4
      %v3318 = vadd.f32 %v3316, %v3317
      %v3319 = vrot.slane %v3318, 2
      %v3320 = vadd.f32 %v3318, %v3319
      %v3321 = vrot.slane %v3320, 1
      %v3322 = vadd.f32 %v3320, %v3321
      %v3323 = vmul.f32 %v3270, %v3270
      %v3324 = vmul.f32 %v3271, %v3271
      %v3325 = vmul.f32 %v3272, %v3272
      %v3326 = vmul.f32 %v3273, %v3273
      %v3327 = vmul.f32 %v3274, %v3274
      %v3328 = vmul.f32 %v3275, %v3275
      %v3329 = vmul.f32 %v3276, %v3276
      %v3330 = vmul.f32 %v3277, %v3277
      %v3331 = vmul.f32 %v3278, %v3278
      %v3332 = vmul.f32 %v3279, %v3279
      %v3333 = vmul.f32 %v3280, %v3280
      %v3334 = vmul.f32 %v3281, %v3281
      %v3335 = vmul.f32 %v3282, %v3282
      %v3336 = vmul.f32 %v3283, %v3283
      %v3337 = vmul.f32 %v3284, %v3284
      %v3338 = vmul.f32 %v3285, %v3285
      %v3339 = vadd.f32 %v3323, %v3324
      %v3340 = vadd.f32 %v3339, %v3325
      %v3341 = vadd.f32 %v3340, %v3326
      %v3342 = vadd.f32 %v3341, %v3327
      %v3343 = vadd.f32 %v3342, %v3328
      %v3344 = vadd.f32 %v3343, %v3329
      %v3345 = vadd.f32 %v3344, %v3330
      %v3346 = vadd.f32 %v3345, %v3331
      %v3347 = vadd.f32 %v3346, %v3332
      %v3348 = vadd.f32 %v3347, %v3333
      %v3349 = vadd.f32 %v3348, %v3334
      %v3350 = vadd.f32 %v3349, %v3335
      %v3351 = vadd.f32 %v3350, %v3336
      %v3352 = vadd.f32 %v3351, %v3337
      %v3353 = vadd.f32 %v3352, %v3338
      %v3354 = vrot.slane %v3353, 4
      %v3355 = vadd.f32 %v3353, %v3354
      %v3356 = vrot.slane %v3355, 2
      %v3357 = vadd.f32 %v3355, %v3356
      %v3358 = vrot.slane %v3357, 1
      %v3359 = vadd.f32 %v3357, %v3358
      %vm3360 = vcmask 1040384
      %v3361 = vsel %vm3360, %v3322, %v3359
      %vm3362 = vcmask 1041408
      %v3363 = vsel %vm3362, %v3361, 0.0
      %3364 = vst [vmem:[%s197] sm:$0xff] %v3363
      %s3365 = smul.u32 8, %s21
      %p3366 = scmp.lt.s32.totalorder %s20, 1
      %s3367 = scalar_select %p3366, %s20, 1
      %p3368 = scmp.lt.s32.totalorder %s3365, 15
      %s3369 = scalar_select %p3368, %s3365, 15
      %s3370 = smul.addr %s3369, 2
      %s3371 = smul.addr %s3367, 32
      %s3372 = sadd.s32 %s3370, %s3371
      %s3373 = smul.addr %s3372, 8
      %s3374 = scalar_lea.vmem %s3, %s3373
      %p3375 = scmp.lt.s32.totalorder %s20, 1
      %s3376 = scalar_select %p3375, %s20, 1
      %p3377 = scmp.lt.s32.totalorder %s21, 1
      %s3378 = scalar_select %p3377, %s21, 1
      %s3379 = smul.addr %s3376, 2
      %s3380 = sadd.s32 %s3378, %s3379
      %s3381 = smul.addr %s3380, 8
      %s3382 = scalar_lea.vmem %s4, %s3381
      // Predicated region
      $region105: #{unet_up_block_forward.4} parent=27 // pred_check
        %p3383 = pneg %p90
      $region106: #{unet_up_block_forward.4} parent=27 // pred_check_branch
        %3385 = sbr.rel (%p3383) target = $region108
      $region107: #{unet_up_block_forward.4} parent=27 // pred_region
        %s3386 = smul.u32 8, %s21
      $region108: #{unet_up_block_forward.4} parent=27 // pred_fallthru
        _
      // Predicated region
      $region109: #{unet_up_block_forward.4} parent=27 // pred_check
        %p3387 = pneg %p118
      $region110: #{unet_up_block_forward.4} parent=27 // pred_check_branch
        %3389 = sbr.rel (%p3387) target = $region112
      $region111: #{unet_up_block_forward.4} parent=27 // pred_region
        _
      $region112: #{unet_up_block_forward.4} parent=27 // pred_fallthru
        _
    $region28: #{unet_up_block_forward.4} parent=5 // pred_fallthru
      _
    %p3390 = scmp.le.s32.totalorder 2, %s11
    // Predicated region
    $region113: #{unet_up_block_forward.4} parent=5 // pred_check
      %p3391 = pneg %p3390
    $region114: #{unet_up_block_forward.4} parent=5 // pred_check_branch
      %3393 = sbr.rel (%p3391) target = $region116
    $region115: #{unet_up_block_forward.4} parent=5 // pred_region
      %s3394 = ssub.s32 %s11, 2
      // Predicated region
      $region117: #{unet_up_block_forward.4} parent=115 // pred_check
        %p3395 = pneg %p96
      $region118: #{unet_up_block_forward.4} parent=115 // pred_check_branch
        %3397 = sbr.rel (%p3395) target = $region120
      $region119: #{unet_up_block_forward.4} parent=115 // pred_region
        %s3398 = smul.u32 8, %s23
        %p3399 = scmp.lt.s32.totalorder %s22, 1
        %s3400 = scalar_select %p3399, %s22, 1
        %p3401 = scmp.lt.s32.totalorder %s3398, 15
        %s3402 = scalar_select %p3401, %s3398, 15
        %s3403 = smul.addr %s3402, 2
        %s3404 = smul.addr %s3400, 32
        %s3405 = sadd.s32 %s3403, %s3404
        %s3406 = smul.addr %s3405, 8
        %s3407 = scalar_lea.vmem %s3, %s3406
      $region120: #{unet_up_block_forward.4} parent=115 // pred_fallthru
        _
      // Predicated region
      $region121: #{unet_up_block_forward.4} parent=115 // pred_check
        %p3408 = pneg %p124
      $region122: #{unet_up_block_forward.4} parent=115 // pred_check_branch
        %3410 = sbr.rel (%p3408) target = $region124
      $region123: #{unet_up_block_forward.4} parent=115 // pred_region
        %p3411 = scmp.lt.s32.totalorder %s22, 1
        %s3412 = scalar_select %p3411, %s22, 1
        %p3413 = scmp.lt.s32.totalorder %s23, 1
        %s3414 = scalar_select %p3413, %s23, 1
        %s3415 = smul.addr %s3412, 2
        %s3416 = sadd.s32 %s3414, %s3415
        %s3417 = smul.addr %s3416, 8
        %s3418 = scalar_lea.vmem %s4, %s3417
      $region124: #{unet_up_block_forward.4} parent=115 // pred_fallthru
        _
    $region116: #{unet_up_block_forward.4} parent=5 // pred_fallthru
      _
  $region6: #{unet_up_block_forward.4} parent=0 // loop_footer
    %s15 = sadd.s32 1, %s11
  $region7: #{unet_up_block_forward.4} parent=0 // loop_footer_branch
    %10 = sbr.rel target = $region3
  $region8: #{unet_up_block_forward.4} parent=0 // loop_exit
    _
  %3419 = vsyncmov [#allocation3]
  %s3420 = vpop.sfrf %3419
  %p3421 = scmp.eq.s32.totalorder %s3420, 0
  %p3422 = pneg %p3421
  %3424 = shalt.err (%p3422)
  %s3425 = scalar_lea.sflag [#allocation3], 1
  %3426 = vsyncmov %s3425
  %s3427 = vpop.sfrf %3426
  %p3428 = scmp.eq.s32.totalorder %s3427, 0
  %p3429 = pneg %p3428
  %3431 = shalt.err (%p3429)

// kernel: unet_up_block_forward.5
$region0: #{unet_up_block_forward.5}
  #allocation0 [shape = 'u32[]', space=smem, size = 0x4, offset = 0x4, fixed_abs, tag = 'smem constant byte address 0x4 - core index']
  #allocation1 [shape = 'u32[144,128]{1,0:T(1,128)}', space=vmem, size = 0x12000, scoped, tag = 'internal scratch']
  #allocation2 [shape = 'bf16[2,10,24,128]{3,2,1,0:T(8,128)(2,1)}', space=vmem, size = 0x1e000, scoped, tag = 'scratch operand']
  #allocation3 [shape = 's32[2]{0}', space=sflag, size = 0x8, scoped, tag = 'scratch operand']
  #allocation4 [shape = 's32[]', space=sflag, size = 0x4, offset = 0, fixed_abs, tag = 'sflag constant byte address 0x0 - dummy sync flag']
  #allocation5 [shape = 's32[]', space=sflag, size = 0x4, offset = 0, fixed_abs, tag = 'sflag constant byte address 0x0 - dummy sync flag']
  %s0 = inlined_call_operand.vmem [shape: bf16[2,18,24,128], index: 0, kind: input, shape index: {}]
  %s1 = inlined_call_operand.vmem [shape: bf16[9,128,128], index: 1, kind: input, shape index: {}]
  %s2 = inlined_call_operand.vmem [shape: f32[1,128], index: 2, kind: input, shape index: {}]
  %s3 = inlined_call_operand.vmem [shape: f32[2,16,16,128], index: 3, kind: output, shape index: {0}]
  %s4 = inlined_call_operand.vmem [shape: f32[2,2,8,128], index: 4, kind: output, shape index: {1}]
  %5 = xla_tuple %s3, %s4
  %s6 = sld [smem:[#allocation0]]
  $region125: #{unet_up_block_forward.5} parent=0
    _
  %s8 = ssub.s32 1, %s6
  %s9 = scalar_select 0, %s8, %s6
  loop: start=0, step=1, limit=6
  $region2: #{unet_up_block_forward.5} parent=0 // loop_pre_header
    _
  $region3: #{unet_up_block_forward.5} parent=0 // loop_header
    %s11 = sphi 0, %s15
    %p12 = scmp.ge.s32.totalorder %s11, 6
    %s18 = sphi 0, %s30
    %s19 = sphi 0, %s26
    %s20 = sphi 0, %s18
    %s21 = sphi 0, %s19
    %s22 = sphi 0, %s20
    %s23 = sphi 0, %s21
    %s31 = sphi 0, %s31
    %s33 = sphi 0, %s31
    %s34 = sphi 0, %s33
    %s48 = sphi 0, %s34
    %s52 = sphi 0, %s52
    %s54 = sphi 0, %s52
    %s55 = sphi 0, %s54
    %s69 = sphi 0, %s55
    %s77 = sphi 0, %s79
    %s80 = sphi 0, %s77
    %s81 = sphi 0, %s80
    %s97 = sphi 0, %s81
    %s105 = sphi 0, %s107
    %s108 = sphi 0, %s105
    %s109 = sphi 0, %s108
    %s125 = sphi 0, %s109
  $region4: #{unet_up_block_forward.5} parent=0 // loop_header_branch
    %14 = sbr.rel (%p12) target = $region8
  $region5: #{unet_up_block_forward.5} parent=0 // loop_body
    %s16 = ssub.s32 %s11, 1
    %s17 = ssub.s32 %s11, 2
    %s24 = sadd.s32 1, %s19
    %p25 = scmp.ge.s32.totalorder %s24, 2
    %s26 = scalar_select %p25, 0, %s24
    %s27 = sadd.s32 1, %s18
    %s28 = scalar_select %p25, %s27, %s18
    %p29 = scmp.ge.s32.totalorder %s28, 2
    %s30 = scalar_select %p29, 0, %s28
    %s32 = sadd.s32 %s31, 1
    %p35 = scmp.eq.s32.totalorder %s11, 3
    %p36 = scmp.ne.s32.totalorder %s31, %s33
    %p37 = scmp.eq.s32.totalorder %s11, 0
    %p38 = por %p36, %p37
    %p39 = scmp.ne.s32.totalorder %s31, %s33
    %p40 = scmp.eq.s32.totalorder %s16, 3
    %p41 = por %p39, %p40
    %p42 = scmp.ne.s32.totalorder %s33, %s34
    %p43 = scmp.eq.s32.totalorder %s16, 0
    %p44 = por %p42, %p43
    %p45 = scmp.ne.s32.totalorder %s33, %s34
    %p46 = scmp.eq.s32.totalorder %s17, 3
    %p47 = por %p45, %p46
    %p49 = scmp.ne.s32.totalorder %s34, %s48
    %p50 = scmp.eq.s32.totalorder %s17, 0
    %p51 = por %p49, %p50
    %s53 = sadd.s32 %s52, 1
    %p56 = scmp.eq.s32.totalorder %s11, 3
    %p57 = scmp.ne.s32.totalorder %s52, %s54
    %p58 = scmp.eq.s32.totalorder %s11, 0
    %p59 = por %p57, %p58
    %p60 = scmp.ne.s32.totalorder %s52, %s54
    %p61 = scmp.eq.s32.totalorder %s16, 3
    %p62 = por %p60, %p61
    %p63 = scmp.ne.s32.totalorder %s54, %s55
    %p64 = scmp.eq.s32.totalorder %s16, 0
    %p65 = por %p63, %p64
    %p66 = scmp.ne.s32.totalorder %s54, %s55
    %p67 = scmp.eq.s32.totalorder %s17, 3
    %p68 = por %p66, %p67
    %p70 = scmp.ne.s32.totalorder %s55, %s69
    %p71 = scmp.eq.s32.totalorder %s17, 0
    %p72 = por %p70, %p71
    %s73 = ssub.s32 %s18, %s30
    %s74 = ssub.s32 %s19, %s26
    %s75 = sor.u32 %s73, %s74
    %p76 = scmp.eq.s32.totalorder %s75, 0
    %s78 = sadd.s32 %s77, 1
    %s79 = scalar_select %p76, %s77, %s78
    %p82 = pneg %p76
    %p83 = scmp.eq.s32.totalorder %s11, 3
    %p84 = por %p82, %p83
    %p85 = scmp.ne.s32.totalorder %s77, %s80
    %p86 = scmp.eq.s32.totalorder %s11, 0
    %p87 = por %p85, %p86
    %p88 = scmp.ne.s32.totalorder %s77, %s80
    %p89 = scmp.eq.s32.totalorder %s16, 3
    %p90 = por %p88, %p89
    %p91 = scmp.ne.s32.totalorder %s80, %s81
    %p92 = scmp.eq.s32.totalorder %s16, 0
    %p93 = por %p91, %p92
    %p94 = scmp.ne.s32.totalorder %s80, %s81
    %p95 = scmp.eq.s32.totalorder %s17, 3
    %p96 = por %p94, %p95
    %p98 = scmp.ne.s32.totalorder %s81, %s97
    %p99 = scmp.eq.s32.totalorder %s17, 0
    %p100 = por %p98, %p99
    %s101 = ssub.s32 %s18, %s30
    %s102 = ssub.s32 %s19, %s26
    %s103 = sor.u32 %s101, %s102
    %p104 = scmp.eq.s32.totalorder %s103, 0
    %s106 = sadd.s32 %s105, 1
    %s107 = scalar_select %p104, %s105, %s106
    %p110 = pneg %p104
    %p111 = scmp.eq.s32.totalorder %s11, 3
    %p112 = por %p110, %p111
    %p113 = scmp.ne.s32.totalorder %s105, %s108
    %p114 = scmp.eq.s32.totalorder %s11, 0
    %p115 = por %p113, %p114
    %p116 = scmp.ne.s32.totalorder %s105, %s108
    %p117 = scmp.eq.s32.totalorder %s16, 3
    %p118 = por %p116, %p117
    %p119 = scmp.ne.s32.totalorder %s108, %s109
    %p120 = scmp.eq.s32.totalorder %s16, 0
    %p121 = por %p119, %p120
    %p122 = scmp.ne.s32.totalorder %s108, %s109
    %p123 = scmp.eq.s32.totalorder %s17, 3
    %p124 = por %p122, %p123
    %p126 = scmp.ne.s32.totalorder %s109, %s125
    %p127 = scmp.eq.s32.totalorder %s17, 0
    %p128 = por %p126, %p127
    %p129 = scmp.le.s32.totalorder 1, %s11
    %p130 = scmp.lt.s32.totalorder %s11, 5
    %p131 = pnand %p129, %p130
    %p132 = pneg %p131
    // Predicated region
    $region9: #{unet_up_block_forward.5} parent=5 // pred_check
      _
    $region10: #{unet_up_block_forward.5} parent=5 // pred_check_branch
      %134 = sbr.rel (%p131) target = $region12
    $region11: #{unet_up_block_forward.5} parent=5 // pred_region
      %s135 = ssub.s32 %s11, 1
      // Predicated region
      $region13: #{unet_up_block_forward.5} parent=11 // pred_check
        %p136 = pneg %p44
      $region14: #{unet_up_block_forward.5} parent=11 // pred_check_branch
        %138 = sbr.rel (%p136) target = $region16
      $region15: #{unet_up_block_forward.5} parent=11 // pred_region
        _
      $region16: #{unet_up_block_forward.5} parent=11 // pred_fallthru
        _
      // Predicated region
      $region17: #{unet_up_block_forward.5} parent=11 // pred_check
        %p139 = pneg %p65
      $region18: #{unet_up_block_forward.5} parent=11 // pred_check_branch
        %141 = sbr.rel (%p139) target = $region20
      $region19: #{unet_up_block_forward.5} parent=11 // pred_region
        _
      $region20: #{unet_up_block_forward.5} parent=11 // pred_fallthru
        _
    $region12: #{unet_up_block_forward.5} parent=5 // pred_fallthru
      _
    %p142 = scmp.lt.s32.totalorder %s11, 4
    // Predicated region
    $region21: #{unet_up_block_forward.5} parent=5 // pred_check
      %p143 = pneg %p142
    $region22: #{unet_up_block_forward.5} parent=5 // pred_check_branch
      %145 = sbr.rel (%p143) target = $region24
    $region23: #{unet_up_block_forward.5} parent=5 // pred_region
      _
    $region24: #{unet_up_block_forward.5} parent=5 // pred_fallthru
      _
    %p146 = scmp.le.s32.totalorder 1, %s11
    %p147 = scmp.lt.s32.totalorder %s11, 5
    %p148 = pnand %p146, %p147
    %p149 = pneg %p148
    // Predicated region
    $region25: #{unet_up_block_forward.5} parent=5 // pred_check
      _
    $region26: #{unet_up_block_forward.5} parent=5 // pred_check_branch
      %151 = sbr.rel (%p148) target = $region28
    $region27: #{unet_up_block_forward.5} parent=5 // pred_region
      %s152 = ssub.s32 %s11, 1
      %p153 = pneg %p44
      %p154 = pneg %p41
      %p155 = pneg %p65
      %p156 = pneg %p62
      %p157 = pneg %p93
      %p158 = pneg %p90
      %s159 = smul.u32 8, %s21
      %p160 = scmp.lt.s32.totalorder %s20, 1
      %s161 = scalar_select %p160, %s20, 1
      %p162 = scmp.lt.s32.totalorder %s159, 15
      %s163 = scalar_select %p162, %s159, 15
      %s164 = smul.addr %s163, 2
      %s165 = smul.addr %s161, 32
      %s166 = sadd.s32 %s164, %s165
      %s167 = smul.addr %s166, 8
      %s168 = scalar_lea.vmem %s3, %s167
      %p169 = pneg %p121
      %p170 = pneg %p118
      %p171 = scmp.lt.s32.totalorder %s20, 1
      %s172 = scalar_select %p171, %s20, 1
      %p173 = scmp.lt.s32.totalorder %s21, 1
      %s174 = scalar_select %p173, %s21, 1
      %s175 = smul.addr %s172, 2
      %s176 = sadd.s32 %s174, %s175
      %s177 = smul.addr %s176, 8
      %s178 = scalar_lea.vmem %s4, %s177
      %s179 = smul.u32 8, %s21
      %p180 = scmp.lt.s32.totalorder %s20, 1
      %s181 = scalar_select %p180, %s20, 1
      %p182 = scmp.lt.s32.totalorder %s179, 15
      %s183 = scalar_select %p182, %s179, 15
      %s184 = smul.addr %s183, 2
      %s185 = smul.addr %s181, 32
      %s186 = sadd.s32 %s184, %s185
      %s187 = smul.addr %s186, 8
      %s188 = scalar_lea.vmem %s3, %s187
      %s189 = smul.u32 8, %s21
      %p190 = scmp.lt.s32.totalorder %s20, 1
      %s191 = scalar_select %p190, %s20, 1
      %p192 = scmp.lt.s32.totalorder %s21, 1
      %s193 = scalar_select %p192, %s21, 1
      %s194 = smul.addr %s191, 2
      %s195 = sadd.s32 %s193, %s194
      %s196 = smul.addr %s195, 8
      %s197 = scalar_lea.vmem %s4, %s196
      %p199 = scmp.lt.s32.totalorder %s21, 0
      %s200 = ssub.s32 0, %s21
      %s201 = scalar_select %p199, %s200, %s21
      %s202 = sand.u32 %s201, 1
      %s203 = ssub.s32 0, %s202
      %s204 = scalar_select %p199, %s203, %s202
      %p205 = scmp.ne.s32.totalorder %s204, 0
      %p206 = scmp.lt.s32.totalorder %s204, 0
      %p207 = pnand %p206, %p205
      %p208 = pneg %p207
      %s209 = sadd.s32 %s204, 2
      %s210 = scalar_select %p208, %s209, %s204
      %p211 = scmp.eq.s32.totalorder %s21, 0
      // Predicated region
      $region29: #{unet_up_block_forward.5} parent=27 // pred_check
        %p212 = pneg %p211
      $region30: #{unet_up_block_forward.5} parent=27 // pred_check_branch
        %214 = sbr.rel (%p212) target = $region32
      $region31: #{unet_up_block_forward.5} parent=27 // pred_region
        %s215 = smul.u32 0, 3
        %s216 = smul.u32 %s20, 54
        %s217 = sadd.s32 %s215, %s216
        %s218 = smul.addr %s217, 4
        %s219 = scalar_lea.vmem %s0, %s218
        %p221 = scmp.lt.u32.totalorder 120, 8
        %p222 = pneg %p221
        // Predicated region
        $region33: #{unet_up_block_forward.5} parent=31 // pred_check
          _
        $region34: #{unet_up_block_forward.5} parent=31 // pred_check_branch
          %224 = sbr.rel (%p221) target = $region36
        $region35: #{unet_up_block_forward.5} parent=31 // pred_region
          %s240 = sand.u32 120, 7
          %p241 = scmp.eq.s32.totalorder %s240, 0
          // Predicated region
          $region48: #{unet_up_block_forward.5} parent=35 // pred_check
            %p242 = pneg %p241
          $region49: #{unet_up_block_forward.5} parent=35 // pred_check_branch
            %244 = sbr.rel (%p242) target = $region51
          $region50: #{unet_up_block_forward.5} parent=35 // pred_region
            loop: start=0, step=1, limit=1
            $region52: #{unet_up_block_forward.5} parent=50 // loop_pre_header
              _
            $region53: #{unet_up_block_forward.5} parent=50 // loop_header
              %s246 = sphi 0, %s250
              %p247 = scmp.ge.s32.totalorder %s246, 1
              %s251 = sphi %s219, %s219
              %s252 = sphi [#allocation2], [#allocation2]
            $region54: #{unet_up_block_forward.5} parent=50 // loop_header_branch
              %249 = sbr.rel (%p247) target = $region58
            $region55: #{unet_up_block_forward.5} parent=50 // loop_body
              %v253 = vld [vmem:[%s251] sm:$0xff]
              %254 = vst [vmem:[%s252] sm:$0xff] %v253
              %v255 = vld [vmem:[%s251 + $0x8] sm:$0xff]
              %256 = vst [vmem:[%s252 + $0x8] sm:$0xff] %v255
              %v257 = vld [vmem:[%s251 + $0x10] sm:$0xff]
              %258 = vst [vmem:[%s252 + $0x10] sm:$0xff] %v257
              %v259 = vld [vmem:[%s251 + $0x18] sm:$0xff]
              %260 = vst [vmem:[%s252 + $0x18] sm:$0xff] %v259
              %v261 = vld [vmem:[%s251 + $0x20] sm:$0xff]
              %262 = vst [vmem:[%s252 + $0x20] sm:$0xff] %v261
              %v263 = vld [vmem:[%s251 + $0x28] sm:$0xff]
              %264 = vst [vmem:[%s252 + $0x28] sm:$0xff] %v263
              %v265 = vld [vmem:[%s251 + $0x30] sm:$0xff]
              %266 = vst [vmem:[%s252 + $0x30] sm:$0xff] %v265
              %v267 = vld [vmem:[%s251 + $0x38] sm:$0xff]
              %268 = vst [vmem:[%s252 + $0x38] sm:$0xff] %v267
              %v269 = vld [vmem:[%s251 + $0x40] sm:$0xff]
              %270 = vst [vmem:[%s252 + $0x40] sm:$0xff] %v269
              %v271 = vld [vmem:[%s251 + $0x48] sm:$0xff]
              %272 = vst [vmem:[%s252 + $0x48] sm:$0xff] %v271
              %v273 = vld [vmem:[%s251 + $0x50] sm:$0xff]
              %274 = vst [vmem:[%s252 + $0x50] sm:$0xff] %v273
              %v275 = vld [vmem:[%s251 + $0x58] sm:$0xff]
              %276 = vst [vmem:[%s252 + $0x58] sm:$0xff] %v275
              %v277 = vld [vmem:[%s251 + $0x60] sm:$0xff]
              %278 = vst [vmem:[%s252 + $0x60] sm:$0xff] %v277
              %v279 = vld [vmem:[%s251 + $0x68] sm:$0xff]
              %280 = vst [vmem:[%s252 + $0x68] sm:$0xff] %v279
              %v281 = vld [vmem:[%s251 + $0x70] sm:$0xff]
              %282 = vst [vmem:[%s252 + $0x70] sm:$0xff] %v281
            $region56: #{unet_up_block_forward.5} parent=50 // loop_footer
              %s250 = sadd.s32 1, %s246
            $region57: #{unet_up_block_forward.5} parent=50 // loop_footer_branch
              %245 = sbr.rel target = $region53
            $region58: #{unet_up_block_forward.5} parent=50 // loop_exit
              _
          $region51: #{unet_up_block_forward.5} parent=35 // pred_fallthru
            _
          %p283 = pneg %p241
          // Predicated region
          $region59: #{unet_up_block_forward.5} parent=35 // pred_check
            _
          $region60: #{unet_up_block_forward.5} parent=35 // pred_check_branch
            %285 = sbr.rel (%p241) target = $region62
          $region61: #{unet_up_block_forward.5} parent=35 // pred_region
            %s286 = sand.u32 120, 7
          $region62: #{unet_up_block_forward.5} parent=35 // pred_fallthru
            _
        $region36: #{unet_up_block_forward.5} parent=31 // pred_fallthru
          _
        // Predicated region
        $region37: #{unet_up_block_forward.5} parent=31 // pred_check
          %p225 = pneg %p221
        $region38: #{unet_up_block_forward.5} parent=31 // pred_check_branch
          %227 = sbr.rel (%p225) target = $region40
        $region39: #{unet_up_block_forward.5} parent=31 // pred_region
          %s228 = sshll.u32 1, 120
          %s229 = ssub.s32 %s228, 1
          loop: start=0, step=1, limit=1
          $region41: #{unet_up_block_forward.5} parent=39 // loop_pre_header
            _
          $region42: #{unet_up_block_forward.5} parent=39 // loop_header
            %s231 = sphi 0, %s235
            %p232 = scmp.ge.s32.totalorder %s231, 1
            %s236 = sphi %s219, %s219
            %s237 = sphi [#allocation2], [#allocation2]
          $region43: #{unet_up_block_forward.5} parent=39 // loop_header_branch
            %234 = sbr.rel (%p232) target = $region47
          $region44: #{unet_up_block_forward.5} parent=39 // loop_body
            %v238 = vld [vmem:[%s236] sm:%s229]
            %239 = vst [vmem:[%s237] sm:%s229] %v238
          $region45: #{unet_up_block_forward.5} parent=39 // loop_footer
            %s235 = sadd.s32 1, %s231
          $region46: #{unet_up_block_forward.5} parent=39 // loop_footer_branch
            %230 = sbr.rel target = $region42
          $region47: #{unet_up_block_forward.5} parent=39 // loop_exit
            _
        $region40: #{unet_up_block_forward.5} parent=31 // pred_fallthru
          _
        // Predicated region
        $region63: #{unet_up_block_forward.5} parent=31 // pred_check
          _
        $region64: #{unet_up_block_forward.5} parent=31 // pred_check_branch
          %289 = sbr.rel (0) target = $region66
        $region65: #{unet_up_block_forward.5} parent=31 // pred_region
          %290 = vsyncadd [#allocation3], 1920
        $region66: #{unet_up_block_forward.5} parent=31 // pred_fallthru
          _
      $region32: #{unet_up_block_forward.5} parent=27 // pred_fallthru
        _
      %s291 = smul.u32 %s21, 8
      %s292 = smul.u32 %s210, 30
      %s293 = smul.addr %s292, 4
      %s294 = scalar_lea.vmem [#allocation2], %s293
      %s295 = scalar_lea.sflag [#allocation3], %s210
      %s296 = smul.u32 4, 10
      %s297 = smul.u32 %s296, 3
      %s298 = smul.u32 %s297, 1
      %s299 = sshll.u32 %s298, 4
      %300 = dma.done %s295, %s299
      %s301 = sadd.s32 %s21, 1
      %p302 = scmp.lt.s32.totalorder %s301, 2
      // Predicated region
      $region67: #{unet_up_block_forward.5} parent=27 // pred_check
        %p303 = pneg %p302
      $region68: #{unet_up_block_forward.5} parent=27 // pred_check_branch
        %305 = sbr.rel (%p303) target = $region70
      $region69: #{unet_up_block_forward.5} parent=27 // pred_region
        %s306 = ssub.s32 1, %s210
        %s307 = smul.u32 %s301, 8
        %s308 = smul.u32 %s307, 3
        %s309 = smul.u32 %s20, 54
        %s310 = sadd.s32 %s308, %s309
        %s311 = smul.addr %s310, 4
        %s312 = scalar_lea.vmem %s0, %s311
        %s313 = smul.u32 %s306, 30
        %s314 = smul.addr %s313, 4
        %s315 = scalar_lea.vmem [#allocation2], %s314
        %s316 = scalar_lea.sflag [#allocation3], %s306
        %p318 = scmp.lt.u32.totalorder 120, 8
        %p319 = pneg %p318
        // Predicated region
        $region71: #{unet_up_block_forward.5} parent=69 // pred_check
          _
        $region72: #{unet_up_block_forward.5} parent=69 // pred_check_branch
          %321 = sbr.rel (%p318) target = $region74
        $region73: #{unet_up_block_forward.5} parent=69 // pred_region
          %s337 = sand.u32 120, 7
          %p338 = scmp.eq.s32.totalorder %s337, 0
          // Predicated region
          $region86: #{unet_up_block_forward.5} parent=73 // pred_check
            %p339 = pneg %p338
          $region87: #{unet_up_block_forward.5} parent=73 // pred_check_branch
            %341 = sbr.rel (%p339) target = $region89
          $region88: #{unet_up_block_forward.5} parent=73 // pred_region
            loop: start=0, step=1, limit=1
            $region90: #{unet_up_block_forward.5} parent=88 // loop_pre_header
              _
            $region91: #{unet_up_block_forward.5} parent=88 // loop_header
              %s343 = sphi 0, %s347
              %p344 = scmp.ge.s32.totalorder %s343, 1
              %s348 = sphi %s312, %s312
              %s349 = sphi %s315, %s315
            $region92: #{unet_up_block_forward.5} parent=88 // loop_header_branch
              %346 = sbr.rel (%p344) target = $region96
            $region93: #{unet_up_block_forward.5} parent=88 // loop_body
              %v350 = vld [vmem:[%s348] sm:$0xff]
              %351 = vst [vmem:[%s349] sm:$0xff] %v350
              %v352 = vld [vmem:[%s348 + $0x8] sm:$0xff]
              %353 = vst [vmem:[%s349 + $0x8] sm:$0xff] %v352
              %v354 = vld [vmem:[%s348 + $0x10] sm:$0xff]
              %355 = vst [vmem:[%s349 + $0x10] sm:$0xff] %v354
              %v356 = vld [vmem:[%s348 + $0x18] sm:$0xff]
              %357 = vst [vmem:[%s349 + $0x18] sm:$0xff] %v356
              %v358 = vld [vmem:[%s348 + $0x20] sm:$0xff]
              %359 = vst [vmem:[%s349 + $0x20] sm:$0xff] %v358
              %v360 = vld [vmem:[%s348 + $0x28] sm:$0xff]
              %361 = vst [vmem:[%s349 + $0x28] sm:$0xff] %v360
              %v362 = vld [vmem:[%s348 + $0x30] sm:$0xff]
              %363 = vst [vmem:[%s349 + $0x30] sm:$0xff] %v362
              %v364 = vld [vmem:[%s348 + $0x38] sm:$0xff]
              %365 = vst [vmem:[%s349 + $0x38] sm:$0xff] %v364
              %v366 = vld [vmem:[%s348 + $0x40] sm:$0xff]
              %367 = vst [vmem:[%s349 + $0x40] sm:$0xff] %v366
              %v368 = vld [vmem:[%s348 + $0x48] sm:$0xff]
              %369 = vst [vmem:[%s349 + $0x48] sm:$0xff] %v368
              %v370 = vld [vmem:[%s348 + $0x50] sm:$0xff]
              %371 = vst [vmem:[%s349 + $0x50] sm:$0xff] %v370
              %v372 = vld [vmem:[%s348 + $0x58] sm:$0xff]
              %373 = vst [vmem:[%s349 + $0x58] sm:$0xff] %v372
              %v374 = vld [vmem:[%s348 + $0x60] sm:$0xff]
              %375 = vst [vmem:[%s349 + $0x60] sm:$0xff] %v374
              %v376 = vld [vmem:[%s348 + $0x68] sm:$0xff]
              %377 = vst [vmem:[%s349 + $0x68] sm:$0xff] %v376
              %v378 = vld [vmem:[%s348 + $0x70] sm:$0xff]
              %379 = vst [vmem:[%s349 + $0x70] sm:$0xff] %v378
            $region94: #{unet_up_block_forward.5} parent=88 // loop_footer
              %s347 = sadd.s32 1, %s343
            $region95: #{unet_up_block_forward.5} parent=88 // loop_footer_branch
              %342 = sbr.rel target = $region91
            $region96: #{unet_up_block_forward.5} parent=88 // loop_exit
              _
          $region89: #{unet_up_block_forward.5} parent=73 // pred_fallthru
            _
          %p380 = pneg %p338
          // Predicated region
          $region97: #{unet_up_block_forward.5} parent=73 // pred_check
            _
          $region98: #{unet_up_block_forward.5} parent=73 // pred_check_branch
            %382 = sbr.rel (%p338) target = $region100
          $region99: #{unet_up_block_forward.5} parent=73 // pred_region
            %s383 = sand.u32 120, 7
          $region100: #{unet_up_block_forward.5} parent=73 // pred_fallthru
            _
        $region74: #{unet_up_block_forward.5} parent=69 // pred_fallthru
          _
        // Predicated region
        $region75: #{unet_up_block_forward.5} parent=69 // pred_check
          %p322 = pneg %p318
        $region76: #{unet_up_block_forward.5} parent=69 // pred_check_branch
          %324 = sbr.rel (%p322) target = $region78
        $region77: #{unet_up_block_forward.5} parent=69 // pred_region
          %s325 = sshll.u32 1, 120
          %s326 = ssub.s32 %s325, 1
          loop: start=0, step=1, limit=1
          $region79: #{unet_up_block_forward.5} parent=77 // loop_pre_header
            _
          $region80: #{unet_up_block_forward.5} parent=77 // loop_header
            %s328 = sphi 0, %s332
            %p329 = scmp.ge.s32.totalorder %s328, 1
            %s333 = sphi %s312, %s312
            %s334 = sphi %s315, %s315
          $region81: #{unet_up_block_forward.5} parent=77 // loop_header_branch
            %331 = sbr.rel (%p329) target = $region85
          $region82: #{unet_up_block_forward.5} parent=77 // loop_body
            %v335 = vld [vmem:[%s333] sm:%s326]
            %336 = vst [vmem:[%s334] sm:%s326] %v335
          $region83: #{unet_up_block_forward.5} parent=77 // loop_footer
            %s332 = sadd.s32 1, %s328
          $region84: #{unet_up_block_forward.5} parent=77 // loop_footer_branch
            %327 = sbr.rel target = $region80
          $region85: #{unet_up_block_forward.5} parent=77 // loop_exit
            _
        $region78: #{unet_up_block_forward.5} parent=69 // pred_fallthru
          _
        // Predicated region
        $region101: #{unet_up_block_forward.5} parent=69 // pred_check
          _
        $region102: #{unet_up_block_forward.5} parent=69 // pred_check_branch
          %386 = sbr.rel (0) target = $region104
        $region103: #{unet_up_block_forward.5} parent=69 // pred_region
          %387 = vsyncadd %s316, 1920
        $region104: #{unet_up_block_forward.5} parent=69 // pred_fallthru
          _
      $region70: #{unet_up_block_forward.5} parent=27 // pred_fallthru
        _
      %v388 = vld [vmem:[%s294] sm:$0xf]
      %v389 = vld [vmem:[%s294 + $0x4] sm:$0xf]
      %v390 = vld [vmem:[%s294 + $0x8] sm:$0xf]
      %v391 = vld [vmem:[%s294 + $0xc] sm:$0xf]
      %v392 = vld [vmem:[%s294 + $0x10] sm:$0xf]
      %v393 = vld [vmem:[%s294 + $0x14] sm:$0xf]
      %v394 = vld [vmem:[%s294 + $0x18] sm:$0xf]
      %v395 = vld [vmem:[%s294 + $0x1c] sm:$0xf]
      %v396 = vld [vmem:[%s294 + $0x20] sm:$0xf]
      %v397 = vld [vmem:[%s294 + $0x24] sm:$0xf]
      %v398 = vld [vmem:[%s294 + $0x28] sm:$0xf]
      %v399 = vld [vmem:[%s294 + $0x2c] sm:$0xf]
      %v400 = vld [vmem:[%s294 + $0x30] sm:$0xf]
      %v401 = vld [vmem:[%s294 + $0x34] sm:$0xf]
      %v402 = vld [vmem:[%s294 + $0x38] sm:$0xf]
      %v403 = vld [vmem:[%s294 + $0x3c] sm:$0xf]
      %v404 = vld [vmem:[%s294 + $0x40] sm:$0xf]
      %v405 = vld [vmem:[%s294 + $0x44] sm:$0xf]
      %v406 = vld [vmem:[%s294 + $0x48] sm:$0xf]
      %v407 = vld [vmem:[%s294 + $0x4c] sm:$0xf]
      %v408 = vld [vmem:[%s294 + $0x50] sm:$0xf]
      %v409 = vld [vmem:[%s294 + $0x54] sm:$0xf]
      %v410 = vld [vmem:[%s294 + $0x58] sm:$0xf]
      %v411 = vld [vmem:[%s294 + $0x5c] sm:$0xf]
      %v412 = vld [vmem:[%s294 + $0x60] sm:$0xf]
      %v413 = vld [vmem:[%s294 + $0x64] sm:$0xf]
      %v414 = vld [vmem:[%s294 + $0x68] sm:$0xf]
      %v415 = vld [vmem:[%s294 + $0x6c] sm:$0xf]
      %v416 = vld [vmem:[%s294 + $0x70] sm:$0xf]
      %v417 = vld [vmem:[%s294 + $0x74] sm:$0xf]
      %v418 = vld [vmem:[%s1] sm:$0xf]
      %v419 = vld [vmem:[%s1 + $0x4] sm:$0xf]
      %v420 = vld [vmem:[%s1 + $0x8] sm:$0xf]
      %v421 = vld [vmem:[%s1 + $0xc] sm:$0xf]
      %v422 = vld [vmem:[%s1 + $0x10] sm:$0xf]
      %v423 = vld [vmem:[%s1 + $0x14] sm:$0xf]
      %v424 = vld [vmem:[%s1 + $0x18] sm:$0xf]
      %v425 = vld [vmem:[%s1 + $0x1c] sm:$0xf]
      %v426 = vld [vmem:[%s1 + $0x20] sm:$0xf]
      %v427 = vld [vmem:[%s1 + $0x24] sm:$0xf]
      %v428 = vld [vmem:[%s1 + $0x28] sm:$0xf]
      %v429 = vld [vmem:[%s1 + $0x2c] sm:$0xf]
      %v430 = vld [vmem:[%s1 + $0x30] sm:$0xf]
      %v431 = vld [vmem:[%s1 + $0x34] sm:$0xf]
      %v432 = vld [vmem:[%s1 + $0x38] sm:$0xf]
      %v433 = vld [vmem:[%s1 + $0x3c] sm:$0xf]
      %s434 = scalar_lea.vmem %s1, 192
      %v435 = vld [vmem:[%s434] sm:$0xf]
      %v436 = vld [vmem:[%s434 + $0x4] sm:$0xf]
      %v437 = vld [vmem:[%s434 + $0x8] sm:$0xf]
      %v438 = vld [vmem:[%s434 + $0xc] sm:$0xf]
      %v439 = vld [vmem:[%s434 + $0x10] sm:$0xf]
      %v440 = vld [vmem:[%s434 + $0x14] sm:$0xf]
      %v441 = vld [vmem:[%s434 + $0x18] sm:$0xf]
      %v442 = vld [vmem:[%s434 + $0x1c] sm:$0xf]
      %v443 = vld [vmem:[%s434 + $0x20] sm:$0xf]
      %v444 = vld [vmem:[%s434 + $0x24] sm:$0xf]
      %v445 = vld [vmem:[%s434 + $0x28] sm:$0xf]
      %v446 = vld [vmem:[%s434 + $0x2c] sm:$0xf]
      %v447 = vld [vmem:[%s434 + $0x30] sm:$0xf]
      %v448 = vld [vmem:[%s434 + $0x34] sm:$0xf]
      %v449 = vld [vmem:[%s434 + $0x38] sm:$0xf]
      %v450 = vld [vmem:[%s434 + $0x3c] sm:$0xf]
      %v475 = vunpack.c.l.b16 %v391
      %v476 = vunpack.c.l.b16 %v392
      %v477 = vunpack.c.l.b16 %v393
      %v478 = vunpack.c.l.b16 %v394
      %v479 = vunpack.c.l.b16 %v395
      %v480 = vunpack.c.l.b16 %v396
      %v481 = vunpack.c.l.b16 %v397
      %v482 = vunpack.c.l.b16 %v398
      %v483 = vunpack.c.l.b16 %v399
      %v484 = vunpack.c.l.b16 %v400
      %v485 = vunpack.c.l.b16 %v401
      %v486 = vunpack.c.l.b16 %v402
      %v487 = vunpack.c.l.b16 %v403
      %v488 = vunpack.c.l.b16 %v404
      %v489 = vunpack.c.l.b16 %v405
      %v490 = vunpack.c.l.b16 %v406
      %v491 = vunpack.c.l.b16 %v407
      %v492 = vunpack.c.l.b16 %v408
      %v493 = vunpack.c.l.b16 %v409
      %v494 = vunpack.c.l.b16 %v410
      %v495 = vunpack.c.l.b16 %v411
      %v496 = vunpack.c.l.b16 %v412
      %v497 = vunpack.c.l.b16 %v413
      %v498 = vunpack.c.l.b16 %v414
      %v499 = vpack.c.b16 %v476, %v475
      %v500 = vpack.c.b16 %v478, %v477
      %v501 = vpack.c.b16 %v480, %v479
      %v502 = vpack.c.b16 %v482, %v481
      %v503 = vpack.c.b16 %v484, %v483
      %v504 = vpack.c.b16 %v486, %v485
      %v505 = vpack.c.b16 %v488, %v487
      %v506 = vpack.c.b16 %v490, %v489
      %v507 = vpack.c.b16 %v492, %v491
      %v508 = vpack.c.b16 %v494, %v493
      %v509 = vpack.c.b16 %v496, %v495
      %v510 = vpack.c.b16 %v498, %v497
      %v539 = vunpack.c.l.b16 %v435
      %v540 = vunpack.c.l.b16 %v436
      %v541 = vunpack.c.l.b16 %v437
      %v542 = vunpack.c.l.b16 %v438
      %v543 = vunpack.c.l.b16 %v439
      %v544 = vunpack.c.l.b16 %v440
      %v545 = vunpack.c.l.b16 %v441
      %v546 = vunpack.c.l.b16 %v442
      %v547 = vunpack.c.l.b16 %v443
      %v548 = vunpack.c.l.b16 %v444
      %v549 = vunpack.c.l.b16 %v445
      %v550 = vunpack.c.l.b16 %v446
      %v551 = vunpack.c.l.b16 %v447
      %v552 = vunpack.c.l.b16 %v448
      %v553 = vunpack.c.l.b16 %v449
      %v554 = vunpack.c.l.b16 %v450
      %v555 = vpack.c.b16 %v540, %v539
      %v556 = vpack.c.b16 %v542, %v541
      %v557 = vpack.c.b16 %v544, %v543
      %v558 = vpack.c.b16 %v546, %v545
      %v559 = vpack.c.b16 %v548, %v547
      %v560 = vpack.c.b16 %v550, %v549
      %v561 = vpack.c.b16 %v552, %v551
      %v562 = vpack.c.b16 %v554, %v553
      %571 = vmatprep.subr.bf16.mxu0 0
      %572 = vmatpush1.bf16.msra.mxu0 %v562
      %573 = vmatprep.subr.bf16.mxu0 0
      %574 = vmatpush1.bf16.msra.mxu0 %v561
      %575 = vmatprep.subr.bf16.mxu0 0
      %576 = vmatpush1.bf16.msra.mxu0 %v560
      %577 = vmatprep.subr.bf16.mxu0 0
      %578 = vmatpush1.bf16.msra.mxu0 %v559
      %579 = vmatprep.subr.bf16.mxu0 0
      %580 = vmatpush1.bf16.msra.mxu0 %v558
      %581 = vmatprep.subr.bf16.mxu0 0
      %582 = vmatpush1.bf16.msra.mxu0 %v557
      %583 = vmatprep.subr.bf16.mxu0 0
      %584 = vmatpush1.bf16.msra.mxu0 %v556
      %585 = vmatprep.subr.bf16.mxu0 0
      %586 = vmatpush1.bf16.msra.mxu0 %v555
      %587 = vmatprep.subr.bf16.mxu0 0
      %588 = vmatpush2.bf16.msra.mxu0 0
      %589 = vmatprep.subr.bf16.mxu0 0
      %590 = vmatpush2.bf16.msra.mxu0 0
      %591 = vmatprep.subr.bf16.mxu0 0
      %592 = vmatpush2.bf16.msra.mxu0 0
      %593 = vmatprep.subr.bf16.mxu0 0
      %594 = vmatpush2.bf16.msra.mxu0 0
      %595 = vmatprep.subr.bf16.mxu0 0
      %596 = vmatpush2.bf16.msra.mxu0 0
      %597 = vmatprep.subr.bf16.mxu0 0
      %598 = vmatpush2.bf16.msra.mxu0 0
      %599 = vmatprep.subr.bf16.mxu0 0
      %600 = vmatpush2.bf16.msra.mxu0 0
      %601 = vmatprep.subr.bf16.mxu0 0
      %602 = vmatpush2.bf16.msra.mxu0 0
      %603 = vmatprep.mubr.bf16.mxu0 0
      %604 = vmatmul.mubr.bf16.gmra.mxu0 %v499
      %v605 = vpop.f32.mrf.mxu0
      %v606 = vadd.f32 0.0, %v605
      %v607 = vpop.f32.mrf.mxu0
      %v608 = vpop.f32.mrf.mxu0
      %v609 = vadd.f32 0.0, %v608
      %v610 = vpop.f32.mrf.mxu0
      %611 = vmatprep.mubr.bf16.mxu0 0
      %612 = vmatmul.mubr.bf16.gmra.mxu0 %v500
      %v613 = vpop.f32.mrf.mxu0
      %v614 = vpop.f32.mrf.mxu0
      %v615 = vpop.f32.mrf.mxu0
      %v616 = vadd.f32 0.0, %v615
      %v617 = vpop.f32.mrf.mxu0
      %618 = vmatprep.mubr.bf16.mxu0 0
      %619 = vmatmul.mubr.bf16.gmra.mxu0 %v501
      %v620 = vpop.f32.mrf.mxu0
      %v621 = vadd.f32 0.0, %v620
      %v622 = vpop.f32.mrf.mxu0
      %v623 = vpop.f32.mrf.mxu0
      %v624 = vpop.f32.mrf.mxu0
      %625 = vmatprep.mubr.bf16.mxu0 0
      %626 = vmatmul.mubr.bf16.gmra.mxu0 %v502
      %v627 = vpop.f32.mrf.mxu0
      %v628 = vadd.f32 0.0, %v627
      %v629 = vpop.f32.mrf.mxu0
      %v630 = vpop.f32.mrf.mxu0
      %v631 = vadd.f32 0.0, %v630
      %v632 = vpop.f32.mrf.mxu0
      %633 = vmatprep.mubr.bf16.mxu0 0
      %634 = vmatmul.mubr.bf16.gmra.mxu0 %v503
      %v635 = vpop.f32.mrf.mxu0
      %v636 = vpop.f32.mrf.mxu0
      %v637 = vpop.f32.mrf.mxu0
      %v638 = vadd.f32 0.0, %v637
      %v639 = vpop.f32.mrf.mxu0
      %640 = vmatprep.mubr.bf16.mxu0 0
      %641 = vmatmul.mubr.bf16.gmra.mxu0 %v504
      %v642 = vpop.f32.mrf.mxu0
      %v643 = vadd.f32 0.0, %v642
      %v644 = vpop.f32.mrf.mxu0
      %v645 = vpop.f32.mrf.mxu0
      %v646 = vpop.f32.mrf.mxu0
      %647 = vmatprep.mubr.bf16.mxu0 0
      %648 = vmatmul.mubr.bf16.gmra.mxu0 %v505
      %v649 = vpop.f32.mrf.mxu0
      %v650 = vadd.f32 0.0, %v649
      %v651 = vpop.f32.mrf.mxu0
      %v652 = vpop.f32.mrf.mxu0
      %v653 = vadd.f32 0.0, %v652
      %v654 = vpop.f32.mrf.mxu0
      %655 = vmatprep.mubr.bf16.mxu0 0
      %656 = vmatmul.mubr.bf16.gmra.mxu0 %v506
      %v657 = vpop.f32.mrf.mxu0
      %v658 = vpop.f32.mrf.mxu0
      %v659 = vpop.f32.mrf.mxu0
      %v660 = vadd.f32 0.0, %v659
      %v661 = vpop.f32.mrf.mxu0
      %662 = vmatprep.mubr.bf16.mxu0 0
      %663 = vmatmul.mubr.bf16.gmra.mxu0 %v507
      %v664 = vpop.f32.mrf.mxu0
      %v665 = vadd.f32 0.0, %v664
      %v666 = vpop.f32.mrf.mxu0
      %v667 = vpop.f32.mrf.mxu0
      %v668 = vpop.f32.mrf.mxu0
      %669 = vmatprep.mubr.bf16.mxu0 0
      %670 = vmatmul.mubr.bf16.gmra.mxu0 %v508
      %v671 = vpop.f32.mrf.mxu0
      %v672 = vadd.f32 0.0, %v671
      %v673 = vpop.f32.mrf.mxu0
      %v674 = vpop.f32.mrf.mxu0
      %v675 = vadd.f32 0.0, %v674
      %v676 = vpop.f32.mrf.mxu0
      %677 = vmatprep.mubr.bf16.mxu0 0
      %678 = vmatmul.mubr.bf16.gmra.mxu0 %v509
      %v679 = vpop.f32.mrf.mxu0
      %v680 = vpop.f32.mrf.mxu0
      %v681 = vpop.f32.mrf.mxu0
      %v682 = vadd.f32 0.0, %v681
      %v683 = vpop.f32.mrf.mxu0
      %684 = vmatprep.mubr.bf16.mxu0 0
      %685 = vmatmul.mubr.bf16.gmra.mxu0 %v510
      %v686 = vpop.f32.mrf.mxu0
      %v687 = vadd.f32 0.0, %v686
      %v688 = vpop.f32.mrf.mxu0
      %v689 = vpop.f32.mrf.mxu0
      %v690 = vpop.f32.mrf.mxu0
      %691 = vdwg.mxu0
      %v695 = vunpack.c.l.b16 %v388
      %v696 = vunpack.c.l.b16 %v389
      %v697 = vunpack.c.l.b16 %v390
      %v698 = vpack.c.b16 %v696, %v695
      %v699 = vpack.c.b16 %v475, %v697
      %v700 = vpack.c.b16 %v477, %v476
      %v701 = vpack.c.b16 %v479, %v478
      %v702 = vpack.c.b16 %v481, %v480
      %v703 = vpack.c.b16 %v483, %v482
      %v704 = vpack.c.b16 %v485, %v484
      %v705 = vpack.c.b16 %v487, %v486
      %v706 = vpack.c.b16 %v489, %v488
      %v707 = vpack.c.b16 %v491, %v490
      %v708 = vpack.c.b16 %v493, %v492
      %v709 = vpack.c.b16 %v495, %v494
      %v738 = vunpack.c.l.b16 %v418
      %v739 = vunpack.c.l.b16 %v419
      %v740 = vunpack.c.l.b16 %v420
      %v741 = vunpack.c.l.b16 %v421
      %v742 = vunpack.c.l.b16 %v422
      %v743 = vunpack.c.l.b16 %v423
      %v744 = vunpack.c.l.b16 %v424
      %v745 = vunpack.c.l.b16 %v425
      %v746 = vunpack.c.l.b16 %v426
      %v747 = vunpack.c.l.b16 %v427
      %v748 = vunpack.c.l.b16 %v428
      %v749 = vunpack.c.l.b16 %v429
      %v750 = vunpack.c.l.b16 %v430
      %v751 = vunpack.c.l.b16 %v431
      %v752 = vunpack.c.l.b16 %v432
      %v753 = vunpack.c.l.b16 %v433
      %v754 = vpack.c.b16 %v739, %v738
      %v755 = vpack.c.b16 %v741, %v740
      %v756 = vpack.c.b16 %v743, %v742
      %v757 = vpack.c.b16 %v745, %v744
      %v758 = vpack.c.b16 %v747, %v746
      %v759 = vpack.c.b16 %v749, %v748
      %v760 = vpack.c.b16 %v751, %v750
      %v761 = vpack.c.b16 %v753, %v752
      %770 = vmatprep.subr.bf16.mxu0 0
      %771 = vmatpush1.bf16.msra.mxu0 %v761
      %772 = vmatprep.subr.bf16.mxu0 0
      %773 = vmatpush1.bf16.msra.mxu0 %v760
      %774 = vmatprep.subr.bf16.mxu0 0
      %775 = vmatpush1.bf16.msra.mxu0 %v759
      %776 = vmatprep.subr.bf16.mxu0 0
      %777 = vmatpush1.bf16.msra.mxu0 %v758
      %778 = vmatprep.subr.bf16.mxu0 0
      %779 = vmatpush1.bf16.msra.mxu0 %v757
      %780 = vmatprep.subr.bf16.mxu0 0
      %781 = vmatpush1.bf16.msra.mxu0 %v756
      %782 = vmatprep.subr.bf16.mxu0 0
      %783 = vmatpush1.bf16.msra.mxu0 %v755
      %784 = vmatprep.subr.bf16.mxu0 0
      %785 = vmatpush1.bf16.msra.mxu0 %v754
      %786 = vmatprep.subr.bf16.mxu0 0
      %787 = vmatpush2.bf16.msra.mxu0 0
      %788 = vmatprep.subr.bf16.mxu0 0
      %789 = vmatpush2.bf16.msra.mxu0 0
      %790 = vmatprep.subr.bf16.mxu0 0
      %791 = vmatpush2.bf16.msra.mxu0 0
      %792 = vmatprep.subr.bf16.mxu0 0
      %793 = vmatpush2.bf16.msra.mxu0 0
      %794 = vmatprep.subr.bf16.mxu0 0
      %795 = vmatpush2.bf16.msra.mxu0 0
      %796 = vmatprep.subr.bf16.mxu0 0
      %797 = vmatpush2.bf16.msra.mxu0 0
      %798 = vmatprep.subr.bf16.mxu0 0
      %799 = vmatpush2.bf16.msra.mxu0 0
      %800 = vmatprep.subr.bf16.mxu0 0
      %801 = vmatpush2.bf16.msra.mxu0 0
      %802 = vmatprep.mubr.bf16.mxu0 0
      %803 = vmatmul.mubr.bf16.gmra.mxu0 %v698
      %v804 = vpop.f32.mrf.mxu0
      %v805 = vadd.f32 %v606, %v804
      %v806 = vpop.f32.mrf.mxu0
      %v807 = vpop.f32.mrf.mxu0
      %v808 = vadd.f32 %v609, %v807
      %v809 = vpop.f32.mrf.mxu0
      %810 = vmatprep.mubr.bf16.mxu0 0
      %811 = vmatmul.mubr.bf16.gmra.mxu0 %v699
      %v812 = vpop.f32.mrf.mxu0
      %v813 = vpop.f32.mrf.mxu0
      %v814 = vpop.f32.mrf.mxu0
      %v815 = vadd.f32 %v616, %v814
      %v816 = vpop.f32.mrf.mxu0
      %817 = vmatprep.mubr.bf16.mxu0 0
      %818 = vmatmul.mubr.bf16.gmra.mxu0 %v700
      %v819 = vpop.f32.mrf.mxu0
      %v820 = vadd.f32 %v621, %v819
      %v821 = vpop.f32.mrf.mxu0
      %v822 = vpop.f32.mrf.mxu0
      %v823 = vpop.f32.mrf.mxu0
      %824 = vmatprep.mubr.bf16.mxu0 0
      %825 = vmatmul.mubr.bf16.gmra.mxu0 %v701
      %v826 = vpop.f32.mrf.mxu0
      %v827 = vadd.f32 %v628, %v826
      %v828 = vpop.f32.mrf.mxu0
      %v829 = vpop.f32.mrf.mxu0
      %v830 = vadd.f32 %v631, %v829
      %v831 = vpop.f32.mrf.mxu0
      %832 = vmatprep.mubr.bf16.mxu0 0
      %833 = vmatmul.mubr.bf16.gmra.mxu0 %v702
      %v834 = vpop.f32.mrf.mxu0
      %v835 = vpop.f32.mrf.mxu0
      %v836 = vpop.f32.mrf.mxu0
      %v837 = vadd.f32 %v638, %v836
      %v838 = vpop.f32.mrf.mxu0
      %839 = vmatprep.mubr.bf16.mxu0 0
      %840 = vmatmul.mubr.bf16.gmra.mxu0 %v703
      %v841 = vpop.f32.mrf.mxu0
      %v842 = vadd.f32 %v643, %v841
      %v843 = vpop.f32.mrf.mxu0
      %v844 = vpop.f32.mrf.mxu0
      %v845 = vpop.f32.mrf.mxu0
      %846 = vmatprep.mubr.bf16.mxu0 0
      %847 = vmatmul.mubr.bf16.gmra.mxu0 %v704
      %v848 = vpop.f32.mrf.mxu0
      %v849 = vadd.f32 %v650, %v848
      %v850 = vpop.f32.mrf.mxu0
      %v851 = vpop.f32.mrf.mxu0
      %v852 = vadd.f32 %v653, %v851
      %v853 = vpop.f32.mrf.mxu0
      %854 = vmatprep.mubr.bf16.mxu0 0
      %855 = vmatmul.mubr.bf16.gmra.mxu0 %v705
      %v856 = vpop.f32.mrf.mxu0
      %v857 = vpop.f32.mrf.mxu0
      %v858 = vpop.f32.mrf.mxu0
      %v859 = vadd.f32 %v660, %v858
      %v860 = vpop.f32.mrf.mxu0
      %861 = vmatprep.mubr.bf16.mxu0 0
      %862 = vmatmul.mubr.bf16.gmra.mxu0 %v706
      %v863 = vpop.f32.mrf.mxu0
      %v864 = vadd.f32 %v665, %v863
      %v865 = vpop.f32.mrf.mxu0
      %v866 = vpop.f32.mrf.mxu0
      %v867 = vpop.f32.mrf.mxu0
      %868 = vmatprep.mubr.bf16.mxu0 0
      %869 = vmatmul.mubr.bf16.gmra.mxu0 %v707
      %v870 = vpop.f32.mrf.mxu0
      %v871 = vadd.f32 %v672, %v870
      %v872 = vpop.f32.mrf.mxu0
      %v873 = vpop.f32.mrf.mxu0
      %v874 = vadd.f32 %v675, %v873
      %v875 = vpop.f32.mrf.mxu0
      %876 = vmatprep.mubr.bf16.mxu0 0
      %877 = vmatmul.mubr.bf16.gmra.mxu0 %v708
      %v878 = vpop.f32.mrf.mxu0
      %v879 = vpop.f32.mrf.mxu0
      %v880 = vpop.f32.mrf.mxu0
      %v881 = vadd.f32 %v682, %v880
      %v882 = vpop.f32.mrf.mxu0
      %883 = vmatprep.mubr.bf16.mxu0 0
      %884 = vmatmul.mubr.bf16.gmra.mxu0 %v709
      %v885 = vpop.f32.mrf.mxu0
      %v886 = vadd.f32 %v687, %v885
      %v887 = vpop.f32.mrf.mxu0
      %v888 = vpop.f32.mrf.mxu0
      %v889 = vpop.f32.mrf.mxu0
      %890 = vdwg.mxu0
      %s891 = scalar_lea.vmem %s1, 384
      %v892 = vld [vmem:[%s891] sm:$0xf]
      %v893 = vld [vmem:[%s891 + $0x4] sm:$0xf]
      %v894 = vld [vmem:[%s891 + $0x8] sm:$0xf]
      %v895 = vld [vmem:[%s891 + $0xc] sm:$0xf]
      %v896 = vld [vmem:[%s891 + $0x10] sm:$0xf]
      %v897 = vld [vmem:[%s891 + $0x14] sm:$0xf]
      %v898 = vld [vmem:[%s891 + $0x18] sm:$0xf]
      %v899 = vld [vmem:[%s891 + $0x1c] sm:$0xf]
      %v900 = vld [vmem:[%s891 + $0x20] sm:$0xf]
      %v901 = vld [vmem:[%s891 + $0x24] sm:$0xf]
      %v902 = vld [vmem:[%s891 + $0x28] sm:$0xf]
      %v903 = vld [vmem:[%s891 + $0x2c] sm:$0xf]
      %v904 = vld [vmem:[%s891 + $0x30] sm:$0xf]
      %v905 = vld [vmem:[%s891 + $0x34] sm:$0xf]
      %v906 = vld [vmem:[%s891 + $0x38] sm:$0xf]
      %v907 = vld [vmem:[%s891 + $0x3c] sm:$0xf]
      %v911 = vunpack.c.l.b16 %v415
      %v912 = vunpack.c.l.b16 %v416
      %v913 = vunpack.c.l.b16 %v417
      %v914 = vpack.c.b16 %v497, %v496
      %v915 = vpack.c.b16 %v911, %v498
      %v916 = vpack.c.b16 %v913, %v912
      %v936 = vunpack.c.l.b16 %v892
      %v937 = vunpack.c.l.b16 %v893
      %v938 = vunpack.c.l.b16 %v894
      %v939 = vunpack.c.l.b16 %v895
      %v940 = vunpack.c.l.b16 %v896
      %v941 = vunpack.c.l.b16 %v897
      %v942 = vunpack.c.l.b16 %v898
      %v943 = vunpack.c.l.b16 %v899
      %v944 = vunpack.c.l.b16 %v900
      %v945 = vunpack.c.l.b16 %v901
      %v946 = vunpack.c.l.b16 %v902
      %v947 = vunpack.c.l.b16 %v903
      %v948 = vunpack.c.l.b16 %v904
      %v949 = vunpack.c.l.b16 %v905
      %v950 = vunpack.c.l.b16 %v906
      %v951 = vunpack.c.l.b16 %v907
      %v952 = vpack.c.b16 %v937, %v936
      %v953 = vpack.c.b16 %v939, %v938
      %v954 = vpack.c.b16 %v941, %v940
      %v955 = vpack.c.b16 %v943, %v942
      %v956 = vpack.c.b16 %v945, %v944
      %v957 = vpack.c.b16 %v947, %v946
      %v958 = vpack.c.b16 %v949, %v948
      %v959 = vpack.c.b16 %v951, %v950
      %968 = vmatprep.subr.bf16.mxu0 0
      %969 = vmatpush1.bf16.msra.mxu0 %v959
      %970 = vmatprep.subr.bf16.mxu0 0
      %971 = vmatpush1.bf16.msra.mxu0 %v958
      %972 = vmatprep.subr.bf16.mxu0 0
      %973 = vmatpush1.bf16.msra.mxu0 %v957
      %974 = vmatprep.subr.bf16.mxu0 0
      %975 = vmatpush1.bf16.msra.mxu0 %v956
      %976 = vmatprep.subr.bf16.mxu0 0
      %977 = vmatpush1.bf16.msra.mxu0 %v955
      %978 = vmatprep.subr.bf16.mxu0 0
      %979 = vmatpush1.bf16.msra.mxu0 %v954
      %980 = vmatprep.subr.bf16.mxu0 0
      %981 = vmatpush1.bf16.msra.mxu0 %v953
      %982 = vmatprep.subr.bf16.mxu0 0
      %983 = vmatpush1.bf16.msra.mxu0 %v952
      %984 = vmatprep.subr.bf16.mxu0 0
      %985 = vmatpush2.bf16.msra.mxu0 0
      %986 = vmatprep.subr.bf16.mxu0 0
      %987 = vmatpush2.bf16.msra.mxu0 0
      %988 = vmatprep.subr.bf16.mxu0 0
      %989 = vmatpush2.bf16.msra.mxu0 0
      %990 = vmatprep.subr.bf16.mxu0 0
      %991 = vmatpush2.bf16.msra.mxu0 0
      %992 = vmatprep.subr.bf16.mxu0 0
      %993 = vmatpush2.bf16.msra.mxu0 0
      %994 = vmatprep.subr.bf16.mxu0 0
      %995 = vmatpush2.bf16.msra.mxu0 0
      %996 = vmatprep.subr.bf16.mxu0 0
      %997 = vmatpush2.bf16.msra.mxu0 0
      %998 = vmatprep.subr.bf16.mxu0 0
      %999 = vmatpush2.bf16.msra.mxu0 0
      %1000 = vmatprep.mubr.bf16.mxu0 0
      %1001 = vmatmul.mubr.bf16.gmra.mxu0 %v701
      %v1002 = vpop.f32.mrf.mxu0
      %v1003 = vadd.f32 0.0, %v1002
      %v1004 = vpop.f32.mrf.mxu0
      %v1005 = vpop.f32.mrf.mxu0
      %v1006 = vadd.f32 0.0, %v1005
      %v1007 = vpop.f32.mrf.mxu0
      %1008 = vmatprep.mubr.bf16.mxu0 0
      %1009 = vmatmul.mubr.bf16.gmra.mxu0 %v702
      %v1010 = vpop.f32.mrf.mxu0
      %v1011 = vpop.f32.mrf.mxu0
      %v1012 = vpop.f32.mrf.mxu0
      %v1013 = vadd.f32 0.0, %v1012
      %v1014 = vpop.f32.mrf.mxu0
      %1015 = vmatprep.mubr.bf16.mxu0 0
      %1016 = vmatmul.mubr.bf16.gmra.mxu0 %v703
      %v1017 = vpop.f32.mrf.mxu0
      %v1018 = vadd.f32 0.0, %v1017
      %v1019 = vpop.f32.mrf.mxu0
      %v1020 = vpop.f32.mrf.mxu0
      %v1021 = vpop.f32.mrf.mxu0
      %1022 = vmatprep.mubr.bf16.mxu0 0
      %1023 = vmatmul.mubr.bf16.gmra.mxu0 %v704
      %v1024 = vpop.f32.mrf.mxu0
      %v1025 = vadd.f32 0.0, %v1024
      %v1026 = vpop.f32.mrf.mxu0
      %v1027 = vpop.f32.mrf.mxu0
      %v1028 = vadd.f32 0.0, %v1027
      %v1029 = vpop.f32.mrf.mxu0
      %1030 = vmatprep.mubr.bf16.mxu0 0
      %1031 = vmatmul.mubr.bf16.gmra.mxu0 %v705
      %v1032 = vpop.f32.mrf.mxu0
      %v1033 = vpop.f32.mrf.mxu0
      %v1034 = vpop.f32.mrf.mxu0
      %v1035 = vadd.f32 0.0, %v1034
      %v1036 = vpop.f32.mrf.mxu0
      %1037 = vmatprep.mubr.bf16.mxu0 0
      %1038 = vmatmul.mubr.bf16.gmra.mxu0 %v706
      %v1039 = vpop.f32.mrf.mxu0
      %v1040 = vadd.f32 0.0, %v1039
      %v1041 = vpop.f32.mrf.mxu0
      %v1042 = vpop.f32.mrf.mxu0
      %v1043 = vpop.f32.mrf.mxu0
      %1044 = vmatprep.mubr.bf16.mxu0 0
      %1045 = vmatmul.mubr.bf16.gmra.mxu0 %v707
      %v1046 = vpop.f32.mrf.mxu0
      %v1047 = vadd.f32 0.0, %v1046
      %v1048 = vpop.f32.mrf.mxu0
      %v1049 = vpop.f32.mrf.mxu0
      %v1050 = vadd.f32 0.0, %v1049
      %v1051 = vpop.f32.mrf.mxu0
      %1052 = vmatprep.mubr.bf16.mxu0 0
      %1053 = vmatmul.mubr.bf16.gmra.mxu0 %v708
      %v1054 = vpop.f32.mrf.mxu0
      %v1055 = vpop.f32.mrf.mxu0
      %v1056 = vpop.f32.mrf.mxu0
      %v1057 = vadd.f32 0.0, %v1056
      %v1058 = vpop.f32.mrf.mxu0
      %1059 = vmatprep.mubr.bf16.mxu0 0
      %1060 = vmatmul.mubr.bf16.gmra.mxu0 %v709
      %v1061 = vpop.f32.mrf.mxu0
      %v1062 = vadd.f32 0.0, %v1061
      %v1063 = vpop.f32.mrf.mxu0
      %v1064 = vpop.f32.mrf.mxu0
      %v1065 = vpop.f32.mrf.mxu0
      %1066 = vmatprep.mubr.bf16.mxu0 0
      %1067 = vmatmul.mubr.bf16.gmra.mxu0 %v914
      %v1068 = vpop.f32.mrf.mxu0
      %v1069 = vadd.f32 0.0, %v1068
      %v1070 = vpop.f32.mrf.mxu0
      %v1071 = vpop.f32.mrf.mxu0
      %v1072 = vadd.f32 0.0, %v1071
      %v1073 = vpop.f32.mrf.mxu0
      %1074 = vmatprep.mubr.bf16.mxu0 0
      %1075 = vmatmul.mubr.bf16.gmra.mxu0 %v915
      %v1076 = vpop.f32.mrf.mxu0
      %v1077 = vpop.f32.mrf.mxu0
      %v1078 = vpop.f32.mrf.mxu0
      %v1079 = vadd.f32 0.0, %v1078
      %v1080 = vpop.f32.mrf.mxu0
      %1081 = vmatprep.mubr.bf16.mxu0 0
      %1082 = vmatmul.mubr.bf16.gmra.mxu0 %v916
      %v1083 = vpop.f32.mrf.mxu0
      %v1084 = vadd.f32 0.0, %v1083
      %v1085 = vpop.f32.mrf.mxu0
      %v1086 = vpop.f32.mrf.mxu0
      %v1087 = vpop.f32.mrf.mxu0
      %1088 = vdwg.mxu0
      %v1089 = vadd.f32 %v805, %v1003
      %v1090 = vadd.f32 %v808, %v1006
      %v1091 = vadd.f32 %v815, %v1013
      %v1092 = vadd.f32 %v820, %v1018
      %v1093 = vadd.f32 %v827, %v1025
      %v1094 = vadd.f32 %v830, %v1028
      %v1095 = vadd.f32 %v837, %v1035
      %v1096 = vadd.f32 %v842, %v1040
      %v1097 = vadd.f32 %v849, %v1047
      %v1098 = vadd.f32 %v852, %v1050
      %v1099 = vadd.f32 %v859, %v1057
      %v1100 = vadd.f32 %v864, %v1062
      %v1101 = vadd.f32 %v871, %v1069
      %v1102 = vadd.f32 %v874, %v1072
      %v1103 = vadd.f32 %v881, %v1079
      %v1104 = vadd.f32 %v886, %v1084
      %v1105 = vadd.f32 %v1089, 0.0
      %v1106 = vadd.f32 %v1090, 0.0
      %v1107 = vadd.f32 %v1091, 0.0
      %v1108 = vadd.f32 %v1092, 0.0
      %v1109 = vadd.f32 %v1093, 0.0
      %v1110 = vadd.f32 %v1094, 0.0
      %v1111 = vadd.f32 %v1095, 0.0
      %v1112 = vadd.f32 %v1096, 0.0
      %v1113 = vadd.f32 %v1097, 0.0
      %v1114 = vadd.f32 %v1098, 0.0
      %v1115 = vadd.f32 %v1099, 0.0
      %v1116 = vadd.f32 %v1100, 0.0
      %v1117 = vadd.f32 %v1101, 0.0
      %v1118 = vadd.f32 %v1102, 0.0
      %v1119 = vadd.f32 %v1103, 0.0
      %v1120 = vadd.f32 %v1104, 0.0
      %s1121 = scalar_lea.vmem %s1, 64
      %v1122 = vld [vmem:[%s1121] sm:$0xf]
      %v1123 = vld [vmem:[%s1121 + $0x4] sm:$0xf]
      %v1124 = vld [vmem:[%s1121 + $0x8] sm:$0xf]
      %v1125 = vld [vmem:[%s1121 + $0xc] sm:$0xf]
      %v1126 = vld [vmem:[%s1121 + $0x10] sm:$0xf]
      %v1127 = vld [vmem:[%s1121 + $0x14] sm:$0xf]
      %v1128 = vld [vmem:[%s1121 + $0x18] sm:$0xf]
      %v1129 = vld [vmem:[%s1121 + $0x1c] sm:$0xf]
      %v1130 = vld [vmem:[%s1121 + $0x20] sm:$0xf]
      %v1131 = vld [vmem:[%s1121 + $0x24] sm:$0xf]
      %v1132 = vld [vmem:[%s1121 + $0x28] sm:$0xf]
      %v1133 = vld [vmem:[%s1121 + $0x2c] sm:$0xf]
      %v1134 = vld [vmem:[%s1121 + $0x30] sm:$0xf]
      %v1135 = vld [vmem:[%s1121 + $0x34] sm:$0xf]
      %v1136 = vld [vmem:[%s1121 + $0x38] sm:$0xf]
      %v1137 = vld [vmem:[%s1121 + $0x3c] sm:$0xf]
      %s1138 = scalar_lea.vmem %s1, 256
      %v1139 = vld [vmem:[%s1138] sm:$0xf]
      %v1140 = vld [vmem:[%s1138 + $0x4] sm:$0xf]
      %v1141 = vld [vmem:[%s1138 + $0x8] sm:$0xf]
      %v1142 = vld [vmem:[%s1138 + $0xc] sm:$0xf]
      %v1143 = vld [vmem:[%s1138 + $0x10] sm:$0xf]
      %v1144 = vld [vmem:[%s1138 + $0x14] sm:$0xf]
      %v1145 = vld [vmem:[%s1138 + $0x18] sm:$0xf]
      %v1146 = vld [vmem:[%s1138 + $0x1c] sm:$0xf]
      %v1147 = vld [vmem:[%s1138 + $0x20] sm:$0xf]
      %v1148 = vld [vmem:[%s1138 + $0x24] sm:$0xf]
      %v1149 = vld [vmem:[%s1138 + $0x28] sm:$0xf]
      %v1150 = vld [vmem:[%s1138 + $0x2c] sm:$0xf]
      %v1151 = vld [vmem:[%s1138 + $0x30] sm:$0xf]
      %v1152 = vld [vmem:[%s1138 + $0x34] sm:$0xf]
      %v1153 = vld [vmem:[%s1138 + $0x38] sm:$0xf]
      %v1154 = vld [vmem:[%s1138 + $0x3c] sm:$0xf]
      %v1171 = vunpack.c.l.b16 %v1139
      %v1172 = vunpack.c.l.b16 %v1140
      %v1173 = vunpack.c.l.b16 %v1141
      %v1174 = vunpack.c.l.b16 %v1142
      %v1175 = vunpack.c.l.b16 %v1143
      %v1176 = vunpack.c.l.b16 %v1144
      %v1177 = vunpack.c.l.b16 %v1145
      %v1178 = vunpack.c.l.b16 %v1146
      %v1179 = vunpack.c.l.b16 %v1147
      %v1180 = vunpack.c.l.b16 %v1148
      %v1181 = vunpack.c.l.b16 %v1149
      %v1182 = vunpack.c.l.b16 %v1150
      %v1183 = vunpack.c.l.b16 %v1151
      %v1184 = vunpack.c.l.b16 %v1152
      %v1185 = vunpack.c.l.b16 %v1153
      %v1186 = vunpack.c.l.b16 %v1154
      %v1187 = vpack.c.b16 %v1172, %v1171
      %v1188 = vpack.c.b16 %v1174, %v1173
      %v1189 = vpack.c.b16 %v1176, %v1175
      %v1190 = vpack.c.b16 %v1178, %v1177
      %v1191 = vpack.c.b16 %v1180, %v1179
      %v1192 = vpack.c.b16 %v1182, %v1181
      %v1193 = vpack.c.b16 %v1184, %v1183
      %v1194 = vpack.c.b16 %v1186, %v1185
      %1203 = vmatprep.subr.bf16.mxu0 0
      %1204 = vmatpush1.bf16.msra.mxu0 %v1194
      %1205 = vmatprep.subr.bf16.mxu0 0
      %1206 = vmatpush1.bf16.msra.mxu0 %v1193
      %1207 = vmatprep.subr.bf16.mxu0 0
      %1208 = vmatpush1.bf16.msra.mxu0 %v1192
      %1209 = vmatprep.subr.bf16.mxu0 0
      %1210 = vmatpush1.bf16.msra.mxu0 %v1191
      %1211 = vmatprep.subr.bf16.mxu0 0
      %1212 = vmatpush1.bf16.msra.mxu0 %v1190
      %1213 = vmatprep.subr.bf16.mxu0 0
      %1214 = vmatpush1.bf16.msra.mxu0 %v1189
      %1215 = vmatprep.subr.bf16.mxu0 0
      %1216 = vmatpush1.bf16.msra.mxu0 %v1188
      %1217 = vmatprep.subr.bf16.mxu0 0
      %1218 = vmatpush1.bf16.msra.mxu0 %v1187
      %1219 = vmatprep.subr.bf16.mxu0 0
      %1220 = vmatpush2.bf16.msra.mxu0 0
      %1221 = vmatprep.subr.bf16.mxu0 0
      %1222 = vmatpush2.bf16.msra.mxu0 0
      %1223 = vmatprep.subr.bf16.mxu0 0
      %1224 = vmatpush2.bf16.msra.mxu0 0
      %1225 = vmatprep.subr.bf16.mxu0 0
      %1226 = vmatpush2.bf16.msra.mxu0 0
      %1227 = vmatprep.subr.bf16.mxu0 0
      %1228 = vmatpush2.bf16.msra.mxu0 0
      %1229 = vmatprep.subr.bf16.mxu0 0
      %1230 = vmatpush2.bf16.msra.mxu0 0
      %1231 = vmatprep.subr.bf16.mxu0 0
      %1232 = vmatpush2.bf16.msra.mxu0 0
      %1233 = vmatprep.subr.bf16.mxu0 0
      %1234 = vmatpush2.bf16.msra.mxu0 0
      %1235 = vmatprep.mubr.bf16.mxu0 0
      %1236 = vmatmul.mubr.bf16.gmra.mxu0 %v499
      %v1237 = vpop.f32.mrf.mxu0
      %v1238 = vadd.f32 0.0, %v1237
      %v1239 = vpop.f32.mrf.mxu0
      %v1240 = vpop.f32.mrf.mxu0
      %v1241 = vadd.f32 0.0, %v1240
      %v1242 = vpop.f32.mrf.mxu0
      %1243 = vmatprep.mubr.bf16.mxu0 0
      %1244 = vmatmul.mubr.bf16.gmra.mxu0 %v500
      %v1245 = vpop.f32.mrf.mxu0
      %v1246 = vadd.f32 0.0, %v1245
      %v1247 = vpop.f32.mrf.mxu0
      %v1248 = vpop.f32.mrf.mxu0
      %v1249 = vadd.f32 0.0, %v1248
      %v1250 = vpop.f32.mrf.mxu0
      %1251 = vmatprep.mubr.bf16.mxu0 0
      %1252 = vmatmul.mubr.bf16.gmra.mxu0 %v501
      %v1253 = vpop.f32.mrf.mxu0
      %v1254 = vadd.f32 0.0, %v1253
      %v1255 = vpop.f32.mrf.mxu0
      %v1256 = vpop.f32.mrf.mxu0
      %v1257 = vadd.f32 0.0, %v1256
      %v1258 = vpop.f32.mrf.mxu0
      %1259 = vmatprep.mubr.bf16.mxu0 0
      %1260 = vmatmul.mubr.bf16.gmra.mxu0 %v502
      %v1261 = vpop.f32.mrf.mxu0
      %v1262 = vadd.f32 0.0, %v1261
      %v1263 = vpop.f32.mrf.mxu0
      %v1264 = vpop.f32.mrf.mxu0
      %v1265 = vadd.f32 0.0, %v1264
      %v1266 = vpop.f32.mrf.mxu0
      %1267 = vmatprep.mubr.bf16.mxu0 0
      %1268 = vmatmul.mubr.bf16.gmra.mxu0 %v503
      %v1269 = vpop.f32.mrf.mxu0
      %v1270 = vadd.f32 0.0, %v1269
      %v1271 = vpop.f32.mrf.mxu0
      %v1272 = vpop.f32.mrf.mxu0
      %v1273 = vadd.f32 0.0, %v1272
      %v1274 = vpop.f32.mrf.mxu0
      %1275 = vmatprep.mubr.bf16.mxu0 0
      %1276 = vmatmul.mubr.bf16.gmra.mxu0 %v504
      %v1277 = vpop.f32.mrf.mxu0
      %v1278 = vadd.f32 0.0, %v1277
      %v1279 = vpop.f32.mrf.mxu0
      %v1280 = vpop.f32.mrf.mxu0
      %v1281 = vadd.f32 0.0, %v1280
      %v1282 = vpop.f32.mrf.mxu0
      %1283 = vmatprep.mubr.bf16.mxu0 0
      %1284 = vmatmul.mubr.bf16.gmra.mxu0 %v505
      %v1285 = vpop.f32.mrf.mxu0
      %v1286 = vadd.f32 0.0, %v1285
      %v1287 = vpop.f32.mrf.mxu0
      %v1288 = vpop.f32.mrf.mxu0
      %v1289 = vadd.f32 0.0, %v1288
      %v1290 = vpop.f32.mrf.mxu0
      %1291 = vmatprep.mubr.bf16.mxu0 0
      %1292 = vmatmul.mubr.bf16.gmra.mxu0 %v506
      %v1293 = vpop.f32.mrf.mxu0
      %v1294 = vadd.f32 0.0, %v1293
      %v1295 = vpop.f32.mrf.mxu0
      %v1296 = vpop.f32.mrf.mxu0
      %v1297 = vadd.f32 0.0, %v1296
      %v1298 = vpop.f32.mrf.mxu0
      %1299 = vmatprep.mubr.bf16.mxu0 0
      %1300 = vmatmul.mubr.bf16.gmra.mxu0 %v507
      %v1301 = vpop.f32.mrf.mxu0
      %v1302 = vadd.f32 0.0, %v1301
      %v1303 = vpop.f32.mrf.mxu0
      %v1304 = vpop.f32.mrf.mxu0
      %v1305 = vadd.f32 0.0, %v1304
      %v1306 = vpop.f32.mrf.mxu0
      %1307 = vmatprep.mubr.bf16.mxu0 0
      %1308 = vmatmul.mubr.bf16.gmra.mxu0 %v508
      %v1309 = vpop.f32.mrf.mxu0
      %v1310 = vadd.f32 0.0, %v1309
      %v1311 = vpop.f32.mrf.mxu0
      %v1312 = vpop.f32.mrf.mxu0
      %v1313 = vadd.f32 0.0, %v1312
      %v1314 = vpop.f32.mrf.mxu0
      %1315 = vmatprep.mubr.bf16.mxu0 0
      %1316 = vmatmul.mubr.bf16.gmra.mxu0 %v509
      %v1317 = vpop.f32.mrf.mxu0
      %v1318 = vadd.f32 0.0, %v1317
      %v1319 = vpop.f32.mrf.mxu0
      %v1320 = vpop.f32.mrf.mxu0
      %v1321 = vadd.f32 0.0, %v1320
      %v1322 = vpop.f32.mrf.mxu0
      %1323 = vmatprep.mubr.bf16.mxu0 0
      %1324 = vmatmul.mubr.bf16.gmra.mxu0 %v510
      %v1325 = vpop.f32.mrf.mxu0
      %v1326 = vadd.f32 0.0, %v1325
      %v1327 = vpop.f32.mrf.mxu0
      %v1328 = vpop.f32.mrf.mxu0
      %v1329 = vadd.f32 0.0, %v1328
      %v1330 = vpop.f32.mrf.mxu0
      %1331 = vdwg.mxu0
      %v1348 = vunpack.c.l.b16 %v1122
      %v1349 = vunpack.c.l.b16 %v1123
      %v1350 = vunpack.c.l.b16 %v1124
      %v1351 = vunpack.c.l.b16 %v1125
      %v1352 = vunpack.c.l.b16 %v1126
      %v1353 = vunpack.c.l.b16 %v1127
      %v1354 = vunpack.c.l.b16 %v1128
      %v1355 = vunpack.c.l.b16 %v1129
      %v1356 = vunpack.c.l.b16 %v1130
      %v1357 = vunpack.c.l.b16 %v1131
      %v1358 = vunpack.c.l.b16 %v1132
      %v1359 = vunpack.c.l.b16 %v1133
      %v1360 = vunpack.c.l.b16 %v1134
      %v1361 = vunpack.c.l.b16 %v1135
      %v1362 = vunpack.c.l.b16 %v1136
      %v1363 = vunpack.c.l.b16 %v1137
      %v1364 = vpack.c.b16 %v1349, %v1348
      %v1365 = vpack.c.b16 %v1351, %v1350
      %v1366 = vpack.c.b16 %v1353, %v1352
      %v1367 = vpack.c.b16 %v1355, %v1354
      %v1368 = vpack.c.b16 %v1357, %v1356
      %v1369 = vpack.c.b16 %v1359, %v1358
      %v1370 = vpack.c.b16 %v1361, %v1360
      %v1371 = vpack.c.b16 %v1363, %v1362
      %1380 = vmatprep.subr.bf16.mxu0 0
      %1381 = vmatpush1.bf16.msra.mxu0 %v1371
      %1382 = vmatprep.subr.bf16.mxu0 0
      %1383 = vmatpush1.bf16.msra.mxu0 %v1370
      %1384 = vmatprep.subr.bf16.mxu0 0
      %1385 = vmatpush1.bf16.msra.mxu0 %v1369
      %1386 = vmatprep.subr.bf16.mxu0 0
      %1387 = vmatpush1.bf16.msra.mxu0 %v1368
      %1388 = vmatprep.subr.bf16.mxu0 0
      %1389 = vmatpush1.bf16.msra.mxu0 %v1367
      %1390 = vmatprep.subr.bf16.mxu0 0
      %1391 = vmatpush1.bf16.msra.mxu0 %v1366
      %1392 = vmatprep.subr.bf16.mxu0 0
      %1393 = vmatpush1.bf16.msra.mxu0 %v1365
      %1394 = vmatprep.subr.bf16.mxu0 0
      %1395 = vmatpush1.bf16.msra.mxu0 %v1364
      %1396 = vmatprep.subr.bf16.mxu0 0
      %1397 = vmatpush2.bf16.msra.mxu0 0
      %1398 = vmatprep.subr.bf16.mxu0 0
      %1399 = vmatpush2.bf16.msra.mxu0 0
      %1400 = vmatprep.subr.bf16.mxu0 0
      %1401 = vmatpush2.bf16.msra.mxu0 0
      %1402 = vmatprep.subr.bf16.mxu0 0
      %1403 = vmatpush2.bf16.msra.mxu0 0
      %1404 = vmatprep.subr.bf16.mxu0 0
      %1405 = vmatpush2.bf16.msra.mxu0 0
      %1406 = vmatprep.subr.bf16.mxu0 0
      %1407 = vmatpush2.bf16.msra.mxu0 0
      %1408 = vmatprep.subr.bf16.mxu0 0
      %1409 = vmatpush2.bf16.msra.mxu0 0
      %1410 = vmatprep.subr.bf16.mxu0 0
      %1411 = vmatpush2.bf16.msra.mxu0 0
      %1412 = vmatprep.mubr.bf16.mxu0 0
      %1413 = vmatmul.mubr.bf16.gmra.mxu0 %v698
      %v1414 = vpop.f32.mrf.mxu0
      %v1415 = vadd.f32 %v1238, %v1414
      %v1416 = vpop.f32.mrf.mxu0
      %v1417 = vpop.f32.mrf.mxu0
      %v1418 = vadd.f32 %v1241, %v1417
      %v1419 = vpop.f32.mrf.mxu0
      %1420 = vmatprep.mubr.bf16.mxu0 0
      %1421 = vmatmul.mubr.bf16.gmra.mxu0 %v699
      %v1422 = vpop.f32.mrf.mxu0
      %v1423 = vadd.f32 %v1246, %v1422
      %v1424 = vpop.f32.mrf.mxu0
      %v1425 = vpop.f32.mrf.mxu0
      %v1426 = vadd.f32 %v1249, %v1425
      %v1427 = vpop.f32.mrf.mxu0
      %1428 = vmatprep.mubr.bf16.mxu0 0
      %1429 = vmatmul.mubr.bf16.gmra.mxu0 %v700
      %v1430 = vpop.f32.mrf.mxu0
      %v1431 = vadd.f32 %v1254, %v1430
      %v1432 = vpop.f32.mrf.mxu0
      %v1433 = vpop.f32.mrf.mxu0
      %v1434 = vadd.f32 %v1257, %v1433
      %v1435 = vpop.f32.mrf.mxu0
      %1436 = vmatprep.mubr.bf16.mxu0 0
      %1437 = vmatmul.mubr.bf16.gmra.mxu0 %v701
      %v1438 = vpop.f32.mrf.mxu0
      %v1439 = vadd.f32 %v1262, %v1438
      %v1440 = vpop.f32.mrf.mxu0
      %v1441 = vpop.f32.mrf.mxu0
      %v1442 = vadd.f32 %v1265, %v1441
      %v1443 = vpop.f32.mrf.mxu0
      %1444 = vmatprep.mubr.bf16.mxu0 0
      %1445 = vmatmul.mubr.bf16.gmra.mxu0 %v702
      %v1446 = vpop.f32.mrf.mxu0
      %v1447 = vadd.f32 %v1270, %v1446
      %v1448 = vpop.f32.mrf.mxu0
      %v1449 = vpop.f32.mrf.mxu0
      %v1450 = vadd.f32 %v1273, %v1449
      %v1451 = vpop.f32.mrf.mxu0
      %1452 = vmatprep.mubr.bf16.mxu0 0
      %1453 = vmatmul.mubr.bf16.gmra.mxu0 %v703
      %v1454 = vpop.f32.mrf.mxu0
      %v1455 = vadd.f32 %v1278, %v1454
      %v1456 = vpop.f32.mrf.mxu0
      %v1457 = vpop.f32.mrf.mxu0
      %v1458 = vadd.f32 %v1281, %v1457
      %v1459 = vpop.f32.mrf.mxu0
      %1460 = vmatprep.mubr.bf16.mxu0 0
      %1461 = vmatmul.mubr.bf16.gmra.mxu0 %v704
      %v1462 = vpop.f32.mrf.mxu0
      %v1463 = vadd.f32 %v1286, %v1462
      %v1464 = vpop.f32.mrf.mxu0
      %v1465 = vpop.f32.mrf.mxu0
      %v1466 = vadd.f32 %v1289, %v1465
      %v1467 = vpop.f32.mrf.mxu0
      %1468 = vmatprep.mubr.bf16.mxu0 0
      %1469 = vmatmul.mubr.bf16.gmra.mxu0 %v705
      %v1470 = vpop.f32.mrf.mxu0
      %v1471 = vadd.f32 %v1294, %v1470
      %v1472 = vpop.f32.mrf.mxu0
      %v1473 = vpop.f32.mrf.mxu0
      %v1474 = vadd.f32 %v1297, %v1473
      %v1475 = vpop.f32.mrf.mxu0
      %1476 = vmatprep.mubr.bf16.mxu0 0
      %1477 = vmatmul.mubr.bf16.gmra.mxu0 %v706
      %v1478 = vpop.f32.mrf.mxu0
      %v1479 = vadd.f32 %v1302, %v1478
      %v1480 = vpop.f32.mrf.mxu0
      %v1481 = vpop.f32.mrf.mxu0
      %v1482 = vadd.f32 %v1305, %v1481
      %v1483 = vpop.f32.mrf.mxu0
      %1484 = vmatprep.mubr.bf16.mxu0 0
      %1485 = vmatmul.mubr.bf16.gmra.mxu0 %v707
      %v1486 = vpop.f32.mrf.mxu0
      %v1487 = vadd.f32 %v1310, %v1486
      %v1488 = vpop.f32.mrf.mxu0
      %v1489 = vpop.f32.mrf.mxu0
      %v1490 = vadd.f32 %v1313, %v1489
      %v1491 = vpop.f32.mrf.mxu0
      %1492 = vmatprep.mubr.bf16.mxu0 0
      %1493 = vmatmul.mubr.bf16.gmra.mxu0 %v708
      %v1494 = vpop.f32.mrf.mxu0
      %v1495 = vadd.f32 %v1318, %v1494
      %v1496 = vpop.f32.mrf.mxu0
      %v1497 = vpop.f32.mrf.mxu0
      %v1498 = vadd.f32 %v1321, %v1497
      %v1499 = vpop.f32.mrf.mxu0
      %1500 = vmatprep.mubr.bf16.mxu0 0
      %1501 = vmatmul.mubr.bf16.gmra.mxu0 %v709
      %v1502 = vpop.f32.mrf.mxu0
      %v1503 = vadd.f32 %v1326, %v1502
      %v1504 = vpop.f32.mrf.mxu0
      %v1505 = vpop.f32.mrf.mxu0
      %v1506 = vadd.f32 %v1329, %v1505
      %v1507 = vpop.f32.mrf.mxu0
      %1508 = vdwg.mxu0
      %s1509 = scalar_lea.vmem %s1, 448
      %v1510 = vld [vmem:[%s1509] sm:$0xf]
      %v1511 = vld [vmem:[%s1509 + $0x4] sm:$0xf]
      %v1512 = vld [vmem:[%s1509 + $0x8] sm:$0xf]
      %v1513 = vld [vmem:[%s1509 + $0xc] sm:$0xf]
      %v1514 = vld [vmem:[%s1509 + $0x10] sm:$0xf]
      %v1515 = vld [vmem:[%s1509 + $0x14] sm:$0xf]
      %v1516 = vld [vmem:[%s1509 + $0x18] sm:$0xf]
      %v1517 = vld [vmem:[%s1509 + $0x1c] sm:$0xf]
      %v1518 = vld [vmem:[%s1509 + $0x20] sm:$0xf]
      %v1519 = vld [vmem:[%s1509 + $0x24] sm:$0xf]
      %v1520 = vld [vmem:[%s1509 + $0x28] sm:$0xf]
      %v1521 = vld [vmem:[%s1509 + $0x2c] sm:$0xf]
      %v1522 = vld [vmem:[%s1509 + $0x30] sm:$0xf]
      %v1523 = vld [vmem:[%s1509 + $0x34] sm:$0xf]
      %v1524 = vld [vmem:[%s1509 + $0x38] sm:$0xf]
      %v1525 = vld [vmem:[%s1509 + $0x3c] sm:$0xf]
      %v1542 = vunpack.c.l.b16 %v1510
      %v1543 = vunpack.c.l.b16 %v1511
      %v1544 = vunpack.c.l.b16 %v1512
      %v1545 = vunpack.c.l.b16 %v1513
      %v1546 = vunpack.c.l.b16 %v1514
      %v1547 = vunpack.c.l.b16 %v1515
      %v1548 = vunpack.c.l.b16 %v1516
      %v1549 = vunpack.c.l.b16 %v1517
      %v1550 = vunpack.c.l.b16 %v1518
      %v1551 = vunpack.c.l.b16 %v1519
      %v1552 = vunpack.c.l.b16 %v1520
      %v1553 = vunpack.c.l.b16 %v1521
      %v1554 = vunpack.c.l.b16 %v1522
      %v1555 = vunpack.c.l.b16 %v1523
      %v1556 = vunpack.c.l.b16 %v1524
      %v1557 = vunpack.c.l.b16 %v1525
      %v1558 = vpack.c.b16 %v1543, %v1542
      %v1559 = vpack.c.b16 %v1545, %v1544
      %v1560 = vpack.c.b16 %v1547, %v1546
      %v1561 = vpack.c.b16 %v1549, %v1548
      %v1562 = vpack.c.b16 %v1551, %v1550
      %v1563 = vpack.c.b16 %v1553, %v1552
      %v1564 = vpack.c.b16 %v1555, %v1554
      %v1565 = vpack.c.b16 %v1557, %v1556
      %1574 = vmatprep.subr.bf16.mxu0 0
      %1575 = vmatpush1.bf16.msra.mxu0 %v1565
      %1576 = vmatprep.subr.bf16.mxu0 0
      %1577 = vmatpush1.bf16.msra.mxu0 %v1564
      %1578 = vmatprep.subr.bf16.mxu0 0
      %1579 = vmatpush1.bf16.msra.mxu0 %v1563
      %1580 = vmatprep.subr.bf16.mxu0 0
      %1581 = vmatpush1.bf16.msra.mxu0 %v1562
      %1582 = vmatprep.subr.bf16.mxu0 0
      %1583 = vmatpush1.bf16.msra.mxu0 %v1561
      %1584 = vmatprep.subr.bf16.mxu0 0
      %1585 = vmatpush1.bf16.msra.mxu0 %v1560
      %1586 = vmatprep.subr.bf16.mxu0 0
      %1587 = vmatpush1.bf16.msra.mxu0 %v1559
      %1588 = vmatprep.subr.bf16.mxu0 0
      %1589 = vmatpush1.bf16.msra.mxu0 %v1558
      %1590 = vmatprep.subr.bf16.mxu0 0
      %1591 = vmatpush2.bf16.msra.mxu0 0
      %1592 = vmatprep.subr.bf16.mxu0 0
      %1593 = vmatpush2.bf16.msra.mxu0 0
      %1594 = vmatprep.subr.bf16.mxu0 0
      %1595 = vmatpush2.bf16.msra.mxu0 0
      %1596 = vmatprep.subr.bf16.mxu0 0
      %1597 = vmatpush2.bf16.msra.mxu0 0
      %1598 = vmatprep.subr.bf16.mxu0 0
      %1599 = vmatpush2.bf16.msra.mxu0 0
      %1600 = vmatprep.subr.bf16.mxu0 0
      %1601 = vmatpush2.bf16.msra.mxu0 0
      %1602 = vmatprep.subr.bf16.mxu0 0
      %1603 = vmatpush2.bf16.msra.mxu0 0
      %1604 = vmatprep.subr.bf16.mxu0 0
      %1605 = vmatpush2.bf16.msra.mxu0 0
      %1606 = vmatprep.mubr.bf16.mxu0 0
      %1607 = vmatmul.mubr.bf16.gmra.mxu0 %v701
      %v1608 = vpop.f32.mrf.mxu0
      %v1609 = vadd.f32 0.0, %v1608
      %v1610 = vpop.f32.mrf.mxu0
      %v1611 = vpop.f32.mrf.mxu0
      %v1612 = vadd.f32 0.0, %v1611
      %v1613 = vpop.f32.mrf.mxu0
      %1614 = vmatprep.mubr.bf16.mxu0 0
      %1615 = vmatmul.mubr.bf16.gmra.mxu0 %v702
      %v1616 = vpop.f32.mrf.mxu0
      %v1617 = vadd.f32 0.0, %v1616
      %v1618 = vpop.f32.mrf.mxu0
      %v1619 = vpop.f32.mrf.mxu0
      %v1620 = vadd.f32 0.0, %v1619
      %v1621 = vpop.f32.mrf.mxu0
      %1622 = vmatprep.mubr.bf16.mxu0 0
      %1623 = vmatmul.mubr.bf16.gmra.mxu0 %v703
      %v1624 = vpop.f32.mrf.mxu0
      %v1625 = vadd.f32 0.0, %v1624
      %v1626 = vpop.f32.mrf.mxu0
      %v1627 = vpop.f32.mrf.mxu0
      %v1628 = vadd.f32 0.0, %v1627
      %v1629 = vpop.f32.mrf.mxu0
      %1630 = vmatprep.mubr.bf16.mxu0 0
      %1631 = vmatmul.mubr.bf16.gmra.mxu0 %v704
      %v1632 = vpop.f32.mrf.mxu0
      %v1633 = vadd.f32 0.0, %v1632
      %v1634 = vpop.f32.mrf.mxu0
      %v1635 = vpop.f32.mrf.mxu0
      %v1636 = vadd.f32 0.0, %v1635
      %v1637 = vpop.f32.mrf.mxu0
      %1638 = vmatprep.mubr.bf16.mxu0 0
      %1639 = vmatmul.mubr.bf16.gmra.mxu0 %v705
      %v1640 = vpop.f32.mrf.mxu0
      %v1641 = vadd.f32 0.0, %v1640
      %v1642 = vpop.f32.mrf.mxu0
      %v1643 = vpop.f32.mrf.mxu0
      %v1644 = vadd.f32 0.0, %v1643
      %v1645 = vpop.f32.mrf.mxu0
      %1646 = vmatprep.mubr.bf16.mxu0 0
      %1647 = vmatmul.mubr.bf16.gmra.mxu0 %v706
      %v1648 = vpop.f32.mrf.mxu0
      %v1649 = vadd.f32 0.0, %v1648
      %v1650 = vpop.f32.mrf.mxu0
      %v1651 = vpop.f32.mrf.mxu0
      %v1652 = vadd.f32 0.0, %v1651
      %v1653 = vpop.f32.mrf.mxu0
      %1654 = vmatprep.mubr.bf16.mxu0 0
      %1655 = vmatmul.mubr.bf16.gmra.mxu0 %v707
      %v1656 = vpop.f32.mrf.mxu0
      %v1657 = vadd.f32 0.0, %v1656
      %v1658 = vpop.f32.mrf.mxu0
      %v1659 = vpop.f32.mrf.mxu0
      %v1660 = vadd.f32 0.0, %v1659
      %v1661 = vpop.f32.mrf.mxu0
      %1662 = vmatprep.mubr.bf16.mxu0 0
      %1663 = vmatmul.mubr.bf16.gmra.mxu0 %v708
      %v1664 = vpop.f32.mrf.mxu0
      %v1665 = vadd.f32 0.0, %v1664
      %v1666 = vpop.f32.mrf.mxu0
      %v1667 = vpop.f32.mrf.mxu0
      %v1668 = vadd.f32 0.0, %v1667
      %v1669 = vpop.f32.mrf.mxu0
      %1670 = vmatprep.mubr.bf16.mxu0 0
      %1671 = vmatmul.mubr.bf16.gmra.mxu0 %v709
      %v1672 = vpop.f32.mrf.mxu0
      %v1673 = vadd.f32 0.0, %v1672
      %v1674 = vpop.f32.mrf.mxu0
      %v1675 = vpop.f32.mrf.mxu0
      %v1676 = vadd.f32 0.0, %v1675
      %v1677 = vpop.f32.mrf.mxu0
      %1678 = vmatprep.mubr.bf16.mxu0 0
      %1679 = vmatmul.mubr.bf16.gmra.mxu0 %v914
      %v1680 = vpop.f32.mrf.mxu0
      %v1681 = vadd.f32 0.0, %v1680
      %v1682 = vpop.f32.mrf.mxu0
      %v1683 = vpop.f32.mrf.mxu0
      %v1684 = vadd.f32 0.0, %v1683
      %v1685 = vpop.f32.mrf.mxu0
      %1686 = vmatprep.mubr.bf16.mxu0 0
      %1687 = vmatmul.mubr.bf16.gmra.mxu0 %v915
      %v1688 = vpop.f32.mrf.mxu0
      %v1689 = vadd.f32 0.0, %v1688
      %v1690 = vpop.f32.mrf.mxu0
      %v1691 = vpop.f32.mrf.mxu0
      %v1692 = vadd.f32 0.0, %v1691
      %v1693 = vpop.f32.mrf.mxu0
      %1694 = vmatprep.mubr.bf16.mxu0 0
      %1695 = vmatmul.mubr.bf16.gmra.mxu0 %v916
      %v1696 = vpop.f32.mrf.mxu0
      %v1697 = vadd.f32 0.0, %v1696
      %v1698 = vpop.f32.mrf.mxu0
      %v1699 = vpop.f32.mrf.mxu0
      %v1700 = vadd.f32 0.0, %v1699
      %v1701 = vpop.f32.mrf.mxu0
      %1702 = vdwg.mxu0
      %v1703 = vadd.f32 %v1415, %v1609
      %v1704 = vadd.f32 %v1418, %v1612
      %v1705 = vadd.f32 %v1423, %v1617
      %v1706 = vadd.f32 %v1426, %v1620
      %v1707 = vadd.f32 %v1431, %v1625
      %v1708 = vadd.f32 %v1434, %v1628
      %v1709 = vadd.f32 %v1439, %v1633
      %v1710 = vadd.f32 %v1442, %v1636
      %v1711 = vadd.f32 %v1447, %v1641
      %v1712 = vadd.f32 %v1450, %v1644
      %v1713 = vadd.f32 %v1455, %v1649
      %v1714 = vadd.f32 %v1458, %v1652
      %v1715 = vadd.f32 %v1463, %v1657
      %v1716 = vadd.f32 %v1466, %v1660
      %v1717 = vadd.f32 %v1471, %v1665
      %v1718 = vadd.f32 %v1474, %v1668
      %v1719 = vadd.f32 %v1479, %v1673
      %v1720 = vadd.f32 %v1482, %v1676
      %v1721 = vadd.f32 %v1487, %v1681
      %v1722 = vadd.f32 %v1490, %v1684
      %v1723 = vadd.f32 %v1495, %v1689
      %v1724 = vadd.f32 %v1498, %v1692
      %v1725 = vadd.f32 %v1503, %v1697
      %v1726 = vadd.f32 %v1506, %v1700
      %vm1751 = vcmask 1046528
      %v1752 = vrot.slane %v1703, 1
      %v1753 = vrot.slane %v1704, 1
      %v1754 = vsel %vm1751, %v1752, %v1753
      %v1755 = vrot.slane %v1705, 1
      %v1756 = vsel %vm1751, %v1753, %v1755
      %v1757 = vrot.slane %v1706, 1
      %v1758 = vrot.slane %v1707, 1
      %v1759 = vsel %vm1751, %v1757, %v1758
      %v1760 = vrot.slane %v1708, 1
      %v1761 = vsel %vm1751, %v1758, %v1760
      %v1762 = vrot.slane %v1709, 1
      %v1763 = vrot.slane %v1710, 1
      %v1764 = vsel %vm1751, %v1762, %v1763
      %v1765 = vrot.slane %v1711, 1
      %v1766 = vsel %vm1751, %v1763, %v1765
      %v1767 = vrot.slane %v1712, 1
      %v1768 = vrot.slane %v1713, 1
      %v1769 = vsel %vm1751, %v1767, %v1768
      %v1770 = vrot.slane %v1714, 1
      %v1771 = vsel %vm1751, %v1768, %v1770
      %v1772 = vrot.slane %v1715, 1
      %v1773 = vrot.slane %v1716, 1
      %v1774 = vsel %vm1751, %v1772, %v1773
      %v1775 = vrot.slane %v1717, 1
      %v1776 = vsel %vm1751, %v1773, %v1775
      %v1777 = vrot.slane %v1718, 1
      %v1778 = vrot.slane %v1719, 1
      %v1779 = vsel %vm1751, %v1777, %v1778
      %v1780 = vrot.slane %v1720, 1
      %v1781 = vsel %vm1751, %v1778, %v1780
      %v1782 = vrot.slane %v1721, 1
      %v1783 = vrot.slane %v1722, 1
      %v1784 = vsel %vm1751, %v1782, %v1783
      %v1785 = vrot.slane %v1723, 1
      %v1786 = vsel %vm1751, %v1783, %v1785
      %v1787 = vrot.slane %v1724, 1
      %v1788 = vrot.slane %v1725, 1
      %v1789 = vsel %vm1751, %v1787, %v1788
      %v1790 = vrot.slane %v1726, 1
      %v1791 = vsel %vm1751, %v1788, %v1790
      %v1808 = vadd.f32 %v1105, %v1754
      %v1809 = vadd.f32 %v1106, %v1756
      %v1810 = vadd.f32 %v1107, %v1759
      %v1811 = vadd.f32 %v1108, %v1761
      %v1812 = vadd.f32 %v1109, %v1764
      %v1813 = vadd.f32 %v1110, %v1766
      %v1814 = vadd.f32 %v1111, %v1769
      %v1815 = vadd.f32 %v1112, %v1771
      %v1816 = vadd.f32 %v1113, %v1774
      %v1817 = vadd.f32 %v1114, %v1776
      %v1818 = vadd.f32 %v1115, %v1779
      %v1819 = vadd.f32 %v1116, %v1781
      %v1820 = vadd.f32 %v1117, %v1784
      %v1821 = vadd.f32 %v1118, %v1786
      %v1822 = vadd.f32 %v1119, %v1789
      %v1823 = vadd.f32 %v1120, %v1791
      %s1824 = scalar_lea.vmem %s1, 128
      %v1825 = vld [vmem:[%s1824] sm:$0xf]
      %v1826 = vld [vmem:[%s1824 + $0x4] sm:$0xf]
      %v1827 = vld [vmem:[%s1824 + $0x8] sm:$0xf]
      %v1828 = vld [vmem:[%s1824 + $0xc] sm:$0xf]
      %v1829 = vld [vmem:[%s1824 + $0x10] sm:$0xf]
      %v1830 = vld [vmem:[%s1824 + $0x14] sm:$0xf]
      %v1831 = vld [vmem:[%s1824 + $0x18] sm:$0xf]
      %v1832 = vld [vmem:[%s1824 + $0x1c] sm:$0xf]
      %v1833 = vld [vmem:[%s1824 + $0x20] sm:$0xf]
      %v1834 = vld [vmem:[%s1824 + $0x24] sm:$0xf]
      %v1835 = vld [vmem:[%s1824 + $0x28] sm:$0xf]
      %v1836 = vld [vmem:[%s1824 + $0x2c] sm:$0xf]
      %v1837 = vld [vmem:[%s1824 + $0x30] sm:$0xf]
      %v1838 = vld [vmem:[%s1824 + $0x34] sm:$0xf]
      %v1839 = vld [vmem:[%s1824 + $0x38] sm:$0xf]
      %v1840 = vld [vmem:[%s1824 + $0x3c] sm:$0xf]
      %s1841 = scalar_lea.vmem %s1, 320
      %v1842 = vld [vmem:[%s1841] sm:$0xf]
      %v1843 = vld [vmem:[%s1841 + $0x4] sm:$0xf]
      %v1844 = vld [vmem:[%s1841 + $0x8] sm:$0xf]
      %v1845 = vld [vmem:[%s1841 + $0xc] sm:$0xf]
      %v1846 = vld [vmem:[%s1841 + $0x10] sm:$0xf]
      %v1847 = vld [vmem:[%s1841 + $0x14] sm:$0xf]
      %v1848 = vld [vmem:[%s1841 + $0x18] sm:$0xf]
      %v1849 = vld [vmem:[%s1841 + $0x1c] sm:$0xf]
      %v1850 = vld [vmem:[%s1841 + $0x20] sm:$0xf]
      %v1851 = vld [vmem:[%s1841 + $0x24] sm:$0xf]
      %v1852 = vld [vmem:[%s1841 + $0x28] sm:$0xf]
      %v1853 = vld [vmem:[%s1841 + $0x2c] sm:$0xf]
      %v1854 = vld [vmem:[%s1841 + $0x30] sm:$0xf]
      %v1855 = vld [vmem:[%s1841 + $0x34] sm:$0xf]
      %v1856 = vld [vmem:[%s1841 + $0x38] sm:$0xf]
      %v1857 = vld [vmem:[%s1841 + $0x3c] sm:$0xf]
      %v1874 = vunpack.c.l.b16 %v1842
      %v1875 = vunpack.c.l.b16 %v1843
      %v1876 = vunpack.c.l.b16 %v1844
      %v1877 = vunpack.c.l.b16 %v1845
      %v1878 = vunpack.c.l.b16 %v1846
      %v1879 = vunpack.c.l.b16 %v1847
      %v1880 = vunpack.c.l.b16 %v1848
      %v1881 = vunpack.c.l.b16 %v1849
      %v1882 = vunpack.c.l.b16 %v1850
      %v1883 = vunpack.c.l.b16 %v1851
      %v1884 = vunpack.c.l.b16 %v1852
      %v1885 = vunpack.c.l.b16 %v1853
      %v1886 = vunpack.c.l.b16 %v1854
      %v1887 = vunpack.c.l.b16 %v1855
      %v1888 = vunpack.c.l.b16 %v1856
      %v1889 = vunpack.c.l.b16 %v1857
      %v1890 = vpack.c.b16 %v1875, %v1874
      %v1891 = vpack.c.b16 %v1877, %v1876
      %v1892 = vpack.c.b16 %v1879, %v1878
      %v1893 = vpack.c.b16 %v1881, %v1880
      %v1894 = vpack.c.b16 %v1883, %v1882
      %v1895 = vpack.c.b16 %v1885, %v1884
      %v1896 = vpack.c.b16 %v1887, %v1886
      %v1897 = vpack.c.b16 %v1889, %v1888
      %1906 = vmatprep.subr.bf16.mxu0 0
      %1907 = vmatpush1.bf16.msra.mxu0 %v1897
      %1908 = vmatprep.subr.bf16.mxu0 0
      %1909 = vmatpush1.bf16.msra.mxu0 %v1896
      %1910 = vmatprep.subr.bf16.mxu0 0
      %1911 = vmatpush1.bf16.msra.mxu0 %v1895
      %1912 = vmatprep.subr.bf16.mxu0 0
      %1913 = vmatpush1.bf16.msra.mxu0 %v1894
      %1914 = vmatprep.subr.bf16.mxu0 0
      %1915 = vmatpush1.bf16.msra.mxu0 %v1893
      %1916 = vmatprep.subr.bf16.mxu0 0
      %1917 = vmatpush1.bf16.msra.mxu0 %v1892
      %1918 = vmatprep.subr.bf16.mxu0 0
      %1919 = vmatpush1.bf16.msra.mxu0 %v1891
      %1920 = vmatprep.subr.bf16.mxu0 0
      %1921 = vmatpush1.bf16.msra.mxu0 %v1890
      %1922 = vmatprep.subr.bf16.mxu0 0
      %1923 = vmatpush2.bf16.msra.mxu0 0
      %1924 = vmatprep.subr.bf16.mxu0 0
      %1925 = vmatpush2.bf16.msra.mxu0 0
      %1926 = vmatprep.subr.bf16.mxu0 0
      %1927 = vmatpush2.bf16.msra.mxu0 0
      %1928 = vmatprep.subr.bf16.mxu0 0
      %1929 = vmatpush2.bf16.msra.mxu0 0
      %1930 = vmatprep.subr.bf16.mxu0 0
      %1931 = vmatpush2.bf16.msra.mxu0 0
      %1932 = vmatprep.subr.bf16.mxu0 0
      %1933 = vmatpush2.bf16.msra.mxu0 0
      %1934 = vmatprep.subr.bf16.mxu0 0
      %1935 = vmatpush2.bf16.msra.mxu0 0
      %1936 = vmatprep.subr.bf16.mxu0 0
      %1937 = vmatpush2.bf16.msra.mxu0 0
      %1938 = vmatprep.mubr.bf16.mxu0 0
      %1939 = vmatmul.mubr.bf16.gmra.mxu0 %v499
      %v1940 = vpop.f32.mrf.mxu0
      %v1941 = vadd.f32 0.0, %v1940
      %v1942 = vpop.f32.mrf.mxu0
      %v1943 = vpop.f32.mrf.mxu0
      %v1944 = vadd.f32 0.0, %v1943
      %v1945 = vpop.f32.mrf.mxu0
      %1946 = vmatprep.mubr.bf16.mxu0 0
      %1947 = vmatmul.mubr.bf16.gmra.mxu0 %v500
      %v1948 = vpop.f32.mrf.mxu0
      %v1949 = vadd.f32 0.0, %v1948
      %v1950 = vpop.f32.mrf.mxu0
      %v1951 = vpop.f32.mrf.mxu0
      %v1952 = vadd.f32 0.0, %v1951
      %v1953 = vpop.f32.mrf.mxu0
      %1954 = vmatprep.mubr.bf16.mxu0 0
      %1955 = vmatmul.mubr.bf16.gmra.mxu0 %v501
      %v1956 = vpop.f32.mrf.mxu0
      %v1957 = vadd.f32 0.0, %v1956
      %v1958 = vpop.f32.mrf.mxu0
      %v1959 = vpop.f32.mrf.mxu0
      %v1960 = vadd.f32 0.0, %v1959
      %v1961 = vpop.f32.mrf.mxu0
      %1962 = vmatprep.mubr.bf16.mxu0 0
      %1963 = vmatmul.mubr.bf16.gmra.mxu0 %v502
      %v1964 = vpop.f32.mrf.mxu0
      %v1965 = vadd.f32 0.0, %v1964
      %v1966 = vpop.f32.mrf.mxu0
      %v1967 = vpop.f32.mrf.mxu0
      %v1968 = vadd.f32 0.0, %v1967
      %v1969 = vpop.f32.mrf.mxu0
      %1970 = vmatprep.mubr.bf16.mxu0 0
      %1971 = vmatmul.mubr.bf16.gmra.mxu0 %v503
      %v1972 = vpop.f32.mrf.mxu0
      %v1973 = vadd.f32 0.0, %v1972
      %v1974 = vpop.f32.mrf.mxu0
      %v1975 = vpop.f32.mrf.mxu0
      %v1976 = vadd.f32 0.0, %v1975
      %v1977 = vpop.f32.mrf.mxu0
      %1978 = vmatprep.mubr.bf16.mxu0 0
      %1979 = vmatmul.mubr.bf16.gmra.mxu0 %v504
      %v1980 = vpop.f32.mrf.mxu0
      %v1981 = vadd.f32 0.0, %v1980
      %v1982 = vpop.f32.mrf.mxu0
      %v1983 = vpop.f32.mrf.mxu0
      %v1984 = vadd.f32 0.0, %v1983
      %v1985 = vpop.f32.mrf.mxu0
      %1986 = vmatprep.mubr.bf16.mxu0 0
      %1987 = vmatmul.mubr.bf16.gmra.mxu0 %v505
      %v1988 = vpop.f32.mrf.mxu0
      %v1989 = vadd.f32 0.0, %v1988
      %v1990 = vpop.f32.mrf.mxu0
      %v1991 = vpop.f32.mrf.mxu0
      %v1992 = vadd.f32 0.0, %v1991
      %v1993 = vpop.f32.mrf.mxu0
      %1994 = vmatprep.mubr.bf16.mxu0 0
      %1995 = vmatmul.mubr.bf16.gmra.mxu0 %v506
      %v1996 = vpop.f32.mrf.mxu0
      %v1997 = vadd.f32 0.0, %v1996
      %v1998 = vpop.f32.mrf.mxu0
      %v1999 = vpop.f32.mrf.mxu0
      %v2000 = vadd.f32 0.0, %v1999
      %v2001 = vpop.f32.mrf.mxu0
      %2002 = vmatprep.mubr.bf16.mxu0 0
      %2003 = vmatmul.mubr.bf16.gmra.mxu0 %v507
      %v2004 = vpop.f32.mrf.mxu0
      %v2005 = vadd.f32 0.0, %v2004
      %v2006 = vpop.f32.mrf.mxu0
      %v2007 = vpop.f32.mrf.mxu0
      %v2008 = vadd.f32 0.0, %v2007
      %v2009 = vpop.f32.mrf.mxu0
      %2010 = vmatprep.mubr.bf16.mxu0 0
      %2011 = vmatmul.mubr.bf16.gmra.mxu0 %v508
      %v2012 = vpop.f32.mrf.mxu0
      %v2013 = vadd.f32 0.0, %v2012
      %v2014 = vpop.f32.mrf.mxu0
      %v2015 = vpop.f32.mrf.mxu0
      %v2016 = vadd.f32 0.0, %v2015
      %v2017 = vpop.f32.mrf.mxu0
      %2018 = vmatprep.mubr.bf16.mxu0 0
      %2019 = vmatmul.mubr.bf16.gmra.mxu0 %v509
      %v2020 = vpop.f32.mrf.mxu0
      %v2021 = vadd.f32 0.0, %v2020
      %v2022 = vpop.f32.mrf.mxu0
      %v2023 = vpop.f32.mrf.mxu0
      %v2024 = vadd.f32 0.0, %v2023
      %v2025 = vpop.f32.mrf.mxu0
      %2026 = vmatprep.mubr.bf16.mxu0 0
      %2027 = vmatmul.mubr.bf16.gmra.mxu0 %v510
      %v2028 = vpop.f32.mrf.mxu0
      %v2029 = vadd.f32 0.0, %v2028
      %v2030 = vpop.f32.mrf.mxu0
      %v2031 = vpop.f32.mrf.mxu0
      %v2032 = vadd.f32 0.0, %v2031
      %v2033 = vpop.f32.mrf.mxu0
      %2034 = vdwg.mxu0
      %v2051 = vunpack.c.l.b16 %v1825
      %v2052 = vunpack.c.l.b16 %v1826
      %v2053 = vunpack.c.l.b16 %v1827
      %v2054 = vunpack.c.l.b16 %v1828
      %v2055 = vunpack.c.l.b16 %v1829
      %v2056 = vunpack.c.l.b16 %v1830
      %v2057 = vunpack.c.l.b16 %v1831
      %v2058 = vunpack.c.l.b16 %v1832
      %v2059 = vunpack.c.l.b16 %v1833
      %v2060 = vunpack.c.l.b16 %v1834
      %v2061 = vunpack.c.l.b16 %v1835
      %v2062 = vunpack.c.l.b16 %v1836
      %v2063 = vunpack.c.l.b16 %v1837
      %v2064 = vunpack.c.l.b16 %v1838
      %v2065 = vunpack.c.l.b16 %v1839
      %v2066 = vunpack.c.l.b16 %v1840
      %v2067 = vpack.c.b16 %v2052, %v2051
      %v2068 = vpack.c.b16 %v2054, %v2053
      %v2069 = vpack.c.b16 %v2056, %v2055
      %v2070 = vpack.c.b16 %v2058, %v2057
      %v2071 = vpack.c.b16 %v2060, %v2059
      %v2072 = vpack.c.b16 %v2062, %v2061
      %v2073 = vpack.c.b16 %v2064, %v2063
      %v2074 = vpack.c.b16 %v2066, %v2065
      %2083 = vmatprep.subr.bf16.mxu0 0
      %2084 = vmatpush1.bf16.msra.mxu0 %v2074
      %2085 = vmatprep.subr.bf16.mxu0 0
      %2086 = vmatpush1.bf16.msra.mxu0 %v2073
      %2087 = vmatprep.subr.bf16.mxu0 0
      %2088 = vmatpush1.bf16.msra.mxu0 %v2072
      %2089 = vmatprep.subr.bf16.mxu0 0
      %2090 = vmatpush1.bf16.msra.mxu0 %v2071
      %2091 = vmatprep.subr.bf16.mxu0 0
      %2092 = vmatpush1.bf16.msra.mxu0 %v2070
      %2093 = vmatprep.subr.bf16.mxu0 0
      %2094 = vmatpush1.bf16.msra.mxu0 %v2069
      %2095 = vmatprep.subr.bf16.mxu0 0
      %2096 = vmatpush1.bf16.msra.mxu0 %v2068
      %2097 = vmatprep.subr.bf16.mxu0 0
      %2098 = vmatpush1.bf16.msra.mxu0 %v2067
      %2099 = vmatprep.subr.bf16.mxu0 0
      %2100 = vmatpush2.bf16.msra.mxu0 0
      %2101 = vmatprep.subr.bf16.mxu0 0
      %2102 = vmatpush2.bf16.msra.mxu0 0
      %2103 = vmatprep.subr.bf16.mxu0 0
      %2104 = vmatpush2.bf16.msra.mxu0 0
      %2105 = vmatprep.subr.bf16.mxu0 0
      %2106 = vmatpush2.bf16.msra.mxu0 0
      %2107 = vmatprep.subr.bf16.mxu0 0
      %2108 = vmatpush2.bf16.msra.mxu0 0
      %2109 = vmatprep.subr.bf16.mxu0 0
      %2110 = vmatpush2.bf16.msra.mxu0 0
      %2111 = vmatprep.subr.bf16.mxu0 0
      %2112 = vmatpush2.bf16.msra.mxu0 0
      %2113 = vmatprep.subr.bf16.mxu0 0
      %2114 = vmatpush2.bf16.msra.mxu0 0
      %2115 = vmatprep.mubr.bf16.mxu0 0
      %2116 = vmatmul.mubr.bf16.gmra.mxu0 %v698
      %v2117 = vpop.f32.mrf.mxu0
      %v2118 = vadd.f32 %v1941, %v2117
      %v2119 = vpop.f32.mrf.mxu0
      %v2120 = vpop.f32.mrf.mxu0
      %v2121 = vadd.f32 %v1944, %v2120
      %v2122 = vpop.f32.mrf.mxu0
      %2123 = vmatprep.mubr.bf16.mxu0 0
      %2124 = vmatmul.mubr.bf16.gmra.mxu0 %v699
      %v2125 = vpop.f32.mrf.mxu0
      %v2126 = vadd.f32 %v1949, %v2125
      %v2127 = vpop.f32.mrf.mxu0
      %v2128 = vpop.f32.mrf.mxu0
      %v2129 = vadd.f32 %v1952, %v2128
      %v2130 = vpop.f32.mrf.mxu0
      %2131 = vmatprep.mubr.bf16.mxu0 0
      %2132 = vmatmul.mubr.bf16.gmra.mxu0 %v700
      %v2133 = vpop.f32.mrf.mxu0
      %v2134 = vadd.f32 %v1957, %v2133
      %v2135 = vpop.f32.mrf.mxu0
      %v2136 = vpop.f32.mrf.mxu0
      %v2137 = vadd.f32 %v1960, %v2136
      %v2138 = vpop.f32.mrf.mxu0
      %2139 = vmatprep.mubr.bf16.mxu0 0
      %2140 = vmatmul.mubr.bf16.gmra.mxu0 %v701
      %v2141 = vpop.f32.mrf.mxu0
      %v2142 = vadd.f32 %v1965, %v2141
      %v2143 = vpop.f32.mrf.mxu0
      %v2144 = vpop.f32.mrf.mxu0
      %v2145 = vadd.f32 %v1968, %v2144
      %v2146 = vpop.f32.mrf.mxu0
      %2147 = vmatprep.mubr.bf16.mxu0 0
      %2148 = vmatmul.mubr.bf16.gmra.mxu0 %v702
      %v2149 = vpop.f32.mrf.mxu0
      %v2150 = vadd.f32 %v1973, %v2149
      %v2151 = vpop.f32.mrf.mxu0
      %v2152 = vpop.f32.mrf.mxu0
      %v2153 = vadd.f32 %v1976, %v2152
      %v2154 = vpop.f32.mrf.mxu0
      %2155 = vmatprep.mubr.bf16.mxu0 0
      %2156 = vmatmul.mubr.bf16.gmra.mxu0 %v703
      %v2157 = vpop.f32.mrf.mxu0
      %v2158 = vadd.f32 %v1981, %v2157
      %v2159 = vpop.f32.mrf.mxu0
      %v2160 = vpop.f32.mrf.mxu0
      %v2161 = vadd.f32 %v1984, %v2160
      %v2162 = vpop.f32.mrf.mxu0
      %2163 = vmatprep.mubr.bf16.mxu0 0
      %2164 = vmatmul.mubr.bf16.gmra.mxu0 %v704
      %v2165 = vpop.f32.mrf.mxu0
      %v2166 = vadd.f32 %v1989, %v2165
      %v2167 = vpop.f32.mrf.mxu0
      %v2168 = vpop.f32.mrf.mxu0
      %v2169 = vadd.f32 %v1992, %v2168
      %v2170 = vpop.f32.mrf.mxu0
      %2171 = vmatprep.mubr.bf16.mxu0 0
      %2172 = vmatmul.mubr.bf16.gmra.mxu0 %v705
      %v2173 = vpop.f32.mrf.mxu0
      %v2174 = vadd.f32 %v1997, %v2173
      %v2175 = vpop.f32.mrf.mxu0
      %v2176 = vpop.f32.mrf.mxu0
      %v2177 = vadd.f32 %v2000, %v2176
      %v2178 = vpop.f32.mrf.mxu0
      %2179 = vmatprep.mubr.bf16.mxu0 0
      %2180 = vmatmul.mubr.bf16.gmra.mxu0 %v706
      %v2181 = vpop.f32.mrf.mxu0
      %v2182 = vadd.f32 %v2005, %v2181
      %v2183 = vpop.f32.mrf.mxu0
      %v2184 = vpop.f32.mrf.mxu0
      %v2185 = vadd.f32 %v2008, %v2184
      %v2186 = vpop.f32.mrf.mxu0
      %2187 = vmatprep.mubr.bf16.mxu0 0
      %2188 = vmatmul.mubr.bf16.gmra.mxu0 %v707
      %v2189 = vpop.f32.mrf.mxu0
      %v2190 = vadd.f32 %v2013, %v2189
      %v2191 = vpop.f32.mrf.mxu0
      %v2192 = vpop.f32.mrf.mxu0
      %v2193 = vadd.f32 %v2016, %v2192
      %v2194 = vpop.f32.mrf.mxu0
      %2195 = vmatprep.mubr.bf16.mxu0 0
      %2196 = vmatmul.mubr.bf16.gmra.mxu0 %v708
      %v2197 = vpop.f32.mrf.mxu0
      %v2198 = vadd.f32 %v2021, %v2197
      %v2199 = vpop.f32.mrf.mxu0
      %v2200 = vpop.f32.mrf.mxu0
      %v2201 = vadd.f32 %v2024, %v2200
      %v2202 = vpop.f32.mrf.mxu0
      %2203 = vmatprep.mubr.bf16.mxu0 0
      %2204 = vmatmul.mubr.bf16.gmra.mxu0 %v709
      %v2205 = vpop.f32.mrf.mxu0
      %v2206 = vadd.f32 %v2029, %v2205
      %v2207 = vpop.f32.mrf.mxu0
      %v2208 = vpop.f32.mrf.mxu0
      %v2209 = vadd.f32 %v2032, %v2208
      %v2210 = vpop.f32.mrf.mxu0
      %2211 = vdwg.mxu0
      %s2212 = scalar_lea.vmem %s1, 512
      %v2213 = vld [vmem:[%s2212] sm:$0xf]
      %v2214 = vld [vmem:[%s2212 + $0x4] sm:$0xf]
      %v2215 = vld [vmem:[%s2212 + $0x8] sm:$0xf]
      %v2216 = vld [vmem:[%s2212 + $0xc] sm:$0xf]
      %v2217 = vld [vmem:[%s2212 + $0x10] sm:$0xf]
      %v2218 = vld [vmem:[%s2212 + $0x14] sm:$0xf]
      %v2219 = vld [vmem:[%s2212 + $0x18] sm:$0xf]
      %v2220 = vld [vmem:[%s2212 + $0x1c] sm:$0xf]
      %v2221 = vld [vmem:[%s2212 + $0x20] sm:$0xf]
      %v2222 = vld [vmem:[%s2212 + $0x24] sm:$0xf]
      %v2223 = vld [vmem:[%s2212 + $0x28] sm:$0xf]
      %v2224 = vld [vmem:[%s2212 + $0x2c] sm:$0xf]
      %v2225 = vld [vmem:[%s2212 + $0x30] sm:$0xf]
      %v2226 = vld [vmem:[%s2212 + $0x34] sm:$0xf]
      %v2227 = vld [vmem:[%s2212 + $0x38] sm:$0xf]
      %v2228 = vld [vmem:[%s2212 + $0x3c] sm:$0xf]
      %v2245 = vunpack.c.l.b16 %v2213
      %v2246 = vunpack.c.l.b16 %v2214
      %v2247 = vunpack.c.l.b16 %v2215
      %v2248 = vunpack.c.l.b16 %v2216
      %v2249 = vunpack.c.l.b16 %v2217
      %v2250 = vunpack.c.l.b16 %v2218
      %v2251 = vunpack.c.l.b16 %v2219
      %v2252 = vunpack.c.l.b16 %v2220
      %v2253 = vunpack.c.l.b16 %v2221
      %v2254 = vunpack.c.l.b16 %v2222
      %v2255 = vunpack.c.l.b16 %v2223
      %v2256 = vunpack.c.l.b16 %v2224
      %v2257 = vunpack.c.l.b16 %v2225
      %v2258 = vunpack.c.l.b16 %v2226
      %v2259 = vunpack.c.l.b16 %v2227
      %v2260 = vunpack.c.l.b16 %v2228
      %v2261 = vpack.c.b16 %v2246, %v2245
      %v2262 = vpack.c.b16 %v2248, %v2247
      %v2263 = vpack.c.b16 %v2250, %v2249
      %v2264 = vpack.c.b16 %v2252, %v2251
      %v2265 = vpack.c.b16 %v2254, %v2253
      %v2266 = vpack.c.b16 %v2256, %v2255
      %v2267 = vpack.c.b16 %v2258, %v2257
      %v2268 = vpack.c.b16 %v2260, %v2259
      %2277 = vmatprep.subr.bf16.mxu0 0
      %2278 = vmatpush1.bf16.msra.mxu0 %v2268
      %2279 = vmatprep.subr.bf16.mxu0 0
      %2280 = vmatpush1.bf16.msra.mxu0 %v2267
      %2281 = vmatprep.subr.bf16.mxu0 0
      %2282 = vmatpush1.bf16.msra.mxu0 %v2266
      %2283 = vmatprep.subr.bf16.mxu0 0
      %2284 = vmatpush1.bf16.msra.mxu0 %v2265
      %2285 = vmatprep.subr.bf16.mxu0 0
      %2286 = vmatpush1.bf16.msra.mxu0 %v2264
      %2287 = vmatprep.subr.bf16.mxu0 0
      %2288 = vmatpush1.bf16.msra.mxu0 %v2263
      %2289 = vmatprep.subr.bf16.mxu0 0
      %2290 = vmatpush1.bf16.msra.mxu0 %v2262
      %2291 = vmatprep.subr.bf16.mxu0 0
      %2292 = vmatpush1.bf16.msra.mxu0 %v2261
      %2293 = vmatprep.subr.bf16.mxu0 0
      %2294 = vmatpush2.bf16.msra.mxu0 0
      %2295 = vmatprep.subr.bf16.mxu0 0
      %2296 = vmatpush2.bf16.msra.mxu0 0
      %2297 = vmatprep.subr.bf16.mxu0 0
      %2298 = vmatpush2.bf16.msra.mxu0 0
      %2299 = vmatprep.subr.bf16.mxu0 0
      %2300 = vmatpush2.bf16.msra.mxu0 0
      %2301 = vmatprep.subr.bf16.mxu0 0
      %2302 = vmatpush2.bf16.msra.mxu0 0
      %2303 = vmatprep.subr.bf16.mxu0 0
      %2304 = vmatpush2.bf16.msra.mxu0 0
      %2305 = vmatprep.subr.bf16.mxu0 0
      %2306 = vmatpush2.bf16.msra.mxu0 0
      %2307 = vmatprep.subr.bf16.mxu0 0
      %2308 = vmatpush2.bf16.msra.mxu0 0
      %2309 = vmatprep.mubr.bf16.mxu0 0
      %2310 = vmatmul.mubr.bf16.gmra.mxu0 %v701
      %v2311 = vpop.f32.mrf.mxu0
      %v2312 = vadd.f32 0.0, %v2311
      %v2313 = vpop.f32.mrf.mxu0
      %v2314 = vpop.f32.mrf.mxu0
      %v2315 = vadd.f32 0.0, %v2314
      %v2316 = vpop.f32.mrf.mxu0
      %2317 = vmatprep.mubr.bf16.mxu0 0
      %2318 = vmatmul.mubr.bf16.gmra.mxu0 %v702
      %v2319 = vpop.f32.mrf.mxu0
      %v2320 = vadd.f32 0.0, %v2319
      %v2321 = vpop.f32.mrf.mxu0
      %v2322 = vpop.f32.mrf.mxu0
      %v2323 = vadd.f32 0.0, %v2322
      %v2324 = vpop.f32.mrf.mxu0
      %2325 = vmatprep.mubr.bf16.mxu0 0
      %2326 = vmatmul.mubr.bf16.gmra.mxu0 %v703
      %v2327 = vpop.f32.mrf.mxu0
      %v2328 = vadd.f32 0.0, %v2327
      %v2329 = vpop.f32.mrf.mxu0
      %v2330 = vpop.f32.mrf.mxu0
      %v2331 = vadd.f32 0.0, %v2330
      %v2332 = vpop.f32.mrf.mxu0
      %2333 = vmatprep.mubr.bf16.mxu0 0
      %2334 = vmatmul.mubr.bf16.gmra.mxu0 %v704
      %v2335 = vpop.f32.mrf.mxu0
      %v2336 = vadd.f32 0.0, %v2335
      %v2337 = vpop.f32.mrf.mxu0
      %v2338 = vpop.f32.mrf.mxu0
      %v2339 = vadd.f32 0.0, %v2338
      %v2340 = vpop.f32.mrf.mxu0
      %2341 = vmatprep.mubr.bf16.mxu0 0
      %2342 = vmatmul.mubr.bf16.gmra.mxu0 %v705
      %v2343 = vpop.f32.mrf.mxu0
      %v2344 = vadd.f32 0.0, %v2343
      %v2345 = vpop.f32.mrf.mxu0
      %v2346 = vpop.f32.mrf.mxu0
      %v2347 = vadd.f32 0.0, %v2346
      %v2348 = vpop.f32.mrf.mxu0
      %2349 = vmatprep.mubr.bf16.mxu0 0
      %2350 = vmatmul.mubr.bf16.gmra.mxu0 %v706
      %v2351 = vpop.f32.mrf.mxu0
      %v2352 = vadd.f32 0.0, %v2351
      %v2353 = vpop.f32.mrf.mxu0
      %v2354 = vpop.f32.mrf.mxu0
      %v2355 = vadd.f32 0.0, %v2354
      %v2356 = vpop.f32.mrf.mxu0
      %2357 = vmatprep.mubr.bf16.mxu0 0
      %2358 = vmatmul.mubr.bf16.gmra.mxu0 %v707
      %v2359 = vpop.f32.mrf.mxu0
      %v2360 = vadd.f32 0.0, %v2359
      %v2361 = vpop.f32.mrf.mxu0
      %v2362 = vpop.f32.mrf.mxu0
      %v2363 = vadd.f32 0.0, %v2362
      %v2364 = vpop.f32.mrf.mxu0
      %2365 = vmatprep.mubr.bf16.mxu0 0
      %2366 = vmatmul.mubr.bf16.gmra.mxu0 %v708
      %v2367 = vpop.f32.mrf.mxu0
      %v2368 = vadd.f32 0.0, %v2367
      %v2369 = vpop.f32.mrf.mxu0
      %v2370 = vpop.f32.mrf.mxu0
      %v2371 = vadd.f32 0.0, %v2370
      %v2372 = vpop.f32.mrf.mxu0
      %2373 = vmatprep.mubr.bf16.mxu0 0
      %2374 = vmatmul.mubr.bf16.gmra.mxu0 %v709
      %v2375 = vpop.f32.mrf.mxu0
      %v2376 = vadd.f32 0.0, %v2375
      %v2377 = vpop.f32.mrf.mxu0
      %v2378 = vpop.f32.mrf.mxu0
      %v2379 = vadd.f32 0.0, %v2378
      %v2380 = vpop.f32.mrf.mxu0
      %2381 = vmatprep.mubr.bf16.mxu0 0
      %2382 = vmatmul.mubr.bf16.gmra.mxu0 %v914
      %v2383 = vpop.f32.mrf.mxu0
      %v2384 = vadd.f32 0.0, %v2383
      %v2385 = vpop.f32.mrf.mxu0
      %v2386 = vpop.f32.mrf.mxu0
      %v2387 = vadd.f32 0.0, %v2386
      %v2388 = vpop.f32.mrf.mxu0
      %2389 = vmatprep.mubr.bf16.mxu0 0
      %2390 = vmatmul.mubr.bf16.gmra.mxu0 %v915
      %v2391 = vpop.f32.mrf.mxu0
      %v2392 = vadd.f32 0.0, %v2391
      %v2393 = vpop.f32.mrf.mxu0
      %v2394 = vpop.f32.mrf.mxu0
      %v2395 = vadd.f32 0.0, %v2394
      %v2396 = vpop.f32.mrf.mxu0
      %2397 = vmatprep.mubr.bf16.mxu0 0
      %2398 = vmatmul.mubr.bf16.gmra.mxu0 %v916
      %v2399 = vpop.f32.mrf.mxu0
      %v2400 = vadd.f32 0.0, %v2399
      %v2401 = vpop.f32.mrf.mxu0
      %v2402 = vpop.f32.mrf.mxu0
      %v2403 = vadd.f32 0.0, %v2402
      %v2404 = vpop.f32.mrf.mxu0
      %2405 = vdwg.mxu0
      %v2406 = vadd.f32 %v2118, %v2312
      %v2407 = vadd.f32 %v2121, %v2315
      %v2408 = vadd.f32 %v2126, %v2320
      %v2409 = vadd.f32 %v2129, %v2323
      %v2410 = vadd.f32 %v2134, %v2328
      %v2411 = vadd.f32 %v2137, %v2331
      %v2412 = vadd.f32 %v2142, %v2336
      %v2413 = vadd.f32 %v2145, %v2339
      %v2414 = vadd.f32 %v2150, %v2344
      %v2415 = vadd.f32 %v2153, %v2347
      %v2416 = vadd.f32 %v2158, %v2352
      %v2417 = vadd.f32 %v2161, %v2355
      %v2418 = vadd.f32 %v2166, %v2360
      %v2419 = vadd.f32 %v2169, %v2363
      %v2420 = vadd.f32 %v2174, %v2368
      %v2421 = vadd.f32 %v2177, %v2371
      %v2422 = vadd.f32 %v2182, %v2376
      %v2423 = vadd.f32 %v2185, %v2379
      %v2424 = vadd.f32 %v2190, %v2384
      %v2425 = vadd.f32 %v2193, %v2387
      %v2426 = vadd.f32 %v2198, %v2392
      %v2427 = vadd.f32 %v2201, %v2395
      %v2428 = vadd.f32 %v2206, %v2400
      %v2429 = vadd.f32 %v2209, %v2403
      %vm2454 = vcmask 1045504
      %v2455 = vrot.slane %v2406, 2
      %v2456 = vrot.slane %v2407, 2
      %v2457 = vsel %vm2454, %v2455, %v2456
      %v2458 = vrot.slane %v2408, 2
      %v2459 = vsel %vm2454, %v2456, %v2458
      %v2460 = vrot.slane %v2409, 2
      %v2461 = vrot.slane %v2410, 2
      %v2462 = vsel %vm2454, %v2460, %v2461
      %v2463 = vrot.slane %v2411, 2
      %v2464 = vsel %vm2454, %v2461, %v2463
      %v2465 = vrot.slane %v2412, 2
      %v2466 = vrot.slane %v2413, 2
      %v2467 = vsel %vm2454, %v2465, %v2466
      %v2468 = vrot.slane %v2414, 2
      %v2469 = vsel %vm2454, %v2466, %v2468
      %v2470 = vrot.slane %v2415, 2
      %v2471 = vrot.slane %v2416, 2
      %v2472 = vsel %vm2454, %v2470, %v2471
      %v2473 = vrot.slane %v2417, 2
      %v2474 = vsel %vm2454, %v2471, %v2473
      %v2475 = vrot.slane %v2418, 2
      %v2476 = vrot.slane %v2419, 2
      %v2477 = vsel %vm2454, %v2475, %v2476
      %v2478 = vrot.slane %v2420, 2
      %v2479 = vsel %vm2454, %v2476, %v2478
      %v2480 = vrot.slane %v2421, 2
      %v2481 = vrot.slane %v2422, 2
      %v2482 = vsel %vm2454, %v2480, %v2481
      %v2483 = vrot.slane %v2423, 2
      %v2484 = vsel %vm2454, %v2481, %v2483
      %v2485 = vrot.slane %v2424, 2
      %v2486 = vrot.slane %v2425, 2
      %v2487 = vsel %vm2454, %v2485, %v2486
      %v2488 = vrot.slane %v2426, 2
      %v2489 = vsel %vm2454, %v2486, %v2488
      %v2490 = vrot.slane %v2427, 2
      %v2491 = vrot.slane %v2428, 2
      %v2492 = vsel %vm2454, %v2490, %v2491
      %v2493 = vrot.slane %v2429, 2
      %v2494 = vsel %vm2454, %v2491, %v2493
      %v2511 = vadd.f32 %v1808, %v2457
      %v2512 = vadd.f32 %v1809, %v2459
      %v2513 = vadd.f32 %v1810, %v2462
      %v2514 = vadd.f32 %v1811, %v2464
      %v2515 = vadd.f32 %v1812, %v2467
      %v2516 = vadd.f32 %v1813, %v2469
      %v2517 = vadd.f32 %v1814, %v2472
      %v2518 = vadd.f32 %v1815, %v2474
      %v2519 = vadd.f32 %v1816, %v2477
      %v2520 = vadd.f32 %v1817, %v2479
      %v2521 = vadd.f32 %v1818, %v2482
      %v2522 = vadd.f32 %v1819, %v2484
      %v2523 = vadd.f32 %v1820, %v2487
      %v2524 = vadd.f32 %v1821, %v2489
      %v2525 = vadd.f32 %v1822, %v2492
      %v2526 = vadd.f32 %v1823, %v2494
      %v2527 = vld [vmem:[%s2] sm:$0x1]
      %v2529 = vlaneseq
      %v2530 = vshrl.u32 %v2529, 7
      %v2531 = vsub.s32 0, %v2530
      %v2532 = vrot.slane %v2527, %v2531
      %v2534 = vadd.f32 %v2511, %v2532
      %v2535 = vadd.f32 %v2512, %v2532
      %v2536 = vadd.f32 %v2513, %v2532
      %v2537 = vadd.f32 %v2514, %v2532
      %v2538 = vadd.f32 %v2515, %v2532
      %v2539 = vadd.f32 %v2516, %v2532
      %v2540 = vadd.f32 %v2517, %v2532
      %v2541 = vadd.f32 %v2518, %v2532
      %v2542 = vadd.f32 %v2519, %v2532
      %v2543 = vadd.f32 %v2520, %v2532
      %v2544 = vadd.f32 %v2521, %v2532
      %v2545 = vadd.f32 %v2522, %v2532
      %v2546 = vadd.f32 %v2523, %v2532
      %v2547 = vadd.f32 %v2524, %v2532
      %v2548 = vadd.f32 %v2525, %v2532
      %v2549 = vadd.f32 %v2526, %v2532
      %v2550 = vmax.f32 %v2534, 0.0
      %v2551 = vmax.f32 %v2535, 0.0
      %v2552 = vmax.f32 %v2536, 0.0
      %v2553 = vmax.f32 %v2537, 0.0
      %v2554 = vmax.f32 %v2538, 0.0
      %v2555 = vmax.f32 %v2539, 0.0
      %v2556 = vmax.f32 %v2540, 0.0
      %v2557 = vmax.f32 %v2541, 0.0
      %v2558 = vmax.f32 %v2542, 0.0
      %v2559 = vmax.f32 %v2543, 0.0
      %v2560 = vmax.f32 %v2544, 0.0
      %v2561 = vmax.f32 %v2545, 0.0
      %v2562 = vmax.f32 %v2546, 0.0
      %v2563 = vmax.f32 %v2547, 0.0
      %v2564 = vmax.f32 %v2548, 0.0
      %v2565 = vmax.f32 %v2549, 0.0
      %2566 = vst [vmem:[%s188] sm:$0xff] %v2550
      %2567 = vst [vmem:[%s188 + $0x8] sm:$0xff] %v2551
      %2568 = vst [vmem:[%s188 + $0x10] sm:$0xff] %v2552
      %2569 = vst [vmem:[%s188 + $0x18] sm:$0xff] %v2553
      %2570 = vst [vmem:[%s188 + $0x20] sm:$0xff] %v2554
      %2571 = vst [vmem:[%s188 + $0x28] sm:$0xff] %v2555
      %2572 = vst [vmem:[%s188 + $0x30] sm:$0xff] %v2556
      %2573 = vst [vmem:[%s188 + $0x38] sm:$0xff] %v2557
      %2574 = vst [vmem:[%s188 + $0x40] sm:$0xff] %v2558
      %2575 = vst [vmem:[%s188 + $0x48] sm:$0xff] %v2559
      %2576 = vst [vmem:[%s188 + $0x50] sm:$0xff] %v2560
      %2577 = vst [vmem:[%s188 + $0x58] sm:$0xff] %v2561
      %2578 = vst [vmem:[%s188 + $0x60] sm:$0xff] %v2562
      %2579 = vst [vmem:[%s188 + $0x68] sm:$0xff] %v2563
      %2580 = vst [vmem:[%s188 + $0x70] sm:$0xff] %v2564
      %2581 = vst [vmem:[%s188 + $0x78] sm:$0xff] %v2565
      %v2582 = vadd.f32 %v2550, %v2551
      %v2583 = vadd.f32 %v2582, %v2552
      %v2584 = vadd.f32 %v2583, %v2553
      %v2585 = vadd.f32 %v2584, %v2554
      %v2586 = vadd.f32 %v2585, %v2555
      %v2587 = vadd.f32 %v2586, %v2556
      %v2588 = vadd.f32 %v2587, %v2557
      %v2589 = vadd.f32 %v2588, %v2558
      %v2590 = vadd.f32 %v2589, %v2559
      %v2591 = vadd.f32 %v2590, %v2560
      %v2592 = vadd.f32 %v2591, %v2561
      %v2593 = vadd.f32 %v2592, %v2562
      %v2594 = vadd.f32 %v2593, %v2563
      %v2595 = vadd.f32 %v2594, %v2564
      %v2596 = vadd.f32 %v2595, %v2565
      %v2597 = vrot.slane %v2596, 4
      %v2598 = vadd.f32 %v2596, %v2597
      %v2599 = vrot.slane %v2598, 2
      %v2600 = vadd.f32 %v2598, %v2599
      %v2601 = vrot.slane %v2600, 1
      %v2602 = vadd.f32 %v2600, %v2601
      %v2603 = vmul.f32 %v2550, %v2550
      %v2604 = vmul.f32 %v2551, %v2551
      %v2605 = vmul.f32 %v2552, %v2552
      %v2606 = vmul.f32 %v2553, %v2553
      %v2607 = vmul.f32 %v2554, %v2554
      %v2608 = vmul.f32 %v2555, %v2555
      %v2609 = vmul.f32 %v2556, %v2556
      %v2610 = vmul.f32 %v2557, %v2557
      %v2611 = vmul.f32 %v2558, %v2558
      %v2612 = vmul.f32 %v2559, %v2559
      %v2613 = vmul.f32 %v2560, %v2560
      %v2614 = vmul.f32 %v2561, %v2561
      %v2615 = vmul.f32 %v2562, %v2562
      %v2616 = vmul.f32 %v2563, %v2563
      %v2617 = vmul.f32 %v2564, %v2564
      %v2618 = vmul.f32 %v2565, %v2565
      %v2619 = vadd.f32 %v2603, %v2604
      %v2620 = vadd.f32 %v2619, %v2605
      %v2621 = vadd.f32 %v2620, %v2606
      %v2622 = vadd.f32 %v2621, %v2607
      %v2623 = vadd.f32 %v2622, %v2608
      %v2624 = vadd.f32 %v2623, %v2609
      %v2625 = vadd.f32 %v2624, %v2610
      %v2626 = vadd.f32 %v2625, %v2611
      %v2627 = vadd.f32 %v2626, %v2612
      %v2628 = vadd.f32 %v2627, %v2613
      %v2629 = vadd.f32 %v2628, %v2614
      %v2630 = vadd.f32 %v2629, %v2615
      %v2631 = vadd.f32 %v2630, %v2616
      %v2632 = vadd.f32 %v2631, %v2617
      %v2633 = vadd.f32 %v2632, %v2618
      %v2634 = vrot.slane %v2633, 4
      %v2635 = vadd.f32 %v2633, %v2634
      %v2636 = vrot.slane %v2635, 2
      %v2637 = vadd.f32 %v2635, %v2636
      %v2638 = vrot.slane %v2637, 1
      %v2639 = vadd.f32 %v2637, %v2638
      %vm2640 = vcmask 1040384
      %v2641 = vsel %vm2640, %v2602, %v2639
      %vm2642 = vcmask 1041408
      %v2643 = vsel %vm2642, %v2641, 0.0
      %2644 = vst [vmem:[%s197] sm:$0xff] %v2643
      %s2645 = smul.u32 8, %s21
      %p2646 = scmp.lt.s32.totalorder %s20, 1
      %s2647 = scalar_select %p2646, %s20, 1
      %p2648 = scmp.lt.s32.totalorder %s2645, 15
      %s2649 = scalar_select %p2648, %s2645, 15
      %s2650 = smul.addr %s2649, 2
      %s2651 = smul.addr %s2647, 32
      %s2652 = sadd.s32 %s2650, %s2651
      %s2653 = smul.addr %s2652, 8
      %s2654 = scalar_lea.vmem %s3, %s2653
      %p2655 = scmp.lt.s32.totalorder %s20, 1
      %s2656 = scalar_select %p2655, %s20, 1
      %p2657 = scmp.lt.s32.totalorder %s21, 1
      %s2658 = scalar_select %p2657, %s21, 1
      %s2659 = smul.addr %s2656, 2
      %s2660 = sadd.s32 %s2658, %s2659
      %s2661 = smul.addr %s2660, 8
      %s2662 = scalar_lea.vmem %s4, %s2661
      // Predicated region
      $region105: #{unet_up_block_forward.5} parent=27 // pred_check
        %p2663 = pneg %p90
      $region106: #{unet_up_block_forward.5} parent=27 // pred_check_branch
        %2665 = sbr.rel (%p2663) target = $region108
      $region107: #{unet_up_block_forward.5} parent=27 // pred_region
        %s2666 = smul.u32 8, %s21
      $region108: #{unet_up_block_forward.5} parent=27 // pred_fallthru
        _
      // Predicated region
      $region109: #{unet_up_block_forward.5} parent=27 // pred_check
        %p2667 = pneg %p118
      $region110: #{unet_up_block_forward.5} parent=27 // pred_check_branch
        %2669 = sbr.rel (%p2667) target = $region112
      $region111: #{unet_up_block_forward.5} parent=27 // pred_region
        _
      $region112: #{unet_up_block_forward.5} parent=27 // pred_fallthru
        _
    $region28: #{unet_up_block_forward.5} parent=5 // pred_fallthru
      _
    %p2670 = scmp.le.s32.totalorder 2, %s11
    // Predicated region
    $region113: #{unet_up_block_forward.5} parent=5 // pred_check
      %p2671 = pneg %p2670
    $region114: #{unet_up_block_forward.5} parent=5 // pred_check_branch
      %2673 = sbr.rel (%p2671) target = $region116
    $region115: #{unet_up_block_forward.5} parent=5 // pred_region
      %s2674 = ssub.s32 %s11, 2
      // Predicated region
      $region117: #{unet_up_block_forward.5} parent=115 // pred_check
        %p2675 = pneg %p96
      $region118: #{unet_up_block_forward.5} parent=115 // pred_check_branch
        %2677 = sbr.rel (%p2675) target = $region120
      $region119: #{unet_up_block_forward.5} parent=115 // pred_region
        %s2678 = smul.u32 8, %s23
        %p2679 = scmp.lt.s32.totalorder %s22, 1
        %s2680 = scalar_select %p2679, %s22, 1
        %p2681 = scmp.lt.s32.totalorder %s2678, 15
        %s2682 = scalar_select %p2681, %s2678, 15
        %s2683 = smul.addr %s2682, 2
        %s2684 = smul.addr %s2680, 32
        %s2685 = sadd.s32 %s2683, %s2684
        %s2686 = smul.addr %s2685, 8
        %s2687 = scalar_lea.vmem %s3, %s2686
      $region120: #{unet_up_block_forward.5} parent=115 // pred_fallthru
        _
      // Predicated region
      $region121: #{unet_up_block_forward.5} parent=115 // pred_check
        %p2688 = pneg %p124
      $region122: #{unet_up_block_forward.5} parent=115 // pred_check_branch
        %2690 = sbr.rel (%p2688) target = $region124
      $region123: #{unet_up_block_forward.5} parent=115 // pred_region
        %p2691 = scmp.lt.s32.totalorder %s22, 1
        %s2692 = scalar_select %p2691, %s22, 1
        %p2693 = scmp.lt.s32.totalorder %s23, 1
        %s2694 = scalar_select %p2693, %s23, 1
        %s2695 = smul.addr %s2692, 2
        %s2696 = sadd.s32 %s2694, %s2695
        %s2697 = smul.addr %s2696, 8
        %s2698 = scalar_lea.vmem %s4, %s2697
      $region124: #{unet_up_block_forward.5} parent=115 // pred_fallthru
        _
    $region116: #{unet_up_block_forward.5} parent=5 // pred_fallthru
      _
  $region6: #{unet_up_block_forward.5} parent=0 // loop_footer
    %s15 = sadd.s32 1, %s11
  $region7: #{unet_up_block_forward.5} parent=0 // loop_footer_branch
    %10 = sbr.rel target = $region3
  $region8: #{unet_up_block_forward.5} parent=0 // loop_exit
    _
  %2699 = vsyncmov [#allocation3]
  %s2700 = vpop.sfrf %2699
  %p2701 = scmp.eq.s32.totalorder %s2700, 0
  %p2702 = pneg %p2701
  %2704 = shalt.err (%p2702)
  %s2705 = scalar_lea.sflag [#allocation3], 1
  %2706 = vsyncmov %s2705
  %s2707 = vpop.sfrf %2706
  %p2708 = scmp.eq.s32.totalorder %s2707, 0
  %p2709 = pneg %p2708
  %2711 = shalt.err (%p2709)

</llo_original>
